<compile_context>
chip_gen: v7x
topology: tpu7x:2x2x1
jax: 0.10.0
libtpu: 0.0.40
codegen_flags: <defaults>
</compile_context>

<pallas_src>
import functools

import jax
import jax.numpy as jnp
from jax.experimental import pallas as pl
from jax.experimental.pallas import tpu as pltpu

VMEM_SPEC = pl.BlockSpec(memory_space=pltpu.MemorySpace.VMEM)


# ----------------------------------------------------------------------------
# In-kernel helpers (pure value functions, traced inside the Pallas kernel).
# ----------------------------------------------------------------------------
def _apply_activation(x, name):
    if name == 'relu':
        return jnp.maximum(x, 0.0)
    if name == 'sigmoid':
        return 1.0 / (1.0 + jnp.exp(-x))
    return x


def _gat_layer(nf, ef, src_oh, dst_oh, dst_t, mask, wn, we, al, ar, am,
               *, num_heads, out_feats, neg_slope, cat, activation):
    """One GATLayer (use_static_feature=False, residual=False) on dense graph."""
    E = src_oh.shape[0]
    H, F = num_heads, out_feats

    fsrc = jnp.dot(nf, wn, preferred_element_type=jnp.float32)            # (N, H*F)
    fedge = jnp.dot(ef, we, preferred_element_type=jnp.float32)           # (E, H*F)

    # Edge gathers hoisted out of the head loop; reused for attention logits.
    fs_src = jnp.dot(src_oh, fsrc, preferred_element_type=jnp.float32)    # (E, H*F)
    fs_dst = jnp.dot(dst_oh, fsrc, preferred_element_type=jnp.float32)    # (E, H*F)

    a_cols = []
    for h in range(H):                                                    # static unroll
        lo, hi = h * F, (h + 1) * F
        # left + right + em  (all (E, T)); == el[src] + er[dst] + em by linearity
        logits = (jnp.dot(fs_src[:, lo:hi], al[lo:hi, :], preferred_element_type=jnp.float32)
                  + jnp.dot(fs_dst[:, lo:hi], ar[lo:hi, :], preferred_element_type=jnp.float32)
                  + jnp.dot(fedge[:, lo:hi], am[lo:hi, :], preferred_element_type=jnp.float32))
        score = jnp.sum(logits * mask, axis=1, keepdims=True)             # (E, 1)
        score = jnp.where(score >= 0.0, score, neg_slope * score)         # LeakyReLU

        # Numerically-stable per-destination edge softmax (dgl.edge_softmax).
        masked = jnp.where(dst_oh > 0.0, score, -1e30)                    # (E, N)
        max_n = jnp.max(masked, axis=0, keepdims=True)                    # (1, N) per-dst max
        max_e = jnp.sum(dst_oh * max_n, axis=1, keepdims=True)            # (E, 1) gather to edges
        ex = jnp.exp(score - max_e)                                       # (E, 1)
        denom_n = jnp.dot(dst_t, ex, preferred_element_type=jnp.float32)  # (N, 1) per-dst sum
        denom_e = jnp.dot(dst_oh, denom_n, preferred_element_type=jnp.float32)  # (E, 1)
        a_h = ex * pl.reciprocal(denom_e, approx=True)                    # (E, 1)
        a_cols.append(jnp.broadcast_to(a_h, (E, F)))

    a_full = jnp.concatenate(a_cols, axis=-1)                             # (E, H*F)
    # Scatter-sum per destination: one full-width matmul + one full-width value.
    rst_n = jnp.dot(dst_t, fs_src * a_full, preferred_element_type=jnp.float32)  # (N, H*F)
    rst_e = (fedge + fs_src + fs_dst) / 3.0                               # (E, H*F) edge_mean_udf

    if not cat:                                                           # mean over heads
        rn, re = rst_n[:, 0:F], rst_e[:, 0:F]
        for h in range(1, H):
            rn = rn + rst_n[:, h * F:(h + 1) * F]
            re = re + rst_e[:, h * F:(h + 1) * F]
        rst_n, rst_e = rn / float(H), re / float(H)

    return _apply_activation(rst_n, activation), _apply_activation(rst_e, activation)


# ----------------------------------------------------------------------------
# The single fused kernel: GAT (g-stack + inv_g-stack, layer0 + last layer)
# followed by the temporal projections.
# ----------------------------------------------------------------------------
def _leim_forward_kernel(*refs, num_hidden, out_dim, heads, neg_slope, activation):
    (temporal_ref,
     g_n_ref, g_e_ref, g_src_ref, g_dst_ref, g_mask_ref,
     ig_n_ref, ig_e_ref, ig_src_ref, ig_dst_ref, ig_mask_ref) = refs[:11]
    lrefs = refs[11:31]                                  # 4 layers x (wn, we, al, ar, am)
    bnmu_ref, bnsig_ref, bemu_ref, besig_ref = refs[31:35]
    nmu_ref, nsig_ref, emu_ref, esig_ref = refs[35:39]

    layers = [tuple(r[...] for r in lrefs[5 * i:5 * (i + 1)]) for i in range(4)]

    temporal = temporal_ref[...]
    g_n, g_e = g_n_ref[...], g_e_ref[...]
    g_src, g_dst, g_mask = g_src_ref[...], g_dst_ref[...], g_mask_ref[...]
    ig_n, ig_e = ig_n_ref[...], ig_e_ref[...]
    ig_src, ig_dst, ig_mask = ig_src_ref[...], ig_dst_ref[...], ig_mask_ref[...]

    # Transpose the destination incidence once per graph, reuse across layers/heads.
    g_dst_t = jnp.transpose(g_dst)                        # (N, E)
    ig_dst_t = jnp.transpose(ig_dst)                      # (N, E)

    H0, H1 = heads[0], heads[-1]

    # ---- GAT layer 0 (cat=True, configured activation) on g and inv_g ----
    hn_g, he_g = _gat_layer(g_n, g_e, g_src, g_dst, g_dst_t, g_mask, *layers[0],
                            num_heads=H0, out_feats=num_hidden,
                            neg_slope=neg_slope, cat=True, activation=activation)
    hn_i, he_i = _gat_layer(ig_n, ig_e, ig_src, ig_dst, ig_dst_t, ig_mask, *layers[1],
                            num_heads=H0, out_feats=num_hidden,
                            neg_slope=neg_slope, cat=True, activation=activation)
    h_n, h_e = hn_g + hn_i, he_g + he_i                   # (N, H0*num_hidden), (E, ...)

    # ---- last GAT layer (cat=False). NOTE: the torch GATLayer ternary maps
    # activation=None to nn.Sigmoid(), so the last layer applies a sigmoid. ----
    on_g, oe_g = _gat_layer(h_n, h_e, g_src, g_dst, g_dst_t, g_mask, *layers[2],
                            num_heads=H1, out_feats=out_dim,
                            neg_slope=neg_slope, cat=False, activation='sigmoid')
    on_i, oe_i = _gat_layer(h_n, h_e, ig_src, ig_dst, ig_dst_t, ig_mask, *layers[3],
                            num_heads=H1, out_feats=out_dim,
                            neg_slope=neg_slope, cat=False, activation='sigmoid')
    node_h, edge_h = on_g + on_i, oe_g + oe_i             # (N, out_dim), (E, out_dim)

    # ---- temporal projection:
    #   mu      = temporal @ (h @ base_mu).T
    #   sigma^2 = (temporal @ (h @ base_sigma).T) ** 2
    dn = (((1,), (1,)), ((), ()))                          # (B, D) x (X, D) -> (B, X)
    pn_mu = jnp.dot(node_h, bnmu_ref[...], preferred_element_type=jnp.float32)    # (N, D)
    pn_sig = jnp.dot(node_h, bnsig_ref[...], preferred_element_type=jnp.float32)
    pe_mu = jnp.dot(edge_h, bemu_ref[...], preferred_element_type=jnp.float32)    # (E, D)
    pe_sig = jnp.dot(edge_h, besig_ref[...], preferred_element_type=jnp.float32)

    nmu_ref[...] = jax.lax.dot_general(temporal, pn_mu, dn, preferred_element_type=jnp.float32)
    ns = jax.lax.dot_general(temporal, pn_sig, dn, preferred_element_type=jnp.float32)
    nsig_ref[...] = ns * ns
    emu_ref[...] = jax.lax.dot_general(temporal, pe_mu, dn, preferred_element_type=jnp.float32)
    es = jax.lax.dot_general(temporal, pe_sig, dn, preferred_element_type=jnp.float32)
    esig_ref[...] = es * es


def leim_forward_pallas(params, g, inv_g, temporal_emb, cfg):
    N = g['n_raw'].shape[0]
    E = g['e_raw'].shape[0]
    B = temporal_emb.shape[0]

    kernel = functools.partial(
        _leim_forward_kernel,
        num_hidden=cfg['num_hidden'], out_dim=cfg['out_dim'],
        heads=tuple(cfg['heads']), neg_slope=cfg['neg_slope'],
        activation=cfg['activation'])

    layer_args = []
    for lp in (params['gat']['layers'][0], params['gat']['i_layers'][0],
               params['gat']['layers'][1], params['gat']['i_layers'][1]):
        layer_args += [lp['wn'], lp['we'], lp['al'], lp['ar'], lp['am']]

    inputs = [temporal_emb,
              g['n_raw'], g['e_raw'], g['src_oh'], g['dst_oh'], g['mask'],
              inv_g['n_raw'], inv_g['e_raw'], inv_g['src_oh'], inv_g['dst_oh'], inv_g['mask'],
              *layer_args,
              params['base_n_mu'], params['base_n_sigma'],
              params['base_e_mu'], params['base_e_sigma']]

    out_shape = (jax.ShapeDtypeStruct((B, N), jnp.float32),
                 jax.ShapeDtypeStruct((B, N), jnp.float32),
                 jax.ShapeDtypeStruct((B, E), jnp.float32),
                 jax.ShapeDtypeStruct((B, E), jnp.float32))

    return pl.pallas_call(
        kernel,
        out_shape=out_shape,
        in_specs=[VMEM_SPEC] * len(inputs),
        out_specs=(VMEM_SPEC,) * 4,
    )(*inputs)


# ----------------------------------------------------------------------------
# Host-side forward (jit'ed): embedding gathers + the single fused kernel.
# ----------------------------------------------------------------------------
def make_forward(cfg):
    @jax.jit
    def forward(params, g, inv_g, day, time):
        temporal_emb = jnp.concatenate(
            [params['day_emb'][day], params['time_emb'][time]], axis=-1)   # (B, D)
        # NOTE: the torch forward also computes edge_weight_nn / turning_weight_nn
        # into g.ndata['pro'] / g.edata['pro'], but with use_static_feature=False
        # those are never read, so they are dead code and omitted here.
        return leim_forward_pallas(params, g, inv_g, temporal_emb, cfg)
    return forward


# ----------------------------------------------------------------------------
# Deterministic parameter / graph construction
# ----------------------------------------------------------------------------
def _normal(key, shape, std):
    return std * jax.random.normal(key, shape, dtype=jnp.float32)


def build_everything(key):
    # sizes implied by the module with road_network=None
    node_pro_dim = edge_pro_dim = 10
    node_size = edge_size = 10
    slot_size = 30
    time_vocab = int(24 * 60 / slot_size)        # 48
    day_emb_dim = 4
    time_emb_dim = 4

    cfg = dict(num_layers=1, num_hidden=8, out_dim=4, heads=[2, 2],
               edge_type_num=3, activation='relu', neg_slope=0.2)

    keys = iter(jax.random.split(key, 64))
    nk = lambda: next(keys)

    def gat_layer_params(n_in, e_in, H, F, T):
        return dict(
            wn=_normal(nk(), (n_in, H * F), 0.1),
            we=_normal(nk(), (e_in, H * F), 0.1),
            al=_normal(nk(), (H * F, T), 0.1),
            ar=_normal(nk(), (H * F, T), 0.1),
            am=_normal(nk(), (H * F, T), 0.1),
        )

    H0, Hlast = cfg['heads'][0], cfg['heads'][-1]
    nh, od, T = cfg['num_hidden'], cfg['out_dim'], cfg['edge_type_num']
    n_in0, e_in0 = edge_pro_dim, 2 * edge_pro_dim + node_pro_dim       # (10, 30)
    in_last = nh * H0                                                  # 16

    gat_params = dict(
        layers=[gat_layer_params(n_in0, e_in0, H0, nh, T),
                gat_layer_params(in_last, in_last, Hlast, od, T)],
        i_layers=[gat_layer_params(n_in0, e_in0, H0, nh, T),
                  gat_layer_params(in_last, in_last, Hlast, od, T)],
    )

    D = day_emb_dim + time_emb_dim
    params = dict(
        day_emb=_normal(nk(), (7, day_emb_dim), 0.5),
        time_emb=_normal(nk(), (time_vocab, time_emb_dim), 0.5),
        base_n_mu=_normal(nk(), (od, D), 0.3),
        base_n_sigma=_normal(nk(), (od, D), 0.3),
        base_e_mu=_normal(nk(), (od, D), 0.3),
        base_e_sigma=_normal(nk(), (od, D), 0.3),
        gat=gat_params,
    )

    # Synthetic line graph g (ring) and its inverse inv_g, deterministic features.
    src = jnp.arange(edge_size, dtype=jnp.int32)
    dst = (src + 1) % node_size
    mask = jax.nn.one_hot(src % T, T, dtype=jnp.float32)               # per-edge edge-type mask
    n_raw = _normal(nk(), (node_size, edge_pro_dim), 1.0)
    e_raw = _normal(nk(), (edge_size, 2 * edge_pro_dim + node_pro_dim), 1.0)

    def make_graph(s, d):
        return dict(n_raw=n_raw, e_raw=e_raw, mask=mask,
                    src_oh=jax.nn.one_hot(s, node_size, dtype=jnp.float32),   # (E, N)
                    dst_oh=jax.nn.one_hot(d, node_size, dtype=jnp.float32))   # (E, N)

    g = make_graph(src, dst)
    inv_g = make_graph(dst, src)
    return params, cfg, g, inv_g, time_vocab


# TODO(synk): feat_drop / attn_drop / dropout are eval-mode identities here;
# training-mode dropout masks are not reproduced.

if __name__ == "__main__":
    key = jax.random.PRNGKey(0)
    k_params, k_day, k_time = jax.random.split(key, 3)
    params, cfg, g, inv_g, time_vocab = build_everything(k_params)
    forward = make_forward(cfg)

    batch_size = 2
    day = jax.random.randint(k_day, (batch_size,), 0, 7, dtype=jnp.int32)
    time = jax.random.randint(k_time, (batch_size,), 0, time_vocab, dtype=jnp.int32)

    n_mu, n_sigma2, e_mu, e_sigma2 = forward(params, g, inv_g, day, time)
    jax.block_until_ready((n_mu, n_sigma2, e_mu, e_sigma2))

    assert n_mu.shape == (batch_size, 10) and n_sigma2.shape == (batch_size, 10)
    assert e_mu.shape == (batch_size, 10) and e_sigma2.shape == (batch_size, 10)
    assert bool(jnp.all(jnp.isfinite(n_mu))) and bool(jnp.all(n_sigma2 >= 0))
    assert bool(jnp.all(jnp.isfinite(e_mu))) and bool(jnp.all(e_sigma2 >= 0))
    print("KERNEL_OK")
</pallas_src>

<mosaic_0001>
module attributes {stable_mosaic.version = 11 : i64} {
  func.func @_leim_forward_kernel(%arg0: memref<2x8xf32, #tpu.memory_space<vmem>>, %arg1: memref<10x10xf32, #tpu.memory_space<vmem>>, %arg2: memref<10x30xf32, #tpu.memory_space<vmem>>, %arg3: memref<10x10xf32, #tpu.memory_space<vmem>>, %arg4: memref<10x10xf32, #tpu.memory_space<vmem>>, %arg5: memref<10x3xf32, #tpu.memory_space<vmem>>, %arg6: memref<10x10xf32, #tpu.memory_space<vmem>>, %arg7: memref<10x30xf32, #tpu.memory_space<vmem>>, %arg8: memref<10x10xf32, #tpu.memory_space<vmem>>, %arg9: memref<10x10xf32, #tpu.memory_space<vmem>>, %arg10: memref<10x3xf32, #tpu.memory_space<vmem>>, %arg11: memref<10x16xf32, #tpu.memory_space<vmem>>, %arg12: memref<30x16xf32, #tpu.memory_space<vmem>>, %arg13: memref<16x3xf32, #tpu.memory_space<vmem>>, %arg14: memref<16x3xf32, #tpu.memory_space<vmem>>, %arg15: memref<16x3xf32, #tpu.memory_space<vmem>>, %arg16: memref<10x16xf32, #tpu.memory_space<vmem>>, %arg17: memref<30x16xf32, #tpu.memory_space<vmem>>, %arg18: memref<16x3xf32, #tpu.memory_space<vmem>>, %arg19: memref<16x3xf32, #tpu.memory_space<vmem>>, %arg20: memref<16x3xf32, #tpu.memory_space<vmem>>, %arg21: memref<16x8xf32, #tpu.memory_space<vmem>>, %arg22: memref<16x8xf32, #tpu.memory_space<vmem>>, %arg23: memref<8x3xf32, #tpu.memory_space<vmem>>, %arg24: memref<8x3xf32, #tpu.memory_space<vmem>>, %arg25: memref<8x3xf32, #tpu.memory_space<vmem>>, %arg26: memref<16x8xf32, #tpu.memory_space<vmem>>, %arg27: memref<16x8xf32, #tpu.memory_space<vmem>>, %arg28: memref<8x3xf32, #tpu.memory_space<vmem>>, %arg29: memref<8x3xf32, #tpu.memory_space<vmem>>, %arg30: memref<8x3xf32, #tpu.memory_space<vmem>>, %arg31: memref<4x8xf32, #tpu.memory_space<vmem>>, %arg32: memref<4x8xf32, #tpu.memory_space<vmem>>, %arg33: memref<4x8xf32, #tpu.memory_space<vmem>>, %arg34: memref<4x8xf32, #tpu.memory_space<vmem>>, %arg35: memref<2x10xf32, #tpu.memory_space<vmem>>, %arg36: memref<2x10xf32, #tpu.memory_space<vmem>>, %arg37: memref<2x10xf32, #tpu.memory_space<vmem>>, %arg38: memref<2x10xf32, #tpu.memory_space<vmem>>) attributes {dimension_semantics = [], scalar_prefetch = 0 : i64, scratch_operands = 0 : i64, tpu.core_type = #tpu.core_type<tc>} {
    %c0 = arith.constant 0 : index
    %c0_0 = arith.constant 0 : index
    %0 = vector.load %arg11[%c0, %c0_0] : memref<10x16xf32, #tpu.memory_space<vmem>>, vector<10x16xf32>
    %c0_1 = arith.constant 0 : index
    %c0_2 = arith.constant 0 : index
    %1 = vector.load %arg12[%c0_1, %c0_2] : memref<30x16xf32, #tpu.memory_space<vmem>>, vector<30x16xf32>
    %c0_3 = arith.constant 0 : index
    %c0_4 = arith.constant 0 : index
    %2 = vector.load %arg13[%c0_3, %c0_4] : memref<16x3xf32, #tpu.memory_space<vmem>>, vector<16x3xf32>
    %c0_5 = arith.constant 0 : index
    %c0_6 = arith.constant 0 : index
    %3 = vector.load %arg14[%c0_5, %c0_6] : memref<16x3xf32, #tpu.memory_space<vmem>>, vector<16x3xf32>
    %c0_7 = arith.constant 0 : index
    %c0_8 = arith.constant 0 : index
    %4 = vector.load %arg15[%c0_7, %c0_8] : memref<16x3xf32, #tpu.memory_space<vmem>>, vector<16x3xf32>
    %c0_9 = arith.constant 0 : index
    %c0_10 = arith.constant 0 : index
    %5 = vector.load %arg16[%c0_9, %c0_10] : memref<10x16xf32, #tpu.memory_space<vmem>>, vector<10x16xf32>
    %c0_11 = arith.constant 0 : index
    %c0_12 = arith.constant 0 : index
    %6 = vector.load %arg17[%c0_11, %c0_12] : memref<30x16xf32, #tpu.memory_space<vmem>>, vector<30x16xf32>
    %c0_13 = arith.constant 0 : index
    %c0_14 = arith.constant 0 : index
    %7 = vector.load %arg18[%c0_13, %c0_14] : memref<16x3xf32, #tpu.memory_space<vmem>>, vector<16x3xf32>
    %c0_15 = arith.constant 0 : index
    %c0_16 = arith.constant 0 : index
    %8 = vector.load %arg19[%c0_15, %c0_16] : memref<16x3xf32, #tpu.memory_space<vmem>>, vector<16x3xf32>
    %c0_17 = arith.constant 0 : index
    %c0_18 = arith.constant 0 : index
    %9 = vector.load %arg20[%c0_17, %c0_18] : memref<16x3xf32, #tpu.memory_space<vmem>>, vector<16x3xf32>
    %c0_19 = arith.constant 0 : index
    %c0_20 = arith.constant 0 : index
    %10 = vector.load %arg21[%c0_19, %c0_20] : memref<16x8xf32, #tpu.memory_space<vmem>>, vector<16x8xf32>
    %c0_21 = arith.constant 0 : index
    %c0_22 = arith.constant 0 : index
    %11 = vector.load %arg22[%c0_21, %c0_22] : memref<16x8xf32, #tpu.memory_space<vmem>>, vector<16x8xf32>
    %c0_23 = arith.constant 0 : index
    %c0_24 = arith.constant 0 : index
    %12 = vector.load %arg23[%c0_23, %c0_24] : memref<8x3xf32, #tpu.memory_space<vmem>>, vector<8x3xf32>
    %c0_25 = arith.constant 0 : index
    %c0_26 = arith.constant 0 : index
    %13 = vector.load %arg24[%c0_25, %c0_26] : memref<8x3xf32, #tpu.memory_space<vmem>>, vector<8x3xf32>
    %c0_27 = arith.constant 0 : index
    %c0_28 = arith.constant 0 : index
    %14 = vector.load %arg25[%c0_27, %c0_28] : memref<8x3xf32, #tpu.memory_space<vmem>>, vector<8x3xf32>
    %c0_29 = arith.constant 0 : index
    %c0_30 = arith.constant 0 : index
    %15 = vector.load %arg26[%c0_29, %c0_30] : memref<16x8xf32, #tpu.memory_space<vmem>>, vector<16x8xf32>
    %c0_31 = arith.constant 0 : index
    %c0_32 = arith.constant 0 : index
    %16 = vector.load %arg27[%c0_31, %c0_32] : memref<16x8xf32, #tpu.memory_space<vmem>>, vector<16x8xf32>
    %c0_33 = arith.constant 0 : index
    %c0_34 = arith.constant 0 : index
    %17 = vector.load %arg28[%c0_33, %c0_34] : memref<8x3xf32, #tpu.memory_space<vmem>>, vector<8x3xf32>
    %c0_35 = arith.constant 0 : index
    %c0_36 = arith.constant 0 : index
    %18 = vector.load %arg29[%c0_35, %c0_36] : memref<8x3xf32, #tpu.memory_space<vmem>>, vector<8x3xf32>
    %c0_37 = arith.constant 0 : index
    %c0_38 = arith.constant 0 : index
    %19 = vector.load %arg30[%c0_37, %c0_38] : memref<8x3xf32, #tpu.memory_space<vmem>>, vector<8x3xf32>
    %c0_39 = arith.constant 0 : index
    %c0_40 = arith.constant 0 : index
    %20 = vector.load %arg0[%c0_39, %c0_40] : memref<2x8xf32, #tpu.memory_space<vmem>>, vector<2x8xf32>
    %c0_41 = arith.constant 0 : index
    %c0_42 = arith.constant 0 : index
    %21 = vector.load %arg1[%c0_41, %c0_42] : memref<10x10xf32, #tpu.memory_space<vmem>>, vector<10x10xf32>
    %c0_43 = arith.constant 0 : index
    %c0_44 = arith.constant 0 : index
    %22 = vector.load %arg2[%c0_43, %c0_44] : memref<10x30xf32, #tpu.memory_space<vmem>>, vector<10x30xf32>
    %c0_45 = arith.constant 0 : index
    %c0_46 = arith.constant 0 : index
    %23 = vector.load %arg3[%c0_45, %c0_46] : memref<10x10xf32, #tpu.memory_space<vmem>>, vector<10x10xf32>
    %c0_47 = arith.constant 0 : index
    %c0_48 = arith.constant 0 : index
    %24 = vector.load %arg4[%c0_47, %c0_48] : memref<10x10xf32, #tpu.memory_space<vmem>>, vector<10x10xf32>
    %c0_49 = arith.constant 0 : index
    %c0_50 = arith.constant 0 : index
    %25 = vector.load %arg5[%c0_49, %c0_50] : memref<10x3xf32, #tpu.memory_space<vmem>>, vector<10x3xf32>
    %c0_51 = arith.constant 0 : index
    %c0_52 = arith.constant 0 : index
    %26 = vector.load %arg6[%c0_51, %c0_52] : memref<10x10xf32, #tpu.memory_space<vmem>>, vector<10x10xf32>
    %c0_53 = arith.constant 0 : index
    %c0_54 = arith.constant 0 : index
    %27 = vector.load %arg7[%c0_53, %c0_54] : memref<10x30xf32, #tpu.memory_space<vmem>>, vector<10x30xf32>
    %c0_55 = arith.constant 0 : index
    %c0_56 = arith.constant 0 : index
    %28 = vector.load %arg8[%c0_55, %c0_56] : memref<10x10xf32, #tpu.memory_space<vmem>>, vector<10x10xf32>
    %c0_57 = arith.constant 0 : index
    %c0_58 = arith.constant 0 : index
    %29 = vector.load %arg9[%c0_57, %c0_58] : memref<10x10xf32, #tpu.memory_space<vmem>>, vector<10x10xf32>
    %c0_59 = arith.constant 0 : index
    %c0_60 = arith.constant 0 : index
    %30 = vector.load %arg10[%c0_59, %c0_60] : memref<10x3xf32, #tpu.memory_space<vmem>>, vector<10x3xf32>
    %31 = tpu.transpose %24, [1, 0] : vector<10x10xf32> -> vector<10x10xf32>
    %32 = tpu.transpose %29, [1, 0] : vector<10x10xf32> -> vector<10x10xf32>
    %cst = arith.constant dense<0.000000e+00> : vector<10x16xf32>
    %33 = tpu.matmul %21, %0, %cst {dimension_numbers = #tpu.dot_dimension_numbers<[1], [0], [0], [1], [0, 0, 1, 1], [], []>} : vector<10x10xf32>, vector<10x16xf32>, vector<10x16xf32> -> vector<10x16xf32>
    %cst_61 = arith.constant dense<0.000000e+00> : vector<10x16xf32>
    %34 = tpu.matmul %22, %1, %cst_61 {dimension_numbers = #tpu.dot_dimension_numbers<[1], [0], [0], [1], [0, 0, 1, 1], [], []>} : vector<10x30xf32>, vector<30x16xf32>, vector<10x16xf32> -> vector<10x16xf32>
    %cst_62 = arith.constant dense<0.000000e+00> : vector<10x16xf32>
    %35 = tpu.matmul %23, %33, %cst_62 {dimension_numbers = #tpu.dot_dimension_numbers<[1], [0], [0], [1], [0, 0, 1, 1], [], []>} : vector<10x10xf32>, vector<10x16xf32>, vector<10x16xf32> -> vector<10x16xf32>
    %cst_63 = arith.constant dense<0.000000e+00> : vector<10x16xf32>
    %36 = tpu.matmul %24, %33, %cst_63 {dimension_numbers = #tpu.dot_dimension_numbers<[1], [0], [0], [1], [0, 0, 1, 1], [], []>} : vector<10x10xf32>, vector<10x16xf32>, vector<10x16xf32> -> vector<10x16xf32>
    %37 = vector.extract_strided_slice %35 {offsets = [0, 0], sizes = [10, 8], strides = [1, 1]} : vector<10x16xf32> to vector<10x8xf32>
    %38 = vector.extract_strided_slice %2 {offsets = [0, 0], sizes = [8, 3], strides = [1, 1]} : vector<16x3xf32> to vector<8x3xf32>
    %cst_64 = arith.constant dense<0.000000e+00> : vector<10x3xf32>
    %39 = tpu.matmul %37, %38, %cst_64 {dimension_numbers = #tpu.dot_dimension_numbers<[1], [0], [0], [1], [0, 0, 1, 1], [], []>} : vector<10x8xf32>, vector<8x3xf32>, vector<10x3xf32> -> vector<10x3xf32>
    %40 = vector.extract_strided_slice %36 {offsets = [0, 0], sizes = [10, 8], strides = [1, 1]} : vector<10x16xf32> to vector<10x8xf32>
    %41 = vector.extract_strided_slice %3 {offsets = [0, 0], sizes = [8, 3], strides = [1, 1]} : vector<16x3xf32> to vector<8x3xf32>
    %cst_65 = arith.constant dense<0.000000e+00> : vector<10x3xf32>
    %42 = tpu.matmul %40, %41, %cst_65 {dimension_numbers = #tpu.dot_dimension_numbers<[1], [0], [0], [1], [0, 0, 1, 1], [], []>} : vector<10x8xf32>, vector<8x3xf32>, vector<10x3xf32> -> vector<10x3xf32>
    %43 = arith.addf %39, %42 : vector<10x3xf32>
    %44 = vector.extract_strided_slice %34 {offsets = [0, 0], sizes = [10, 8], strides = [1, 1]} : vector<10x16xf32> to vector<10x8xf32>
    %45 = vector.extract_strided_slice %4 {offsets = [0, 0], sizes = [8, 3], strides = [1, 1]} : vector<16x3xf32> to vector<8x3xf32>
    %cst_66 = arith.constant dense<0.000000e+00> : vector<10x3xf32>
    %46 = tpu.matmul %44, %45, %cst_66 {dimension_numbers = #tpu.dot_dimension_numbers<[1], [0], [0], [1], [0, 0, 1, 1], [], []>} : vector<10x8xf32>, vector<8x3xf32>, vector<10x3xf32> -> vector<10x3xf32>
    %47 = arith.addf %43, %46 : vector<10x3xf32>
    %48 = arith.mulf %47, %25 : vector<10x3xf32>
    %cst_67 = arith.constant dense<0.000000e+00> : vector<10xf32>
    %49 = vector.multi_reduction <add>, %48, %cst_67 [1] : vector<10x3xf32> to vector<10xf32>
    %50 = vector.shape_cast %49 : vector<10xf32> to vector<10x1xf32>
    %cst_68 = arith.constant 0.000000e+00 : f32
    %51 = vector.broadcast %cst_68 : f32 to vector<10x1xf32>
    %52 = arith.cmpf oge, %50, %51 : vector<10x1xf32>
    %cst_69 = arith.constant 2.000000e-01 : f32
    %53 = vector.broadcast %cst_69 : f32 to vector<10x1xf32>
    %54 = arith.mulf %53, %50 : vector<10x1xf32>
    %55 = arith.select %52, %50, %54 : vector<10x1xi1>, vector<10x1xf32>
    %cst_70 = arith.constant 0.000000e+00 : f32
    %56 = vector.broadcast %cst_70 : f32 to vector<10x10xf32>
    %57 = arith.cmpf ogt, %24, %56 : vector<10x10xf32>
    %cst_71 = arith.constant -1.000000e+30 : f32
    %58 = vector.shape_cast %55 : vector<10x1xf32> to vector<10x1xf32>
    %59 = vector.broadcast %58 : vector<10x1xf32> to vector<10x10xf32>
    %60 = vector.broadcast %cst_71 : f32 to vector<10x10xf32>
    %61 = arith.select %57, %59, %60 : vector<10x10xi1>, vector<10x10xf32>
    %cst_72 = arith.constant dense<0xFF800000> : vector<10xf32>
    %62 = vector.multi_reduction <maximumf>, %61, %cst_72 [0] : vector<10x10xf32> to vector<10xf32>
    %63 = vector.shape_cast %62 : vector<10xf32> to vector<1x10xf32>
    %64 = vector.broadcast %63 : vector<1x10xf32> to vector<10x10xf32>
    %65 = arith.mulf %24, %64 : vector<10x10xf32>
    %cst_73 = arith.constant dense<0.000000e+00> : vector<10xf32>
    %66 = vector.multi_reduction <add>, %65, %cst_73 [1] : vector<10x10xf32> to vector<10xf32>
    %67 = vector.shape_cast %66 : vector<10xf32> to vector<10x1xf32>
    %68 = arith.subf %55, %67 : vector<10x1xf32>
    %69 = math.exp %68 : vector<10x1xf32>
    %cst_74 = arith.constant dense<0.000000e+00> : vector<10x1xf32>
    %70 = tpu.matmul %31, %69, %cst_74 {dimension_numbers = #tpu.dot_dimension_numbers<[1], [0], [0], [1], [0, 0, 1, 1], [], []>} : vector<10x10xf32>, vector<10x1xf32>, vector<10x1xf32> -> vector<10x1xf32>
    %cst_75 = arith.constant dense<0.000000e+00> : vector<10x1xf32>
    %71 = tpu.matmul %24, %70, %cst_75 {dimension_numbers = #tpu.dot_dimension_numbers<[1], [0], [0], [1], [0, 0, 1, 1], [], []>} : vector<10x10xf32>, vector<10x1xf32>, vector<10x1xf32> -> vector<10x1xf32>
    %72 = tpu.reciprocal %71 {approx = true} : vector<10x1xf32> -> vector<10x1xf32>
    %73 = arith.mulf %69, %72 : vector<10x1xf32>
    %74 = vector.shape_cast %73 : vector<10x1xf32> to vector<10x1xf32>
    %75 = vector.broadcast %74 : vector<10x1xf32> to vector<10x8xf32>
    %76 = vector.extract_strided_slice %35 {offsets = [0, 8], sizes = [10, 8], strides = [1, 1]} : vector<10x16xf32> to vector<10x8xf32>
    %77 = vector.extract_strided_slice %2 {offsets = [8, 0], sizes = [8, 3], strides = [1, 1]} : vector<16x3xf32> to vector<8x3xf32>
    %cst_76 = arith.constant dense<0.000000e+00> : vector<10x3xf32>
    %78 = tpu.matmul %76, %77, %cst_76 {dimension_numbers = #tpu.dot_dimension_numbers<[1], [0], [0], [1], [0, 0, 1, 1], [], []>} : vector<10x8xf32>, vector<8x3xf32>, vector<10x3xf32> -> vector<10x3xf32>
    %79 = vector.extract_strided_slice %36 {offsets = [0, 8], sizes = [10, 8], strides = [1, 1]} : vector<10x16xf32> to vector<10x8xf32>
    %80 = vector.extract_strided_slice %3 {offsets = [8, 0], sizes = [8, 3], strides = [1, 1]} : vector<16x3xf32> to vector<8x3xf32>
    %cst_77 = arith.constant dense<0.000000e+00> : vector<10x3xf32>
    %81 = tpu.matmul %79, %80, %cst_77 {dimension_numbers = #tpu.dot_dimension_numbers<[1], [0], [0], [1], [0, 0, 1, 1], [], []>} : vector<10x8xf32>, vector<8x3xf32>, vector<10x3xf32> -> vector<10x3xf32>
    %82 = arith.addf %78, %81 : vector<10x3xf32>
    %83 = vector.extract_strided_slice %34 {offsets = [0, 8], sizes = [10, 8], strides = [1, 1]} : vector<10x16xf32> to vector<10x8xf32>
    %84 = vector.extract_strided_slice %4 {offsets = [8, 0], sizes = [8, 3], strides = [1, 1]} : vector<16x3xf32> to vector<8x3xf32>
    %cst_78 = arith.constant dense<0.000000e+00> : vector<10x3xf32>
    %85 = tpu.matmul %83, %84, %cst_78 {dimension_numbers = #tpu.dot_dimension_numbers<[1], [0], [0], [1], [0, 0, 1, 1], [], []>} : vector<10x8xf32>, vector<8x3xf32>, vector<10x3xf32> -> vector<10x3xf32>
    %86 = arith.addf %82, %85 : vector<10x3xf32>
    %87 = arith.mulf %86, %25 : vector<10x3xf32>
    %cst_79 = arith.constant dense<0.000000e+00> : vector<10xf32>
    %88 = vector.multi_reduction <add>, %87, %cst_79 [1] : vector<10x3xf32> to vector<10xf32>
    %89 = vector.shape_cast %88 : vector<10xf32> to vector<10x1xf32>
    %cst_80 = arith.constant 0.000000e+00 : f32
    %90 = vector.broadcast %cst_80 : f32 to vector<10x1xf32>
    %91 = arith.cmpf oge, %89, %90 : vector<10x1xf32>
    %cst_81 = arith.constant 2.000000e-01 : f32
    %92 = vector.broadcast %cst_81 : f32 to vector<10x1xf32>
    %93 = arith.mulf %92, %89 : vector<10x1xf32>
    %94 = arith.select %91, %89, %93 : vector<10x1xi1>, vector<10x1xf32>
    %cst_82 = arith.constant 0.000000e+00 : f32
    %95 = vector.broadcast %cst_82 : f32 to vector<10x10xf32>
    %96 = arith.cmpf ogt, %24, %95 : vector<10x10xf32>
    %cst_83 = arith.constant -1.000000e+30 : f32
    %97 = vector.shape_cast %94 : vector<10x1xf32> to vector<10x1xf32>
    %98 = vector.broadcast %97 : vector<10x1xf32> to vector<10x10xf32>
    %99 = vector.broadcast %cst_83 : f32 to vector<10x10xf32>
    %100 = arith.select %96, %98, %99 : vector<10x10xi1>, vector<10x10xf32>
    %cst_84 = arith.constant dense<0xFF800000> : vector<10xf32>
    %101 = vector.multi_reduction <maximumf>, %100, %cst_84 [0] : vector<10x10xf32> to vector<10xf32>
    %102 = vector.shape_cast %101 : vector<10xf32> to vector<1x10xf32>
    %103 = vector.broadcast %102 : vector<1x10xf32> to vector<10x10xf32>
    %104 = arith.mulf %24, %103 : vector<10x10xf32>
    %cst_85 = arith.constant dense<0.000000e+00> : vector<10xf32>
    %105 = vector.multi_reduction <add>, %104, %cst_85 [1] : vector<10x10xf32> to vector<10xf32>
    %106 = vector.shape_cast %105 : vector<10xf32> to vector<10x1xf32>
    %107 = arith.subf %94, %106 : vector<10x1xf32>
    %108 = math.exp %107 : vector<10x1xf32>
    %cst_86 = arith.constant dense<0.000000e+00> : vector<10x1xf32>
    %109 = tpu.matmul %31, %108, %cst_86 {dimension_numbers = #tpu.dot_dimension_numbers<[1], [0], [0], [1], [0, 0, 1, 1], [], []>} : vector<10x10xf32>, vector<10x1xf32>, vector<10x1xf32> -> vector<10x1xf32>
    %cst_87 = arith.constant dense<0.000000e+00> : vector<10x1xf32>
    %110 = tpu.matmul %24, %109, %cst_87 {dimension_numbers = #tpu.dot_dimension_numbers<[1], [0], [0], [1], [0, 0, 1, 1], [], []>} : vector<10x10xf32>, vector<10x1xf32>, vector<10x1xf32> -> vector<10x1xf32>
    %111 = tpu.reciprocal %110 {approx = true} : vector<10x1xf32> -> vector<10x1xf32>
    %112 = arith.mulf %108, %111 : vector<10x1xf32>
    %113 = vector.shape_cast %112 : vector<10x1xf32> to vector<10x1xf32>
    %114 = vector.broadcast %113 : vector<10x1xf32> to vector<10x8xf32>
    %115 = tpu.concatenate %75, %114 in 1 : vector<10x8xf32>, vector<10x8xf32> -> vector<10x16xf32>
    %116 = arith.mulf %35, %115 : vector<10x16xf32>
    %cst_88 = arith.constant dense<0.000000e+00> : vector<10x16xf32>
    %117 = tpu.matmul %31, %116, %cst_88 {dimension_numbers = #tpu.dot_dimension_numbers<[1], [0], [0], [1], [0, 0, 1, 1], [], []>} : vector<10x10xf32>, vector<10x16xf32>, vector<10x16xf32> -> vector<10x16xf32>
    %118 = arith.addf %34, %35 : vector<10x16xf32>
    %119 = arith.addf %118, %36 : vector<10x16xf32>
    %cst_89 = arith.constant 3.000000e+00 : f32
    %120 = vector.broadcast %cst_89 : f32 to vector<10x16xf32>
    %121 = arith.divf %119, %120 : vector<10x16xf32>
    %cst_90 = arith.constant 0.000000e+00 : f32
    %122 = vector.broadcast %cst_90 : f32 to vector<10x16xf32>
    %123 = arith.maximumf %117, %122 : vector<10x16xf32>
    %cst_91 = arith.constant 0.000000e+00 : f32
    %124 = vector.broadcast %cst_91 : f32 to vector<10x16xf32>
    %125 = arith.maximumf %121, %124 : vector<10x16xf32>
    %cst_92 = arith.constant dense<0.000000e+00> : vector<10x16xf32>
    %126 = tpu.matmul %26, %5, %cst_92 {dimension_numbers = #tpu.dot_dimension_numbers<[1], [0], [0], [1], [0, 0, 1, 1], [], []>} : vector<10x10xf32>, vector<10x16xf32>, vector<10x16xf32> -> vector<10x16xf32>
    %cst_93 = arith.constant dense<0.000000e+00> : vector<10x16xf32>
    %127 = tpu.matmul %27, %6, %cst_93 {dimension_numbers = #tpu.dot_dimension_numbers<[1], [0], [0], [1], [0, 0, 1, 1], [], []>} : vector<10x30xf32>, vector<30x16xf32>, vector<10x16xf32> -> vector<10x16xf32>
    %cst_94 = arith.constant dense<0.000000e+00> : vector<10x16xf32>
    %128 = tpu.matmul %28, %126, %cst_94 {dimension_numbers = #tpu.dot_dimension_numbers<[1], [0], [0], [1], [0, 0, 1, 1], [], []>} : vector<10x10xf32>, vector<10x16xf32>, vector<10x16xf32> -> vector<10x16xf32>
    %cst_95 = arith.constant dense<0.000000e+00> : vector<10x16xf32>
    %129 = tpu.matmul %29, %126, %cst_95 {dimension_numbers = #tpu.dot_dimension_numbers<[1], [0], [0], [1], [0, 0, 1, 1], [], []>} : vector<10x10xf32>, vector<10x16xf32>, vector<10x16xf32> -> vector<10x16xf32>
    %130 = vector.extract_strided_slice %128 {offsets = [0, 0], sizes = [10, 8], strides = [1, 1]} : vector<10x16xf32> to vector<10x8xf32>
    %131 = vector.extract_strided_slice %7 {offsets = [0, 0], sizes = [8, 3], strides = [1, 1]} : vector<16x3xf32> to vector<8x3xf32>
    %cst_96 = arith.constant dense<0.000000e+00> : vector<10x3xf32>
    %132 = tpu.matmul %130, %131, %cst_96 {dimension_numbers = #tpu.dot_dimension_numbers<[1], [0], [0], [1], [0, 0, 1, 1], [], []>} : vector<10x8xf32>, vector<8x3xf32>, vector<10x3xf32> -> vector<10x3xf32>
    %133 = vector.extract_strided_slice %129 {offsets = [0, 0], sizes = [10, 8], strides = [1, 1]} : vector<10x16xf32> to vector<10x8xf32>
    %134 = vector.extract_strided_slice %8 {offsets = [0, 0], sizes = [8, 3], strides = [1, 1]} : vector<16x3xf32> to vector<8x3xf32>
    %cst_97 = arith.constant dense<0.000000e+00> : vector<10x3xf32>
    %135 = tpu.matmul %133, %134, %cst_97 {dimension_numbers = #tpu.dot_dimension_numbers<[1], [0], [0], [1], [0, 0, 1, 1], [], []>} : vector<10x8xf32>, vector<8x3xf32>, vector<10x3xf32> -> vector<10x3xf32>
    %136 = arith.addf %132, %135 : vector<10x3xf32>
    %137 = vector.extract_strided_slice %127 {offsets = [0, 0], sizes = [10, 8], strides = [1, 1]} : vector<10x16xf32> to vector<10x8xf32>
    %138 = vector.extract_strided_slice %9 {offsets = [0, 0], sizes = [8, 3], strides = [1, 1]} : vector<16x3xf32> to vector<8x3xf32>
    %cst_98 = arith.constant dense<0.000000e+00> : vector<10x3xf32>
    %139 = tpu.matmul %137, %138, %cst_98 {dimension_numbers = #tpu.dot_dimension_numbers<[1], [0], [0], [1], [0, 0, 1, 1], [], []>} : vector<10x8xf32>, vector<8x3xf32>, vector<10x3xf32> -> vector<10x3xf32>
    %140 = arith.addf %136, %139 : vector<10x3xf32>
    %141 = arith.mulf %140, %30 : vector<10x3xf32>
    %cst_99 = arith.constant dense<0.000000e+00> : vector<10xf32>
    %142 = vector.multi_reduction <add>, %141, %cst_99 [1] : vector<10x3xf32> to vector<10xf32>
    %143 = vector.shape_cast %142 : vector<10xf32> to vector<10x1xf32>
    %cst_100 = arith.constant 0.000000e+00 : f32
    %144 = vector.broadcast %cst_100 : f32 to vector<10x1xf32>
    %145 = arith.cmpf oge, %143, %144 : vector<10x1xf32>
    %cst_101 = arith.constant 2.000000e-01 : f32
    %146 = vector.broadcast %cst_101 : f32 to vector<10x1xf32>
    %147 = arith.mulf %146, %143 : vector<10x1xf32>
    %148 = arith.select %145, %143, %147 : vector<10x1xi1>, vector<10x1xf32>
    %cst_102 = arith.constant 0.000000e+00 : f32
    %149 = vector.broadcast %cst_102 : f32 to vector<10x10xf32>
    %150 = arith.cmpf ogt, %29, %149 : vector<10x10xf32>
    %cst_103 = arith.constant -1.000000e+30 : f32
    %151 = vector.shape_cast %148 : vector<10x1xf32> to vector<10x1xf32>
    %152 = vector.broadcast %151 : vector<10x1xf32> to vector<10x10xf32>
    %153 = vector.broadcast %cst_103 : f32 to vector<10x10xf32>
    %154 = arith.select %150, %152, %153 : vector<10x10xi1>, vector<10x10xf32>
    %cst_104 = arith.constant dense<0xFF800000> : vector<10xf32>
    %155 = vector.multi_reduction <maximumf>, %154, %cst_104 [0] : vector<10x10xf32> to vector<10xf32>
    %156 = vector.shape_cast %155 : vector<10xf32> to vector<1x10xf32>
    %157 = vector.broadcast %156 : vector<1x10xf32> to vector<10x10xf32>
    %158 = arith.mulf %29, %157 : vector<10x10xf32>
    %cst_105 = arith.constant dense<0.000000e+00> : vector<10xf32>
    %159 = vector.multi_reduction <add>, %158, %cst_105 [1] : vector<10x10xf32> to vector<10xf32>
    %160 = vector.shape_cast %159 : vector<10xf32> to vector<10x1xf32>
    %161 = arith.subf %148, %160 : vector<10x1xf32>
    %162 = math.exp %161 : vector<10x1xf32>
    %cst_106 = arith.constant dense<0.000000e+00> : vector<10x1xf32>
    %163 = tpu.matmul %32, %162, %cst_106 {dimension_numbers = #tpu.dot_dimension_numbers<[1], [0], [0], [1], [0, 0, 1, 1], [], []>} : vector<10x10xf32>, vector<10x1xf32>, vector<10x1xf32> -> vector<10x1xf32>
    %cst_107 = arith.constant dense<0.000000e+00> : vector<10x1xf32>
    %164 = tpu.matmul %29, %163, %cst_107 {dimension_numbers = #tpu.dot_dimension_numbers<[1], [0], [0], [1], [0, 0, 1, 1], [], []>} : vector<10x10xf32>, vector<10x1xf32>, vector<10x1xf32> -> vector<10x1xf32>
    %165 = tpu.reciprocal %164 {approx = true} : vector<10x1xf32> -> vector<10x1xf32>
    %166 = arith.mulf %162, %165 : vector<10x1xf32>
    %167 = vector.shape_cast %166 : vector<10x1xf32> to vector<10x1xf32>
    %168 = vector.broadcast %167 : vector<10x1xf32> to vector<10x8xf32>
    %169 = vector.extract_strided_slice %128 {offsets = [0, 8], sizes = [10, 8], strides = [1, 1]} : vector<10x16xf32> to vector<10x8xf32>
    %170 = vector.extract_strided_slice %7 {offsets = [8, 0], sizes = [8, 3], strides = [1, 1]} : vector<16x3xf32> to vector<8x3xf32>
    %cst_108 = arith.constant dense<0.000000e+00> : vector<10x3xf32>
    %171 = tpu.matmul %169, %170, %cst_108 {dimension_numbers = #tpu.dot_dimension_numbers<[1], [0], [0], [1], [0, 0, 1, 1], [], []>} : vector<10x8xf32>, vector<8x3xf32>, vector<10x3xf32> -> vector<10x3xf32>
    %172 = vector.extract_strided_slice %129 {offsets = [0, 8], sizes = [10, 8], strides = [1, 1]} : vector<10x16xf32> to vector<10x8xf32>
    %173 = vector.extract_strided_slice %8 {offsets = [8, 0], sizes = [8, 3], strides = [1, 1]} : vector<16x3xf32> to vector<8x3xf32>
    %cst_109 = arith.constant dense<0.000000e+00> : vector<10x3xf32>
    %174 = tpu.matmul %172, %173, %cst_109 {dimension_numbers = #tpu.dot_dimension_numbers<[1], [0], [0], [1], [0, 0, 1, 1], [], []>} : vector<10x8xf32>, vector<8x3xf32>, vector<10x3xf32> -> vector<10x3xf32>
    %175 = arith.addf %171, %174 : vector<10x3xf32>
    %176 = vector.extract_strided_slice %127 {offsets = [0, 8], sizes = [10, 8], strides = [1, 1]} : vector<10x16xf32> to vector<10x8xf32>
    %177 = vector.extract_strided_slice %9 {offsets = [8, 0], sizes = [8, 3], strides = [1, 1]} : vector<16x3xf32> to vector<8x3xf32>
    %cst_110 = arith.constant dense<0.000000e+00> : vector<10x3xf32>
    %178 = tpu.matmul %176, %177, %cst_110 {dimension_numbers = #tpu.dot_dimension_numbers<[1], [0], [0], [1], [0, 0, 1, 1], [], []>} : vector<10x8xf32>, vector<8x3xf32>, vector<10x3xf32> -> vector<10x3xf32>
    %179 = arith.addf %175, %178 : vector<10x3xf32>
    %180 = arith.mulf %179, %30 : vector<10x3xf32>
    %cst_111 = arith.constant dense<0.000000e+00> : vector<10xf32>
    %181 = vector.multi_reduction <add>, %180, %cst_111 [1] : vector<10x3xf32> to vector<10xf32>
    %182 = vector.shape_cast %181 : vector<10xf32> to vector<10x1xf32>
    %cst_112 = arith.constant 0.000000e+00 : f32
    %183 = vector.broadcast %cst_112 : f32 to vector<10x1xf32>
    %184 = arith.cmpf oge, %182, %183 : vector<10x1xf32>
    %cst_113 = arith.constant 2.000000e-01 : f32
    %185 = vector.broadcast %cst_113 : f32 to vector<10x1xf32>
    %186 = arith.mulf %185, %182 : vector<10x1xf32>
    %187 = arith.select %184, %182, %186 : vector<10x1xi1>, vector<10x1xf32>
    %cst_114 = arith.constant 0.000000e+00 : f32
    %188 = vector.broadcast %cst_114 : f32 to vector<10x10xf32>
    %189 = arith.cmpf ogt, %29, %188 : vector<10x10xf32>
    %cst_115 = arith.constant -1.000000e+30 : f32
    %190 = vector.shape_cast %187 : vector<10x1xf32> to vector<10x1xf32>
    %191 = vector.broadcast %190 : vector<10x1xf32> to vector<10x10xf32>
    %192 = vector.broadcast %cst_115 : f32 to vector<10x10xf32>
    %193 = arith.select %189, %191, %192 : vector<10x10xi1>, vector<10x10xf32>
    %cst_116 = arith.constant dense<0xFF800000> : vector<10xf32>
    %194 = vector.multi_reduction <maximumf>, %193, %cst_116 [0] : vector<10x10xf32> to vector<10xf32>
    %195 = vector.shape_cast %194 : vector<10xf32> to vector<1x10xf32>
    %196 = vector.broadcast %195 : vector<1x10xf32> to vector<10x10xf32>
    %197 = arith.mulf %29, %196 : vector<10x10xf32>
    %cst_117 = arith.constant dense<0.000000e+00> : vector<10xf32>
    %198 = vector.multi_reduction <add>, %197, %cst_117 [1] : vector<10x10xf32> to vector<10xf32>
    %199 = vector.shape_cast %198 : vector<10xf32> to vector<10x1xf32>
    %200 = arith.subf %187, %199 : vector<10x1xf32>
    %201 = math.exp %200 : vector<10x1xf32>
    %cst_118 = arith.constant dense<0.000000e+00> : vector<10x1xf32>
    %202 = tpu.matmul %32, %201, %cst_118 {dimension_numbers = #tpu.dot_dimension_numbers<[1], [0], [0], [1], [0, 0, 1, 1], [], []>} : vector<10x10xf32>, vector<10x1xf32>, vector<10x1xf32> -> vector<10x1xf32>
    %cst_119 = arith.constant dense<0.000000e+00> : vector<10x1xf32>
    %203 = tpu.matmul %29, %202, %cst_119 {dimension_numbers = #tpu.dot_dimension_numbers<[1], [0], [0], [1], [0, 0, 1, 1], [], []>} : vector<10x10xf32>, vector<10x1xf32>, vector<10x1xf32> -> vector<10x1xf32>
    %204 = tpu.reciprocal %203 {approx = true} : vector<10x1xf32> -> vector<10x1xf32>
    %205 = arith.mulf %201, %204 : vector<10x1xf32>
    %206 = vector.shape_cast %205 : vector<10x1xf32> to vector<10x1xf32>
    %207 = vector.broadcast %206 : vector<10x1xf32> to vector<10x8xf32>
    %208 = tpu.concatenate %168, %207 in 1 : vector<10x8xf32>, vector<10x8xf32> -> vector<10x16xf32>
    %209 = arith.mulf %128, %208 : vector<10x16xf32>
    %cst_120 = arith.constant dense<0.000000e+00> : vector<10x16xf32>
    %210 = tpu.matmul %32, %209, %cst_120 {dimension_numbers = #tpu.dot_dimension_numbers<[1], [0], [0], [1], [0, 0, 1, 1], [], []>} : vector<10x10xf32>, vector<10x16xf32>, vector<10x16xf32> -> vector<10x16xf32>
    %211 = arith.addf %127, %128 : vector<10x16xf32>
    %212 = arith.addf %211, %129 : vector<10x16xf32>
    %cst_121 = arith.constant 3.000000e+00 : f32
    %213 = vector.broadcast %cst_121 : f32 to vector<10x16xf32>
    %214 = arith.divf %212, %213 : vector<10x16xf32>
    %cst_122 = arith.constant 0.000000e+00 : f32
    %215 = vector.broadcast %cst_122 : f32 to vector<10x16xf32>
    %216 = arith.maximumf %210, %215 : vector<10x16xf32>
    %cst_123 = arith.constant 0.000000e+00 : f32
    %217 = vector.broadcast %cst_123 : f32 to vector<10x16xf32>
    %218 = arith.maximumf %214, %217 : vector<10x16xf32>
    %219 = arith.addf %123, %216 : vector<10x16xf32>
    %220 = arith.addf %125, %218 : vector<10x16xf32>
    %cst_124 = arith.constant dense<0.000000e+00> : vector<10x8xf32>
    %221 = tpu.matmul %219, %10, %cst_124 {dimension_numbers = #tpu.dot_dimension_numbers<[1], [0], [0], [1], [0, 0, 1, 1], [], []>} : vector<10x16xf32>, vector<16x8xf32>, vector<10x8xf32> -> vector<10x8xf32>
    %cst_125 = arith.constant dense<0.000000e+00> : vector<10x8xf32>
    %222 = tpu.matmul %220, %11, %cst_125 {dimension_numbers = #tpu.dot_dimension_numbers<[1], [0], [0], [1], [0, 0, 1, 1], [], []>} : vector<10x16xf32>, vector<16x8xf32>, vector<10x8xf32> -> vector<10x8xf32>
    %cst_126 = arith.constant dense<0.000000e+00> : vector<10x8xf32>
    %223 = tpu.matmul %23, %221, %cst_126 {dimension_numbers = #tpu.dot_dimension_numbers<[1], [0], [0], [1], [0, 0, 1, 1], [], []>} : vector<10x10xf32>, vector<10x8xf32>, vector<10x8xf32> -> vector<10x8xf32>
    %cst_127 = arith.constant dense<0.000000e+00> : vector<10x8xf32>
    %224 = tpu.matmul %24, %221, %cst_127 {dimension_numbers = #tpu.dot_dimension_numbers<[1], [0], [0], [1], [0, 0, 1, 1], [], []>} : vector<10x10xf32>, vector<10x8xf32>, vector<10x8xf32> -> vector<10x8xf32>
    %225 = vector.extract_strided_slice %223 {offsets = [0, 0], sizes = [10, 4], strides = [1, 1]} : vector<10x8xf32> to vector<10x4xf32>
    %226 = vector.extract_strided_slice %12 {offsets = [0, 0], sizes = [4, 3], strides = [1, 1]} : vector<8x3xf32> to vector<4x3xf32>
    %cst_128 = arith.constant dense<0.000000e+00> : vector<10x3xf32>
    %227 = tpu.matmul %225, %226, %cst_128 {dimension_numbers = #tpu.dot_dimension_numbers<[1], [0], [0], [1], [0, 0, 1, 1], [], []>} : vector<10x4xf32>, vector<4x3xf32>, vector<10x3xf32> -> vector<10x3xf32>
    %228 = vector.extract_strided_slice %224 {offsets = [0, 0], sizes = [10, 4], strides = [1, 1]} : vector<10x8xf32> to vector<10x4xf32>
    %229 = vector.extract_strided_slice %13 {offsets = [0, 0], sizes = [4, 3], strides = [1, 1]} : vector<8x3xf32> to vector<4x3xf32>
    %cst_129 = arith.constant dense<0.000000e+00> : vector<10x3xf32>
    %230 = tpu.matmul %228, %229, %cst_129 {dimension_numbers = #tpu.dot_dimension_numbers<[1], [0], [0], [1], [0, 0, 1, 1], [], []>} : vector<10x4xf32>, vector<4x3xf32>, vector<10x3xf32> -> vector<10x3xf32>
    %231 = arith.addf %227, %230 : vector<10x3xf32>
    %232 = vector.extract_strided_slice %222 {offsets = [0, 0], sizes = [10, 4], strides = [1, 1]} : vector<10x8xf32> to vector<10x4xf32>
    %233 = vector.extract_strided_slice %14 {offsets = [0, 0], sizes = [4, 3], strides = [1, 1]} : vector<8x3xf32> to vector<4x3xf32>
    %cst_130 = arith.constant dense<0.000000e+00> : vector<10x3xf32>
    %234 = tpu.matmul %232, %233, %cst_130 {dimension_numbers = #tpu.dot_dimension_numbers<[1], [0], [0], [1], [0, 0, 1, 1], [], []>} : vector<10x4xf32>, vector<4x3xf32>, vector<10x3xf32> -> vector<10x3xf32>
    %235 = arith.addf %231, %234 : vector<10x3xf32>
    %236 = arith.mulf %235, %25 : vector<10x3xf32>
    %cst_131 = arith.constant dense<0.000000e+00> : vector<10xf32>
    %237 = vector.multi_reduction <add>, %236, %cst_131 [1] : vector<10x3xf32> to vector<10xf32>
    %238 = vector.shape_cast %237 : vector<10xf32> to vector<10x1xf32>
    %cst_132 = arith.constant 0.000000e+00 : f32
    %239 = vector.broadcast %cst_132 : f32 to vector<10x1xf32>
    %240 = arith.cmpf oge, %238, %239 : vector<10x1xf32>
    %cst_133 = arith.constant 2.000000e-01 : f32
    %241 = vector.broadcast %cst_133 : f32 to vector<10x1xf32>
    %242 = arith.mulf %241, %238 : vector<10x1xf32>
    %243 = arith.select %240, %238, %242 : vector<10x1xi1>, vector<10x1xf32>
    %cst_134 = arith.constant 0.000000e+00 : f32
    %244 = vector.broadcast %cst_134 : f32 to vector<10x10xf32>
    %245 = arith.cmpf ogt, %24, %244 : vector<10x10xf32>
    %cst_135 = arith.constant -1.000000e+30 : f32
    %246 = vector.shape_cast %243 : vector<10x1xf32> to vector<10x1xf32>
    %247 = vector.broadcast %246 : vector<10x1xf32> to vector<10x10xf32>
    %248 = vector.broadcast %cst_135 : f32 to vector<10x10xf32>
    %249 = arith.select %245, %247, %248 : vector<10x10xi1>, vector<10x10xf32>
    %cst_136 = arith.constant dense<0xFF800000> : vector<10xf32>
    %250 = vector.multi_reduction <maximumf>, %249, %cst_136 [0] : vector<10x10xf32> to vector<10xf32>
    %251 = vector.shape_cast %250 : vector<10xf32> to vector<1x10xf32>
    %252 = vector.broadcast %251 : vector<1x10xf32> to vector<10x10xf32>
    %253 = arith.mulf %24, %252 : vector<10x10xf32>
    %cst_137 = arith.constant dense<0.000000e+00> : vector<10xf32>
    %254 = vector.multi_reduction <add>, %253, %cst_137 [1] : vector<10x10xf32> to vector<10xf32>
    %255 = vector.shape_cast %254 : vector<10xf32> to vector<10x1xf32>
    %256 = arith.subf %243, %255 : vector<10x1xf32>
    %257 = math.exp %256 : vector<10x1xf32>
    %cst_138 = arith.constant dense<0.000000e+00> : vector<10x1xf32>
    %258 = tpu.matmul %31, %257, %cst_138 {dimension_numbers = #tpu.dot_dimension_numbers<[1], [0], [0], [1], [0, 0, 1, 1], [], []>} : vector<10x10xf32>, vector<10x1xf32>, vector<10x1xf32> -> vector<10x1xf32>
    %cst_139 = arith.constant dense<0.000000e+00> : vector<10x1xf32>
    %259 = tpu.matmul %24, %258, %cst_139 {dimension_numbers = #tpu.dot_dimension_numbers<[1], [0], [0], [1], [0, 0, 1, 1], [], []>} : vector<10x10xf32>, vector<10x1xf32>, vector<10x1xf32> -> vector<10x1xf32>
    %260 = tpu.reciprocal %259 {approx = true} : vector<10x1xf32> -> vector<10x1xf32>
    %261 = arith.mulf %257, %260 : vector<10x1xf32>
    %262 = vector.shape_cast %261 : vector<10x1xf32> to vector<10x1xf32>
    %263 = vector.broadcast %262 : vector<10x1xf32> to vector<10x4xf32>
    %264 = vector.extract_strided_slice %223 {offsets = [0, 4], sizes = [10, 4], strides = [1, 1]} : vector<10x8xf32> to vector<10x4xf32>
    %265 = vector.extract_strided_slice %12 {offsets = [4, 0], sizes = [4, 3], strides = [1, 1]} : vector<8x3xf32> to vector<4x3xf32>
    %cst_140 = arith.constant dense<0.000000e+00> : vector<10x3xf32>
    %266 = tpu.matmul %264, %265, %cst_140 {dimension_numbers = #tpu.dot_dimension_numbers<[1], [0], [0], [1], [0, 0, 1, 1], [], []>} : vector<10x4xf32>, vector<4x3xf32>, vector<10x3xf32> -> vector<10x3xf32>
    %267 = vector.extract_strided_slice %224 {offsets = [0, 4], sizes = [10, 4], strides = [1, 1]} : vector<10x8xf32> to vector<10x4xf32>
    %268 = vector.extract_strided_slice %13 {offsets = [4, 0], sizes = [4, 3], strides = [1, 1]} : vector<8x3xf32> to vector<4x3xf32>
    %cst_141 = arith.constant dense<0.000000e+00> : vector<10x3xf32>
    %269 = tpu.matmul %267, %268, %cst_141 {dimension_numbers = #tpu.dot_dimension_numbers<[1], [0], [0], [1], [0, 0, 1, 1], [], []>} : vector<10x4xf32>, vector<4x3xf32>, vector<10x3xf32> -> vector<10x3xf32>
    %270 = arith.addf %266, %269 : vector<10x3xf32>
    %271 = vector.extract_strided_slice %222 {offsets = [0, 4], sizes = [10, 4], strides = [1, 1]} : vector<10x8xf32> to vector<10x4xf32>
    %272 = vector.extract_strided_slice %14 {offsets = [4, 0], sizes = [4, 3], strides = [1, 1]} : vector<8x3xf32> to vector<4x3xf32>
    %cst_142 = arith.constant dense<0.000000e+00> : vector<10x3xf32>
    %273 = tpu.matmul %271, %272, %cst_142 {dimension_numbers = #tpu.dot_dimension_numbers<[1], [0], [0], [1], [0, 0, 1, 1], [], []>} : vector<10x4xf32>, vector<4x3xf32>, vector<10x3xf32> -> vector<10x3xf32>
    %274 = arith.addf %270, %273 : vector<10x3xf32>
    %275 = arith.mulf %274, %25 : vector<10x3xf32>
    %cst_143 = arith.constant dense<0.000000e+00> : vector<10xf32>
    %276 = vector.multi_reduction <add>, %275, %cst_143 [1] : vector<10x3xf32> to vector<10xf32>
    %277 = vector.shape_cast %276 : vector<10xf32> to vector<10x1xf32>
    %cst_144 = arith.constant 0.000000e+00 : f32
    %278 = vector.broadcast %cst_144 : f32 to vector<10x1xf32>
    %279 = arith.cmpf oge, %277, %278 : vector<10x1xf32>
    %cst_145 = arith.constant 2.000000e-01 : f32
    %280 = vector.broadcast %cst_145 : f32 to vector<10x1xf32>
    %281 = arith.mulf %280, %277 : vector<10x1xf32>
    %282 = arith.select %279, %277, %281 : vector<10x1xi1>, vector<10x1xf32>
    %cst_146 = arith.constant 0.000000e+00 : f32
    %283 = vector.broadcast %cst_146 : f32 to vector<10x10xf32>
    %284 = arith.cmpf ogt, %24, %283 : vector<10x10xf32>
    %cst_147 = arith.constant -1.000000e+30 : f32
    %285 = vector.shape_cast %282 : vector<10x1xf32> to vector<10x1xf32>
    %286 = vector.broadcast %285 : vector<10x1xf32> to vector<10x10xf32>
    %287 = vector.broadcast %cst_147 : f32 to vector<10x10xf32>
    %288 = arith.select %284, %286, %287 : vector<10x10xi1>, vector<10x10xf32>
    %cst_148 = arith.constant dense<0xFF800000> : vector<10xf32>
    %289 = vector.multi_reduction <maximumf>, %288, %cst_148 [0] : vector<10x10xf32> to vector<10xf32>
    %290 = vector.shape_cast %289 : vector<10xf32> to vector<1x10xf32>
    %291 = vector.broadcast %290 : vector<1x10xf32> to vector<10x10xf32>
    %292 = arith.mulf %24, %291 : vector<10x10xf32>
    %cst_149 = arith.constant dense<0.000000e+00> : vector<10xf32>
    %293 = vector.multi_reduction <add>, %292, %cst_149 [1] : vector<10x10xf32> to vector<10xf32>
    %294 = vector.shape_cast %293 : vector<10xf32> to vector<10x1xf32>
    %295 = arith.subf %282, %294 : vector<10x1xf32>
    %296 = math.exp %295 : vector<10x1xf32>
    %cst_150 = arith.constant dense<0.000000e+00> : vector<10x1xf32>
    %297 = tpu.matmul %31, %296, %cst_150 {dimension_numbers = #tpu.dot_dimension_numbers<[1], [0], [0], [1], [0, 0, 1, 1], [], []>} : vector<10x10xf32>, vector<10x1xf32>, vector<10x1xf32> -> vector<10x1xf32>
    %cst_151 = arith.constant dense<0.000000e+00> : vector<10x1xf32>
    %298 = tpu.matmul %24, %297, %cst_151 {dimension_numbers = #tpu.dot_dimension_numbers<[1], [0], [0], [1], [0, 0, 1, 1], [], []>} : vector<10x10xf32>, vector<10x1xf32>, vector<10x1xf32> -> vector<10x1xf32>
    %299 = tpu.reciprocal %298 {approx = true} : vector<10x1xf32> -> vector<10x1xf32>
    %300 = arith.mulf %296, %299 : vector<10x1xf32>
    %301 = vector.shape_cast %300 : vector<10x1xf32> to vector<10x1xf32>
    %302 = vector.broadcast %301 : vector<10x1xf32> to vector<10x4xf32>
    %303 = tpu.concatenate %263, %302 in 1 : vector<10x4xf32>, vector<10x4xf32> -> vector<10x8xf32>
    %304 = arith.mulf %223, %303 : vector<10x8xf32>
    %cst_152 = arith.constant dense<0.000000e+00> : vector<10x8xf32>
    %305 = tpu.matmul %31, %304, %cst_152 {dimension_numbers = #tpu.dot_dimension_numbers<[1], [0], [0], [1], [0, 0, 1, 1], [], []>} : vector<10x10xf32>, vector<10x8xf32>, vector<10x8xf32> -> vector<10x8xf32>
    %306 = arith.addf %222, %223 : vector<10x8xf32>
    %307 = arith.addf %306, %224 : vector<10x8xf32>
    %cst_153 = arith.constant 3.000000e+00 : f32
    %308 = vector.broadcast %cst_153 : f32 to vector<10x8xf32>
    %309 = arith.divf %307, %308 : vector<10x8xf32>
    %310 = vector.extract_strided_slice %305 {offsets = [0, 0], sizes = [10, 4], strides = [1, 1]} : vector<10x8xf32> to vector<10x4xf32>
    %311 = vector.extract_strided_slice %309 {offsets = [0, 0], sizes = [10, 4], strides = [1, 1]} : vector<10x8xf32> to vector<10x4xf32>
    %312 = vector.extract_strided_slice %305 {offsets = [0, 4], sizes = [10, 4], strides = [1, 1]} : vector<10x8xf32> to vector<10x4xf32>
    %313 = arith.addf %310, %312 : vector<10x4xf32>
    %314 = vector.extract_strided_slice %309 {offsets = [0, 4], sizes = [10, 4], strides = [1, 1]} : vector<10x8xf32> to vector<10x4xf32>
    %315 = arith.addf %311, %314 : vector<10x4xf32>
    %cst_154 = arith.constant 2.000000e+00 : f32
    %316 = vector.broadcast %cst_154 : f32 to vector<10x4xf32>
    %317 = arith.divf %313, %316 : vector<10x4xf32>
    %cst_155 = arith.constant 2.000000e+00 : f32
    %318 = vector.broadcast %cst_155 : f32 to vector<10x4xf32>
    %319 = arith.divf %315, %318 : vector<10x4xf32>
    %cst_156 = arith.constant 0.000000e+00 : f32
    %320 = vector.broadcast %cst_156 : f32 to vector<10x4xf32>
    %321 = arith.subf %320, %317 : vector<10x4xf32>
    %322 = math.exp %321 : vector<10x4xf32>
    %cst_157 = arith.constant 1.000000e+00 : f32
    %323 = vector.broadcast %cst_157 : f32 to vector<10x4xf32>
    %324 = arith.addf %323, %322 : vector<10x4xf32>
    %cst_158 = arith.constant 1.000000e+00 : f32
    %325 = vector.broadcast %cst_158 : f32 to vector<10x4xf32>
    %326 = arith.divf %325, %324 : vector<10x4xf32>
    %cst_159 = arith.constant 0.000000e+00 : f32
    %327 = vector.broadcast %cst_159 : f32 to vector<10x4xf32>
    %328 = arith.subf %327, %319 : vector<10x4xf32>
    %329 = math.exp %328 : vector<10x4xf32>
    %cst_160 = arith.constant 1.000000e+00 : f32
    %330 = vector.broadcast %cst_160 : f32 to vector<10x4xf32>
    %331 = arith.addf %330, %329 : vector<10x4xf32>
    %cst_161 = arith.constant 1.000000e+00 : f32
    %332 = vector.broadcast %cst_161 : f32 to vector<10x4xf32>
    %333 = arith.divf %332, %331 : vector<10x4xf32>
    %cst_162 = arith.constant dense<0.000000e+00> : vector<10x8xf32>
    %334 = tpu.matmul %219, %15, %cst_162 {dimension_numbers = #tpu.dot_dimension_numbers<[1], [0], [0], [1], [0, 0, 1, 1], [], []>} : vector<10x16xf32>, vector<16x8xf32>, vector<10x8xf32> -> vector<10x8xf32>
    %cst_163 = arith.constant dense<0.000000e+00> : vector<10x8xf32>
    %335 = tpu.matmul %220, %16, %cst_163 {dimension_numbers = #tpu.dot_dimension_numbers<[1], [0], [0], [1], [0, 0, 1, 1], [], []>} : vector<10x16xf32>, vector<16x8xf32>, vector<10x8xf32> -> vector<10x8xf32>
    %cst_164 = arith.constant dense<0.000000e+00> : vector<10x8xf32>
    %336 = tpu.matmul %28, %334, %cst_164 {dimension_numbers = #tpu.dot_dimension_numbers<[1], [0], [0], [1], [0, 0, 1, 1], [], []>} : vector<10x10xf32>, vector<10x8xf32>, vector<10x8xf32> -> vector<10x8xf32>
    %cst_165 = arith.constant dense<0.000000e+00> : vector<10x8xf32>
    %337 = tpu.matmul %29, %334, %cst_165 {dimension_numbers = #tpu.dot_dimension_numbers<[1], [0], [0], [1], [0, 0, 1, 1], [], []>} : vector<10x10xf32>, vector<10x8xf32>, vector<10x8xf32> -> vector<10x8xf32>
    %338 = vector.extract_strided_slice %336 {offsets = [0, 0], sizes = [10, 4], strides = [1, 1]} : vector<10x8xf32> to vector<10x4xf32>
    %339 = vector.extract_strided_slice %17 {offsets = [0, 0], sizes = [4, 3], strides = [1, 1]} : vector<8x3xf32> to vector<4x3xf32>
    %cst_166 = arith.constant dense<0.000000e+00> : vector<10x3xf32>
    %340 = tpu.matmul %338, %339, %cst_166 {dimension_numbers = #tpu.dot_dimension_numbers<[1], [0], [0], [1], [0, 0, 1, 1], [], []>} : vector<10x4xf32>, vector<4x3xf32>, vector<10x3xf32> -> vector<10x3xf32>
    %341 = vector.extract_strided_slice %337 {offsets = [0, 0], sizes = [10, 4], strides = [1, 1]} : vector<10x8xf32> to vector<10x4xf32>
    %342 = vector.extract_strided_slice %18 {offsets = [0, 0], sizes = [4, 3], strides = [1, 1]} : vector<8x3xf32> to vector<4x3xf32>
    %cst_167 = arith.constant dense<0.000000e+00> : vector<10x3xf32>
    %343 = tpu.matmul %341, %342, %cst_167 {dimension_numbers = #tpu.dot_dimension_numbers<[1], [0], [0], [1], [0, 0, 1, 1], [], []>} : vector<10x4xf32>, vector<4x3xf32>, vector<10x3xf32> -> vector<10x3xf32>
    %344 = arith.addf %340, %343 : vector<10x3xf32>
    %345 = vector.extract_strided_slice %335 {offsets = [0, 0], sizes = [10, 4], strides = [1, 1]} : vector<10x8xf32> to vector<10x4xf32>
    %346 = vector.extract_strided_slice %19 {offsets = [0, 0], sizes = [4, 3], strides = [1, 1]} : vector<8x3xf32> to vector<4x3xf32>
    %cst_168 = arith.constant dense<0.000000e+00> : vector<10x3xf32>
    %347 = tpu.matmul %345, %346, %cst_168 {dimension_numbers = #tpu.dot_dimension_numbers<[1], [0], [0], [1], [0, 0, 1, 1], [], []>} : vector<10x4xf32>, vector<4x3xf32>, vector<10x3xf32> -> vector<10x3xf32>
    %348 = arith.addf %344, %347 : vector<10x3xf32>
    %349 = arith.mulf %348, %30 : vector<10x3xf32>
    %cst_169 = arith.constant dense<0.000000e+00> : vector<10xf32>
    %350 = vector.multi_reduction <add>, %349, %cst_169 [1] : vector<10x3xf32> to vector<10xf32>
    %351 = vector.shape_cast %350 : vector<10xf32> to vector<10x1xf32>
    %cst_170 = arith.constant 0.000000e+00 : f32
    %352 = vector.broadcast %cst_170 : f32 to vector<10x1xf32>
    %353 = arith.cmpf oge, %351, %352 : vector<10x1xf32>
    %cst_171 = arith.constant 2.000000e-01 : f32
    %354 = vector.broadcast %cst_171 : f32 to vector<10x1xf32>
    %355 = arith.mulf %354, %351 : vector<10x1xf32>
    %356 = arith.select %353, %351, %355 : vector<10x1xi1>, vector<10x1xf32>
    %cst_172 = arith.constant 0.000000e+00 : f32
    %357 = vector.broadcast %cst_172 : f32 to vector<10x10xf32>
    %358 = arith.cmpf ogt, %29, %357 : vector<10x10xf32>
    %cst_173 = arith.constant -1.000000e+30 : f32
    %359 = vector.shape_cast %356 : vector<10x1xf32> to vector<10x1xf32>
    %360 = vector.broadcast %359 : vector<10x1xf32> to vector<10x10xf32>
    %361 = vector.broadcast %cst_173 : f32 to vector<10x10xf32>
    %362 = arith.select %358, %360, %361 : vector<10x10xi1>, vector<10x10xf32>
    %cst_174 = arith.constant dense<0xFF800000> : vector<10xf32>
    %363 = vector.multi_reduction <maximumf>, %362, %cst_174 [0] : vector<10x10xf32> to vector<10xf32>
    %364 = vector.shape_cast %363 : vector<10xf32> to vector<1x10xf32>
    %365 = vector.broadcast %364 : vector<1x10xf32> to vector<10x10xf32>
    %366 = arith.mulf %29, %365 : vector<10x10xf32>
    %cst_175 = arith.constant dense<0.000000e+00> : vector<10xf32>
    %367 = vector.multi_reduction <add>, %366, %cst_175 [1] : vector<10x10xf32> to vector<10xf32>
    %368 = vector.shape_cast %367 : vector<10xf32> to vector<10x1xf32>
    %369 = arith.subf %356, %368 : vector<10x1xf32>
    %370 = math.exp %369 : vector<10x1xf32>
    %cst_176 = arith.constant dense<0.000000e+00> : vector<10x1xf32>
    %371 = tpu.matmul %32, %370, %cst_176 {dimension_numbers = #tpu.dot_dimension_numbers<[1], [0], [0], [1], [0, 0, 1, 1], [], []>} : vector<10x10xf32>, vector<10x1xf32>, vector<10x1xf32> -> vector<10x1xf32>
    %cst_177 = arith.constant dense<0.000000e+00> : vector<10x1xf32>
    %372 = tpu.matmul %29, %371, %cst_177 {dimension_numbers = #tpu.dot_dimension_numbers<[1], [0], [0], [1], [0, 0, 1, 1], [], []>} : vector<10x10xf32>, vector<10x1xf32>, vector<10x1xf32> -> vector<10x1xf32>
    %373 = tpu.reciprocal %372 {approx = true} : vector<10x1xf32> -> vector<10x1xf32>
    %374 = arith.mulf %370, %373 : vector<10x1xf32>
    %375 = vector.shape_cast %374 : vector<10x1xf32> to vector<10x1xf32>
    %376 = vector.broadcast %375 : vector<10x1xf32> to vector<10x4xf32>
    %377 = vector.extract_strided_slice %336 {offsets = [0, 4], sizes = [10, 4], strides = [1, 1]} : vector<10x8xf32> to vector<10x4xf32>
    %378 = vector.extract_strided_slice %17 {offsets = [4, 0], sizes = [4, 3], strides = [1, 1]} : vector<8x3xf32> to vector<4x3xf32>
    %cst_178 = arith.constant dense<0.000000e+00> : vector<10x3xf32>
    %379 = tpu.matmul %377, %378, %cst_178 {dimension_numbers = #tpu.dot_dimension_numbers<[1], [0], [0], [1], [0, 0, 1, 1], [], []>} : vector<10x4xf32>, vector<4x3xf32>, vector<10x3xf32> -> vector<10x3xf32>
    %380 = vector.extract_strided_slice %337 {offsets = [0, 4], sizes = [10, 4], strides = [1, 1]} : vector<10x8xf32> to vector<10x4xf32>
    %381 = vector.extract_strided_slice %18 {offsets = [4, 0], sizes = [4, 3], strides = [1, 1]} : vector<8x3xf32> to vector<4x3xf32>
    %cst_179 = arith.constant dense<0.000000e+00> : vector<10x3xf32>
    %382 = tpu.matmul %380, %381, %cst_179 {dimension_numbers = #tpu.dot_dimension_numbers<[1], [0], [0], [1], [0, 0, 1, 1], [], []>} : vector<10x4xf32>, vector<4x3xf32>, vector<10x3xf32> -> vector<10x3xf32>
    %383 = arith.addf %379, %382 : vector<10x3xf32>
    %384 = vector.extract_strided_slice %335 {offsets = [0, 4], sizes = [10, 4], strides = [1, 1]} : vector<10x8xf32> to vector<10x4xf32>
    %385 = vector.extract_strided_slice %19 {offsets = [4, 0], sizes = [4, 3], strides = [1, 1]} : vector<8x3xf32> to vector<4x3xf32>
    %cst_180 = arith.constant dense<0.000000e+00> : vector<10x3xf32>
    %386 = tpu.matmul %384, %385, %cst_180 {dimension_numbers = #tpu.dot_dimension_numbers<[1], [0], [0], [1], [0, 0, 1, 1], [], []>} : vector<10x4xf32>, vector<4x3xf32>, vector<10x3xf32> -> vector<10x3xf32>
    %387 = arith.addf %383, %386 : vector<10x3xf32>
    %388 = arith.mulf %387, %30 : vector<10x3xf32>
    %cst_181 = arith.constant dense<0.000000e+00> : vector<10xf32>
    %389 = vector.multi_reduction <add>, %388, %cst_181 [1] : vector<10x3xf32> to vector<10xf32>
    %390 = vector.shape_cast %389 : vector<10xf32> to vector<10x1xf32>
    %cst_182 = arith.constant 0.000000e+00 : f32
    %391 = vector.broadcast %cst_182 : f32 to vector<10x1xf32>
    %392 = arith.cmpf oge, %390, %391 : vector<10x1xf32>
    %cst_183 = arith.constant 2.000000e-01 : f32
    %393 = vector.broadcast %cst_183 : f32 to vector<10x1xf32>
    %394 = arith.mulf %393, %390 : vector<10x1xf32>
    %395 = arith.select %392, %390, %394 : vector<10x1xi1>, vector<10x1xf32>
    %cst_184 = arith.constant 0.000000e+00 : f32
    %396 = vector.broadcast %cst_184 : f32 to vector<10x10xf32>
    %397 = arith.cmpf ogt, %29, %396 : vector<10x10xf32>
    %cst_185 = arith.constant -1.000000e+30 : f32
    %398 = vector.shape_cast %395 : vector<10x1xf32> to vector<10x1xf32>
    %399 = vector.broadcast %398 : vector<10x1xf32> to vector<10x10xf32>
    %400 = vector.broadcast %cst_185 : f32 to vector<10x10xf32>
    %401 = arith.select %397, %399, %400 : vector<10x10xi1>, vector<10x10xf32>
    %cst_186 = arith.constant dense<0xFF800000> : vector<10xf32>
    %402 = vector.multi_reduction <maximumf>, %401, %cst_186 [0] : vector<10x10xf32> to vector<10xf32>
    %403 = vector.shape_cast %402 : vector<10xf32> to vector<1x10xf32>
    %404 = vector.broadcast %403 : vector<1x10xf32> to vector<10x10xf32>
    %405 = arith.mulf %29, %404 : vector<10x10xf32>
    %cst_187 = arith.constant dense<0.000000e+00> : vector<10xf32>
    %406 = vector.multi_reduction <add>, %405, %cst_187 [1] : vector<10x10xf32> to vector<10xf32>
    %407 = vector.shape_cast %406 : vector<10xf32> to vector<10x1xf32>
    %408 = arith.subf %395, %407 : vector<10x1xf32>
    %409 = math.exp %408 : vector<10x1xf32>
    %cst_188 = arith.constant dense<0.000000e+00> : vector<10x1xf32>
    %410 = tpu.matmul %32, %409, %cst_188 {dimension_numbers = #tpu.dot_dimension_numbers<[1], [0], [0], [1], [0, 0, 1, 1], [], []>} : vector<10x10xf32>, vector<10x1xf32>, vector<10x1xf32> -> vector<10x1xf32>
    %cst_189 = arith.constant dense<0.000000e+00> : vector<10x1xf32>
    %411 = tpu.matmul %29, %410, %cst_189 {dimension_numbers = #tpu.dot_dimension_numbers<[1], [0], [0], [1], [0, 0, 1, 1], [], []>} : vector<10x10xf32>, vector<10x1xf32>, vector<10x1xf32> -> vector<10x1xf32>
    %412 = tpu.reciprocal %411 {approx = true} : vector<10x1xf32> -> vector<10x1xf32>
    %413 = arith.mulf %409, %412 : vector<10x1xf32>
    %414 = vector.shape_cast %413 : vector<10x1xf32> to vector<10x1xf32>
    %415 = vector.broadcast %414 : vector<10x1xf32> to vector<10x4xf32>
    %416 = tpu.concatenate %376, %415 in 1 : vector<10x4xf32>, vector<10x4xf32> -> vector<10x8xf32>
    %417 = arith.mulf %336, %416 : vector<10x8xf32>
    %cst_190 = arith.constant dense<0.000000e+00> : vector<10x8xf32>
    %418 = tpu.matmul %32, %417, %cst_190 {dimension_numbers = #tpu.dot_dimension_numbers<[1], [0], [0], [1], [0, 0, 1, 1], [], []>} : vector<10x10xf32>, vector<10x8xf32>, vector<10x8xf32> -> vector<10x8xf32>
    %419 = arith.addf %335, %336 : vector<10x8xf32>
    %420 = arith.addf %419, %337 : vector<10x8xf32>
    %cst_191 = arith.constant 3.000000e+00 : f32
    %421 = vector.broadcast %cst_191 : f32 to vector<10x8xf32>
    %422 = arith.divf %420, %421 : vector<10x8xf32>
    %423 = vector.extract_strided_slice %418 {offsets = [0, 0], sizes = [10, 4], strides = [1, 1]} : vector<10x8xf32> to vector<10x4xf32>
    %424 = vector.extract_strided_slice %422 {offsets = [0, 0], sizes = [10, 4], strides = [1, 1]} : vector<10x8xf32> to vector<10x4xf32>
    %425 = vector.extract_strided_slice %418 {offsets = [0, 4], sizes = [10, 4], strides = [1, 1]} : vector<10x8xf32> to vector<10x4xf32>
    %426 = arith.addf %423, %425 : vector<10x4xf32>
    %427 = vector.extract_strided_slice %422 {offsets = [0, 4], sizes = [10, 4], strides = [1, 1]} : vector<10x8xf32> to vector<10x4xf32>
    %428 = arith.addf %424, %427 : vector<10x4xf32>
    %cst_192 = arith.constant 2.000000e+00 : f32
    %429 = vector.broadcast %cst_192 : f32 to vector<10x4xf32>
    %430 = arith.divf %426, %429 : vector<10x4xf32>
    %cst_193 = arith.constant 2.000000e+00 : f32
    %431 = vector.broadcast %cst_193 : f32 to vector<10x4xf32>
    %432 = arith.divf %428, %431 : vector<10x4xf32>
    %cst_194 = arith.constant 0.000000e+00 : f32
    %433 = vector.broadcast %cst_194 : f32 to vector<10x4xf32>
    %434 = arith.subf %433, %430 : vector<10x4xf32>
    %435 = math.exp %434 : vector<10x4xf32>
    %cst_195 = arith.constant 1.000000e+00 : f32
    %436 = vector.broadcast %cst_195 : f32 to vector<10x4xf32>
    %437 = arith.addf %436, %435 : vector<10x4xf32>
    %cst_196 = arith.constant 1.000000e+00 : f32
    %438 = vector.broadcast %cst_196 : f32 to vector<10x4xf32>
    %439 = arith.divf %438, %437 : vector<10x4xf32>
    %cst_197 = arith.constant 0.000000e+00 : f32
    %440 = vector.broadcast %cst_197 : f32 to vector<10x4xf32>
    %441 = arith.subf %440, %432 : vector<10x4xf32>
    %442 = math.exp %441 : vector<10x4xf32>
    %cst_198 = arith.constant 1.000000e+00 : f32
    %443 = vector.broadcast %cst_198 : f32 to vector<10x4xf32>
    %444 = arith.addf %443, %442 : vector<10x4xf32>
    %cst_199 = arith.constant 1.000000e+00 : f32
    %445 = vector.broadcast %cst_199 : f32 to vector<10x4xf32>
    %446 = arith.divf %445, %444 : vector<10x4xf32>
    %447 = arith.addf %326, %439 : vector<10x4xf32>
    %448 = arith.addf %333, %446 : vector<10x4xf32>
    %c0_200 = arith.constant 0 : index
    %c0_201 = arith.constant 0 : index
    %449 = vector.load %arg31[%c0_200, %c0_201] : memref<4x8xf32, #tpu.memory_space<vmem>>, vector<4x8xf32>
    %cst_202 = arith.constant dense<0.000000e+00> : vector<10x8xf32>
    %450 = tpu.matmul %447, %449, %cst_202 {dimension_numbers = #tpu.dot_dimension_numbers<[1], [0], [0], [1], [0, 0, 1, 1], [], []>} : vector<10x4xf32>, vector<4x8xf32>, vector<10x8xf32> -> vector<10x8xf32>
    %c0_203 = arith.constant 0 : index
    %c0_204 = arith.constant 0 : index
    %451 = vector.load %arg32[%c0_203, %c0_204] : memref<4x8xf32, #tpu.memory_space<vmem>>, vector<4x8xf32>
    %cst_205 = arith.constant dense<0.000000e+00> : vector<10x8xf32>
    %452 = tpu.matmul %447, %451, %cst_205 {dimension_numbers = #tpu.dot_dimension_numbers<[1], [0], [0], [1], [0, 0, 1, 1], [], []>} : vector<10x4xf32>, vector<4x8xf32>, vector<10x8xf32> -> vector<10x8xf32>
    %c0_206 = arith.constant 0 : index
    %c0_207 = arith.constant 0 : index
    %453 = vector.load %arg33[%c0_206, %c0_207] : memref<4x8xf32, #tpu.memory_space<vmem>>, vector<4x8xf32>
    %cst_208 = arith.constant dense<0.000000e+00> : vector<10x8xf32>
    %454 = tpu.matmul %448, %453, %cst_208 {dimension_numbers = #tpu.dot_dimension_numbers<[1], [0], [0], [1], [0, 0, 1, 1], [], []>} : vector<10x4xf32>, vector<4x8xf32>, vector<10x8xf32> -> vector<10x8xf32>
    %c0_209 = arith.constant 0 : index
    %c0_210 = arith.constant 0 : index
    %455 = vector.load %arg34[%c0_209, %c0_210] : memref<4x8xf32, #tpu.memory_space<vmem>>, vector<4x8xf32>
    %cst_211 = arith.constant dense<0.000000e+00> : vector<10x8xf32>
    %456 = tpu.matmul %448, %455, %cst_211 {dimension_numbers = #tpu.dot_dimension_numbers<[1], [0], [0], [1], [0, 0, 1, 1], [], []>} : vector<10x4xf32>, vector<4x8xf32>, vector<10x8xf32> -> vector<10x8xf32>
    %cst_212 = arith.constant dense<0.000000e+00> : vector<2x10xf32>
    %457 = tpu.matmul %20, %450, %cst_212 {dimension_numbers = #tpu.dot_dimension_numbers<[1], [1], [0], [0], [0, 0, 1, 0], [], []>} : vector<2x8xf32>, vector<10x8xf32>, vector<2x10xf32> -> vector<2x10xf32>
    %c0_213 = arith.constant 0 : index
    %c0_214 = arith.constant 0 : index
    %458 = vector.load %arg35[%c0_213, %c0_214] : memref<2x10xf32, #tpu.memory_space<vmem>>, vector<2x10xf32>
    tpu.vector_store %arg35[%c0_213, %c0_214], %457 {strides = array<i32>} : memref<2x10xf32, #tpu.memory_space<vmem>>, vector<2x10xf32>,
    %cst_215 = arith.constant dense<0.000000e+00> : vector<2x10xf32>
    %459 = tpu.matmul %20, %452, %cst_215 {dimension_numbers = #tpu.dot_dimension_numbers<[1], [1], [0], [0], [0, 0, 1, 0], [], []>} : vector<2x8xf32>, vector<10x8xf32>, vector<2x10xf32> -> vector<2x10xf32>
    %460 = arith.mulf %459, %459 : vector<2x10xf32>
    %c0_216 = arith.constant 0 : index
    %c0_217 = arith.constant 0 : index
    %461 = vector.load %arg36[%c0_216, %c0_217] : memref<2x10xf32, #tpu.memory_space<vmem>>, vector<2x10xf32>
    tpu.vector_store %arg36[%c0_216, %c0_217], %460 {strides = array<i32>} : memref<2x10xf32, #tpu.memory_space<vmem>>, vector<2x10xf32>,
    %cst_218 = arith.constant dense<0.000000e+00> : vector<2x10xf32>
    %462 = tpu.matmul %20, %454, %cst_218 {dimension_numbers = #tpu.dot_dimension_numbers<[1], [1], [0], [0], [0, 0, 1, 0], [], []>} : vector<2x8xf32>, vector<10x8xf32>, vector<2x10xf32> -> vector<2x10xf32>
    %c0_219 = arith.constant 0 : index
    %c0_220 = arith.constant 0 : index
    %463 = vector.load %arg37[%c0_219, %c0_220] : memref<2x10xf32, #tpu.memory_space<vmem>>, vector<2x10xf32>
    tpu.vector_store %arg37[%c0_219, %c0_220], %462 {strides = array<i32>} : memref<2x10xf32, #tpu.memory_space<vmem>>, vector<2x10xf32>,
    %cst_221 = arith.constant dense<0.000000e+00> : vector<2x10xf32>
    %464 = tpu.matmul %20, %456, %cst_221 {dimension_numbers = #tpu.dot_dimension_numbers<[1], [1], [0], [0], [0, 0, 1, 0], [], []>} : vector<2x8xf32>, vector<10x8xf32>, vector<2x10xf32> -> vector<2x10xf32>
    %465 = arith.mulf %464, %464 : vector<2x10xf32>
    %c0_222 = arith.constant 0 : index
    %c0_223 = arith.constant 0 : index
    %466 = vector.load %arg38[%c0_222, %c0_223] : memref<2x10xf32, #tpu.memory_space<vmem>>, vector<2x10xf32>
    tpu.vector_store %arg38[%c0_222, %c0_223], %465 {strides = array<i32>} : memref<2x10xf32, #tpu.memory_space<vmem>>, vector<2x10xf32>,
    return
  }
}

</mosaic_0001>

<llo_original>
// kernel: forward.1
$region0: #{forward.1}
  #allocation0 [shape = 'u32[]', space=smem, size = 0x4, offset = 0x4, fixed_abs, tag = 'smem constant byte address 0x4 - core index']
  #allocation1 [shape = 'u32[144,128]{1,0:T(1,128)}', space=vmem, size = 0x12000, scoped, tag = 'internal scratch']
  %s0 = inlined_call_operand.smem [shape: u32[39], index: -1, kind: input, shape index: {}]
  %s1 = sld [smem:[%s0]]
  %s2 = scalar_lea.smem %s0, 1
  %s3 = sld [smem:[%s2]]
  %s4 = scalar_lea.smem %s0, 2
  %s5 = sld [smem:[%s4]]
  %s6 = scalar_lea.smem %s0, 3
  %s7 = sld [smem:[%s6]]
  %s8 = scalar_lea.smem %s0, 4
  %s9 = sld [smem:[%s8]]
  %s10 = scalar_lea.smem %s0, 5
  %s11 = sld [smem:[%s10]]
  %s12 = scalar_lea.smem %s0, 6
  %s13 = sld [smem:[%s12]]
  %s14 = scalar_lea.smem %s0, 7
  %s15 = sld [smem:[%s14]]
  %s16 = scalar_lea.smem %s0, 8
  %s17 = sld [smem:[%s16]]
  %s18 = scalar_lea.smem %s0, 9
  %s19 = sld [smem:[%s18]]
  %s20 = scalar_lea.smem %s0, 10
  %s21 = sld [smem:[%s20]]
  %s22 = scalar_lea.smem %s0, 11
  %s23 = sld [smem:[%s22]]
  %s24 = scalar_lea.smem %s0, 12
  %s25 = sld [smem:[%s24]]
  %s26 = scalar_lea.smem %s0, 13
  %s27 = sld [smem:[%s26]]
  %s28 = scalar_lea.smem %s0, 14
  %s29 = sld [smem:[%s28]]
  %s30 = scalar_lea.smem %s0, 15
  %s31 = sld [smem:[%s30]]
  %s32 = scalar_lea.smem %s0, 16
  %s33 = sld [smem:[%s32]]
  %s34 = scalar_lea.smem %s0, 17
  %s35 = sld [smem:[%s34]]
  %s36 = scalar_lea.smem %s0, 18
  %s37 = sld [smem:[%s36]]
  %s38 = scalar_lea.smem %s0, 19
  %s39 = sld [smem:[%s38]]
  %s40 = scalar_lea.smem %s0, 20
  %s41 = sld [smem:[%s40]]
  %s42 = scalar_lea.smem %s0, 21
  %s43 = sld [smem:[%s42]]
  %s44 = scalar_lea.smem %s0, 22
  %s45 = sld [smem:[%s44]]
  %s46 = scalar_lea.smem %s0, 23
  %s47 = sld [smem:[%s46]]
  %s48 = scalar_lea.smem %s0, 24
  %s49 = sld [smem:[%s48]]
  %s50 = scalar_lea.smem %s0, 25
  %s51 = sld [smem:[%s50]]
  %s52 = scalar_lea.smem %s0, 26
  %s53 = sld [smem:[%s52]]
  %s54 = scalar_lea.smem %s0, 27
  %s55 = sld [smem:[%s54]]
  %s56 = scalar_lea.smem %s0, 28
  %s57 = sld [smem:[%s56]]
  %s58 = scalar_lea.smem %s0, 29
  %s59 = sld [smem:[%s58]]
  %s60 = scalar_lea.smem %s0, 30
  %s61 = sld [smem:[%s60]]
  %s62 = scalar_lea.smem %s0, 31
  %s63 = sld [smem:[%s62]]
  %s64 = scalar_lea.smem %s0, 32
  %s65 = sld [smem:[%s64]]
  %s66 = scalar_lea.smem %s0, 33
  %s67 = sld [smem:[%s66]]
  %s68 = scalar_lea.smem %s0, 34
  %s69 = sld [smem:[%s68]]
  %s70 = scalar_lea.smem %s0, 35
  %s71 = sld [smem:[%s70]]
  %s72 = scalar_lea.smem %s0, 36
  %s73 = sld [smem:[%s72]]
  %s74 = scalar_lea.smem %s0, 37
  %s75 = sld [smem:[%s74]]
  %s76 = scalar_lea.smem %s0, 38
  %s77 = sld [smem:[%s76]]
  %78 = xla_tuple %s71, %s73, %s75, %s77
  %s79 = sld [smem:[#allocation0]]
  $region174: #{forward.1} parent=0
    _
  %s81 = ssub.s32 1, %s79
  %s82 = scalar_select 0, %s81, %s79
  $region1: #{forward.1} parent=0
    #allocation2 [shape = 'u8[1024]{0}', space=vmem, size = 0x400, scoped, tag = 'output window, operand 0, single buffered']
    #allocation3 [shape = 's32[1]{0}', space=sflag, size = 0x4, scoped, tag = 'scoped memory for forward.1']
    #allocation4 [shape = 'u8[1024]{0}', space=vmem, size = 0x400, scoped, tag = 'output window, operand 1, single buffered']
    #allocation5 [shape = 's32[1]{0}', space=sflag, size = 0x4, scoped, tag = 'scoped memory for forward.1']
    #allocation6 [shape = 'u8[1024]{0}', space=vmem, size = 0x400, scoped, tag = 'output window, operand 2, single buffered']
    #allocation7 [shape = 'u8[1024]{0}', space=vmem, size = 0x400, scoped, tag = 'output window, operand 3, single buffered']
    #allocation8 [shape = 's32[1]{0}', space=sflag, size = 0x4, scoped, tag = 'scoped memory for forward.1']
    %83 = vsyncpa [#allocation3], 0
    %84 = vsyncpa [#allocation5], 0
    %85 = vsyncpa [#allocation8], 0
    // Predicated region
    $region2: #{forward.1} parent=1 // pred_check
      _
    $region3: #{forward.1} parent=1 // pred_check_branch
      %87 = sbr.rel (0) target = $region5
    $region4: #{forward.1} parent=1 // pred_region
      _
    $region5: #{forward.1} parent=1 // pred_fallthru
      _
    // Predicated region
    $region6: #{forward.1} parent=1 // pred_check
      _
    $region7: #{forward.1} parent=1 // pred_check_branch
      %89 = sbr.rel (0) target = $region9
    $region8: #{forward.1} parent=1 // pred_region
      _
    $region9: #{forward.1} parent=1 // pred_fallthru
      _
    // Predicated region
    $region10: #{forward.1} parent=1 // pred_check
      _
    $region11: #{forward.1} parent=1 // pred_check_branch
      %91 = sbr.rel (0) target = $region13
    $region12: #{forward.1} parent=1 // pred_region
      _
    $region13: #{forward.1} parent=1 // pred_fallthru
      _
    // Predicated region
    $region14: #{forward.1} parent=1 // pred_check
      _
    $region15: #{forward.1} parent=1 // pred_check_branch
      %93 = sbr.rel (0) target = $region17
    $region16: #{forward.1} parent=1 // pred_region
      _
    $region17: #{forward.1} parent=1 // pred_fallthru
      _
    // Predicated region
    $region18: #{forward.1} parent=1 // pred_check
      _
    $region19: #{forward.1} parent=1 // pred_check_branch
      %95 = sbr.rel (0) target = $region21
    $region20: #{forward.1} parent=1 // pred_region
      _
    $region21: #{forward.1} parent=1 // pred_fallthru
      _
    // Predicated region
    $region22: #{forward.1} parent=1 // pred_check
      _
    $region23: #{forward.1} parent=1 // pred_check_branch
      %97 = sbr.rel (0) target = $region25
    $region24: #{forward.1} parent=1 // pred_region
      _
    $region25: #{forward.1} parent=1 // pred_fallthru
      _
    // Predicated region
    $region26: #{forward.1} parent=1 // pred_check
      _
    $region27: #{forward.1} parent=1 // pred_check_branch
      %99 = sbr.rel (0) target = $region29
    $region28: #{forward.1} parent=1 // pred_region
      _
    $region29: #{forward.1} parent=1 // pred_fallthru
      _
    // Predicated region
    $region30: #{forward.1} parent=1 // pred_check
      _
    $region31: #{forward.1} parent=1 // pred_check_branch
      %101 = sbr.rel (0) target = $region33
    $region32: #{forward.1} parent=1 // pred_region
      _
    $region33: #{forward.1} parent=1 // pred_fallthru
      _
    // Predicated region
    $region34: #{forward.1} parent=1 // pred_check
      _
    $region35: #{forward.1} parent=1 // pred_check_branch
      %103 = sbr.rel (0) target = $region37
    $region36: #{forward.1} parent=1 // pred_region
      _
    $region37: #{forward.1} parent=1 // pred_fallthru
      _
    // Predicated region
    $region38: #{forward.1} parent=1 // pred_check
      _
    $region39: #{forward.1} parent=1 // pred_check_branch
      %105 = sbr.rel (0) target = $region41
    $region40: #{forward.1} parent=1 // pred_region
      _
    $region41: #{forward.1} parent=1 // pred_fallthru
      _
    // Predicated region
    $region42: #{forward.1} parent=1 // pred_check
      _
    $region43: #{forward.1} parent=1 // pred_check_branch
      %107 = sbr.rel (0) target = $region45
    $region44: #{forward.1} parent=1 // pred_region
      _
    $region45: #{forward.1} parent=1 // pred_fallthru
      _
    // Predicated region
    $region46: #{forward.1} parent=1 // pred_check
      _
    $region47: #{forward.1} parent=1 // pred_check_branch
      %109 = sbr.rel (0) target = $region49
    $region48: #{forward.1} parent=1 // pred_region
      _
    $region49: #{forward.1} parent=1 // pred_fallthru
      _
    // Predicated region
    $region50: #{forward.1} parent=1 // pred_check
      _
    $region51: #{forward.1} parent=1 // pred_check_branch
      %111 = sbr.rel (0) target = $region53
    $region52: #{forward.1} parent=1 // pred_region
      _
    $region53: #{forward.1} parent=1 // pred_fallthru
      _
    // Predicated region
    $region54: #{forward.1} parent=1 // pred_check
      _
    $region55: #{forward.1} parent=1 // pred_check_branch
      %113 = sbr.rel (0) target = $region57
    $region56: #{forward.1} parent=1 // pred_region
      _
    $region57: #{forward.1} parent=1 // pred_fallthru
      _
    // Predicated region
    $region58: #{forward.1} parent=1 // pred_check
      _
    $region59: #{forward.1} parent=1 // pred_check_branch
      %115 = sbr.rel (0) target = $region61
    $region60: #{forward.1} parent=1 // pred_region
      _
    $region61: #{forward.1} parent=1 // pred_fallthru
      _
    // Predicated region
    $region62: #{forward.1} parent=1 // pred_check
      _
    $region63: #{forward.1} parent=1 // pred_check_branch
      %117 = sbr.rel (0) target = $region65
    $region64: #{forward.1} parent=1 // pred_region
      _
    $region65: #{forward.1} parent=1 // pred_fallthru
      _
    // Predicated region
    $region66: #{forward.1} parent=1 // pred_check
      _
    $region67: #{forward.1} parent=1 // pred_check_branch
      %119 = sbr.rel (0) target = $region69
    $region68: #{forward.1} parent=1 // pred_region
      _
    $region69: #{forward.1} parent=1 // pred_fallthru
      _
    // Predicated region
    $region70: #{forward.1} parent=1 // pred_check
      _
    $region71: #{forward.1} parent=1 // pred_check_branch
      %121 = sbr.rel (0) target = $region73
    $region72: #{forward.1} parent=1 // pred_region
      _
    $region73: #{forward.1} parent=1 // pred_fallthru
      _
    // Predicated region
    $region74: #{forward.1} parent=1 // pred_check
      _
    $region75: #{forward.1} parent=1 // pred_check_branch
      %123 = sbr.rel (0) target = $region77
    $region76: #{forward.1} parent=1 // pred_region
      _
    $region77: #{forward.1} parent=1 // pred_fallthru
      _
    // Predicated region
    $region78: #{forward.1} parent=1 // pred_check
      _
    $region79: #{forward.1} parent=1 // pred_check_branch
      %125 = sbr.rel (0) target = $region81
    $region80: #{forward.1} parent=1 // pred_region
      _
    $region81: #{forward.1} parent=1 // pred_fallthru
      _
    // Predicated region
    $region82: #{forward.1} parent=1 // pred_check
      _
    $region83: #{forward.1} parent=1 // pred_check_branch
      %127 = sbr.rel (0) target = $region85
    $region84: #{forward.1} parent=1 // pred_region
      _
    $region85: #{forward.1} parent=1 // pred_fallthru
      _
    // Predicated region
    $region86: #{forward.1} parent=1 // pred_check
      _
    $region87: #{forward.1} parent=1 // pred_check_branch
      %129 = sbr.rel (0) target = $region89
    $region88: #{forward.1} parent=1 // pred_region
      _
    $region89: #{forward.1} parent=1 // pred_fallthru
      _
    // Predicated region
    $region90: #{forward.1} parent=1 // pred_check
      _
    $region91: #{forward.1} parent=1 // pred_check_branch
      %131 = sbr.rel (0) target = $region93
    $region92: #{forward.1} parent=1 // pred_region
      _
    $region93: #{forward.1} parent=1 // pred_fallthru
      _
    // Predicated region
    $region94: #{forward.1} parent=1 // pred_check
      _
    $region95: #{forward.1} parent=1 // pred_check_branch
      %133 = sbr.rel (0) target = $region97
    $region96: #{forward.1} parent=1 // pred_region
      _
    $region97: #{forward.1} parent=1 // pred_fallthru
      _
    // Predicated region
    $region98: #{forward.1} parent=1 // pred_check
      _
    $region99: #{forward.1} parent=1 // pred_check_branch
      %135 = sbr.rel (0) target = $region101
    $region100: #{forward.1} parent=1 // pred_region
      _
    $region101: #{forward.1} parent=1 // pred_fallthru
      _
    // Predicated region
    $region102: #{forward.1} parent=1 // pred_check
      _
    $region103: #{forward.1} parent=1 // pred_check_branch
      %137 = sbr.rel (0) target = $region105
    $region104: #{forward.1} parent=1 // pred_region
      _
    $region105: #{forward.1} parent=1 // pred_fallthru
      _
    // Predicated region
    $region106: #{forward.1} parent=1 // pred_check
      _
    $region107: #{forward.1} parent=1 // pred_check_branch
      %139 = sbr.rel (0) target = $region109
    $region108: #{forward.1} parent=1 // pred_region
      _
    $region109: #{forward.1} parent=1 // pred_fallthru
      _
    // Predicated region
    $region110: #{forward.1} parent=1 // pred_check
      _
    $region111: #{forward.1} parent=1 // pred_check_branch
      %141 = sbr.rel (0) target = $region113
    $region112: #{forward.1} parent=1 // pred_region
      _
    $region113: #{forward.1} parent=1 // pred_fallthru
      _
    // Predicated region
    $region114: #{forward.1} parent=1 // pred_check
      _
    $region115: #{forward.1} parent=1 // pred_check_branch
      %143 = sbr.rel (0) target = $region117
    $region116: #{forward.1} parent=1 // pred_region
      _
    $region117: #{forward.1} parent=1 // pred_fallthru
      _
    // Predicated region
    $region118: #{forward.1} parent=1 // pred_check
      _
    $region119: #{forward.1} parent=1 // pred_check_branch
      %145 = sbr.rel (0) target = $region121
    $region120: #{forward.1} parent=1 // pred_region
      _
    $region121: #{forward.1} parent=1 // pred_fallthru
      _
    // Predicated region
    $region122: #{forward.1} parent=1 // pred_check
      _
    $region123: #{forward.1} parent=1 // pred_check_branch
      %147 = sbr.rel (0) target = $region125
    $region124: #{forward.1} parent=1 // pred_region
      _
    $region125: #{forward.1} parent=1 // pred_fallthru
      _
    // Predicated region
    $region126: #{forward.1} parent=1 // pred_check
      _
    $region127: #{forward.1} parent=1 // pred_check_branch
      %149 = sbr.rel (0) target = $region129
    $region128: #{forward.1} parent=1 // pred_region
      _
    $region129: #{forward.1} parent=1 // pred_fallthru
      _
    // Predicated region
    $region130: #{forward.1} parent=1 // pred_check
      _
    $region131: #{forward.1} parent=1 // pred_check_branch
      %151 = sbr.rel (0) target = $region133
    $region132: #{forward.1} parent=1 // pred_region
      _
    $region133: #{forward.1} parent=1 // pred_fallthru
      _
    // Predicated region
    $region134: #{forward.1} parent=1 // pred_check
      _
    $region135: #{forward.1} parent=1 // pred_check_branch
      %153 = sbr.rel (0) target = $region137
    $region136: #{forward.1} parent=1 // pred_region
      _
    $region137: #{forward.1} parent=1 // pred_fallthru
      _
    // Predicated region
    $region138: #{forward.1} parent=1 // pred_check
      _
    $region139: #{forward.1} parent=1 // pred_check_branch
      %155 = sbr.rel (0) target = $region141
    $region140: #{forward.1} parent=1 // pred_region
      _
    $region141: #{forward.1} parent=1 // pred_fallthru
      _
    %v156 = vld [vmem:[%s23] sm:$0xff]
    %v157 = vld [vmem:[%s23 + $0x8] sm:$0x3]
    %v158 = vld [vmem:[%s25] sm:$0xff]
    %v159 = vld [vmem:[%s25 + $0x8] sm:$0xff]
    %v160 = vld [vmem:[%s25 + $0x10] sm:$0xff]
    %v161 = vld [vmem:[%s25 + $0x18] sm:$0x3f]
    %v162 = vld [vmem:[%s27] sm:$0xff]
    %v163 = vld [vmem:[%s27 + $0x8] sm:$0xff]
    %v164 = vld [vmem:[%s29] sm:$0xff]
    %v165 = vld [vmem:[%s29 + $0x8] sm:$0xff]
    %v166 = vld [vmem:[%s31] sm:$0xff]
    %v167 = vld [vmem:[%s31 + $0x8] sm:$0xff]
    %v168 = vld [vmem:[%s33] sm:$0xff]
    %v169 = vld [vmem:[%s33 + $0x8] sm:$0x3]
    %v170 = vld [vmem:[%s35] sm:$0xff]
    %v171 = vld [vmem:[%s35 + $0x8] sm:$0xff]
    %v172 = vld [vmem:[%s35 + $0x10] sm:$0xff]
    %v173 = vld [vmem:[%s35 + $0x18] sm:$0x3f]
    %v174 = vld [vmem:[%s37] sm:$0xff]
    %v175 = vld [vmem:[%s37 + $0x8] sm:$0xff]
    %v176 = vld [vmem:[%s39] sm:$0xff]
    %v177 = vld [vmem:[%s39 + $0x8] sm:$0xff]
    %v178 = vld [vmem:[%s41] sm:$0xff]
    %v179 = vld [vmem:[%s41 + $0x8] sm:$0xff]
    %v180 = vld [vmem:[%s43] sm:$0xff]
    %v181 = vld [vmem:[%s43 + $0x8] sm:$0xff]
    %v182 = vld [vmem:[%s45] sm:$0xff]
    %v183 = vld [vmem:[%s45 + $0x8] sm:$0xff]
    %v184 = vld [vmem:[%s47] sm:$0xff]
    %v185 = vld [vmem:[%s49] sm:$0xff]
    %v186 = vld [vmem:[%s51] sm:$0xff]
    %v187 = vld [vmem:[%s53] sm:$0xff]
    %v188 = vld [vmem:[%s53 + $0x8] sm:$0xff]
    %v189 = vld [vmem:[%s55] sm:$0xff]
    %v190 = vld [vmem:[%s55 + $0x8] sm:$0xff]
    %v191 = vld [vmem:[%s57] sm:$0xff]
    %v192 = vld [vmem:[%s59] sm:$0xff]
    %v193 = vld [vmem:[%s61] sm:$0xff]
    %v194 = vld [vmem:[%s1] sm:$0x3]
    %v195 = vld [vmem:[%s3] sm:$0xff]
    %v196 = vld [vmem:[%s3 + $0x8] sm:$0x3]
    %v197 = vld [vmem:[%s5] sm:$0xff]
    %v198 = vld [vmem:[%s5 + $0x8] sm:$0x3]
    %v199 = vld [vmem:[%s7] sm:$0xff]
    %v200 = vld [vmem:[%s7 + $0x8] sm:$0x3]
    %v201 = vld [vmem:[%s9] sm:$0xff]
    %v202 = vld [vmem:[%s9 + $0x8] sm:$0x3]
    %v203 = vld [vmem:[%s11] sm:$0xff]
    %v204 = vld [vmem:[%s11 + $0x8] sm:$0x3]
    %v205 = vld [vmem:[%s13] sm:$0xff]
    %v206 = vld [vmem:[%s13 + $0x8] sm:$0x3]
    %v207 = vld [vmem:[%s15] sm:$0xff]
    %v208 = vld [vmem:[%s15 + $0x8] sm:$0x3]
    %v209 = vld [vmem:[%s17] sm:$0xff]
    %v210 = vld [vmem:[%s17 + $0x8] sm:$0x3]
    %v211 = vld [vmem:[%s19] sm:$0xff]
    %v212 = vld [vmem:[%s19 + $0x8] sm:$0x3]
    %v213 = vld [vmem:[%s21] sm:$0xff]
    %v214 = vld [vmem:[%s21 + $0x8] sm:$0x3]
    %215 = vxpose.xlu0.b32.start [1/16] %v201, 128
    %216 = vxpose.xlu0.b32.cont [2/16] %v202, 128
    %217 = vxpose.xlu0.b32.cont [3/16] 0.0, 128
    %218 = vxpose.xlu0.b32.cont [4/16] 0.0, 128
    %219 = vxpose.xlu0.b32.cont [5/16] 0.0, 128
    %220 = vxpose.xlu0.b32.cont [6/16] 0.0, 128
    %221 = vxpose.xlu0.b32.cont [7/16] 0.0, 128
    %222 = vxpose.xlu0.b32.cont [8/16] 0.0, 128
    %223 = vxpose.xlu0.b32.cont [9/16] 0.0, 128
    %224 = vxpose.xlu0.b32.cont [10/16] 0.0, 128
    %225 = vxpose.xlu0.b32.cont [11/16] 0.0, 128
    %226 = vxpose.xlu0.b32.cont [12/16] 0.0, 128
    %227 = vxpose.xlu0.b32.cont [13/16] 0.0, 128
    %228 = vxpose.xlu0.b32.cont [14/16] 0.0, 128
    %229 = vxpose.xlu0.b32.cont [15/16] 0.0, 128
    %230 = vxpose.xlu0.b32.end [16/16] 0.0, 128
    %v231 = vpop.trf.xlu0
    %v232 = vpop.trf.xlu0
    %v233 = vpop.trf.xlu0
    %v234 = vpop.trf.xlu0
    %v235 = vpop.trf.xlu0
    %v236 = vpop.trf.xlu0
    %v237 = vpop.trf.xlu0
    %v238 = vpop.trf.xlu0
    %v239 = vpop.trf.xlu0
    %v240 = vpop.trf.xlu0
    %v241 = vpop.trf.xlu0
    %v242 = vpop.trf.xlu0
    %v243 = vpop.trf.xlu0
    %v244 = vpop.trf.xlu0
    %v245 = vpop.trf.xlu0
    %v246 = vpop.trf.xlu0
    %247 = vxpose.xlu0.b32.start [1/16] %v211, 128
    %248 = vxpose.xlu0.b32.cont [2/16] %v212, 128
    %249 = vxpose.xlu0.b32.cont [3/16] 0.0, 128
    %250 = vxpose.xlu0.b32.cont [4/16] 0.0, 128
    %251 = vxpose.xlu0.b32.cont [5/16] 0.0, 128
    %252 = vxpose.xlu0.b32.cont [6/16] 0.0, 128
    %253 = vxpose.xlu0.b32.cont [7/16] 0.0, 128
    %254 = vxpose.xlu0.b32.cont [8/16] 0.0, 128
    %255 = vxpose.xlu0.b32.cont [9/16] 0.0, 128
    %256 = vxpose.xlu0.b32.cont [10/16] 0.0, 128
    %257 = vxpose.xlu0.b32.cont [11/16] 0.0, 128
    %258 = vxpose.xlu0.b32.cont [12/16] 0.0, 128
    %259 = vxpose.xlu0.b32.cont [13/16] 0.0, 128
    %260 = vxpose.xlu0.b32.cont [14/16] 0.0, 128
    %261 = vxpose.xlu0.b32.cont [15/16] 0.0, 128
    %262 = vxpose.xlu0.b32.end [16/16] 0.0, 128
    %v263 = vpop.trf.xlu0
    %v264 = vpop.trf.xlu0
    %v265 = vpop.trf.xlu0
    %v266 = vpop.trf.xlu0
    %v267 = vpop.trf.xlu0
    %v268 = vpop.trf.xlu0
    %v269 = vpop.trf.xlu0
    %v270 = vpop.trf.xlu0
    %v271 = vpop.trf.xlu0
    %v272 = vpop.trf.xlu0
    %v273 = vpop.trf.xlu0
    %v274 = vpop.trf.xlu0
    %v275 = vpop.trf.xlu0
    %v276 = vpop.trf.xlu0
    %v277 = vpop.trf.xlu0
    %v278 = vpop.trf.xlu0
    %vm279 = vcmask 80896
    %v281 = vsel %vm279, %v195, 0
    %v284 = vsel %vm279, %v196, 0
    %vm286 = vcmask 1041408
    %v288 = vsel %vm286, %v157, 0
    %290 = vmatprep.subr.mxu0 0.0
    %291 = vmatpush1.msra.mxu0 %v156
    %292 = vmatprep.subr.mxu0 0.0
    %293 = vmatpush1.msra.mxu0 %v288
    %294 = vmatprep.subr.mxu0 0.0
    %295 = vmatpush1.msra.mxu0 0.0
    %296 = vmatprep.subr.mxu0 0.0
    %297 = vmatpush1.msra.mxu0 0.0
    %298 = vmatprep.subr.mxu0 0.0
    %299 = vmatpush1.msra.mxu0 0.0
    %300 = vmatprep.subr.mxu0 0.0
    %301 = vmatpush1.msra.mxu0 0.0
    %302 = vmatprep.subr.mxu0 0.0
    %303 = vmatpush1.msra.mxu0 0.0
    %304 = vmatprep.subr.mxu0 0.0
    %305 = vmatpush1.msra.mxu0 0.0
    %306 = vmatprep.subr.mxu0 0.0
    %307 = vmatpush1.msra.mxu0 0.0
    %308 = vmatprep.subr.mxu0 0.0
    %309 = vmatpush1.msra.mxu0 0.0
    %310 = vmatprep.subr.mxu0 0.0
    %311 = vmatpush1.msra.mxu0 0.0
    %312 = vmatprep.subr.mxu0 0.0
    %313 = vmatpush1.msra.mxu0 0.0
    %314 = vmatprep.subr.mxu0 0.0
    %315 = vmatpush1.msra.mxu0 0.0
    %316 = vmatprep.subr.mxu0 0.0
    %317 = vmatpush1.msra.mxu0 0.0
    %318 = vmatprep.subr.mxu0 0.0
    %319 = vmatpush1.msra.mxu0 0.0
    %320 = vmatprep.subr.mxu0 0.0
    %321 = vmatpush1.msra.mxu0 0.0
    %322 = vmatprep.subr.mxu0 0.0
    %323 = vmatpush1.msra.mxu0 0.0
    %324 = vmatprep.subr.mxu0 0.0
    %325 = vmatpush1.msra.mxu0 0.0
    %326 = vmatprep.subr.mxu0 0.0
    %327 = vmatpush1.msra.mxu0 0.0
    %328 = vmatprep.subr.mxu0 0.0
    %329 = vmatpush1.msra.mxu0 0.0
    %330 = vmatprep.subr.mxu0 0.0
    %331 = vmatpush1.msra.mxu0 0.0
    %332 = vmatprep.subr.mxu0 0.0
    %333 = vmatpush1.msra.mxu0 0.0
    %334 = vmatprep.subr.mxu0 0.0
    %335 = vmatpush1.msra.mxu0 0.0
    %336 = vmatprep.subr.mxu0 0.0
    %337 = vmatpush1.msra.mxu0 0.0
    %338 = vmatprep.subr.mxu0 0.0
    %339 = vmatpush1.msra.mxu0 0.0
    %340 = vmatprep.subr.mxu0 0.0
    %341 = vmatpush1.msra.mxu0 0.0
    %342 = vmatprep.subr.mxu0 0.0
    %343 = vmatpush1.msra.mxu0 0.0
    %344 = vmatprep.subr.mxu0 0.0
    %345 = vmatpush1.msra.mxu0 0.0
    %346 = vmatprep.subr.mxu0 0.0
    %347 = vmatpush1.msra.mxu0 0.0
    %348 = vmatprep.subr.mxu0 0.0
    %349 = vmatpush1.msra.mxu0 0.0
    %350 = vmatprep.subr.mxu0 0.0
    %351 = vmatpush1.msra.mxu0 0.0
    %352 = vmatprep.subr.mxu0 0.0
    %353 = vmatpush1.msra.mxu0 0.0
    %354 = vmatprep.mubr.f32.mxu0 0.0
    %355 = vmatmul.mubr.f32.gmra.mrb[0].mxu0 %v281
    %v356 = vpop.f32.mrb[0].mxu0
    %v357 = vadd.f32 0.0, %v356
    %v358 = vpop.f32.mrb[0].mxu0
    %359 = vmatprep.mubr.f32.mxu0 0.0
    %360 = vmatmul.mubr.f32.gmra.mrb[0].mxu0 %v284
    %v361 = vpop.f32.mrb[0].mxu0
    %v362 = vadd.f32 0.0, %v361
    %v363 = vpop.f32.mrb[0].mxu0
    %364 = vdwg.mxu0
    %vm365 = vcmask 244736
    %v367 = vsel %vm365, %v197, 0
    %v370 = vsel %vm365, %v198, 0
    %vm372 = vcmask 1045504
    %v374 = vsel %vm372, %v161, 0
    %376 = vmatprep.subr.mxu0 0.0
    %377 = vmatpush1.msra.mxu0 %v158
    %378 = vmatprep.subr.mxu0 0.0
    %379 = vmatpush1.msra.mxu0 %v159
    %380 = vmatprep.subr.mxu0 0.0
    %381 = vmatpush1.msra.mxu0 %v160
    %382 = vmatprep.subr.mxu0 0.0
    %383 = vmatpush1.msra.mxu0 %v374
    %384 = vmatprep.subr.mxu0 0.0
    %385 = vmatpush1.msra.mxu0 0.0
    %386 = vmatprep.subr.mxu0 0.0
    %387 = vmatpush1.msra.mxu0 0.0
    %388 = vmatprep.subr.mxu0 0.0
    %389 = vmatpush1.msra.mxu0 0.0
    %390 = vmatprep.subr.mxu0 0.0
    %391 = vmatpush1.msra.mxu0 0.0
    %392 = vmatprep.subr.mxu0 0.0
    %393 = vmatpush1.msra.mxu0 0.0
    %394 = vmatprep.subr.mxu0 0.0
    %395 = vmatpush1.msra.mxu0 0.0
    %396 = vmatprep.subr.mxu0 0.0
    %397 = vmatpush1.msra.mxu0 0.0
    %398 = vmatprep.subr.mxu0 0.0
    %399 = vmatpush1.msra.mxu0 0.0
    %400 = vmatprep.subr.mxu0 0.0
    %401 = vmatpush1.msra.mxu0 0.0
    %402 = vmatprep.subr.mxu0 0.0
    %403 = vmatpush1.msra.mxu0 0.0
    %404 = vmatprep.subr.mxu0 0.0
    %405 = vmatpush1.msra.mxu0 0.0
    %406 = vmatprep.subr.mxu0 0.0
    %407 = vmatpush1.msra.mxu0 0.0
    %408 = vmatprep.subr.mxu0 0.0
    %409 = vmatpush1.msra.mxu0 0.0
    %410 = vmatprep.subr.mxu0 0.0
    %411 = vmatpush1.msra.mxu0 0.0
    %412 = vmatprep.subr.mxu0 0.0
    %413 = vmatpush1.msra.mxu0 0.0
    %414 = vmatprep.subr.mxu0 0.0
    %415 = vmatpush1.msra.mxu0 0.0
    %416 = vmatprep.subr.mxu0 0.0
    %417 = vmatpush1.msra.mxu0 0.0
    %418 = vmatprep.subr.mxu0 0.0
    %419 = vmatpush1.msra.mxu0 0.0
    %420 = vmatprep.subr.mxu0 0.0
    %421 = vmatpush1.msra.mxu0 0.0
    %422 = vmatprep.subr.mxu0 0.0
    %423 = vmatpush1.msra.mxu0 0.0
    %424 = vmatprep.subr.mxu0 0.0
    %425 = vmatpush1.msra.mxu0 0.0
    %426 = vmatprep.subr.mxu0 0.0
    %427 = vmatpush1.msra.mxu0 0.0
    %428 = vmatprep.subr.mxu0 0.0
    %429 = vmatpush1.msra.mxu0 0.0
    %430 = vmatprep.subr.mxu0 0.0
    %431 = vmatpush1.msra.mxu0 0.0
    %432 = vmatprep.subr.mxu0 0.0
    %433 = vmatpush1.msra.mxu0 0.0
    %434 = vmatprep.subr.mxu0 0.0
    %435 = vmatpush1.msra.mxu0 0.0
    %436 = vmatprep.subr.mxu0 0.0
    %437 = vmatpush1.msra.mxu0 0.0
    %438 = vmatprep.subr.mxu0 0.0
    %439 = vmatpush1.msra.mxu0 0.0
    %440 = vmatprep.mubr.f32.mxu0 0.0
    %441 = vmatmul.mubr.f32.gmra.mrb[0].mxu0 %v367
    %v442 = vpop.f32.mrb[0].mxu0
    %v443 = vadd.f32 0.0, %v442
    %v444 = vpop.f32.mrb[0].mxu0
    %445 = vmatprep.mubr.f32.mxu0 0.0
    %446 = vmatmul.mubr.f32.gmra.mrb[0].mxu0 %v370
    %v447 = vpop.f32.mrb[0].mxu0
    %v448 = vadd.f32 0.0, %v447
    %v449 = vpop.f32.mrb[0].mxu0
    %450 = vdwg.mxu0
    %v452 = vsel %vm279, %v199, 0
    %v455 = vsel %vm279, %v200, 0
    %v458 = vsel %vm286, %v362, 0
    %460 = vmatprep.subr.mxu0 0.0
    %461 = vmatpush1.msra.mxu0 %v357
    %462 = vmatprep.subr.mxu0 0.0
    %463 = vmatpush1.msra.mxu0 %v458
    %464 = vmatprep.subr.mxu0 0.0
    %465 = vmatpush1.msra.mxu0 0.0
    %466 = vmatprep.subr.mxu0 0.0
    %467 = vmatpush1.msra.mxu0 0.0
    %468 = vmatprep.subr.mxu0 0.0
    %469 = vmatpush1.msra.mxu0 0.0
    %470 = vmatprep.subr.mxu0 0.0
    %471 = vmatpush1.msra.mxu0 0.0
    %472 = vmatprep.subr.mxu0 0.0
    %473 = vmatpush1.msra.mxu0 0.0
    %474 = vmatprep.subr.mxu0 0.0
    %475 = vmatpush1.msra.mxu0 0.0
    %476 = vmatprep.subr.mxu0 0.0
    %477 = vmatpush1.msra.mxu0 0.0
    %478 = vmatprep.subr.mxu0 0.0
    %479 = vmatpush1.msra.mxu0 0.0
    %480 = vmatprep.subr.mxu0 0.0
    %481 = vmatpush1.msra.mxu0 0.0
    %482 = vmatprep.subr.mxu0 0.0
    %483 = vmatpush1.msra.mxu0 0.0
    %484 = vmatprep.subr.mxu0 0.0
    %485 = vmatpush1.msra.mxu0 0.0
    %486 = vmatprep.subr.mxu0 0.0
    %487 = vmatpush1.msra.mxu0 0.0
    %488 = vmatprep.subr.mxu0 0.0
    %489 = vmatpush1.msra.mxu0 0.0
    %490 = vmatprep.subr.mxu0 0.0
    %491 = vmatpush1.msra.mxu0 0.0
    %492 = vmatprep.subr.mxu0 0.0
    %493 = vmatpush1.msra.mxu0 0.0
    %494 = vmatprep.subr.mxu0 0.0
    %495 = vmatpush1.msra.mxu0 0.0
    %496 = vmatprep.subr.mxu0 0.0
    %497 = vmatpush1.msra.mxu0 0.0
    %498 = vmatprep.subr.mxu0 0.0
    %499 = vmatpush1.msra.mxu0 0.0
    %500 = vmatprep.subr.mxu0 0.0
    %501 = vmatpush1.msra.mxu0 0.0
    %502 = vmatprep.subr.mxu0 0.0
    %503 = vmatpush1.msra.mxu0 0.0
    %504 = vmatprep.subr.mxu0 0.0
    %505 = vmatpush1.msra.mxu0 0.0
    %506 = vmatprep.subr.mxu0 0.0
    %507 = vmatpush1.msra.mxu0 0.0
    %508 = vmatprep.subr.mxu0 0.0
    %509 = vmatpush1.msra.mxu0 0.0
    %510 = vmatprep.subr.mxu0 0.0
    %511 = vmatpush1.msra.mxu0 0.0
    %512 = vmatprep.subr.mxu0 0.0
    %513 = vmatpush1.msra.mxu0 0.0
    %514 = vmatprep.subr.mxu0 0.0
    %515 = vmatpush1.msra.mxu0 0.0
    %516 = vmatprep.subr.mxu0 0.0
    %517 = vmatpush1.msra.mxu0 0.0
    %518 = vmatprep.subr.mxu0 0.0
    %519 = vmatpush1.msra.mxu0 0.0
    %520 = vmatprep.subr.mxu0 0.0
    %521 = vmatpush1.msra.mxu0 0.0
    %522 = vmatprep.subr.mxu0 0.0
    %523 = vmatpush1.msra.mxu0 0.0
    %524 = vmatprep.mubr.f32.mxu0 0.0
    %525 = vmatmul.mubr.f32.gmra.mrb[0].mxu0 %v452
    %v526 = vpop.f32.mrb[0].mxu0
    %v527 = vadd.f32 0.0, %v526
    %v528 = vpop.f32.mrb[0].mxu0
    %529 = vmatprep.mubr.f32.mxu0 0.0
    %530 = vmatmul.mubr.f32.gmra.mrb[0].mxu0 %v455
    %v531 = vpop.f32.mrb[0].mxu0
    %v532 = vadd.f32 0.0, %v531
    %v533 = vpop.f32.mrb[0].mxu0
    %534 = vdwg.mxu0
    %v536 = vsel %vm279, %v201, 0
    %v539 = vsel %vm279, %v202, 0
    %541 = vmatprep.subr.mxu0 0.0
    %542 = vmatpush1.msra.mxu0 %v357
    %543 = vmatprep.subr.mxu0 0.0
    %544 = vmatpush1.msra.mxu0 %v458
    %545 = vmatprep.subr.mxu0 0.0
    %546 = vmatpush1.msra.mxu0 0.0
    %547 = vmatprep.subr.mxu0 0.0
    %548 = vmatpush1.msra.mxu0 0.0
    %549 = vmatprep.subr.mxu0 0.0
    %550 = vmatpush1.msra.mxu0 0.0
    %551 = vmatprep.subr.mxu0 0.0
    %552 = vmatpush1.msra.mxu0 0.0
    %553 = vmatprep.subr.mxu0 0.0
    %554 = vmatpush1.msra.mxu0 0.0
    %555 = vmatprep.subr.mxu0 0.0
    %556 = vmatpush1.msra.mxu0 0.0
    %557 = vmatprep.subr.mxu0 0.0
    %558 = vmatpush1.msra.mxu0 0.0
    %559 = vmatprep.subr.mxu0 0.0
    %560 = vmatpush1.msra.mxu0 0.0
    %561 = vmatprep.subr.mxu0 0.0
    %562 = vmatpush1.msra.mxu0 0.0
    %563 = vmatprep.subr.mxu0 0.0
    %564 = vmatpush1.msra.mxu0 0.0
    %565 = vmatprep.subr.mxu0 0.0
    %566 = vmatpush1.msra.mxu0 0.0
    %567 = vmatprep.subr.mxu0 0.0
    %568 = vmatpush1.msra.mxu0 0.0
    %569 = vmatprep.subr.mxu0 0.0
    %570 = vmatpush1.msra.mxu0 0.0
    %571 = vmatprep.subr.mxu0 0.0
    %572 = vmatpush1.msra.mxu0 0.0
    %573 = vmatprep.subr.mxu0 0.0
    %574 = vmatpush1.msra.mxu0 0.0
    %575 = vmatprep.subr.mxu0 0.0
    %576 = vmatpush1.msra.mxu0 0.0
    %577 = vmatprep.subr.mxu0 0.0
    %578 = vmatpush1.msra.mxu0 0.0
    %579 = vmatprep.subr.mxu0 0.0
    %580 = vmatpush1.msra.mxu0 0.0
    %581 = vmatprep.subr.mxu0 0.0
    %582 = vmatpush1.msra.mxu0 0.0
    %583 = vmatprep.subr.mxu0 0.0
    %584 = vmatpush1.msra.mxu0 0.0
    %585 = vmatprep.subr.mxu0 0.0
    %586 = vmatpush1.msra.mxu0 0.0
    %587 = vmatprep.subr.mxu0 0.0
    %588 = vmatpush1.msra.mxu0 0.0
    %589 = vmatprep.subr.mxu0 0.0
    %590 = vmatpush1.msra.mxu0 0.0
    %591 = vmatprep.subr.mxu0 0.0
    %592 = vmatpush1.msra.mxu0 0.0
    %593 = vmatprep.subr.mxu0 0.0
    %594 = vmatpush1.msra.mxu0 0.0
    %595 = vmatprep.subr.mxu0 0.0
    %596 = vmatpush1.msra.mxu0 0.0
    %597 = vmatprep.subr.mxu0 0.0
    %598 = vmatpush1.msra.mxu0 0.0
    %599 = vmatprep.subr.mxu0 0.0
    %600 = vmatpush1.msra.mxu0 0.0
    %601 = vmatprep.subr.mxu0 0.0
    %602 = vmatpush1.msra.mxu0 0.0
    %603 = vmatprep.subr.mxu0 0.0
    %604 = vmatpush1.msra.mxu0 0.0
    %605 = vmatprep.mubr.f32.mxu0 0.0
    %606 = vmatmul.mubr.f32.gmra.mrb[0].mxu0 %v536
    %v607 = vpop.f32.mrb[0].mxu0
    %v608 = vadd.f32 0.0, %v607
    %v609 = vpop.f32.mrb[0].mxu0
    %610 = vmatprep.mubr.f32.mxu0 0.0
    %611 = vmatmul.mubr.f32.gmra.mrb[0].mxu0 %v539
    %v612 = vpop.f32.mrb[0].mxu0
    %v613 = vadd.f32 0.0, %v612
    %v614 = vpop.f32.mrb[0].mxu0
    %615 = vdwg.mxu0
    %vm616 = vcmask 64512
    %v618 = vsel %vm616, %v608, 0
    %v621 = vsel %vm616, %v613, 0
    %623 = vmatprep.subr.mxu0 0.0
    %624 = vmatpush1.msra.mxu0 %v164
    %625 = vmatprep.subr.mxu0 0.0
    %626 = vmatpush1.msra.mxu0 0.0
    %627 = vmatprep.subr.mxu0 0.0
    %628 = vmatpush1.msra.mxu0 0.0
    %629 = vmatprep.subr.mxu0 0.0
    %630 = vmatpush1.msra.mxu0 0.0
    %631 = vmatprep.subr.mxu0 0.0
    %632 = vmatpush1.msra.mxu0 0.0
    %633 = vmatprep.subr.mxu0 0.0
    %634 = vmatpush1.msra.mxu0 0.0
    %635 = vmatprep.subr.mxu0 0.0
    %636 = vmatpush1.msra.mxu0 0.0
    %637 = vmatprep.subr.mxu0 0.0
    %638 = vmatpush1.msra.mxu0 0.0
    %639 = vmatprep.subr.mxu0 0.0
    %640 = vmatpush1.msra.mxu0 0.0
    %641 = vmatprep.subr.mxu0 0.0
    %642 = vmatpush1.msra.mxu0 0.0
    %643 = vmatprep.subr.mxu0 0.0
    %644 = vmatpush1.msra.mxu0 0.0
    %645 = vmatprep.subr.mxu0 0.0
    %646 = vmatpush1.msra.mxu0 0.0
    %647 = vmatprep.subr.mxu0 0.0
    %648 = vmatpush1.msra.mxu0 0.0
    %649 = vmatprep.subr.mxu0 0.0
    %650 = vmatpush1.msra.mxu0 0.0
    %651 = vmatprep.subr.mxu0 0.0
    %652 = vmatpush1.msra.mxu0 0.0
    %653 = vmatprep.subr.mxu0 0.0
    %654 = vmatpush1.msra.mxu0 0.0
    %655 = vmatprep.subr.mxu0 0.0
    %656 = vmatpush1.msra.mxu0 0.0
    %657 = vmatprep.subr.mxu0 0.0
    %658 = vmatpush1.msra.mxu0 0.0
    %659 = vmatprep.subr.mxu0 0.0
    %660 = vmatpush1.msra.mxu0 0.0
    %661 = vmatprep.subr.mxu0 0.0
    %662 = vmatpush1.msra.mxu0 0.0
    %663 = vmatprep.subr.mxu0 0.0
    %664 = vmatpush1.msra.mxu0 0.0
    %665 = vmatprep.subr.mxu0 0.0
    %666 = vmatpush1.msra.mxu0 0.0
    %667 = vmatprep.subr.mxu0 0.0
    %668 = vmatpush1.msra.mxu0 0.0
    %669 = vmatprep.subr.mxu0 0.0
    %670 = vmatpush1.msra.mxu0 0.0
    %671 = vmatprep.subr.mxu0 0.0
    %672 = vmatpush1.msra.mxu0 0.0
    %673 = vmatprep.subr.mxu0 0.0
    %674 = vmatpush1.msra.mxu0 0.0
    %675 = vmatprep.subr.mxu0 0.0
    %676 = vmatpush1.msra.mxu0 0.0
    %677 = vmatprep.subr.mxu0 0.0
    %678 = vmatpush1.msra.mxu0 0.0
    %679 = vmatprep.subr.mxu0 0.0
    %680 = vmatpush1.msra.mxu0 0.0
    %681 = vmatprep.subr.mxu0 0.0
    %682 = vmatpush1.msra.mxu0 0.0
    %683 = vmatprep.subr.mxu0 0.0
    %684 = vmatpush1.msra.mxu0 0.0
    %685 = vmatprep.subr.mxu0 0.0
    %686 = vmatpush1.msra.mxu0 0.0
    %687 = vmatprep.mubr.f32.mxu0 0.0
    %688 = vmatmul.mubr.f32.gmra.mrb[0].mxu0 %v618
    %v689 = vpop.f32.mrb[0].mxu0
    %v690 = vadd.f32 0.0, %v689
    %v691 = vpop.f32.mrb[0].mxu0
    %692 = vmatprep.mubr.f32.mxu0 0.0
    %693 = vmatmul.mubr.f32.gmra.mrb[0].mxu0 %v621
    %v694 = vpop.f32.mrb[0].mxu0
    %v695 = vadd.f32 0.0, %v694
    %v696 = vpop.f32.mrb[0].mxu0
    %697 = vdwg.mxu0
    %v699 = vsel %vm616, %v527, 0
    %v702 = vsel %vm616, %v532, 0
    %704 = vmatprep.subr.mxu0 0.0
    %705 = vmatpush1.msra.mxu0 %v162
    %706 = vmatprep.subr.mxu0 0.0
    %707 = vmatpush1.msra.mxu0 0.0
    %708 = vmatprep.subr.mxu0 0.0
    %709 = vmatpush1.msra.mxu0 0.0
    %710 = vmatprep.subr.mxu0 0.0
    %711 = vmatpush1.msra.mxu0 0.0
    %712 = vmatprep.subr.mxu0 0.0
    %713 = vmatpush1.msra.mxu0 0.0
    %714 = vmatprep.subr.mxu0 0.0
    %715 = vmatpush1.msra.mxu0 0.0
    %716 = vmatprep.subr.mxu0 0.0
    %717 = vmatpush1.msra.mxu0 0.0
    %718 = vmatprep.subr.mxu0 0.0
    %719 = vmatpush1.msra.mxu0 0.0
    %720 = vmatprep.subr.mxu0 0.0
    %721 = vmatpush1.msra.mxu0 0.0
    %722 = vmatprep.subr.mxu0 0.0
    %723 = vmatpush1.msra.mxu0 0.0
    %724 = vmatprep.subr.mxu0 0.0
    %725 = vmatpush1.msra.mxu0 0.0
    %726 = vmatprep.subr.mxu0 0.0
    %727 = vmatpush1.msra.mxu0 0.0
    %728 = vmatprep.subr.mxu0 0.0
    %729 = vmatpush1.msra.mxu0 0.0
    %730 = vmatprep.subr.mxu0 0.0
    %731 = vmatpush1.msra.mxu0 0.0
    %732 = vmatprep.subr.mxu0 0.0
    %733 = vmatpush1.msra.mxu0 0.0
    %734 = vmatprep.subr.mxu0 0.0
    %735 = vmatpush1.msra.mxu0 0.0
    %736 = vmatprep.subr.mxu0 0.0
    %737 = vmatpush1.msra.mxu0 0.0
    %738 = vmatprep.subr.mxu0 0.0
    %739 = vmatpush1.msra.mxu0 0.0
    %740 = vmatprep.subr.mxu0 0.0
    %741 = vmatpush1.msra.mxu0 0.0
    %742 = vmatprep.subr.mxu0 0.0
    %743 = vmatpush1.msra.mxu0 0.0
    %744 = vmatprep.subr.mxu0 0.0
    %745 = vmatpush1.msra.mxu0 0.0
    %746 = vmatprep.subr.mxu0 0.0
    %747 = vmatpush1.msra.mxu0 0.0
    %748 = vmatprep.subr.mxu0 0.0
    %749 = vmatpush1.msra.mxu0 0.0
    %750 = vmatprep.subr.mxu0 0.0
    %751 = vmatpush1.msra.mxu0 0.0
    %752 = vmatprep.subr.mxu0 0.0
    %753 = vmatpush1.msra.mxu0 0.0
    %754 = vmatprep.subr.mxu0 0.0
    %755 = vmatpush1.msra.mxu0 0.0
    %756 = vmatprep.subr.mxu0 0.0
    %757 = vmatpush1.msra.mxu0 0.0
    %758 = vmatprep.subr.mxu0 0.0
    %759 = vmatpush1.msra.mxu0 0.0
    %760 = vmatprep.subr.mxu0 0.0
    %761 = vmatpush1.msra.mxu0 0.0
    %762 = vmatprep.subr.mxu0 0.0
    %763 = vmatpush1.msra.mxu0 0.0
    %764 = vmatprep.subr.mxu0 0.0
    %765 = vmatpush1.msra.mxu0 0.0
    %766 = vmatprep.subr.mxu0 0.0
    %767 = vmatpush1.msra.mxu0 0.0
    %768 = vmatprep.mubr.f32.mxu0 0.0
    %769 = vmatmul.mubr.f32.gmra.mrb[0].mxu0 %v699
    %v770 = vpop.f32.mrb[0].mxu0
    %v771 = vadd.f32 %v690, %v770
    %v772 = vpop.f32.mrb[0].mxu0
    %773 = vmatprep.mubr.f32.mxu0 0.0
    %774 = vmatmul.mubr.f32.gmra.mrb[0].mxu0 %v702
    %v775 = vpop.f32.mrb[0].mxu0
    %v776 = vadd.f32 %v695, %v775
    %v777 = vpop.f32.mrb[0].mxu0
    %778 = vdwg.mxu0
    %v780 = vsel %vm616, %v443, 0
    %v783 = vsel %vm616, %v448, 0
    %785 = vmatprep.subr.mxu0 0.0
    %786 = vmatpush1.msra.mxu0 %v166
    %787 = vmatprep.subr.mxu0 0.0
    %788 = vmatpush1.msra.mxu0 0.0
    %789 = vmatprep.subr.mxu0 0.0
    %790 = vmatpush1.msra.mxu0 0.0
    %791 = vmatprep.subr.mxu0 0.0
    %792 = vmatpush1.msra.mxu0 0.0
    %793 = vmatprep.subr.mxu0 0.0
    %794 = vmatpush1.msra.mxu0 0.0
    %795 = vmatprep.subr.mxu0 0.0
    %796 = vmatpush1.msra.mxu0 0.0
    %797 = vmatprep.subr.mxu0 0.0
    %798 = vmatpush1.msra.mxu0 0.0
    %799 = vmatprep.subr.mxu0 0.0
    %800 = vmatpush1.msra.mxu0 0.0
    %801 = vmatprep.subr.mxu0 0.0
    %802 = vmatpush1.msra.mxu0 0.0
    %803 = vmatprep.subr.mxu0 0.0
    %804 = vmatpush1.msra.mxu0 0.0
    %805 = vmatprep.subr.mxu0 0.0
    %806 = vmatpush1.msra.mxu0 0.0
    %807 = vmatprep.subr.mxu0 0.0
    %808 = vmatpush1.msra.mxu0 0.0
    %809 = vmatprep.subr.mxu0 0.0
    %810 = vmatpush1.msra.mxu0 0.0
    %811 = vmatprep.subr.mxu0 0.0
    %812 = vmatpush1.msra.mxu0 0.0
    %813 = vmatprep.subr.mxu0 0.0
    %814 = vmatpush1.msra.mxu0 0.0
    %815 = vmatprep.subr.mxu0 0.0
    %816 = vmatpush1.msra.mxu0 0.0
    %817 = vmatprep.subr.mxu0 0.0
    %818 = vmatpush1.msra.mxu0 0.0
    %819 = vmatprep.subr.mxu0 0.0
    %820 = vmatpush1.msra.mxu0 0.0
    %821 = vmatprep.subr.mxu0 0.0
    %822 = vmatpush1.msra.mxu0 0.0
    %823 = vmatprep.subr.mxu0 0.0
    %824 = vmatpush1.msra.mxu0 0.0
    %825 = vmatprep.subr.mxu0 0.0
    %826 = vmatpush1.msra.mxu0 0.0
    %827 = vmatprep.subr.mxu0 0.0
    %828 = vmatpush1.msra.mxu0 0.0
    %829 = vmatprep.subr.mxu0 0.0
    %830 = vmatpush1.msra.mxu0 0.0
    %831 = vmatprep.subr.mxu0 0.0
    %832 = vmatpush1.msra.mxu0 0.0
    %833 = vmatprep.subr.mxu0 0.0
    %834 = vmatpush1.msra.mxu0 0.0
    %835 = vmatprep.subr.mxu0 0.0
    %836 = vmatpush1.msra.mxu0 0.0
    %837 = vmatprep.subr.mxu0 0.0
    %838 = vmatpush1.msra.mxu0 0.0
    %839 = vmatprep.subr.mxu0 0.0
    %840 = vmatpush1.msra.mxu0 0.0
    %841 = vmatprep.subr.mxu0 0.0
    %842 = vmatpush1.msra.mxu0 0.0
    %843 = vmatprep.subr.mxu0 0.0
    %844 = vmatpush1.msra.mxu0 0.0
    %845 = vmatprep.subr.mxu0 0.0
    %846 = vmatpush1.msra.mxu0 0.0
    %847 = vmatprep.subr.mxu0 0.0
    %848 = vmatpush1.msra.mxu0 0.0
    %849 = vmatprep.mubr.f32.mxu0 0.0
    %850 = vmatmul.mubr.f32.gmra.mrb[0].mxu0 %v780
    %v851 = vpop.f32.mrb[0].mxu0
    %v852 = vadd.f32 0.0, %v851
    %v853 = vpop.f32.mrb[0].mxu0
    %854 = vmatprep.mubr.f32.mxu0 0.0
    %855 = vmatmul.mubr.f32.gmra.mrb[0].mxu0 %v783
    %v856 = vpop.f32.mrb[0].mxu0
    %v857 = vadd.f32 0.0, %v856
    %v858 = vpop.f32.mrb[0].mxu0
    %859 = vdwg.mxu0
    %v860 = vadd.f32 %v771, %v852
    %v861 = vadd.f32 %v776, %v857
    %v862 = vmul.f32 %v860, %v203
    %v863 = vmul.f32 %v861, %v204
    %vm864 = vcmask 23552
    %v865 = vsel %vm864, %v862, 0.0
    %866 = vadd.xlane.f32.xlu0 %v865
    %v867 = vpop.xlane.xlu0 %866
    %vm868 = vcmask 17408
    %v869 = vsel %vm868, %v863, 0.0
    %870 = vadd.xlane.f32.xlu0 %v869
    %v871 = vpop.xlane.xlu0 %870
    %vm872 = vcmp.ge.f32.partialorder %v867, 0.0
    %vm873 = vcmp.ge.f32.partialorder %v871, 0.0
    %v874 = vmul.f32 %v867, 0.2
    %v875 = vmul.f32 %v871, 0.2
    %v876 = vsel %vm872, %v867, %v874
    %v877 = vsel %vm873, %v871, %v875
    %vm878 = vcmp.gt.f32.partialorder %v201, 0.0
    %vm879 = vcmp.gt.f32.partialorder %v202, 0.0
    %v880 = vsel %vm878, %v876, -1e+30
    %v881 = vsel %vm879, %v877, -1e+30
    %v882 = vsel %vm279, %v880, -inf
    %vm883 = vcmask 74752
    %v884 = vsel %vm883, %v881, -inf
    %v885 = vmax.f32 %v882, %v884
    %v886 = vrot.slane %v885, 4
    %v887 = vmax.f32 %v885, %v886
    %v888 = vrot.slane %v887, 2
    %v889 = vmax.f32 %v887, %v888
    %v890 = vrot.slane %v889, 1
    %v891 = vmax.f32 %v889, %v890
    %v892 = vmul.f32 %v201, %v891
    %v893 = vmul.f32 %v202, %v891
    %v894 = vsel %vm279, %v892, 0.0
    %895 = vadd.xlane.f32.xlu0 %v894
    %v896 = vpop.xlane.xlu0 %895
    %v897 = vsel %vm883, %v893, 0.0
    %898 = vadd.xlane.f32.xlu0 %v897
    %v899 = vpop.xlane.xlu0 %898
    %v900 = vsub.f32 %v876, %v896
    %v901 = vsub.f32 %v877, %v899
    %v902 = vmul.f32 %v900, 1.442695
    %v903 = vpow.pop %v902
    %v904 = vmul.f32 %v901, 1.442695
    %v905 = vpow.pop %v904
    %v907 = vsel %vm279, %v231, 0
    %v910 = vsel %vm279, %v232, 0
    %v913 = vsel %vm286, %v905, 0
    %915 = vmatprep.subr.mxu0 0.0
    %916 = vmatpush1.msra.mxu0 %v903
    %917 = vmatprep.subr.mxu0 0.0
    %918 = vmatpush1.msra.mxu0 %v913
    %919 = vmatprep.subr.mxu0 0.0
    %920 = vmatpush1.msra.mxu0 0.0
    %921 = vmatprep.subr.mxu0 0.0
    %922 = vmatpush1.msra.mxu0 0.0
    %923 = vmatprep.subr.mxu0 0.0
    %924 = vmatpush1.msra.mxu0 0.0
    %925 = vmatprep.subr.mxu0 0.0
    %926 = vmatpush1.msra.mxu0 0.0
    %927 = vmatprep.subr.mxu0 0.0
    %928 = vmatpush1.msra.mxu0 0.0
    %929 = vmatprep.subr.mxu0 0.0
    %930 = vmatpush1.msra.mxu0 0.0
    %931 = vmatprep.subr.mxu0 0.0
    %932 = vmatpush1.msra.mxu0 0.0
    %933 = vmatprep.subr.mxu0 0.0
    %934 = vmatpush1.msra.mxu0 0.0
    %935 = vmatprep.subr.mxu0 0.0
    %936 = vmatpush1.msra.mxu0 0.0
    %937 = vmatprep.subr.mxu0 0.0
    %938 = vmatpush1.msra.mxu0 0.0
    %939 = vmatprep.subr.mxu0 0.0
    %940 = vmatpush1.msra.mxu0 0.0
    %941 = vmatprep.subr.mxu0 0.0
    %942 = vmatpush1.msra.mxu0 0.0
    %943 = vmatprep.subr.mxu0 0.0
    %944 = vmatpush1.msra.mxu0 0.0
    %945 = vmatprep.subr.mxu0 0.0
    %946 = vmatpush1.msra.mxu0 0.0
    %947 = vmatprep.subr.mxu0 0.0
    %948 = vmatpush1.msra.mxu0 0.0
    %949 = vmatprep.subr.mxu0 0.0
    %950 = vmatpush1.msra.mxu0 0.0
    %951 = vmatprep.subr.mxu0 0.0
    %952 = vmatpush1.msra.mxu0 0.0
    %953 = vmatprep.subr.mxu0 0.0
    %954 = vmatpush1.msra.mxu0 0.0
    %955 = vmatprep.subr.mxu0 0.0
    %956 = vmatpush1.msra.mxu0 0.0
    %957 = vmatprep.subr.mxu0 0.0
    %958 = vmatpush1.msra.mxu0 0.0
    %959 = vmatprep.subr.mxu0 0.0
    %960 = vmatpush1.msra.mxu0 0.0
    %961 = vmatprep.subr.mxu0 0.0
    %962 = vmatpush1.msra.mxu0 0.0
    %963 = vmatprep.subr.mxu0 0.0
    %964 = vmatpush1.msra.mxu0 0.0
    %965 = vmatprep.subr.mxu0 0.0
    %966 = vmatpush1.msra.mxu0 0.0
    %967 = vmatprep.subr.mxu0 0.0
    %968 = vmatpush1.msra.mxu0 0.0
    %969 = vmatprep.subr.mxu0 0.0
    %970 = vmatpush1.msra.mxu0 0.0
    %971 = vmatprep.subr.mxu0 0.0
    %972 = vmatpush1.msra.mxu0 0.0
    %973 = vmatprep.subr.mxu0 0.0
    %974 = vmatpush1.msra.mxu0 0.0
    %975 = vmatprep.subr.mxu0 0.0
    %976 = vmatpush1.msra.mxu0 0.0
    %977 = vmatprep.subr.mxu0 0.0
    %978 = vmatpush1.msra.mxu0 0.0
    %979 = vmatprep.mubr.f32.mxu0 0.0
    %980 = vmatmul.mubr.f32.gmra.mrb[0].mxu0 %v907
    %v981 = vpop.f32.mrb[0].mxu0
    %v982 = vadd.f32 0.0, %v981
    %v983 = vpop.f32.mrb[0].mxu0
    %984 = vmatprep.mubr.f32.mxu0 0.0
    %985 = vmatmul.mubr.f32.gmra.mrb[0].mxu0 %v910
    %v986 = vpop.f32.mrb[0].mxu0
    %v987 = vadd.f32 0.0, %v986
    %v988 = vpop.f32.mrb[0].mxu0
    %989 = vdwg.mxu0
    %v991 = vsel %vm286, %v987, 0
    %993 = vmatprep.subr.mxu0 0.0
    %994 = vmatpush1.msra.mxu0 %v982
    %995 = vmatprep.subr.mxu0 0.0
    %996 = vmatpush1.msra.mxu0 %v991
    %997 = vmatprep.subr.mxu0 0.0
    %998 = vmatpush1.msra.mxu0 0.0
    %999 = vmatprep.subr.mxu0 0.0
    %1000 = vmatpush1.msra.mxu0 0.0
    %1001 = vmatprep.subr.mxu0 0.0
    %1002 = vmatpush1.msra.mxu0 0.0
    %1003 = vmatprep.subr.mxu0 0.0
    %1004 = vmatpush1.msra.mxu0 0.0
    %1005 = vmatprep.subr.mxu0 0.0
    %1006 = vmatpush1.msra.mxu0 0.0
    %1007 = vmatprep.subr.mxu0 0.0
    %1008 = vmatpush1.msra.mxu0 0.0
    %1009 = vmatprep.subr.mxu0 0.0
    %1010 = vmatpush1.msra.mxu0 0.0
    %1011 = vmatprep.subr.mxu0 0.0
    %1012 = vmatpush1.msra.mxu0 0.0
    %1013 = vmatprep.subr.mxu0 0.0
    %1014 = vmatpush1.msra.mxu0 0.0
    %1015 = vmatprep.subr.mxu0 0.0
    %1016 = vmatpush1.msra.mxu0 0.0
    %1017 = vmatprep.subr.mxu0 0.0
    %1018 = vmatpush1.msra.mxu0 0.0
    %1019 = vmatprep.subr.mxu0 0.0
    %1020 = vmatpush1.msra.mxu0 0.0
    %1021 = vmatprep.subr.mxu0 0.0
    %1022 = vmatpush1.msra.mxu0 0.0
    %1023 = vmatprep.subr.mxu0 0.0
    %1024 = vmatpush1.msra.mxu0 0.0
    %1025 = vmatprep.subr.mxu0 0.0
    %1026 = vmatpush1.msra.mxu0 0.0
    %1027 = vmatprep.subr.mxu0 0.0
    %1028 = vmatpush1.msra.mxu0 0.0
    %1029 = vmatprep.subr.mxu0 0.0
    %1030 = vmatpush1.msra.mxu0 0.0
    %1031 = vmatprep.subr.mxu0 0.0
    %1032 = vmatpush1.msra.mxu0 0.0
    %1033 = vmatprep.subr.mxu0 0.0
    %1034 = vmatpush1.msra.mxu0 0.0
    %1035 = vmatprep.subr.mxu0 0.0
    %1036 = vmatpush1.msra.mxu0 0.0
    %1037 = vmatprep.subr.mxu0 0.0
    %1038 = vmatpush1.msra.mxu0 0.0
    %1039 = vmatprep.subr.mxu0 0.0
    %1040 = vmatpush1.msra.mxu0 0.0
    %1041 = vmatprep.subr.mxu0 0.0
    %1042 = vmatpush1.msra.mxu0 0.0
    %1043 = vmatprep.subr.mxu0 0.0
    %1044 = vmatpush1.msra.mxu0 0.0
    %1045 = vmatprep.subr.mxu0 0.0
    %1046 = vmatpush1.msra.mxu0 0.0
    %1047 = vmatprep.subr.mxu0 0.0
    %1048 = vmatpush1.msra.mxu0 0.0
    %1049 = vmatprep.subr.mxu0 0.0
    %1050 = vmatpush1.msra.mxu0 0.0
    %1051 = vmatprep.subr.mxu0 0.0
    %1052 = vmatpush1.msra.mxu0 0.0
    %1053 = vmatprep.subr.mxu0 0.0
    %1054 = vmatpush1.msra.mxu0 0.0
    %1055 = vmatprep.subr.mxu0 0.0
    %1056 = vmatpush1.msra.mxu0 0.0
    %1057 = vmatprep.mubr.f32.mxu0 0.0
    %1058 = vmatmul.mubr.f32.gmra.mrb[0].mxu0 %v536
    %v1059 = vpop.f32.mrb[0].mxu0
    %v1060 = vadd.f32 0.0, %v1059
    %v1061 = vpop.f32.mrb[0].mxu0
    %1062 = vmatprep.mubr.f32.mxu0 0.0
    %1063 = vmatmul.mubr.f32.gmra.mrb[0].mxu0 %v539
    %v1064 = vpop.f32.mrb[0].mxu0
    %v1065 = vadd.f32 0.0, %v1064
    %v1066 = vpop.f32.mrb[0].mxu0
    %1067 = vdwg.mxu0
    %v1068 = vrcp.pop %v1060
    %v1069 = vrcp.pop %v1065
    %v1070 = vmul.f32 %v903, %v1068
    %v1071 = vmul.f32 %v905, %v1069
    %1073 = vset.pattern.permute.xlu0 0
    %1074 = vperm.xlu0 %1073, %v1070
    %v1075 = vpop.permute.xlu0 %1074
    %1078 = vset.pattern.permute.xlu0 0
    %1079 = vperm.xlu0 %1078, %v1071
    %v1080 = vpop.permute.xlu0 %1079
    %1082 = vrot.lane.b32.xlu0 %v608, 120
    %v1083 = vpop.permute.xlu0 %1082
    %1084 = vrot.lane.b32.xlu0 %v613, 120
    %v1085 = vpop.permute.xlu0 %1084
    %v1086 = vsel %vm616, %v1083, 0
    %v1088 = vsel %vm616, %v1085, 0
    %1090 = vmatprep.subr.mxu0 0.0
    %1091 = vmatpush1.msra.mxu0 %v165
    %1092 = vmatprep.subr.mxu0 0.0
    %1093 = vmatpush1.msra.mxu0 0.0
    %1094 = vmatprep.subr.mxu0 0.0
    %1095 = vmatpush1.msra.mxu0 0.0
    %1096 = vmatprep.subr.mxu0 0.0
    %1097 = vmatpush1.msra.mxu0 0.0
    %1098 = vmatprep.subr.mxu0 0.0
    %1099 = vmatpush1.msra.mxu0 0.0
    %1100 = vmatprep.subr.mxu0 0.0
    %1101 = vmatpush1.msra.mxu0 0.0
    %1102 = vmatprep.subr.mxu0 0.0
    %1103 = vmatpush1.msra.mxu0 0.0
    %1104 = vmatprep.subr.mxu0 0.0
    %1105 = vmatpush1.msra.mxu0 0.0
    %1106 = vmatprep.subr.mxu0 0.0
    %1107 = vmatpush1.msra.mxu0 0.0
    %1108 = vmatprep.subr.mxu0 0.0
    %1109 = vmatpush1.msra.mxu0 0.0
    %1110 = vmatprep.subr.mxu0 0.0
    %1111 = vmatpush1.msra.mxu0 0.0
    %1112 = vmatprep.subr.mxu0 0.0
    %1113 = vmatpush1.msra.mxu0 0.0
    %1114 = vmatprep.subr.mxu0 0.0
    %1115 = vmatpush1.msra.mxu0 0.0
    %1116 = vmatprep.subr.mxu0 0.0
    %1117 = vmatpush1.msra.mxu0 0.0
    %1118 = vmatprep.subr.mxu0 0.0
    %1119 = vmatpush1.msra.mxu0 0.0
    %1120 = vmatprep.subr.mxu0 0.0
    %1121 = vmatpush1.msra.mxu0 0.0
    %1122 = vmatprep.subr.mxu0 0.0
    %1123 = vmatpush1.msra.mxu0 0.0
    %1124 = vmatprep.subr.mxu0 0.0
    %1125 = vmatpush1.msra.mxu0 0.0
    %1126 = vmatprep.subr.mxu0 0.0
    %1127 = vmatpush1.msra.mxu0 0.0
    %1128 = vmatprep.subr.mxu0 0.0
    %1129 = vmatpush1.msra.mxu0 0.0
    %1130 = vmatprep.subr.mxu0 0.0
    %1131 = vmatpush1.msra.mxu0 0.0
    %1132 = vmatprep.subr.mxu0 0.0
    %1133 = vmatpush1.msra.mxu0 0.0
    %1134 = vmatprep.subr.mxu0 0.0
    %1135 = vmatpush1.msra.mxu0 0.0
    %1136 = vmatprep.subr.mxu0 0.0
    %1137 = vmatpush1.msra.mxu0 0.0
    %1138 = vmatprep.subr.mxu0 0.0
    %1139 = vmatpush1.msra.mxu0 0.0
    %1140 = vmatprep.subr.mxu0 0.0
    %1141 = vmatpush1.msra.mxu0 0.0
    %1142 = vmatprep.subr.mxu0 0.0
    %1143 = vmatpush1.msra.mxu0 0.0
    %1144 = vmatprep.subr.mxu0 0.0
    %1145 = vmatpush1.msra.mxu0 0.0
    %1146 = vmatprep.subr.mxu0 0.0
    %1147 = vmatpush1.msra.mxu0 0.0
    %1148 = vmatprep.subr.mxu0 0.0
    %1149 = vmatpush1.msra.mxu0 0.0
    %1150 = vmatprep.subr.mxu0 0.0
    %1151 = vmatpush1.msra.mxu0 0.0
    %1152 = vmatprep.subr.mxu0 0.0
    %1153 = vmatpush1.msra.mxu0 0.0
    %1154 = vmatprep.mubr.f32.mxu0 0.0
    %1155 = vmatmul.mubr.f32.gmra.mrb[0].mxu0 %v1086
    %v1156 = vpop.f32.mrb[0].mxu0
    %v1157 = vadd.f32 0.0, %v1156
    %v1158 = vpop.f32.mrb[0].mxu0
    %1159 = vmatprep.mubr.f32.mxu0 0.0
    %1160 = vmatmul.mubr.f32.gmra.mrb[0].mxu0 %v1088
    %v1161 = vpop.f32.mrb[0].mxu0
    %v1162 = vadd.f32 0.0, %v1161
    %v1163 = vpop.f32.mrb[0].mxu0
    %1164 = vdwg.mxu0
    %1165 = vrot.lane.b32.xlu0 %v527, 120
    %v1166 = vpop.permute.xlu0 %1165
    %1167 = vrot.lane.b32.xlu0 %v532, 120
    %v1168 = vpop.permute.xlu0 %1167
    %v1169 = vsel %vm616, %v1166, 0
    %v1171 = vsel %vm616, %v1168, 0
    %1173 = vmatprep.subr.mxu0 0.0
    %1174 = vmatpush1.msra.mxu0 %v163
    %1175 = vmatprep.subr.mxu0 0.0
    %1176 = vmatpush1.msra.mxu0 0.0
    %1177 = vmatprep.subr.mxu0 0.0
    %1178 = vmatpush1.msra.mxu0 0.0
    %1179 = vmatprep.subr.mxu0 0.0
    %1180 = vmatpush1.msra.mxu0 0.0
    %1181 = vmatprep.subr.mxu0 0.0
    %1182 = vmatpush1.msra.mxu0 0.0
    %1183 = vmatprep.subr.mxu0 0.0
    %1184 = vmatpush1.msra.mxu0 0.0
    %1185 = vmatprep.subr.mxu0 0.0
    %1186 = vmatpush1.msra.mxu0 0.0
    %1187 = vmatprep.subr.mxu0 0.0
    %1188 = vmatpush1.msra.mxu0 0.0
    %1189 = vmatprep.subr.mxu0 0.0
    %1190 = vmatpush1.msra.mxu0 0.0
    %1191 = vmatprep.subr.mxu0 0.0
    %1192 = vmatpush1.msra.mxu0 0.0
    %1193 = vmatprep.subr.mxu0 0.0
    %1194 = vmatpush1.msra.mxu0 0.0
    %1195 = vmatprep.subr.mxu0 0.0
    %1196 = vmatpush1.msra.mxu0 0.0
    %1197 = vmatprep.subr.mxu0 0.0
    %1198 = vmatpush1.msra.mxu0 0.0
    %1199 = vmatprep.subr.mxu0 0.0
    %1200 = vmatpush1.msra.mxu0 0.0
    %1201 = vmatprep.subr.mxu0 0.0
    %1202 = vmatpush1.msra.mxu0 0.0
    %1203 = vmatprep.subr.mxu0 0.0
    %1204 = vmatpush1.msra.mxu0 0.0
    %1205 = vmatprep.subr.mxu0 0.0
    %1206 = vmatpush1.msra.mxu0 0.0
    %1207 = vmatprep.subr.mxu0 0.0
    %1208 = vmatpush1.msra.mxu0 0.0
    %1209 = vmatprep.subr.mxu0 0.0
    %1210 = vmatpush1.msra.mxu0 0.0
    %1211 = vmatprep.subr.mxu0 0.0
    %1212 = vmatpush1.msra.mxu0 0.0
    %1213 = vmatprep.subr.mxu0 0.0
    %1214 = vmatpush1.msra.mxu0 0.0
    %1215 = vmatprep.subr.mxu0 0.0
    %1216 = vmatpush1.msra.mxu0 0.0
    %1217 = vmatprep.subr.mxu0 0.0
    %1218 = vmatpush1.msra.mxu0 0.0
    %1219 = vmatprep.subr.mxu0 0.0
    %1220 = vmatpush1.msra.mxu0 0.0
    %1221 = vmatprep.subr.mxu0 0.0
    %1222 = vmatpush1.msra.mxu0 0.0
    %1223 = vmatprep.subr.mxu0 0.0
    %1224 = vmatpush1.msra.mxu0 0.0
    %1225 = vmatprep.subr.mxu0 0.0
    %1226 = vmatpush1.msra.mxu0 0.0
    %1227 = vmatprep.subr.mxu0 0.0
    %1228 = vmatpush1.msra.mxu0 0.0
    %1229 = vmatprep.subr.mxu0 0.0
    %1230 = vmatpush1.msra.mxu0 0.0
    %1231 = vmatprep.subr.mxu0 0.0
    %1232 = vmatpush1.msra.mxu0 0.0
    %1233 = vmatprep.subr.mxu0 0.0
    %1234 = vmatpush1.msra.mxu0 0.0
    %1235 = vmatprep.subr.mxu0 0.0
    %1236 = vmatpush1.msra.mxu0 0.0
    %1237 = vmatprep.mubr.f32.mxu0 0.0
    %1238 = vmatmul.mubr.f32.gmra.mrb[0].mxu0 %v1169
    %v1239 = vpop.f32.mrb[0].mxu0
    %v1240 = vadd.f32 %v1157, %v1239
    %v1241 = vpop.f32.mrb[0].mxu0
    %1242 = vmatprep.mubr.f32.mxu0 0.0
    %1243 = vmatmul.mubr.f32.gmra.mrb[0].mxu0 %v1171
    %v1244 = vpop.f32.mrb[0].mxu0
    %v1245 = vadd.f32 %v1162, %v1244
    %v1246 = vpop.f32.mrb[0].mxu0
    %1247 = vdwg.mxu0
    %1248 = vrot.lane.b32.xlu0 %v443, 120
    %v1249 = vpop.permute.xlu0 %1248
    %1250 = vrot.lane.b32.xlu0 %v448, 120
    %v1251 = vpop.permute.xlu0 %1250
    %v1252 = vsel %vm616, %v1249, 0
    %v1254 = vsel %vm616, %v1251, 0
    %1256 = vmatprep.subr.mxu0 0.0
    %1257 = vmatpush1.msra.mxu0 %v167
    %1258 = vmatprep.subr.mxu0 0.0
    %1259 = vmatpush1.msra.mxu0 0.0
    %1260 = vmatprep.subr.mxu0 0.0
    %1261 = vmatpush1.msra.mxu0 0.0
    %1262 = vmatprep.subr.mxu0 0.0
    %1263 = vmatpush1.msra.mxu0 0.0
    %1264 = vmatprep.subr.mxu0 0.0
    %1265 = vmatpush1.msra.mxu0 0.0
    %1266 = vmatprep.subr.mxu0 0.0
    %1267 = vmatpush1.msra.mxu0 0.0
    %1268 = vmatprep.subr.mxu0 0.0
    %1269 = vmatpush1.msra.mxu0 0.0
    %1270 = vmatprep.subr.mxu0 0.0
    %1271 = vmatpush1.msra.mxu0 0.0
    %1272 = vmatprep.subr.mxu0 0.0
    %1273 = vmatpush1.msra.mxu0 0.0
    %1274 = vmatprep.subr.mxu0 0.0
    %1275 = vmatpush1.msra.mxu0 0.0
    %1276 = vmatprep.subr.mxu0 0.0
    %1277 = vmatpush1.msra.mxu0 0.0
    %1278 = vmatprep.subr.mxu0 0.0
    %1279 = vmatpush1.msra.mxu0 0.0
    %1280 = vmatprep.subr.mxu0 0.0
    %1281 = vmatpush1.msra.mxu0 0.0
    %1282 = vmatprep.subr.mxu0 0.0
    %1283 = vmatpush1.msra.mxu0 0.0
    %1284 = vmatprep.subr.mxu0 0.0
    %1285 = vmatpush1.msra.mxu0 0.0
    %1286 = vmatprep.subr.mxu0 0.0
    %1287 = vmatpush1.msra.mxu0 0.0
    %1288 = vmatprep.subr.mxu0 0.0
    %1289 = vmatpush1.msra.mxu0 0.0
    %1290 = vmatprep.subr.mxu0 0.0
    %1291 = vmatpush1.msra.mxu0 0.0
    %1292 = vmatprep.subr.mxu0 0.0
    %1293 = vmatpush1.msra.mxu0 0.0
    %1294 = vmatprep.subr.mxu0 0.0
    %1295 = vmatpush1.msra.mxu0 0.0
    %1296 = vmatprep.subr.mxu0 0.0
    %1297 = vmatpush1.msra.mxu0 0.0
    %1298 = vmatprep.subr.mxu0 0.0
    %1299 = vmatpush1.msra.mxu0 0.0
    %1300 = vmatprep.subr.mxu0 0.0
    %1301 = vmatpush1.msra.mxu0 0.0
    %1302 = vmatprep.subr.mxu0 0.0
    %1303 = vmatpush1.msra.mxu0 0.0
    %1304 = vmatprep.subr.mxu0 0.0
    %1305 = vmatpush1.msra.mxu0 0.0
    %1306 = vmatprep.subr.mxu0 0.0
    %1307 = vmatpush1.msra.mxu0 0.0
    %1308 = vmatprep.subr.mxu0 0.0
    %1309 = vmatpush1.msra.mxu0 0.0
    %1310 = vmatprep.subr.mxu0 0.0
    %1311 = vmatpush1.msra.mxu0 0.0
    %1312 = vmatprep.subr.mxu0 0.0
    %1313 = vmatpush1.msra.mxu0 0.0
    %1314 = vmatprep.subr.mxu0 0.0
    %1315 = vmatpush1.msra.mxu0 0.0
    %1316 = vmatprep.subr.mxu0 0.0
    %1317 = vmatpush1.msra.mxu0 0.0
    %1318 = vmatprep.subr.mxu0 0.0
    %1319 = vmatpush1.msra.mxu0 0.0
    %1320 = vmatprep.mubr.f32.mxu0 0.0
    %1321 = vmatmul.mubr.f32.gmra.mrb[0].mxu0 %v1252
    %v1322 = vpop.f32.mrb[0].mxu0
    %v1323 = vadd.f32 0.0, %v1322
    %v1324 = vpop.f32.mrb[0].mxu0
    %1325 = vmatprep.mubr.f32.mxu0 0.0
    %1326 = vmatmul.mubr.f32.gmra.mrb[0].mxu0 %v1254
    %v1327 = vpop.f32.mrb[0].mxu0
    %v1328 = vadd.f32 0.0, %v1327
    %v1329 = vpop.f32.mrb[0].mxu0
    %1330 = vdwg.mxu0
    %v1331 = vadd.f32 %v1240, %v1323
    %v1332 = vadd.f32 %v1245, %v1328
    %v1333 = vmul.f32 %v1331, %v203
    %v1334 = vmul.f32 %v1332, %v204
    %v1335 = vsel %vm864, %v1333, 0.0
    %1336 = vadd.xlane.f32.xlu0 %v1335
    %v1337 = vpop.xlane.xlu0 %1336
    %v1338 = vsel %vm868, %v1334, 0.0
    %1339 = vadd.xlane.f32.xlu0 %v1338
    %v1340 = vpop.xlane.xlu0 %1339
    %vm1341 = vcmp.ge.f32.partialorder %v1337, 0.0
    %vm1342 = vcmp.ge.f32.partialorder %v1340, 0.0
    %v1343 = vmul.f32 %v1337, 0.2
    %v1344 = vmul.f32 %v1340, 0.2
    %v1345 = vsel %vm1341, %v1337, %v1343
    %v1346 = vsel %vm1342, %v1340, %v1344
    %v1347 = vsel %vm878, %v1345, -1e+30
    %v1348 = vsel %vm879, %v1346, -1e+30
    %v1349 = vsel %vm279, %v1347, -inf
    %v1350 = vsel %vm883, %v1348, -inf
    %v1351 = vmax.f32 %v1349, %v1350
    %v1352 = vrot.slane %v1351, 4
    %v1353 = vmax.f32 %v1351, %v1352
    %v1354 = vrot.slane %v1353, 2
    %v1355 = vmax.f32 %v1353, %v1354
    %v1356 = vrot.slane %v1355, 1
    %v1357 = vmax.f32 %v1355, %v1356
    %v1358 = vmul.f32 %v201, %v1357
    %v1359 = vmul.f32 %v202, %v1357
    %v1360 = vsel %vm279, %v1358, 0.0
    %1361 = vadd.xlane.f32.xlu0 %v1360
    %v1362 = vpop.xlane.xlu0 %1361
    %v1363 = vsel %vm883, %v1359, 0.0
    %1364 = vadd.xlane.f32.xlu0 %v1363
    %v1365 = vpop.xlane.xlu0 %1364
    %v1366 = vsub.f32 %v1345, %v1362
    %v1367 = vsub.f32 %v1346, %v1365
    %v1368 = vmul.f32 %v1366, 1.442695
    %v1369 = vpow.pop %v1368
    %v1370 = vmul.f32 %v1367, 1.442695
    %v1371 = vpow.pop %v1370
    %v1373 = vsel %vm286, %v1371, 0
    %1375 = vmatprep.subr.mxu0 0.0
    %1376 = vmatpush1.msra.mxu0 %v1369
    %1377 = vmatprep.subr.mxu0 0.0
    %1378 = vmatpush1.msra.mxu0 %v1373
    %1379 = vmatprep.subr.mxu0 0.0
    %1380 = vmatpush1.msra.mxu0 0.0
    %1381 = vmatprep.subr.mxu0 0.0
    %1382 = vmatpush1.msra.mxu0 0.0
    %1383 = vmatprep.subr.mxu0 0.0
    %1384 = vmatpush1.msra.mxu0 0.0
    %1385 = vmatprep.subr.mxu0 0.0
    %1386 = vmatpush1.msra.mxu0 0.0
    %1387 = vmatprep.subr.mxu0 0.0
    %1388 = vmatpush1.msra.mxu0 0.0
    %1389 = vmatprep.subr.mxu0 0.0
    %1390 = vmatpush1.msra.mxu0 0.0
    %1391 = vmatprep.subr.mxu0 0.0
    %1392 = vmatpush1.msra.mxu0 0.0
    %1393 = vmatprep.subr.mxu0 0.0
    %1394 = vmatpush1.msra.mxu0 0.0
    %1395 = vmatprep.subr.mxu0 0.0
    %1396 = vmatpush1.msra.mxu0 0.0
    %1397 = vmatprep.subr.mxu0 0.0
    %1398 = vmatpush1.msra.mxu0 0.0
    %1399 = vmatprep.subr.mxu0 0.0
    %1400 = vmatpush1.msra.mxu0 0.0
    %1401 = vmatprep.subr.mxu0 0.0
    %1402 = vmatpush1.msra.mxu0 0.0
    %1403 = vmatprep.subr.mxu0 0.0
    %1404 = vmatpush1.msra.mxu0 0.0
    %1405 = vmatprep.subr.mxu0 0.0
    %1406 = vmatpush1.msra.mxu0 0.0
    %1407 = vmatprep.subr.mxu0 0.0
    %1408 = vmatpush1.msra.mxu0 0.0
    %1409 = vmatprep.subr.mxu0 0.0
    %1410 = vmatpush1.msra.mxu0 0.0
    %1411 = vmatprep.subr.mxu0 0.0
    %1412 = vmatpush1.msra.mxu0 0.0
    %1413 = vmatprep.subr.mxu0 0.0
    %1414 = vmatpush1.msra.mxu0 0.0
    %1415 = vmatprep.subr.mxu0 0.0
    %1416 = vmatpush1.msra.mxu0 0.0
    %1417 = vmatprep.subr.mxu0 0.0
    %1418 = vmatpush1.msra.mxu0 0.0
    %1419 = vmatprep.subr.mxu0 0.0
    %1420 = vmatpush1.msra.mxu0 0.0
    %1421 = vmatprep.subr.mxu0 0.0
    %1422 = vmatpush1.msra.mxu0 0.0
    %1423 = vmatprep.subr.mxu0 0.0
    %1424 = vmatpush1.msra.mxu0 0.0
    %1425 = vmatprep.subr.mxu0 0.0
    %1426 = vmatpush1.msra.mxu0 0.0
    %1427 = vmatprep.subr.mxu0 0.0
    %1428 = vmatpush1.msra.mxu0 0.0
    %1429 = vmatprep.subr.mxu0 0.0
    %1430 = vmatpush1.msra.mxu0 0.0
    %1431 = vmatprep.subr.mxu0 0.0
    %1432 = vmatpush1.msra.mxu0 0.0
    %1433 = vmatprep.subr.mxu0 0.0
    %1434 = vmatpush1.msra.mxu0 0.0
    %1435 = vmatprep.subr.mxu0 0.0
    %1436 = vmatpush1.msra.mxu0 0.0
    %1437 = vmatprep.subr.mxu0 0.0
    %1438 = vmatpush1.msra.mxu0 0.0
    %1439 = vmatprep.mubr.f32.mxu0 0.0
    %1440 = vmatmul.mubr.f32.gmra.mrb[0].mxu0 %v907
    %v1441 = vpop.f32.mrb[0].mxu0
    %v1442 = vadd.f32 0.0, %v1441
    %v1443 = vpop.f32.mrb[0].mxu0
    %1444 = vmatprep.mubr.f32.mxu0 0.0
    %1445 = vmatmul.mubr.f32.gmra.mrb[0].mxu0 %v910
    %v1446 = vpop.f32.mrb[0].mxu0
    %v1447 = vadd.f32 0.0, %v1446
    %v1448 = vpop.f32.mrb[0].mxu0
    %1449 = vdwg.mxu0
    %v1451 = vsel %vm286, %v1447, 0
    %1453 = vmatprep.subr.mxu0 0.0
    %1454 = vmatpush1.msra.mxu0 %v1442
    %1455 = vmatprep.subr.mxu0 0.0
    %1456 = vmatpush1.msra.mxu0 %v1451
    %1457 = vmatprep.subr.mxu0 0.0
    %1458 = vmatpush1.msra.mxu0 0.0
    %1459 = vmatprep.subr.mxu0 0.0
    %1460 = vmatpush1.msra.mxu0 0.0
    %1461 = vmatprep.subr.mxu0 0.0
    %1462 = vmatpush1.msra.mxu0 0.0
    %1463 = vmatprep.subr.mxu0 0.0
    %1464 = vmatpush1.msra.mxu0 0.0
    %1465 = vmatprep.subr.mxu0 0.0
    %1466 = vmatpush1.msra.mxu0 0.0
    %1467 = vmatprep.subr.mxu0 0.0
    %1468 = vmatpush1.msra.mxu0 0.0
    %1469 = vmatprep.subr.mxu0 0.0
    %1470 = vmatpush1.msra.mxu0 0.0
    %1471 = vmatprep.subr.mxu0 0.0
    %1472 = vmatpush1.msra.mxu0 0.0
    %1473 = vmatprep.subr.mxu0 0.0
    %1474 = vmatpush1.msra.mxu0 0.0
    %1475 = vmatprep.subr.mxu0 0.0
    %1476 = vmatpush1.msra.mxu0 0.0
    %1477 = vmatprep.subr.mxu0 0.0
    %1478 = vmatpush1.msra.mxu0 0.0
    %1479 = vmatprep.subr.mxu0 0.0
    %1480 = vmatpush1.msra.mxu0 0.0
    %1481 = vmatprep.subr.mxu0 0.0
    %1482 = vmatpush1.msra.mxu0 0.0
    %1483 = vmatprep.subr.mxu0 0.0
    %1484 = vmatpush1.msra.mxu0 0.0
    %1485 = vmatprep.subr.mxu0 0.0
    %1486 = vmatpush1.msra.mxu0 0.0
    %1487 = vmatprep.subr.mxu0 0.0
    %1488 = vmatpush1.msra.mxu0 0.0
    %1489 = vmatprep.subr.mxu0 0.0
    %1490 = vmatpush1.msra.mxu0 0.0
    %1491 = vmatprep.subr.mxu0 0.0
    %1492 = vmatpush1.msra.mxu0 0.0
    %1493 = vmatprep.subr.mxu0 0.0
    %1494 = vmatpush1.msra.mxu0 0.0
    %1495 = vmatprep.subr.mxu0 0.0
    %1496 = vmatpush1.msra.mxu0 0.0
    %1497 = vmatprep.subr.mxu0 0.0
    %1498 = vmatpush1.msra.mxu0 0.0
    %1499 = vmatprep.subr.mxu0 0.0
    %1500 = vmatpush1.msra.mxu0 0.0
    %1501 = vmatprep.subr.mxu0 0.0
    %1502 = vmatpush1.msra.mxu0 0.0
    %1503 = vmatprep.subr.mxu0 0.0
    %1504 = vmatpush1.msra.mxu0 0.0
    %1505 = vmatprep.subr.mxu0 0.0
    %1506 = vmatpush1.msra.mxu0 0.0
    %1507 = vmatprep.subr.mxu0 0.0
    %1508 = vmatpush1.msra.mxu0 0.0
    %1509 = vmatprep.subr.mxu0 0.0
    %1510 = vmatpush1.msra.mxu0 0.0
    %1511 = vmatprep.subr.mxu0 0.0
    %1512 = vmatpush1.msra.mxu0 0.0
    %1513 = vmatprep.subr.mxu0 0.0
    %1514 = vmatpush1.msra.mxu0 0.0
    %1515 = vmatprep.subr.mxu0 0.0
    %1516 = vmatpush1.msra.mxu0 0.0
    %1517 = vmatprep.mubr.f32.mxu0 0.0
    %1518 = vmatmul.mubr.f32.gmra.mrb[0].mxu0 %v536
    %v1519 = vpop.f32.mrb[0].mxu0
    %v1520 = vadd.f32 0.0, %v1519
    %v1521 = vpop.f32.mrb[0].mxu0
    %1522 = vmatprep.mubr.f32.mxu0 0.0
    %1523 = vmatmul.mubr.f32.gmra.mrb[0].mxu0 %v539
    %v1524 = vpop.f32.mrb[0].mxu0
    %v1525 = vadd.f32 0.0, %v1524
    %v1526 = vpop.f32.mrb[0].mxu0
    %1527 = vdwg.mxu0
    %v1528 = vrcp.pop %v1520
    %v1529 = vrcp.pop %v1525
    %v1530 = vmul.f32 %v1369, %v1528
    %v1531 = vmul.f32 %v1371, %v1529
    %1533 = vset.pattern.permute.xlu0 0
    %1534 = vperm.xlu0 %1533, %v1530
    %v1535 = vpop.permute.xlu0 %1534
    %1538 = vset.pattern.permute.xlu0 0
    %1539 = vperm.xlu0 %1538, %v1531
    %v1540 = vpop.permute.xlu0 %1539
    %v1542 = vsel %vm616, %v1075, %v1535
    %v1543 = vsel %vm616, %v1080, %v1540
    %v1544 = vmul.f32 %v527, %v1542
    %v1545 = vmul.f32 %v532, %v1543
    %v1547 = vsel %vm286, %v1545, 0
    %1549 = vmatprep.subr.mxu0 0.0
    %1550 = vmatpush1.msra.mxu0 %v1544
    %1551 = vmatprep.subr.mxu0 0.0
    %1552 = vmatpush1.msra.mxu0 %v1547
    %1553 = vmatprep.subr.mxu0 0.0
    %1554 = vmatpush1.msra.mxu0 0.0
    %1555 = vmatprep.subr.mxu0 0.0
    %1556 = vmatpush1.msra.mxu0 0.0
    %1557 = vmatprep.subr.mxu0 0.0
    %1558 = vmatpush1.msra.mxu0 0.0
    %1559 = vmatprep.subr.mxu0 0.0
    %1560 = vmatpush1.msra.mxu0 0.0
    %1561 = vmatprep.subr.mxu0 0.0
    %1562 = vmatpush1.msra.mxu0 0.0
    %1563 = vmatprep.subr.mxu0 0.0
    %1564 = vmatpush1.msra.mxu0 0.0
    %1565 = vmatprep.subr.mxu0 0.0
    %1566 = vmatpush1.msra.mxu0 0.0
    %1567 = vmatprep.subr.mxu0 0.0
    %1568 = vmatpush1.msra.mxu0 0.0
    %1569 = vmatprep.subr.mxu0 0.0
    %1570 = vmatpush1.msra.mxu0 0.0
    %1571 = vmatprep.subr.mxu0 0.0
    %1572 = vmatpush1.msra.mxu0 0.0
    %1573 = vmatprep.subr.mxu0 0.0
    %1574 = vmatpush1.msra.mxu0 0.0
    %1575 = vmatprep.subr.mxu0 0.0
    %1576 = vmatpush1.msra.mxu0 0.0
    %1577 = vmatprep.subr.mxu0 0.0
    %1578 = vmatpush1.msra.mxu0 0.0
    %1579 = vmatprep.subr.mxu0 0.0
    %1580 = vmatpush1.msra.mxu0 0.0
    %1581 = vmatprep.subr.mxu0 0.0
    %1582 = vmatpush1.msra.mxu0 0.0
    %1583 = vmatprep.subr.mxu0 0.0
    %1584 = vmatpush1.msra.mxu0 0.0
    %1585 = vmatprep.subr.mxu0 0.0
    %1586 = vmatpush1.msra.mxu0 0.0
    %1587 = vmatprep.subr.mxu0 0.0
    %1588 = vmatpush1.msra.mxu0 0.0
    %1589 = vmatprep.subr.mxu0 0.0
    %1590 = vmatpush1.msra.mxu0 0.0
    %1591 = vmatprep.subr.mxu0 0.0
    %1592 = vmatpush1.msra.mxu0 0.0
    %1593 = vmatprep.subr.mxu0 0.0
    %1594 = vmatpush1.msra.mxu0 0.0
    %1595 = vmatprep.subr.mxu0 0.0
    %1596 = vmatpush1.msra.mxu0 0.0
    %1597 = vmatprep.subr.mxu0 0.0
    %1598 = vmatpush1.msra.mxu0 0.0
    %1599 = vmatprep.subr.mxu0 0.0
    %1600 = vmatpush1.msra.mxu0 0.0
    %1601 = vmatprep.subr.mxu0 0.0
    %1602 = vmatpush1.msra.mxu0 0.0
    %1603 = vmatprep.subr.mxu0 0.0
    %1604 = vmatpush1.msra.mxu0 0.0
    %1605 = vmatprep.subr.mxu0 0.0
    %1606 = vmatpush1.msra.mxu0 0.0
    %1607 = vmatprep.subr.mxu0 0.0
    %1608 = vmatpush1.msra.mxu0 0.0
    %1609 = vmatprep.subr.mxu0 0.0
    %1610 = vmatpush1.msra.mxu0 0.0
    %1611 = vmatprep.subr.mxu0 0.0
    %1612 = vmatpush1.msra.mxu0 0.0
    %1613 = vmatprep.mubr.f32.mxu0 0.0
    %1614 = vmatmul.mubr.f32.gmra.mrb[0].mxu0 %v907
    %v1615 = vpop.f32.mrb[0].mxu0
    %v1616 = vadd.f32 0.0, %v1615
    %v1617 = vpop.f32.mrb[0].mxu0
    %1618 = vmatprep.mubr.f32.mxu0 0.0
    %1619 = vmatmul.mubr.f32.gmra.mrb[0].mxu0 %v910
    %v1620 = vpop.f32.mrb[0].mxu0
    %v1621 = vadd.f32 0.0, %v1620
    %v1622 = vpop.f32.mrb[0].mxu0
    %1623 = vdwg.mxu0
    %v1624 = vadd.f32 %v443, %v527
    %v1625 = vadd.f32 %v448, %v532
    %v1626 = vadd.f32 %v1624, %v608
    %v1627 = vadd.f32 %v1625, %v613
    %v1628 = vrcp.pop 3.0
    %v1629 = vmul.f32 %v1626, %v1628
    %v1630 = vmul.f32 %v1627, %v1628
    %v1631 = vmax.f32 %v1616, 0.0
    %v1632 = vmax.f32 %v1621, 0.0
    %v1633 = vmax.f32 %v1629, 0.0
    %v1634 = vmax.f32 %v1630, 0.0
    %v1636 = vsel %vm279, %v205, 0
    %v1639 = vsel %vm279, %v206, 0
    %v1642 = vsel %vm286, %v169, 0
    %1644 = vmatprep.subr.mxu0 0.0
    %1645 = vmatpush1.msra.mxu0 %v168
    %1646 = vmatprep.subr.mxu0 0.0
    %1647 = vmatpush1.msra.mxu0 %v1642
    %1648 = vmatprep.subr.mxu0 0.0
    %1649 = vmatpush1.msra.mxu0 0.0
    %1650 = vmatprep.subr.mxu0 0.0
    %1651 = vmatpush1.msra.mxu0 0.0
    %1652 = vmatprep.subr.mxu0 0.0
    %1653 = vmatpush1.msra.mxu0 0.0
    %1654 = vmatprep.subr.mxu0 0.0
    %1655 = vmatpush1.msra.mxu0 0.0
    %1656 = vmatprep.subr.mxu0 0.0
    %1657 = vmatpush1.msra.mxu0 0.0
    %1658 = vmatprep.subr.mxu0 0.0
    %1659 = vmatpush1.msra.mxu0 0.0
    %1660 = vmatprep.subr.mxu0 0.0
    %1661 = vmatpush1.msra.mxu0 0.0
    %1662 = vmatprep.subr.mxu0 0.0
    %1663 = vmatpush1.msra.mxu0 0.0
    %1664 = vmatprep.subr.mxu0 0.0
    %1665 = vmatpush1.msra.mxu0 0.0
    %1666 = vmatprep.subr.mxu0 0.0
    %1667 = vmatpush1.msra.mxu0 0.0
    %1668 = vmatprep.subr.mxu0 0.0
    %1669 = vmatpush1.msra.mxu0 0.0
    %1670 = vmatprep.subr.mxu0 0.0
    %1671 = vmatpush1.msra.mxu0 0.0
    %1672 = vmatprep.subr.mxu0 0.0
    %1673 = vmatpush1.msra.mxu0 0.0
    %1674 = vmatprep.subr.mxu0 0.0
    %1675 = vmatpush1.msra.mxu0 0.0
    %1676 = vmatprep.subr.mxu0 0.0
    %1677 = vmatpush1.msra.mxu0 0.0
    %1678 = vmatprep.subr.mxu0 0.0
    %1679 = vmatpush1.msra.mxu0 0.0
    %1680 = vmatprep.subr.mxu0 0.0
    %1681 = vmatpush1.msra.mxu0 0.0
    %1682 = vmatprep.subr.mxu0 0.0
    %1683 = vmatpush1.msra.mxu0 0.0
    %1684 = vmatprep.subr.mxu0 0.0
    %1685 = vmatpush1.msra.mxu0 0.0
    %1686 = vmatprep.subr.mxu0 0.0
    %1687 = vmatpush1.msra.mxu0 0.0
    %1688 = vmatprep.subr.mxu0 0.0
    %1689 = vmatpush1.msra.mxu0 0.0
    %1690 = vmatprep.subr.mxu0 0.0
    %1691 = vmatpush1.msra.mxu0 0.0
    %1692 = vmatprep.subr.mxu0 0.0
    %1693 = vmatpush1.msra.mxu0 0.0
    %1694 = vmatprep.subr.mxu0 0.0
    %1695 = vmatpush1.msra.mxu0 0.0
    %1696 = vmatprep.subr.mxu0 0.0
    %1697 = vmatpush1.msra.mxu0 0.0
    %1698 = vmatprep.subr.mxu0 0.0
    %1699 = vmatpush1.msra.mxu0 0.0
    %1700 = vmatprep.subr.mxu0 0.0
    %1701 = vmatpush1.msra.mxu0 0.0
    %1702 = vmatprep.subr.mxu0 0.0
    %1703 = vmatpush1.msra.mxu0 0.0
    %1704 = vmatprep.subr.mxu0 0.0
    %1705 = vmatpush1.msra.mxu0 0.0
    %1706 = vmatprep.subr.mxu0 0.0
    %1707 = vmatpush1.msra.mxu0 0.0
    %1708 = vmatprep.mubr.f32.mxu0 0.0
    %1709 = vmatmul.mubr.f32.gmra.mrb[0].mxu0 %v1636
    %v1710 = vpop.f32.mrb[0].mxu0
    %v1711 = vadd.f32 0.0, %v1710
    %v1712 = vpop.f32.mrb[0].mxu0
    %1713 = vmatprep.mubr.f32.mxu0 0.0
    %1714 = vmatmul.mubr.f32.gmra.mrb[0].mxu0 %v1639
    %v1715 = vpop.f32.mrb[0].mxu0
    %v1716 = vadd.f32 0.0, %v1715
    %v1717 = vpop.f32.mrb[0].mxu0
    %1718 = vdwg.mxu0
    %v1720 = vsel %vm365, %v207, 0
    %v1723 = vsel %vm365, %v208, 0
    %v1726 = vsel %vm372, %v173, 0
    %1728 = vmatprep.subr.mxu0 0.0
    %1729 = vmatpush1.msra.mxu0 %v170
    %1730 = vmatprep.subr.mxu0 0.0
    %1731 = vmatpush1.msra.mxu0 %v171
    %1732 = vmatprep.subr.mxu0 0.0
    %1733 = vmatpush1.msra.mxu0 %v172
    %1734 = vmatprep.subr.mxu0 0.0
    %1735 = vmatpush1.msra.mxu0 %v1726
    %1736 = vmatprep.subr.mxu0 0.0
    %1737 = vmatpush1.msra.mxu0 0.0
    %1738 = vmatprep.subr.mxu0 0.0
    %1739 = vmatpush1.msra.mxu0 0.0
    %1740 = vmatprep.subr.mxu0 0.0
    %1741 = vmatpush1.msra.mxu0 0.0
    %1742 = vmatprep.subr.mxu0 0.0
    %1743 = vmatpush1.msra.mxu0 0.0
    %1744 = vmatprep.subr.mxu0 0.0
    %1745 = vmatpush1.msra.mxu0 0.0
    %1746 = vmatprep.subr.mxu0 0.0
    %1747 = vmatpush1.msra.mxu0 0.0
    %1748 = vmatprep.subr.mxu0 0.0
    %1749 = vmatpush1.msra.mxu0 0.0
    %1750 = vmatprep.subr.mxu0 0.0
    %1751 = vmatpush1.msra.mxu0 0.0
    %1752 = vmatprep.subr.mxu0 0.0
    %1753 = vmatpush1.msra.mxu0 0.0
    %1754 = vmatprep.subr.mxu0 0.0
    %1755 = vmatpush1.msra.mxu0 0.0
    %1756 = vmatprep.subr.mxu0 0.0
    %1757 = vmatpush1.msra.mxu0 0.0
    %1758 = vmatprep.subr.mxu0 0.0
    %1759 = vmatpush1.msra.mxu0 0.0
    %1760 = vmatprep.subr.mxu0 0.0
    %1761 = vmatpush1.msra.mxu0 0.0
    %1762 = vmatprep.subr.mxu0 0.0
    %1763 = vmatpush1.msra.mxu0 0.0
    %1764 = vmatprep.subr.mxu0 0.0
    %1765 = vmatpush1.msra.mxu0 0.0
    %1766 = vmatprep.subr.mxu0 0.0
    %1767 = vmatpush1.msra.mxu0 0.0
    %1768 = vmatprep.subr.mxu0 0.0
    %1769 = vmatpush1.msra.mxu0 0.0
    %1770 = vmatprep.subr.mxu0 0.0
    %1771 = vmatpush1.msra.mxu0 0.0
    %1772 = vmatprep.subr.mxu0 0.0
    %1773 = vmatpush1.msra.mxu0 0.0
    %1774 = vmatprep.subr.mxu0 0.0
    %1775 = vmatpush1.msra.mxu0 0.0
    %1776 = vmatprep.subr.mxu0 0.0
    %1777 = vmatpush1.msra.mxu0 0.0
    %1778 = vmatprep.subr.mxu0 0.0
    %1779 = vmatpush1.msra.mxu0 0.0
    %1780 = vmatprep.subr.mxu0 0.0
    %1781 = vmatpush1.msra.mxu0 0.0
    %1782 = vmatprep.subr.mxu0 0.0
    %1783 = vmatpush1.msra.mxu0 0.0
    %1784 = vmatprep.subr.mxu0 0.0
    %1785 = vmatpush1.msra.mxu0 0.0
    %1786 = vmatprep.subr.mxu0 0.0
    %1787 = vmatpush1.msra.mxu0 0.0
    %1788 = vmatprep.subr.mxu0 0.0
    %1789 = vmatpush1.msra.mxu0 0.0
    %1790 = vmatprep.subr.mxu0 0.0
    %1791 = vmatpush1.msra.mxu0 0.0
    %1792 = vmatprep.mubr.f32.mxu0 0.0
    %1793 = vmatmul.mubr.f32.gmra.mrb[0].mxu0 %v1720
    %v1794 = vpop.f32.mrb[0].mxu0
    %v1795 = vadd.f32 0.0, %v1794
    %v1796 = vpop.f32.mrb[0].mxu0
    %1797 = vmatprep.mubr.f32.mxu0 0.0
    %1798 = vmatmul.mubr.f32.gmra.mrb[0].mxu0 %v1723
    %v1799 = vpop.f32.mrb[0].mxu0
    %v1800 = vadd.f32 0.0, %v1799
    %v1801 = vpop.f32.mrb[0].mxu0
    %1802 = vdwg.mxu0
    %v1804 = vsel %vm279, %v209, 0
    %v1807 = vsel %vm279, %v210, 0
    %v1810 = vsel %vm286, %v1716, 0
    %1812 = vmatprep.subr.mxu0 0.0
    %1813 = vmatpush1.msra.mxu0 %v1711
    %1814 = vmatprep.subr.mxu0 0.0
    %1815 = vmatpush1.msra.mxu0 %v1810
    %1816 = vmatprep.subr.mxu0 0.0
    %1817 = vmatpush1.msra.mxu0 0.0
    %1818 = vmatprep.subr.mxu0 0.0
    %1819 = vmatpush1.msra.mxu0 0.0
    %1820 = vmatprep.subr.mxu0 0.0
    %1821 = vmatpush1.msra.mxu0 0.0
    %1822 = vmatprep.subr.mxu0 0.0
    %1823 = vmatpush1.msra.mxu0 0.0
    %1824 = vmatprep.subr.mxu0 0.0
    %1825 = vmatpush1.msra.mxu0 0.0
    %1826 = vmatprep.subr.mxu0 0.0
    %1827 = vmatpush1.msra.mxu0 0.0
    %1828 = vmatprep.subr.mxu0 0.0
    %1829 = vmatpush1.msra.mxu0 0.0
    %1830 = vmatprep.subr.mxu0 0.0
    %1831 = vmatpush1.msra.mxu0 0.0
    %1832 = vmatprep.subr.mxu0 0.0
    %1833 = vmatpush1.msra.mxu0 0.0
    %1834 = vmatprep.subr.mxu0 0.0
    %1835 = vmatpush1.msra.mxu0 0.0
    %1836 = vmatprep.subr.mxu0 0.0
    %1837 = vmatpush1.msra.mxu0 0.0
    %1838 = vmatprep.subr.mxu0 0.0
    %1839 = vmatpush1.msra.mxu0 0.0
    %1840 = vmatprep.subr.mxu0 0.0
    %1841 = vmatpush1.msra.mxu0 0.0
    %1842 = vmatprep.subr.mxu0 0.0
    %1843 = vmatpush1.msra.mxu0 0.0
    %1844 = vmatprep.subr.mxu0 0.0
    %1845 = vmatpush1.msra.mxu0 0.0
    %1846 = vmatprep.subr.mxu0 0.0
    %1847 = vmatpush1.msra.mxu0 0.0
    %1848 = vmatprep.subr.mxu0 0.0
    %1849 = vmatpush1.msra.mxu0 0.0
    %1850 = vmatprep.subr.mxu0 0.0
    %1851 = vmatpush1.msra.mxu0 0.0
    %1852 = vmatprep.subr.mxu0 0.0
    %1853 = vmatpush1.msra.mxu0 0.0
    %1854 = vmatprep.subr.mxu0 0.0
    %1855 = vmatpush1.msra.mxu0 0.0
    %1856 = vmatprep.subr.mxu0 0.0
    %1857 = vmatpush1.msra.mxu0 0.0
    %1858 = vmatprep.subr.mxu0 0.0
    %1859 = vmatpush1.msra.mxu0 0.0
    %1860 = vmatprep.subr.mxu0 0.0
    %1861 = vmatpush1.msra.mxu0 0.0
    %1862 = vmatprep.subr.mxu0 0.0
    %1863 = vmatpush1.msra.mxu0 0.0
    %1864 = vmatprep.subr.mxu0 0.0
    %1865 = vmatpush1.msra.mxu0 0.0
    %1866 = vmatprep.subr.mxu0 0.0
    %1867 = vmatpush1.msra.mxu0 0.0
    %1868 = vmatprep.subr.mxu0 0.0
    %1869 = vmatpush1.msra.mxu0 0.0
    %1870 = vmatprep.subr.mxu0 0.0
    %1871 = vmatpush1.msra.mxu0 0.0
    %1872 = vmatprep.subr.mxu0 0.0
    %1873 = vmatpush1.msra.mxu0 0.0
    %1874 = vmatprep.subr.mxu0 0.0
    %1875 = vmatpush1.msra.mxu0 0.0
    %1876 = vmatprep.mubr.f32.mxu0 0.0
    %1877 = vmatmul.mubr.f32.gmra.mrb[0].mxu0 %v1804
    %v1878 = vpop.f32.mrb[0].mxu0
    %v1879 = vadd.f32 0.0, %v1878
    %v1880 = vpop.f32.mrb[0].mxu0
    %1881 = vmatprep.mubr.f32.mxu0 0.0
    %1882 = vmatmul.mubr.f32.gmra.mrb[0].mxu0 %v1807
    %v1883 = vpop.f32.mrb[0].mxu0
    %v1884 = vadd.f32 0.0, %v1883
    %v1885 = vpop.f32.mrb[0].mxu0
    %1886 = vdwg.mxu0
    %v1888 = vsel %vm279, %v211, 0
    %v1891 = vsel %vm279, %v212, 0
    %1893 = vmatprep.subr.mxu0 0.0
    %1894 = vmatpush1.msra.mxu0 %v1711
    %1895 = vmatprep.subr.mxu0 0.0
    %1896 = vmatpush1.msra.mxu0 %v1810
    %1897 = vmatprep.subr.mxu0 0.0
    %1898 = vmatpush1.msra.mxu0 0.0
    %1899 = vmatprep.subr.mxu0 0.0
    %1900 = vmatpush1.msra.mxu0 0.0
    %1901 = vmatprep.subr.mxu0 0.0
    %1902 = vmatpush1.msra.mxu0 0.0
    %1903 = vmatprep.subr.mxu0 0.0
    %1904 = vmatpush1.msra.mxu0 0.0
    %1905 = vmatprep.subr.mxu0 0.0
    %1906 = vmatpush1.msra.mxu0 0.0
    %1907 = vmatprep.subr.mxu0 0.0
    %1908 = vmatpush1.msra.mxu0 0.0
    %1909 = vmatprep.subr.mxu0 0.0
    %1910 = vmatpush1.msra.mxu0 0.0
    %1911 = vmatprep.subr.mxu0 0.0
    %1912 = vmatpush1.msra.mxu0 0.0
    %1913 = vmatprep.subr.mxu0 0.0
    %1914 = vmatpush1.msra.mxu0 0.0
    %1915 = vmatprep.subr.mxu0 0.0
    %1916 = vmatpush1.msra.mxu0 0.0
    %1917 = vmatprep.subr.mxu0 0.0
    %1918 = vmatpush1.msra.mxu0 0.0
    %1919 = vmatprep.subr.mxu0 0.0
    %1920 = vmatpush1.msra.mxu0 0.0
    %1921 = vmatprep.subr.mxu0 0.0
    %1922 = vmatpush1.msra.mxu0 0.0
    %1923 = vmatprep.subr.mxu0 0.0
    %1924 = vmatpush1.msra.mxu0 0.0
    %1925 = vmatprep.subr.mxu0 0.0
    %1926 = vmatpush1.msra.mxu0 0.0
    %1927 = vmatprep.subr.mxu0 0.0
    %1928 = vmatpush1.msra.mxu0 0.0
    %1929 = vmatprep.subr.mxu0 0.0
    %1930 = vmatpush1.msra.mxu0 0.0
    %1931 = vmatprep.subr.mxu0 0.0
    %1932 = vmatpush1.msra.mxu0 0.0
    %1933 = vmatprep.subr.mxu0 0.0
    %1934 = vmatpush1.msra.mxu0 0.0
    %1935 = vmatprep.subr.mxu0 0.0
    %1936 = vmatpush1.msra.mxu0 0.0
    %1937 = vmatprep.subr.mxu0 0.0
    %1938 = vmatpush1.msra.mxu0 0.0
    %1939 = vmatprep.subr.mxu0 0.0
    %1940 = vmatpush1.msra.mxu0 0.0
    %1941 = vmatprep.subr.mxu0 0.0
    %1942 = vmatpush1.msra.mxu0 0.0
    %1943 = vmatprep.subr.mxu0 0.0
    %1944 = vmatpush1.msra.mxu0 0.0
    %1945 = vmatprep.subr.mxu0 0.0
    %1946 = vmatpush1.msra.mxu0 0.0
    %1947 = vmatprep.subr.mxu0 0.0
    %1948 = vmatpush1.msra.mxu0 0.0
    %1949 = vmatprep.subr.mxu0 0.0
    %1950 = vmatpush1.msra.mxu0 0.0
    %1951 = vmatprep.subr.mxu0 0.0
    %1952 = vmatpush1.msra.mxu0 0.0
    %1953 = vmatprep.subr.mxu0 0.0
    %1954 = vmatpush1.msra.mxu0 0.0
    %1955 = vmatprep.subr.mxu0 0.0
    %1956 = vmatpush1.msra.mxu0 0.0
    %1957 = vmatprep.mubr.f32.mxu0 0.0
    %1958 = vmatmul.mubr.f32.gmra.mrb[0].mxu0 %v1888
    %v1959 = vpop.f32.mrb[0].mxu0
    %v1960 = vadd.f32 0.0, %v1959
    %v1961 = vpop.f32.mrb[0].mxu0
    %1962 = vmatprep.mubr.f32.mxu0 0.0
    %1963 = vmatmul.mubr.f32.gmra.mrb[0].mxu0 %v1891
    %v1964 = vpop.f32.mrb[0].mxu0
    %v1965 = vadd.f32 0.0, %v1964
    %v1966 = vpop.f32.mrb[0].mxu0
    %1967 = vdwg.mxu0
    %v1969 = vsel %vm616, %v1960, 0
    %v1972 = vsel %vm616, %v1965, 0
    %1974 = vmatprep.subr.mxu0 0.0
    %1975 = vmatpush1.msra.mxu0 %v176
    %1976 = vmatprep.subr.mxu0 0.0
    %1977 = vmatpush1.msra.mxu0 0.0
    %1978 = vmatprep.subr.mxu0 0.0
    %1979 = vmatpush1.msra.mxu0 0.0
    %1980 = vmatprep.subr.mxu0 0.0
    %1981 = vmatpush1.msra.mxu0 0.0
    %1982 = vmatprep.subr.mxu0 0.0
    %1983 = vmatpush1.msra.mxu0 0.0
    %1984 = vmatprep.subr.mxu0 0.0
    %1985 = vmatpush1.msra.mxu0 0.0
    %1986 = vmatprep.subr.mxu0 0.0
    %1987 = vmatpush1.msra.mxu0 0.0
    %1988 = vmatprep.subr.mxu0 0.0
    %1989 = vmatpush1.msra.mxu0 0.0
    %1990 = vmatprep.subr.mxu0 0.0
    %1991 = vmatpush1.msra.mxu0 0.0
    %1992 = vmatprep.subr.mxu0 0.0
    %1993 = vmatpush1.msra.mxu0 0.0
    %1994 = vmatprep.subr.mxu0 0.0
    %1995 = vmatpush1.msra.mxu0 0.0
    %1996 = vmatprep.subr.mxu0 0.0
    %1997 = vmatpush1.msra.mxu0 0.0
    %1998 = vmatprep.subr.mxu0 0.0
    %1999 = vmatpush1.msra.mxu0 0.0
    %2000 = vmatprep.subr.mxu0 0.0
    %2001 = vmatpush1.msra.mxu0 0.0
    %2002 = vmatprep.subr.mxu0 0.0
    %2003 = vmatpush1.msra.mxu0 0.0
    %2004 = vmatprep.subr.mxu0 0.0
    %2005 = vmatpush1.msra.mxu0 0.0
    %2006 = vmatprep.subr.mxu0 0.0
    %2007 = vmatpush1.msra.mxu0 0.0
    %2008 = vmatprep.subr.mxu0 0.0
    %2009 = vmatpush1.msra.mxu0 0.0
    %2010 = vmatprep.subr.mxu0 0.0
    %2011 = vmatpush1.msra.mxu0 0.0
    %2012 = vmatprep.subr.mxu0 0.0
    %2013 = vmatpush1.msra.mxu0 0.0
    %2014 = vmatprep.subr.mxu0 0.0
    %2015 = vmatpush1.msra.mxu0 0.0
    %2016 = vmatprep.subr.mxu0 0.0
    %2017 = vmatpush1.msra.mxu0 0.0
    %2018 = vmatprep.subr.mxu0 0.0
    %2019 = vmatpush1.msra.mxu0 0.0
    %2020 = vmatprep.subr.mxu0 0.0
    %2021 = vmatpush1.msra.mxu0 0.0
    %2022 = vmatprep.subr.mxu0 0.0
    %2023 = vmatpush1.msra.mxu0 0.0
    %2024 = vmatprep.subr.mxu0 0.0
    %2025 = vmatpush1.msra.mxu0 0.0
    %2026 = vmatprep.subr.mxu0 0.0
    %2027 = vmatpush1.msra.mxu0 0.0
    %2028 = vmatprep.subr.mxu0 0.0
    %2029 = vmatpush1.msra.mxu0 0.0
    %2030 = vmatprep.subr.mxu0 0.0
    %2031 = vmatpush1.msra.mxu0 0.0
    %2032 = vmatprep.subr.mxu0 0.0
    %2033 = vmatpush1.msra.mxu0 0.0
    %2034 = vmatprep.subr.mxu0 0.0
    %2035 = vmatpush1.msra.mxu0 0.0
    %2036 = vmatprep.subr.mxu0 0.0
    %2037 = vmatpush1.msra.mxu0 0.0
    %2038 = vmatprep.mubr.f32.mxu0 0.0
    %2039 = vmatmul.mubr.f32.gmra.mrb[0].mxu0 %v1969
    %v2040 = vpop.f32.mrb[0].mxu0
    %v2041 = vadd.f32 0.0, %v2040
    %v2042 = vpop.f32.mrb[0].mxu0
    %2043 = vmatprep.mubr.f32.mxu0 0.0
    %2044 = vmatmul.mubr.f32.gmra.mrb[0].mxu0 %v1972
    %v2045 = vpop.f32.mrb[0].mxu0
    %v2046 = vadd.f32 0.0, %v2045
    %v2047 = vpop.f32.mrb[0].mxu0
    %2048 = vdwg.mxu0
    %v2050 = vsel %vm616, %v1879, 0
    %v2053 = vsel %vm616, %v1884, 0
    %2055 = vmatprep.subr.mxu0 0.0
    %2056 = vmatpush1.msra.mxu0 %v174
    %2057 = vmatprep.subr.mxu0 0.0
    %2058 = vmatpush1.msra.mxu0 0.0
    %2059 = vmatprep.subr.mxu0 0.0
    %2060 = vmatpush1.msra.mxu0 0.0
    %2061 = vmatprep.subr.mxu0 0.0
    %2062 = vmatpush1.msra.mxu0 0.0
    %2063 = vmatprep.subr.mxu0 0.0
    %2064 = vmatpush1.msra.mxu0 0.0
    %2065 = vmatprep.subr.mxu0 0.0
    %2066 = vmatpush1.msra.mxu0 0.0
    %2067 = vmatprep.subr.mxu0 0.0
    %2068 = vmatpush1.msra.mxu0 0.0
    %2069 = vmatprep.subr.mxu0 0.0
    %2070 = vmatpush1.msra.mxu0 0.0
    %2071 = vmatprep.subr.mxu0 0.0
    %2072 = vmatpush1.msra.mxu0 0.0
    %2073 = vmatprep.subr.mxu0 0.0
    %2074 = vmatpush1.msra.mxu0 0.0
    %2075 = vmatprep.subr.mxu0 0.0
    %2076 = vmatpush1.msra.mxu0 0.0
    %2077 = vmatprep.subr.mxu0 0.0
    %2078 = vmatpush1.msra.mxu0 0.0
    %2079 = vmatprep.subr.mxu0 0.0
    %2080 = vmatpush1.msra.mxu0 0.0
    %2081 = vmatprep.subr.mxu0 0.0
    %2082 = vmatpush1.msra.mxu0 0.0
    %2083 = vmatprep.subr.mxu0 0.0
    %2084 = vmatpush1.msra.mxu0 0.0
    %2085 = vmatprep.subr.mxu0 0.0
    %2086 = vmatpush1.msra.mxu0 0.0
    %2087 = vmatprep.subr.mxu0 0.0
    %2088 = vmatpush1.msra.mxu0 0.0
    %2089 = vmatprep.subr.mxu0 0.0
    %2090 = vmatpush1.msra.mxu0 0.0
    %2091 = vmatprep.subr.mxu0 0.0
    %2092 = vmatpush1.msra.mxu0 0.0
    %2093 = vmatprep.subr.mxu0 0.0
    %2094 = vmatpush1.msra.mxu0 0.0
    %2095 = vmatprep.subr.mxu0 0.0
    %2096 = vmatpush1.msra.mxu0 0.0
    %2097 = vmatprep.subr.mxu0 0.0
    %2098 = vmatpush1.msra.mxu0 0.0
    %2099 = vmatprep.subr.mxu0 0.0
    %2100 = vmatpush1.msra.mxu0 0.0
    %2101 = vmatprep.subr.mxu0 0.0
    %2102 = vmatpush1.msra.mxu0 0.0
    %2103 = vmatprep.subr.mxu0 0.0
    %2104 = vmatpush1.msra.mxu0 0.0
    %2105 = vmatprep.subr.mxu0 0.0
    %2106 = vmatpush1.msra.mxu0 0.0
    %2107 = vmatprep.subr.mxu0 0.0
    %2108 = vmatpush1.msra.mxu0 0.0
    %2109 = vmatprep.subr.mxu0 0.0
    %2110 = vmatpush1.msra.mxu0 0.0
    %2111 = vmatprep.subr.mxu0 0.0
    %2112 = vmatpush1.msra.mxu0 0.0
    %2113 = vmatprep.subr.mxu0 0.0
    %2114 = vmatpush1.msra.mxu0 0.0
    %2115 = vmatprep.subr.mxu0 0.0
    %2116 = vmatpush1.msra.mxu0 0.0
    %2117 = vmatprep.subr.mxu0 0.0
    %2118 = vmatpush1.msra.mxu0 0.0
    %2119 = vmatprep.mubr.f32.mxu0 0.0
    %2120 = vmatmul.mubr.f32.gmra.mrb[0].mxu0 %v2050
    %v2121 = vpop.f32.mrb[0].mxu0
    %v2122 = vadd.f32 %v2041, %v2121
    %v2123 = vpop.f32.mrb[0].mxu0
    %2124 = vmatprep.mubr.f32.mxu0 0.0
    %2125 = vmatmul.mubr.f32.gmra.mrb[0].mxu0 %v2053
    %v2126 = vpop.f32.mrb[0].mxu0
    %v2127 = vadd.f32 %v2046, %v2126
    %v2128 = vpop.f32.mrb[0].mxu0
    %2129 = vdwg.mxu0
    %v2131 = vsel %vm616, %v1795, 0
    %v2134 = vsel %vm616, %v1800, 0
    %2136 = vmatprep.subr.mxu0 0.0
    %2137 = vmatpush1.msra.mxu0 %v178
    %2138 = vmatprep.subr.mxu0 0.0
    %2139 = vmatpush1.msra.mxu0 0.0
    %2140 = vmatprep.subr.mxu0 0.0
    %2141 = vmatpush1.msra.mxu0 0.0
    %2142 = vmatprep.subr.mxu0 0.0
    %2143 = vmatpush1.msra.mxu0 0.0
    %2144 = vmatprep.subr.mxu0 0.0
    %2145 = vmatpush1.msra.mxu0 0.0
    %2146 = vmatprep.subr.mxu0 0.0
    %2147 = vmatpush1.msra.mxu0 0.0
    %2148 = vmatprep.subr.mxu0 0.0
    %2149 = vmatpush1.msra.mxu0 0.0
    %2150 = vmatprep.subr.mxu0 0.0
    %2151 = vmatpush1.msra.mxu0 0.0
    %2152 = vmatprep.subr.mxu0 0.0
    %2153 = vmatpush1.msra.mxu0 0.0
    %2154 = vmatprep.subr.mxu0 0.0
    %2155 = vmatpush1.msra.mxu0 0.0
    %2156 = vmatprep.subr.mxu0 0.0
    %2157 = vmatpush1.msra.mxu0 0.0
    %2158 = vmatprep.subr.mxu0 0.0
    %2159 = vmatpush1.msra.mxu0 0.0
    %2160 = vmatprep.subr.mxu0 0.0
    %2161 = vmatpush1.msra.mxu0 0.0
    %2162 = vmatprep.subr.mxu0 0.0
    %2163 = vmatpush1.msra.mxu0 0.0
    %2164 = vmatprep.subr.mxu0 0.0
    %2165 = vmatpush1.msra.mxu0 0.0
    %2166 = vmatprep.subr.mxu0 0.0
    %2167 = vmatpush1.msra.mxu0 0.0
    %2168 = vmatprep.subr.mxu0 0.0
    %2169 = vmatpush1.msra.mxu0 0.0
    %2170 = vmatprep.subr.mxu0 0.0
    %2171 = vmatpush1.msra.mxu0 0.0
    %2172 = vmatprep.subr.mxu0 0.0
    %2173 = vmatpush1.msra.mxu0 0.0
    %2174 = vmatprep.subr.mxu0 0.0
    %2175 = vmatpush1.msra.mxu0 0.0
    %2176 = vmatprep.subr.mxu0 0.0
    %2177 = vmatpush1.msra.mxu0 0.0
    %2178 = vmatprep.subr.mxu0 0.0
    %2179 = vmatpush1.msra.mxu0 0.0
    %2180 = vmatprep.subr.mxu0 0.0
    %2181 = vmatpush1.msra.mxu0 0.0
    %2182 = vmatprep.subr.mxu0 0.0
    %2183 = vmatpush1.msra.mxu0 0.0
    %2184 = vmatprep.subr.mxu0 0.0
    %2185 = vmatpush1.msra.mxu0 0.0
    %2186 = vmatprep.subr.mxu0 0.0
    %2187 = vmatpush1.msra.mxu0 0.0
    %2188 = vmatprep.subr.mxu0 0.0
    %2189 = vmatpush1.msra.mxu0 0.0
    %2190 = vmatprep.subr.mxu0 0.0
    %2191 = vmatpush1.msra.mxu0 0.0
    %2192 = vmatprep.subr.mxu0 0.0
    %2193 = vmatpush1.msra.mxu0 0.0
    %2194 = vmatprep.subr.mxu0 0.0
    %2195 = vmatpush1.msra.mxu0 0.0
    %2196 = vmatprep.subr.mxu0 0.0
    %2197 = vmatpush1.msra.mxu0 0.0
    %2198 = vmatprep.subr.mxu0 0.0
    %2199 = vmatpush1.msra.mxu0 0.0
    %2200 = vmatprep.mubr.f32.mxu0 0.0
    %2201 = vmatmul.mubr.f32.gmra.mrb[0].mxu0 %v2131
    %v2202 = vpop.f32.mrb[0].mxu0
    %v2203 = vadd.f32 0.0, %v2202
    %v2204 = vpop.f32.mrb[0].mxu0
    %2205 = vmatprep.mubr.f32.mxu0 0.0
    %2206 = vmatmul.mubr.f32.gmra.mrb[0].mxu0 %v2134
    %v2207 = vpop.f32.mrb[0].mxu0
    %v2208 = vadd.f32 0.0, %v2207
    %v2209 = vpop.f32.mrb[0].mxu0
    %2210 = vdwg.mxu0
    %v2211 = vadd.f32 %v2122, %v2203
    %v2212 = vadd.f32 %v2127, %v2208
    %v2213 = vmul.f32 %v2211, %v213
    %v2214 = vmul.f32 %v2212, %v214
    %v2215 = vsel %vm864, %v2213, 0.0
    %2216 = vadd.xlane.f32.xlu0 %v2215
    %v2217 = vpop.xlane.xlu0 %2216
    %v2218 = vsel %vm868, %v2214, 0.0
    %2219 = vadd.xlane.f32.xlu0 %v2218
    %v2220 = vpop.xlane.xlu0 %2219
    %vm2221 = vcmp.ge.f32.partialorder %v2217, 0.0
    %vm2222 = vcmp.ge.f32.partialorder %v2220, 0.0
    %v2223 = vmul.f32 %v2217, 0.2
    %v2224 = vmul.f32 %v2220, 0.2
    %v2225 = vsel %vm2221, %v2217, %v2223
    %v2226 = vsel %vm2222, %v2220, %v2224
    %vm2227 = vcmp.gt.f32.partialorder %v211, 0.0
    %vm2228 = vcmp.gt.f32.partialorder %v212, 0.0
    %v2229 = vsel %vm2227, %v2225, -1e+30
    %v2230 = vsel %vm2228, %v2226, -1e+30
    %v2231 = vsel %vm279, %v2229, -inf
    %v2232 = vsel %vm883, %v2230, -inf
    %v2233 = vmax.f32 %v2231, %v2232
    %v2234 = vrot.slane %v2233, 4
    %v2235 = vmax.f32 %v2233, %v2234
    %v2236 = vrot.slane %v2235, 2
    %v2237 = vmax.f32 %v2235, %v2236
    %v2238 = vrot.slane %v2237, 1
    %v2239 = vmax.f32 %v2237, %v2238
    %v2240 = vmul.f32 %v211, %v2239
    %v2241 = vmul.f32 %v212, %v2239
    %v2242 = vsel %vm279, %v2240, 0.0
    %2243 = vadd.xlane.f32.xlu0 %v2242
    %v2244 = vpop.xlane.xlu0 %2243
    %v2245 = vsel %vm883, %v2241, 0.0
    %2246 = vadd.xlane.f32.xlu0 %v2245
    %v2247 = vpop.xlane.xlu0 %2246
    %v2248 = vsub.f32 %v2225, %v2244
    %v2249 = vsub.f32 %v2226, %v2247
    %v2250 = vmul.f32 %v2248, 1.442695
    %v2251 = vpow.pop %v2250
    %v2252 = vmul.f32 %v2249, 1.442695
    %v2253 = vpow.pop %v2252
    %v2255 = vsel %vm279, %v263, 0
    %v2258 = vsel %vm279, %v264, 0
    %v2261 = vsel %vm286, %v2253, 0
    %2263 = vmatprep.subr.mxu0 0.0
    %2264 = vmatpush1.msra.mxu0 %v2251
    %2265 = vmatprep.subr.mxu0 0.0
    %2266 = vmatpush1.msra.mxu0 %v2261
    %2267 = vmatprep.subr.mxu0 0.0
    %2268 = vmatpush1.msra.mxu0 0.0
    %2269 = vmatprep.subr.mxu0 0.0
    %2270 = vmatpush1.msra.mxu0 0.0
    %2271 = vmatprep.subr.mxu0 0.0
    %2272 = vmatpush1.msra.mxu0 0.0
    %2273 = vmatprep.subr.mxu0 0.0
    %2274 = vmatpush1.msra.mxu0 0.0
    %2275 = vmatprep.subr.mxu0 0.0
    %2276 = vmatpush1.msra.mxu0 0.0
    %2277 = vmatprep.subr.mxu0 0.0
    %2278 = vmatpush1.msra.mxu0 0.0
    %2279 = vmatprep.subr.mxu0 0.0
    %2280 = vmatpush1.msra.mxu0 0.0
    %2281 = vmatprep.subr.mxu0 0.0
    %2282 = vmatpush1.msra.mxu0 0.0
    %2283 = vmatprep.subr.mxu0 0.0
    %2284 = vmatpush1.msra.mxu0 0.0
    %2285 = vmatprep.subr.mxu0 0.0
    %2286 = vmatpush1.msra.mxu0 0.0
    %2287 = vmatprep.subr.mxu0 0.0
    %2288 = vmatpush1.msra.mxu0 0.0
    %2289 = vmatprep.subr.mxu0 0.0
    %2290 = vmatpush1.msra.mxu0 0.0
    %2291 = vmatprep.subr.mxu0 0.0
    %2292 = vmatpush1.msra.mxu0 0.0
    %2293 = vmatprep.subr.mxu0 0.0
    %2294 = vmatpush1.msra.mxu0 0.0
    %2295 = vmatprep.subr.mxu0 0.0
    %2296 = vmatpush1.msra.mxu0 0.0
    %2297 = vmatprep.subr.mxu0 0.0
    %2298 = vmatpush1.msra.mxu0 0.0
    %2299 = vmatprep.subr.mxu0 0.0
    %2300 = vmatpush1.msra.mxu0 0.0
    %2301 = vmatprep.subr.mxu0 0.0
    %2302 = vmatpush1.msra.mxu0 0.0
    %2303 = vmatprep.subr.mxu0 0.0
    %2304 = vmatpush1.msra.mxu0 0.0
    %2305 = vmatprep.subr.mxu0 0.0
    %2306 = vmatpush1.msra.mxu0 0.0
    %2307 = vmatprep.subr.mxu0 0.0
    %2308 = vmatpush1.msra.mxu0 0.0
    %2309 = vmatprep.subr.mxu0 0.0
    %2310 = vmatpush1.msra.mxu0 0.0
    %2311 = vmatprep.subr.mxu0 0.0
    %2312 = vmatpush1.msra.mxu0 0.0
    %2313 = vmatprep.subr.mxu0 0.0
    %2314 = vmatpush1.msra.mxu0 0.0
    %2315 = vmatprep.subr.mxu0 0.0
    %2316 = vmatpush1.msra.mxu0 0.0
    %2317 = vmatprep.subr.mxu0 0.0
    %2318 = vmatpush1.msra.mxu0 0.0
    %2319 = vmatprep.subr.mxu0 0.0
    %2320 = vmatpush1.msra.mxu0 0.0
    %2321 = vmatprep.subr.mxu0 0.0
    %2322 = vmatpush1.msra.mxu0 0.0
    %2323 = vmatprep.subr.mxu0 0.0
    %2324 = vmatpush1.msra.mxu0 0.0
    %2325 = vmatprep.subr.mxu0 0.0
    %2326 = vmatpush1.msra.mxu0 0.0
    %2327 = vmatprep.mubr.f32.mxu0 0.0
    %2328 = vmatmul.mubr.f32.gmra.mrb[0].mxu0 %v2255
    %v2329 = vpop.f32.mrb[0].mxu0
    %v2330 = vadd.f32 0.0, %v2329
    %v2331 = vpop.f32.mrb[0].mxu0
    %2332 = vmatprep.mubr.f32.mxu0 0.0
    %2333 = vmatmul.mubr.f32.gmra.mrb[0].mxu0 %v2258
    %v2334 = vpop.f32.mrb[0].mxu0
    %v2335 = vadd.f32 0.0, %v2334
    %v2336 = vpop.f32.mrb[0].mxu0
    %2337 = vdwg.mxu0
    %v2339 = vsel %vm286, %v2335, 0
    %2341 = vmatprep.subr.mxu0 0.0
    %2342 = vmatpush1.msra.mxu0 %v2330
    %2343 = vmatprep.subr.mxu0 0.0
    %2344 = vmatpush1.msra.mxu0 %v2339
    %2345 = vmatprep.subr.mxu0 0.0
    %2346 = vmatpush1.msra.mxu0 0.0
    %2347 = vmatprep.subr.mxu0 0.0
    %2348 = vmatpush1.msra.mxu0 0.0
    %2349 = vmatprep.subr.mxu0 0.0
    %2350 = vmatpush1.msra.mxu0 0.0
    %2351 = vmatprep.subr.mxu0 0.0
    %2352 = vmatpush1.msra.mxu0 0.0
    %2353 = vmatprep.subr.mxu0 0.0
    %2354 = vmatpush1.msra.mxu0 0.0
    %2355 = vmatprep.subr.mxu0 0.0
    %2356 = vmatpush1.msra.mxu0 0.0
    %2357 = vmatprep.subr.mxu0 0.0
    %2358 = vmatpush1.msra.mxu0 0.0
    %2359 = vmatprep.subr.mxu0 0.0
    %2360 = vmatpush1.msra.mxu0 0.0
    %2361 = vmatprep.subr.mxu0 0.0
    %2362 = vmatpush1.msra.mxu0 0.0
    %2363 = vmatprep.subr.mxu0 0.0
    %2364 = vmatpush1.msra.mxu0 0.0
    %2365 = vmatprep.subr.mxu0 0.0
    %2366 = vmatpush1.msra.mxu0 0.0
    %2367 = vmatprep.subr.mxu0 0.0
    %2368 = vmatpush1.msra.mxu0 0.0
    %2369 = vmatprep.subr.mxu0 0.0
    %2370 = vmatpush1.msra.mxu0 0.0
    %2371 = vmatprep.subr.mxu0 0.0
    %2372 = vmatpush1.msra.mxu0 0.0
    %2373 = vmatprep.subr.mxu0 0.0
    %2374 = vmatpush1.msra.mxu0 0.0
    %2375 = vmatprep.subr.mxu0 0.0
    %2376 = vmatpush1.msra.mxu0 0.0
    %2377 = vmatprep.subr.mxu0 0.0
    %2378 = vmatpush1.msra.mxu0 0.0
    %2379 = vmatprep.subr.mxu0 0.0
    %2380 = vmatpush1.msra.mxu0 0.0
    %2381 = vmatprep.subr.mxu0 0.0
    %2382 = vmatpush1.msra.mxu0 0.0
    %2383 = vmatprep.subr.mxu0 0.0
    %2384 = vmatpush1.msra.mxu0 0.0
    %2385 = vmatprep.subr.mxu0 0.0
    %2386 = vmatpush1.msra.mxu0 0.0
    %2387 = vmatprep.subr.mxu0 0.0
    %2388 = vmatpush1.msra.mxu0 0.0
    %2389 = vmatprep.subr.mxu0 0.0
    %2390 = vmatpush1.msra.mxu0 0.0
    %2391 = vmatprep.subr.mxu0 0.0
    %2392 = vmatpush1.msra.mxu0 0.0
    %2393 = vmatprep.subr.mxu0 0.0
    %2394 = vmatpush1.msra.mxu0 0.0
    %2395 = vmatprep.subr.mxu0 0.0
    %2396 = vmatpush1.msra.mxu0 0.0
    %2397 = vmatprep.subr.mxu0 0.0
    %2398 = vmatpush1.msra.mxu0 0.0
    %2399 = vmatprep.subr.mxu0 0.0
    %2400 = vmatpush1.msra.mxu0 0.0
    %2401 = vmatprep.subr.mxu0 0.0
    %2402 = vmatpush1.msra.mxu0 0.0
    %2403 = vmatprep.subr.mxu0 0.0
    %2404 = vmatpush1.msra.mxu0 0.0
    %2405 = vmatprep.mubr.f32.mxu0 0.0
    %2406 = vmatmul.mubr.f32.gmra.mrb[0].mxu0 %v1888
    %v2407 = vpop.f32.mrb[0].mxu0
    %v2408 = vadd.f32 0.0, %v2407
    %v2409 = vpop.f32.mrb[0].mxu0
    %2410 = vmatprep.mubr.f32.mxu0 0.0
    %2411 = vmatmul.mubr.f32.gmra.mrb[0].mxu0 %v1891
    %v2412 = vpop.f32.mrb[0].mxu0
    %v2413 = vadd.f32 0.0, %v2412
    %v2414 = vpop.f32.mrb[0].mxu0
    %2415 = vdwg.mxu0
    %v2416 = vrcp.pop %v2408
    %v2417 = vrcp.pop %v2413
    %v2418 = vmul.f32 %v2251, %v2416
    %v2419 = vmul.f32 %v2253, %v2417
    %2421 = vset.pattern.permute.xlu0 0
    %2422 = vperm.xlu0 %2421, %v2418
    %v2423 = vpop.permute.xlu0 %2422
    %2426 = vset.pattern.permute.xlu0 0
    %2427 = vperm.xlu0 %2426, %v2419
    %v2428 = vpop.permute.xlu0 %2427
    %2430 = vrot.lane.b32.xlu0 %v1960, 120
    %v2431 = vpop.permute.xlu0 %2430
    %2432 = vrot.lane.b32.xlu0 %v1965, 120
    %v2433 = vpop.permute.xlu0 %2432
    %v2434 = vsel %vm616, %v2431, 0
    %v2436 = vsel %vm616, %v2433, 0
    %2438 = vmatprep.subr.mxu0 0.0
    %2439 = vmatpush1.msra.mxu0 %v177
    %2440 = vmatprep.subr.mxu0 0.0
    %2441 = vmatpush1.msra.mxu0 0.0
    %2442 = vmatprep.subr.mxu0 0.0
    %2443 = vmatpush1.msra.mxu0 0.0
    %2444 = vmatprep.subr.mxu0 0.0
    %2445 = vmatpush1.msra.mxu0 0.0
    %2446 = vmatprep.subr.mxu0 0.0
    %2447 = vmatpush1.msra.mxu0 0.0
    %2448 = vmatprep.subr.mxu0 0.0
    %2449 = vmatpush1.msra.mxu0 0.0
    %2450 = vmatprep.subr.mxu0 0.0
    %2451 = vmatpush1.msra.mxu0 0.0
    %2452 = vmatprep.subr.mxu0 0.0
    %2453 = vmatpush1.msra.mxu0 0.0
    %2454 = vmatprep.subr.mxu0 0.0
    %2455 = vmatpush1.msra.mxu0 0.0
    %2456 = vmatprep.subr.mxu0 0.0
    %2457 = vmatpush1.msra.mxu0 0.0
    %2458 = vmatprep.subr.mxu0 0.0
    %2459 = vmatpush1.msra.mxu0 0.0
    %2460 = vmatprep.subr.mxu0 0.0
    %2461 = vmatpush1.msra.mxu0 0.0
    %2462 = vmatprep.subr.mxu0 0.0
    %2463 = vmatpush1.msra.mxu0 0.0
    %2464 = vmatprep.subr.mxu0 0.0
    %2465 = vmatpush1.msra.mxu0 0.0
    %2466 = vmatprep.subr.mxu0 0.0
    %2467 = vmatpush1.msra.mxu0 0.0
    %2468 = vmatprep.subr.mxu0 0.0
    %2469 = vmatpush1.msra.mxu0 0.0
    %2470 = vmatprep.subr.mxu0 0.0
    %2471 = vmatpush1.msra.mxu0 0.0
    %2472 = vmatprep.subr.mxu0 0.0
    %2473 = vmatpush1.msra.mxu0 0.0
    %2474 = vmatprep.subr.mxu0 0.0
    %2475 = vmatpush1.msra.mxu0 0.0
    %2476 = vmatprep.subr.mxu0 0.0
    %2477 = vmatpush1.msra.mxu0 0.0
    %2478 = vmatprep.subr.mxu0 0.0
    %2479 = vmatpush1.msra.mxu0 0.0
    %2480 = vmatprep.subr.mxu0 0.0
    %2481 = vmatpush1.msra.mxu0 0.0
    %2482 = vmatprep.subr.mxu0 0.0
    %2483 = vmatpush1.msra.mxu0 0.0
    %2484 = vmatprep.subr.mxu0 0.0
    %2485 = vmatpush1.msra.mxu0 0.0
    %2486 = vmatprep.subr.mxu0 0.0
    %2487 = vmatpush1.msra.mxu0 0.0
    %2488 = vmatprep.subr.mxu0 0.0
    %2489 = vmatpush1.msra.mxu0 0.0
    %2490 = vmatprep.subr.mxu0 0.0
    %2491 = vmatpush1.msra.mxu0 0.0
    %2492 = vmatprep.subr.mxu0 0.0
    %2493 = vmatpush1.msra.mxu0 0.0
    %2494 = vmatprep.subr.mxu0 0.0
    %2495 = vmatpush1.msra.mxu0 0.0
    %2496 = vmatprep.subr.mxu0 0.0
    %2497 = vmatpush1.msra.mxu0 0.0
    %2498 = vmatprep.subr.mxu0 0.0
    %2499 = vmatpush1.msra.mxu0 0.0
    %2500 = vmatprep.subr.mxu0 0.0
    %2501 = vmatpush1.msra.mxu0 0.0
    %2502 = vmatprep.mubr.f32.mxu0 0.0
    %2503 = vmatmul.mubr.f32.gmra.mrb[0].mxu0 %v2434
    %v2504 = vpop.f32.mrb[0].mxu0
    %v2505 = vadd.f32 0.0, %v2504
    %v2506 = vpop.f32.mrb[0].mxu0
    %2507 = vmatprep.mubr.f32.mxu0 0.0
    %2508 = vmatmul.mubr.f32.gmra.mrb[0].mxu0 %v2436
    %v2509 = vpop.f32.mrb[0].mxu0
    %v2510 = vadd.f32 0.0, %v2509
    %v2511 = vpop.f32.mrb[0].mxu0
    %2512 = vdwg.mxu0
    %2513 = vrot.lane.b32.xlu0 %v1879, 120
    %v2514 = vpop.permute.xlu0 %2513
    %2515 = vrot.lane.b32.xlu0 %v1884, 120
    %v2516 = vpop.permute.xlu0 %2515
    %v2517 = vsel %vm616, %v2514, 0
    %v2519 = vsel %vm616, %v2516, 0
    %2521 = vmatprep.subr.mxu0 0.0
    %2522 = vmatpush1.msra.mxu0 %v175
    %2523 = vmatprep.subr.mxu0 0.0
    %2524 = vmatpush1.msra.mxu0 0.0
    %2525 = vmatprep.subr.mxu0 0.0
    %2526 = vmatpush1.msra.mxu0 0.0
    %2527 = vmatprep.subr.mxu0 0.0
    %2528 = vmatpush1.msra.mxu0 0.0
    %2529 = vmatprep.subr.mxu0 0.0
    %2530 = vmatpush1.msra.mxu0 0.0
    %2531 = vmatprep.subr.mxu0 0.0
    %2532 = vmatpush1.msra.mxu0 0.0
    %2533 = vmatprep.subr.mxu0 0.0
    %2534 = vmatpush1.msra.mxu0 0.0
    %2535 = vmatprep.subr.mxu0 0.0
    %2536 = vmatpush1.msra.mxu0 0.0
    %2537 = vmatprep.subr.mxu0 0.0
    %2538 = vmatpush1.msra.mxu0 0.0
    %2539 = vmatprep.subr.mxu0 0.0
    %2540 = vmatpush1.msra.mxu0 0.0
    %2541 = vmatprep.subr.mxu0 0.0
    %2542 = vmatpush1.msra.mxu0 0.0
    %2543 = vmatprep.subr.mxu0 0.0
    %2544 = vmatpush1.msra.mxu0 0.0
    %2545 = vmatprep.subr.mxu0 0.0
    %2546 = vmatpush1.msra.mxu0 0.0
    %2547 = vmatprep.subr.mxu0 0.0
    %2548 = vmatpush1.msra.mxu0 0.0
    %2549 = vmatprep.subr.mxu0 0.0
    %2550 = vmatpush1.msra.mxu0 0.0
    %2551 = vmatprep.subr.mxu0 0.0
    %2552 = vmatpush1.msra.mxu0 0.0
    %2553 = vmatprep.subr.mxu0 0.0
    %2554 = vmatpush1.msra.mxu0 0.0
    %2555 = vmatprep.subr.mxu0 0.0
    %2556 = vmatpush1.msra.mxu0 0.0
    %2557 = vmatprep.subr.mxu0 0.0
    %2558 = vmatpush1.msra.mxu0 0.0
    %2559 = vmatprep.subr.mxu0 0.0
    %2560 = vmatpush1.msra.mxu0 0.0
    %2561 = vmatprep.subr.mxu0 0.0
    %2562 = vmatpush1.msra.mxu0 0.0
    %2563 = vmatprep.subr.mxu0 0.0
    %2564 = vmatpush1.msra.mxu0 0.0
    %2565 = vmatprep.subr.mxu0 0.0
    %2566 = vmatpush1.msra.mxu0 0.0
    %2567 = vmatprep.subr.mxu0 0.0
    %2568 = vmatpush1.msra.mxu0 0.0
    %2569 = vmatprep.subr.mxu0 0.0
    %2570 = vmatpush1.msra.mxu0 0.0
    %2571 = vmatprep.subr.mxu0 0.0
    %2572 = vmatpush1.msra.mxu0 0.0
    %2573 = vmatprep.subr.mxu0 0.0
    %2574 = vmatpush1.msra.mxu0 0.0
    %2575 = vmatprep.subr.mxu0 0.0
    %2576 = vmatpush1.msra.mxu0 0.0
    %2577 = vmatprep.subr.mxu0 0.0
    %2578 = vmatpush1.msra.mxu0 0.0
    %2579 = vmatprep.subr.mxu0 0.0
    %2580 = vmatpush1.msra.mxu0 0.0
    %2581 = vmatprep.subr.mxu0 0.0
    %2582 = vmatpush1.msra.mxu0 0.0
    %2583 = vmatprep.subr.mxu0 0.0
    %2584 = vmatpush1.msra.mxu0 0.0
    %2585 = vmatprep.mubr.f32.mxu0 0.0
    %2586 = vmatmul.mubr.f32.gmra.mrb[0].mxu0 %v2517
    %v2587 = vpop.f32.mrb[0].mxu0
    %v2588 = vadd.f32 %v2505, %v2587
    %v2589 = vpop.f32.mrb[0].mxu0
    %2590 = vmatprep.mubr.f32.mxu0 0.0
    %2591 = vmatmul.mubr.f32.gmra.mrb[0].mxu0 %v2519
    %v2592 = vpop.f32.mrb[0].mxu0
    %v2593 = vadd.f32 %v2510, %v2592
    %v2594 = vpop.f32.mrb[0].mxu0
    %2595 = vdwg.mxu0
    %2596 = vrot.lane.b32.xlu0 %v1795, 120
    %v2597 = vpop.permute.xlu0 %2596
    %2598 = vrot.lane.b32.xlu0 %v1800, 120
    %v2599 = vpop.permute.xlu0 %2598
    %v2600 = vsel %vm616, %v2597, 0
    %v2602 = vsel %vm616, %v2599, 0
    %2604 = vmatprep.subr.mxu0 0.0
    %2605 = vmatpush1.msra.mxu0 %v179
    %2606 = vmatprep.subr.mxu0 0.0
    %2607 = vmatpush1.msra.mxu0 0.0
    %2608 = vmatprep.subr.mxu0 0.0
    %2609 = vmatpush1.msra.mxu0 0.0
    %2610 = vmatprep.subr.mxu0 0.0
    %2611 = vmatpush1.msra.mxu0 0.0
    %2612 = vmatprep.subr.mxu0 0.0
    %2613 = vmatpush1.msra.mxu0 0.0
    %2614 = vmatprep.subr.mxu0 0.0
    %2615 = vmatpush1.msra.mxu0 0.0
    %2616 = vmatprep.subr.mxu0 0.0
    %2617 = vmatpush1.msra.mxu0 0.0
    %2618 = vmatprep.subr.mxu0 0.0
    %2619 = vmatpush1.msra.mxu0 0.0
    %2620 = vmatprep.subr.mxu0 0.0
    %2621 = vmatpush1.msra.mxu0 0.0
    %2622 = vmatprep.subr.mxu0 0.0
    %2623 = vmatpush1.msra.mxu0 0.0
    %2624 = vmatprep.subr.mxu0 0.0
    %2625 = vmatpush1.msra.mxu0 0.0
    %2626 = vmatprep.subr.mxu0 0.0
    %2627 = vmatpush1.msra.mxu0 0.0
    %2628 = vmatprep.subr.mxu0 0.0
    %2629 = vmatpush1.msra.mxu0 0.0
    %2630 = vmatprep.subr.mxu0 0.0
    %2631 = vmatpush1.msra.mxu0 0.0
    %2632 = vmatprep.subr.mxu0 0.0
    %2633 = vmatpush1.msra.mxu0 0.0
    %2634 = vmatprep.subr.mxu0 0.0
    %2635 = vmatpush1.msra.mxu0 0.0
    %2636 = vmatprep.subr.mxu0 0.0
    %2637 = vmatpush1.msra.mxu0 0.0
    %2638 = vmatprep.subr.mxu0 0.0
    %2639 = vmatpush1.msra.mxu0 0.0
    %2640 = vmatprep.subr.mxu0 0.0
    %2641 = vmatpush1.msra.mxu0 0.0
    %2642 = vmatprep.subr.mxu0 0.0
    %2643 = vmatpush1.msra.mxu0 0.0
    %2644 = vmatprep.subr.mxu0 0.0
    %2645 = vmatpush1.msra.mxu0 0.0
    %2646 = vmatprep.subr.mxu0 0.0
    %2647 = vmatpush1.msra.mxu0 0.0
    %2648 = vmatprep.subr.mxu0 0.0
    %2649 = vmatpush1.msra.mxu0 0.0
    %2650 = vmatprep.subr.mxu0 0.0
    %2651 = vmatpush1.msra.mxu0 0.0
    %2652 = vmatprep.subr.mxu0 0.0
    %2653 = vmatpush1.msra.mxu0 0.0
    %2654 = vmatprep.subr.mxu0 0.0
    %2655 = vmatpush1.msra.mxu0 0.0
    %2656 = vmatprep.subr.mxu0 0.0
    %2657 = vmatpush1.msra.mxu0 0.0
    %2658 = vmatprep.subr.mxu0 0.0
    %2659 = vmatpush1.msra.mxu0 0.0
    %2660 = vmatprep.subr.mxu0 0.0
    %2661 = vmatpush1.msra.mxu0 0.0
    %2662 = vmatprep.subr.mxu0 0.0
    %2663 = vmatpush1.msra.mxu0 0.0
    %2664 = vmatprep.subr.mxu0 0.0
    %2665 = vmatpush1.msra.mxu0 0.0
    %2666 = vmatprep.subr.mxu0 0.0
    %2667 = vmatpush1.msra.mxu0 0.0
    %2668 = vmatprep.mubr.f32.mxu0 0.0
    %2669 = vmatmul.mubr.f32.gmra.mrb[0].mxu0 %v2600
    %v2670 = vpop.f32.mrb[0].mxu0
    %v2671 = vadd.f32 0.0, %v2670
    %v2672 = vpop.f32.mrb[0].mxu0
    %2673 = vmatprep.mubr.f32.mxu0 0.0
    %2674 = vmatmul.mubr.f32.gmra.mrb[0].mxu0 %v2602
    %v2675 = vpop.f32.mrb[0].mxu0
    %v2676 = vadd.f32 0.0, %v2675
    %v2677 = vpop.f32.mrb[0].mxu0
    %2678 = vdwg.mxu0
    %v2679 = vadd.f32 %v2588, %v2671
    %v2680 = vadd.f32 %v2593, %v2676
    %v2681 = vmul.f32 %v2679, %v213
    %v2682 = vmul.f32 %v2680, %v214
    %v2683 = vsel %vm864, %v2681, 0.0
    %2684 = vadd.xlane.f32.xlu0 %v2683
    %v2685 = vpop.xlane.xlu0 %2684
    %v2686 = vsel %vm868, %v2682, 0.0
    %2687 = vadd.xlane.f32.xlu0 %v2686
    %v2688 = vpop.xlane.xlu0 %2687
    %vm2689 = vcmp.ge.f32.partialorder %v2685, 0.0
    %vm2690 = vcmp.ge.f32.partialorder %v2688, 0.0
    %v2691 = vmul.f32 %v2685, 0.2
    %v2692 = vmul.f32 %v2688, 0.2
    %v2693 = vsel %vm2689, %v2685, %v2691
    %v2694 = vsel %vm2690, %v2688, %v2692
    %v2695 = vsel %vm2227, %v2693, -1e+30
    %v2696 = vsel %vm2228, %v2694, -1e+30
    %v2697 = vsel %vm279, %v2695, -inf
    %v2698 = vsel %vm883, %v2696, -inf
    %v2699 = vmax.f32 %v2697, %v2698
    %v2700 = vrot.slane %v2699, 4
    %v2701 = vmax.f32 %v2699, %v2700
    %v2702 = vrot.slane %v2701, 2
    %v2703 = vmax.f32 %v2701, %v2702
    %v2704 = vrot.slane %v2703, 1
    %v2705 = vmax.f32 %v2703, %v2704
    %v2706 = vmul.f32 %v211, %v2705
    %v2707 = vmul.f32 %v212, %v2705
    %v2708 = vsel %vm279, %v2706, 0.0
    %2709 = vadd.xlane.f32.xlu0 %v2708
    %v2710 = vpop.xlane.xlu0 %2709
    %v2711 = vsel %vm883, %v2707, 0.0
    %2712 = vadd.xlane.f32.xlu0 %v2711
    %v2713 = vpop.xlane.xlu0 %2712
    %v2714 = vsub.f32 %v2693, %v2710
    %v2715 = vsub.f32 %v2694, %v2713
    %v2716 = vmul.f32 %v2714, 1.442695
    %v2717 = vpow.pop %v2716
    %v2718 = vmul.f32 %v2715, 1.442695
    %v2719 = vpow.pop %v2718
    %v2721 = vsel %vm286, %v2719, 0
    %2723 = vmatprep.subr.mxu0 0.0
    %2724 = vmatpush1.msra.mxu0 %v2717
    %2725 = vmatprep.subr.mxu0 0.0
    %2726 = vmatpush1.msra.mxu0 %v2721
    %2727 = vmatprep.subr.mxu0 0.0
    %2728 = vmatpush1.msra.mxu0 0.0
    %2729 = vmatprep.subr.mxu0 0.0
    %2730 = vmatpush1.msra.mxu0 0.0
    %2731 = vmatprep.subr.mxu0 0.0
    %2732 = vmatpush1.msra.mxu0 0.0
    %2733 = vmatprep.subr.mxu0 0.0
    %2734 = vmatpush1.msra.mxu0 0.0
    %2735 = vmatprep.subr.mxu0 0.0
    %2736 = vmatpush1.msra.mxu0 0.0
    %2737 = vmatprep.subr.mxu0 0.0
    %2738 = vmatpush1.msra.mxu0 0.0
    %2739 = vmatprep.subr.mxu0 0.0
    %2740 = vmatpush1.msra.mxu0 0.0
    %2741 = vmatprep.subr.mxu0 0.0
    %2742 = vmatpush1.msra.mxu0 0.0
    %2743 = vmatprep.subr.mxu0 0.0
    %2744 = vmatpush1.msra.mxu0 0.0
    %2745 = vmatprep.subr.mxu0 0.0
    %2746 = vmatpush1.msra.mxu0 0.0
    %2747 = vmatprep.subr.mxu0 0.0
    %2748 = vmatpush1.msra.mxu0 0.0
    %2749 = vmatprep.subr.mxu0 0.0
    %2750 = vmatpush1.msra.mxu0 0.0
    %2751 = vmatprep.subr.mxu0 0.0
    %2752 = vmatpush1.msra.mxu0 0.0
    %2753 = vmatprep.subr.mxu0 0.0
    %2754 = vmatpush1.msra.mxu0 0.0
    %2755 = vmatprep.subr.mxu0 0.0
    %2756 = vmatpush1.msra.mxu0 0.0
    %2757 = vmatprep.subr.mxu0 0.0
    %2758 = vmatpush1.msra.mxu0 0.0
    %2759 = vmatprep.subr.mxu0 0.0
    %2760 = vmatpush1.msra.mxu0 0.0
    %2761 = vmatprep.subr.mxu0 0.0
    %2762 = vmatpush1.msra.mxu0 0.0
    %2763 = vmatprep.subr.mxu0 0.0
    %2764 = vmatpush1.msra.mxu0 0.0
    %2765 = vmatprep.subr.mxu0 0.0
    %2766 = vmatpush1.msra.mxu0 0.0
    %2767 = vmatprep.subr.mxu0 0.0
    %2768 = vmatpush1.msra.mxu0 0.0
    %2769 = vmatprep.subr.mxu0 0.0
    %2770 = vmatpush1.msra.mxu0 0.0
    %2771 = vmatprep.subr.mxu0 0.0
    %2772 = vmatpush1.msra.mxu0 0.0
    %2773 = vmatprep.subr.mxu0 0.0
    %2774 = vmatpush1.msra.mxu0 0.0
    %2775 = vmatprep.subr.mxu0 0.0
    %2776 = vmatpush1.msra.mxu0 0.0
    %2777 = vmatprep.subr.mxu0 0.0
    %2778 = vmatpush1.msra.mxu0 0.0
    %2779 = vmatprep.subr.mxu0 0.0
    %2780 = vmatpush1.msra.mxu0 0.0
    %2781 = vmatprep.subr.mxu0 0.0
    %2782 = vmatpush1.msra.mxu0 0.0
    %2783 = vmatprep.subr.mxu0 0.0
    %2784 = vmatpush1.msra.mxu0 0.0
    %2785 = vmatprep.subr.mxu0 0.0
    %2786 = vmatpush1.msra.mxu0 0.0
    %2787 = vmatprep.mubr.f32.mxu0 0.0
    %2788 = vmatmul.mubr.f32.gmra.mrb[0].mxu0 %v2255
    %v2789 = vpop.f32.mrb[0].mxu0
    %v2790 = vadd.f32 0.0, %v2789
    %v2791 = vpop.f32.mrb[0].mxu0
    %2792 = vmatprep.mubr.f32.mxu0 0.0
    %2793 = vmatmul.mubr.f32.gmra.mrb[0].mxu0 %v2258
    %v2794 = vpop.f32.mrb[0].mxu0
    %v2795 = vadd.f32 0.0, %v2794
    %v2796 = vpop.f32.mrb[0].mxu0
    %2797 = vdwg.mxu0
    %v2799 = vsel %vm286, %v2795, 0
    %2801 = vmatprep.subr.mxu0 0.0
    %2802 = vmatpush1.msra.mxu0 %v2790
    %2803 = vmatprep.subr.mxu0 0.0
    %2804 = vmatpush1.msra.mxu0 %v2799
    %2805 = vmatprep.subr.mxu0 0.0
    %2806 = vmatpush1.msra.mxu0 0.0
    %2807 = vmatprep.subr.mxu0 0.0
    %2808 = vmatpush1.msra.mxu0 0.0
    %2809 = vmatprep.subr.mxu0 0.0
    %2810 = vmatpush1.msra.mxu0 0.0
    %2811 = vmatprep.subr.mxu0 0.0
    %2812 = vmatpush1.msra.mxu0 0.0
    %2813 = vmatprep.subr.mxu0 0.0
    %2814 = vmatpush1.msra.mxu0 0.0
    %2815 = vmatprep.subr.mxu0 0.0
    %2816 = vmatpush1.msra.mxu0 0.0
    %2817 = vmatprep.subr.mxu0 0.0
    %2818 = vmatpush1.msra.mxu0 0.0
    %2819 = vmatprep.subr.mxu0 0.0
    %2820 = vmatpush1.msra.mxu0 0.0
    %2821 = vmatprep.subr.mxu0 0.0
    %2822 = vmatpush1.msra.mxu0 0.0
    %2823 = vmatprep.subr.mxu0 0.0
    %2824 = vmatpush1.msra.mxu0 0.0
    %2825 = vmatprep.subr.mxu0 0.0
    %2826 = vmatpush1.msra.mxu0 0.0
    %2827 = vmatprep.subr.mxu0 0.0
    %2828 = vmatpush1.msra.mxu0 0.0
    %2829 = vmatprep.subr.mxu0 0.0
    %2830 = vmatpush1.msra.mxu0 0.0
    %2831 = vmatprep.subr.mxu0 0.0
    %2832 = vmatpush1.msra.mxu0 0.0
    %2833 = vmatprep.subr.mxu0 0.0
    %2834 = vmatpush1.msra.mxu0 0.0
    %2835 = vmatprep.subr.mxu0 0.0
    %2836 = vmatpush1.msra.mxu0 0.0
    %2837 = vmatprep.subr.mxu0 0.0
    %2838 = vmatpush1.msra.mxu0 0.0
    %2839 = vmatprep.subr.mxu0 0.0
    %2840 = vmatpush1.msra.mxu0 0.0
    %2841 = vmatprep.subr.mxu0 0.0
    %2842 = vmatpush1.msra.mxu0 0.0
    %2843 = vmatprep.subr.mxu0 0.0
    %2844 = vmatpush1.msra.mxu0 0.0
    %2845 = vmatprep.subr.mxu0 0.0
    %2846 = vmatpush1.msra.mxu0 0.0
    %2847 = vmatprep.subr.mxu0 0.0
    %2848 = vmatpush1.msra.mxu0 0.0
    %2849 = vmatprep.subr.mxu0 0.0
    %2850 = vmatpush1.msra.mxu0 0.0
    %2851 = vmatprep.subr.mxu0 0.0
    %2852 = vmatpush1.msra.mxu0 0.0
    %2853 = vmatprep.subr.mxu0 0.0
    %2854 = vmatpush1.msra.mxu0 0.0
    %2855 = vmatprep.subr.mxu0 0.0
    %2856 = vmatpush1.msra.mxu0 0.0
    %2857 = vmatprep.subr.mxu0 0.0
    %2858 = vmatpush1.msra.mxu0 0.0
    %2859 = vmatprep.subr.mxu0 0.0
    %2860 = vmatpush1.msra.mxu0 0.0
    %2861 = vmatprep.subr.mxu0 0.0
    %2862 = vmatpush1.msra.mxu0 0.0
    %2863 = vmatprep.subr.mxu0 0.0
    %2864 = vmatpush1.msra.mxu0 0.0
    %2865 = vmatprep.mubr.f32.mxu0 0.0
    %2866 = vmatmul.mubr.f32.gmra.mrb[0].mxu0 %v1888
    %v2867 = vpop.f32.mrb[0].mxu0
    %v2868 = vadd.f32 0.0, %v2867
    %v2869 = vpop.f32.mrb[0].mxu0
    %2870 = vmatprep.mubr.f32.mxu0 0.0
    %2871 = vmatmul.mubr.f32.gmra.mrb[0].mxu0 %v1891
    %v2872 = vpop.f32.mrb[0].mxu0
    %v2873 = vadd.f32 0.0, %v2872
    %v2874 = vpop.f32.mrb[0].mxu0
    %2875 = vdwg.mxu0
    %v2876 = vrcp.pop %v2868
    %v2877 = vrcp.pop %v2873
    %v2878 = vmul.f32 %v2717, %v2876
    %v2879 = vmul.f32 %v2719, %v2877
    %2881 = vset.pattern.permute.xlu0 0
    %2882 = vperm.xlu0 %2881, %v2878
    %v2883 = vpop.permute.xlu0 %2882
    %2886 = vset.pattern.permute.xlu0 0
    %2887 = vperm.xlu0 %2886, %v2879
    %v2888 = vpop.permute.xlu0 %2887
    %v2890 = vsel %vm616, %v2423, %v2883
    %v2891 = vsel %vm616, %v2428, %v2888
    %v2892 = vmul.f32 %v1879, %v2890
    %v2893 = vmul.f32 %v1884, %v2891
    %v2895 = vsel %vm286, %v2893, 0
    %2897 = vmatprep.subr.mxu0 0.0
    %2898 = vmatpush1.msra.mxu0 %v2892
    %2899 = vmatprep.subr.mxu0 0.0
    %2900 = vmatpush1.msra.mxu0 %v2895
    %2901 = vmatprep.subr.mxu0 0.0
    %2902 = vmatpush1.msra.mxu0 0.0
    %2903 = vmatprep.subr.mxu0 0.0
    %2904 = vmatpush1.msra.mxu0 0.0
    %2905 = vmatprep.subr.mxu0 0.0
    %2906 = vmatpush1.msra.mxu0 0.0
    %2907 = vmatprep.subr.mxu0 0.0
    %2908 = vmatpush1.msra.mxu0 0.0
    %2909 = vmatprep.subr.mxu0 0.0
    %2910 = vmatpush1.msra.mxu0 0.0
    %2911 = vmatprep.subr.mxu0 0.0
    %2912 = vmatpush1.msra.mxu0 0.0
    %2913 = vmatprep.subr.mxu0 0.0
    %2914 = vmatpush1.msra.mxu0 0.0
    %2915 = vmatprep.subr.mxu0 0.0
    %2916 = vmatpush1.msra.mxu0 0.0
    %2917 = vmatprep.subr.mxu0 0.0
    %2918 = vmatpush1.msra.mxu0 0.0
    %2919 = vmatprep.subr.mxu0 0.0
    %2920 = vmatpush1.msra.mxu0 0.0
    %2921 = vmatprep.subr.mxu0 0.0
    %2922 = vmatpush1.msra.mxu0 0.0
    %2923 = vmatprep.subr.mxu0 0.0
    %2924 = vmatpush1.msra.mxu0 0.0
    %2925 = vmatprep.subr.mxu0 0.0
    %2926 = vmatpush1.msra.mxu0 0.0
    %2927 = vmatprep.subr.mxu0 0.0
    %2928 = vmatpush1.msra.mxu0 0.0
    %2929 = vmatprep.subr.mxu0 0.0
    %2930 = vmatpush1.msra.mxu0 0.0
    %2931 = vmatprep.subr.mxu0 0.0
    %2932 = vmatpush1.msra.mxu0 0.0
    %2933 = vmatprep.subr.mxu0 0.0
    %2934 = vmatpush1.msra.mxu0 0.0
    %2935 = vmatprep.subr.mxu0 0.0
    %2936 = vmatpush1.msra.mxu0 0.0
    %2937 = vmatprep.subr.mxu0 0.0
    %2938 = vmatpush1.msra.mxu0 0.0
    %2939 = vmatprep.subr.mxu0 0.0
    %2940 = vmatpush1.msra.mxu0 0.0
    %2941 = vmatprep.subr.mxu0 0.0
    %2942 = vmatpush1.msra.mxu0 0.0
    %2943 = vmatprep.subr.mxu0 0.0
    %2944 = vmatpush1.msra.mxu0 0.0
    %2945 = vmatprep.subr.mxu0 0.0
    %2946 = vmatpush1.msra.mxu0 0.0
    %2947 = vmatprep.subr.mxu0 0.0
    %2948 = vmatpush1.msra.mxu0 0.0
    %2949 = vmatprep.subr.mxu0 0.0
    %2950 = vmatpush1.msra.mxu0 0.0
    %2951 = vmatprep.subr.mxu0 0.0
    %2952 = vmatpush1.msra.mxu0 0.0
    %2953 = vmatprep.subr.mxu0 0.0
    %2954 = vmatpush1.msra.mxu0 0.0
    %2955 = vmatprep.subr.mxu0 0.0
    %2956 = vmatpush1.msra.mxu0 0.0
    %2957 = vmatprep.subr.mxu0 0.0
    %2958 = vmatpush1.msra.mxu0 0.0
    %2959 = vmatprep.subr.mxu0 0.0
    %2960 = vmatpush1.msra.mxu0 0.0
    %2961 = vmatprep.mubr.f32.mxu0 0.0
    %2962 = vmatmul.mubr.f32.gmra.mrb[0].mxu0 %v2255
    %v2963 = vpop.f32.mrb[0].mxu0
    %v2964 = vadd.f32 0.0, %v2963
    %v2965 = vpop.f32.mrb[0].mxu0
    %2966 = vmatprep.mubr.f32.mxu0 0.0
    %2967 = vmatmul.mubr.f32.gmra.mrb[0].mxu0 %v2258
    %v2968 = vpop.f32.mrb[0].mxu0
    %v2969 = vadd.f32 0.0, %v2968
    %v2970 = vpop.f32.mrb[0].mxu0
    %2971 = vdwg.mxu0
    %v2972 = vadd.f32 %v1795, %v1879
    %v2973 = vadd.f32 %v1800, %v1884
    %v2974 = vadd.f32 %v2972, %v1960
    %v2975 = vadd.f32 %v2973, %v1965
    %v2976 = vmul.f32 %v2974, %v1628
    %v2977 = vmul.f32 %v2975, %v1628
    %v2978 = vmax.f32 %v2964, 0.0
    %v2979 = vmax.f32 %v2969, 0.0
    %v2980 = vmax.f32 %v2976, 0.0
    %v2981 = vmax.f32 %v2977, 0.0
    %v2982 = vadd.f32 %v1631, %v2978
    %v2983 = vadd.f32 %v1632, %v2979
    %v2984 = vadd.f32 %v1633, %v2980
    %v2985 = vadd.f32 %v1634, %v2981
    %vm2986 = vcmask 130048
    %v2988 = vsel %vm2986, %v2982, 0
    %v2991 = vsel %vm2986, %v2983, 0
    %2993 = vmatprep.subr.mxu0 0.0
    %2994 = vmatpush1.msra.mxu0 %v180
    %2995 = vmatprep.subr.mxu0 0.0
    %2996 = vmatpush1.msra.mxu0 %v181
    %2997 = vmatprep.subr.mxu0 0.0
    %2998 = vmatpush1.msra.mxu0 0.0
    %2999 = vmatprep.subr.mxu0 0.0
    %3000 = vmatpush1.msra.mxu0 0.0
    %3001 = vmatprep.subr.mxu0 0.0
    %3002 = vmatpush1.msra.mxu0 0.0
    %3003 = vmatprep.subr.mxu0 0.0
    %3004 = vmatpush1.msra.mxu0 0.0
    %3005 = vmatprep.subr.mxu0 0.0
    %3006 = vmatpush1.msra.mxu0 0.0
    %3007 = vmatprep.subr.mxu0 0.0
    %3008 = vmatpush1.msra.mxu0 0.0
    %3009 = vmatprep.subr.mxu0 0.0
    %3010 = vmatpush1.msra.mxu0 0.0
    %3011 = vmatprep.subr.mxu0 0.0
    %3012 = vmatpush1.msra.mxu0 0.0
    %3013 = vmatprep.subr.mxu0 0.0
    %3014 = vmatpush1.msra.mxu0 0.0
    %3015 = vmatprep.subr.mxu0 0.0
    %3016 = vmatpush1.msra.mxu0 0.0
    %3017 = vmatprep.subr.mxu0 0.0
    %3018 = vmatpush1.msra.mxu0 0.0
    %3019 = vmatprep.subr.mxu0 0.0
    %3020 = vmatpush1.msra.mxu0 0.0
    %3021 = vmatprep.subr.mxu0 0.0
    %3022 = vmatpush1.msra.mxu0 0.0
    %3023 = vmatprep.subr.mxu0 0.0
    %3024 = vmatpush1.msra.mxu0 0.0
    %3025 = vmatprep.subr.mxu0 0.0
    %3026 = vmatpush1.msra.mxu0 0.0
    %3027 = vmatprep.subr.mxu0 0.0
    %3028 = vmatpush1.msra.mxu0 0.0
    %3029 = vmatprep.subr.mxu0 0.0
    %3030 = vmatpush1.msra.mxu0 0.0
    %3031 = vmatprep.subr.mxu0 0.0
    %3032 = vmatpush1.msra.mxu0 0.0
    %3033 = vmatprep.subr.mxu0 0.0
    %3034 = vmatpush1.msra.mxu0 0.0
    %3035 = vmatprep.subr.mxu0 0.0
    %3036 = vmatpush1.msra.mxu0 0.0
    %3037 = vmatprep.subr.mxu0 0.0
    %3038 = vmatpush1.msra.mxu0 0.0
    %3039 = vmatprep.subr.mxu0 0.0
    %3040 = vmatpush1.msra.mxu0 0.0
    %3041 = vmatprep.subr.mxu0 0.0
    %3042 = vmatpush1.msra.mxu0 0.0
    %3043 = vmatprep.subr.mxu0 0.0
    %3044 = vmatpush1.msra.mxu0 0.0
    %3045 = vmatprep.subr.mxu0 0.0
    %3046 = vmatpush1.msra.mxu0 0.0
    %3047 = vmatprep.subr.mxu0 0.0
    %3048 = vmatpush1.msra.mxu0 0.0
    %3049 = vmatprep.subr.mxu0 0.0
    %3050 = vmatpush1.msra.mxu0 0.0
    %3051 = vmatprep.subr.mxu0 0.0
    %3052 = vmatpush1.msra.mxu0 0.0
    %3053 = vmatprep.subr.mxu0 0.0
    %3054 = vmatpush1.msra.mxu0 0.0
    %3055 = vmatprep.subr.mxu0 0.0
    %3056 = vmatpush1.msra.mxu0 0.0
    %3057 = vmatprep.mubr.f32.mxu0 0.0
    %3058 = vmatmul.mubr.f32.gmra.mrb[0].mxu0 %v2988
    %v3059 = vpop.f32.mrb[0].mxu0
    %v3060 = vadd.f32 0.0, %v3059
    %v3061 = vpop.f32.mrb[0].mxu0
    %3062 = vmatprep.mubr.f32.mxu0 0.0
    %3063 = vmatmul.mubr.f32.gmra.mrb[0].mxu0 %v2991
    %v3064 = vpop.f32.mrb[0].mxu0
    %v3065 = vadd.f32 0.0, %v3064
    %v3066 = vpop.f32.mrb[0].mxu0
    %3067 = vdwg.mxu0
    %v3069 = vsel %vm2986, %v2984, 0
    %v3072 = vsel %vm2986, %v2985, 0
    %3074 = vmatprep.subr.mxu0 0.0
    %3075 = vmatpush1.msra.mxu0 %v182
    %3076 = vmatprep.subr.mxu0 0.0
    %3077 = vmatpush1.msra.mxu0 %v183
    %3078 = vmatprep.subr.mxu0 0.0
    %3079 = vmatpush1.msra.mxu0 0.0
    %3080 = vmatprep.subr.mxu0 0.0
    %3081 = vmatpush1.msra.mxu0 0.0
    %3082 = vmatprep.subr.mxu0 0.0
    %3083 = vmatpush1.msra.mxu0 0.0
    %3084 = vmatprep.subr.mxu0 0.0
    %3085 = vmatpush1.msra.mxu0 0.0
    %3086 = vmatprep.subr.mxu0 0.0
    %3087 = vmatpush1.msra.mxu0 0.0
    %3088 = vmatprep.subr.mxu0 0.0
    %3089 = vmatpush1.msra.mxu0 0.0
    %3090 = vmatprep.subr.mxu0 0.0
    %3091 = vmatpush1.msra.mxu0 0.0
    %3092 = vmatprep.subr.mxu0 0.0
    %3093 = vmatpush1.msra.mxu0 0.0
    %3094 = vmatprep.subr.mxu0 0.0
    %3095 = vmatpush1.msra.mxu0 0.0
    %3096 = vmatprep.subr.mxu0 0.0
    %3097 = vmatpush1.msra.mxu0 0.0
    %3098 = vmatprep.subr.mxu0 0.0
    %3099 = vmatpush1.msra.mxu0 0.0
    %3100 = vmatprep.subr.mxu0 0.0
    %3101 = vmatpush1.msra.mxu0 0.0
    %3102 = vmatprep.subr.mxu0 0.0
    %3103 = vmatpush1.msra.mxu0 0.0
    %3104 = vmatprep.subr.mxu0 0.0
    %3105 = vmatpush1.msra.mxu0 0.0
    %3106 = vmatprep.subr.mxu0 0.0
    %3107 = vmatpush1.msra.mxu0 0.0
    %3108 = vmatprep.subr.mxu0 0.0
    %3109 = vmatpush1.msra.mxu0 0.0
    %3110 = vmatprep.subr.mxu0 0.0
    %3111 = vmatpush1.msra.mxu0 0.0
    %3112 = vmatprep.subr.mxu0 0.0
    %3113 = vmatpush1.msra.mxu0 0.0
    %3114 = vmatprep.subr.mxu0 0.0
    %3115 = vmatpush1.msra.mxu0 0.0
    %3116 = vmatprep.subr.mxu0 0.0
    %3117 = vmatpush1.msra.mxu0 0.0
    %3118 = vmatprep.subr.mxu0 0.0
    %3119 = vmatpush1.msra.mxu0 0.0
    %3120 = vmatprep.subr.mxu0 0.0
    %3121 = vmatpush1.msra.mxu0 0.0
    %3122 = vmatprep.subr.mxu0 0.0
    %3123 = vmatpush1.msra.mxu0 0.0
    %3124 = vmatprep.subr.mxu0 0.0
    %3125 = vmatpush1.msra.mxu0 0.0
    %3126 = vmatprep.subr.mxu0 0.0
    %3127 = vmatpush1.msra.mxu0 0.0
    %3128 = vmatprep.subr.mxu0 0.0
    %3129 = vmatpush1.msra.mxu0 0.0
    %3130 = vmatprep.subr.mxu0 0.0
    %3131 = vmatpush1.msra.mxu0 0.0
    %3132 = vmatprep.subr.mxu0 0.0
    %3133 = vmatpush1.msra.mxu0 0.0
    %3134 = vmatprep.subr.mxu0 0.0
    %3135 = vmatpush1.msra.mxu0 0.0
    %3136 = vmatprep.subr.mxu0 0.0
    %3137 = vmatpush1.msra.mxu0 0.0
    %3138 = vmatprep.mubr.f32.mxu0 0.0
    %3139 = vmatmul.mubr.f32.gmra.mrb[0].mxu0 %v3069
    %v3140 = vpop.f32.mrb[0].mxu0
    %v3141 = vadd.f32 0.0, %v3140
    %v3142 = vpop.f32.mrb[0].mxu0
    %3143 = vmatprep.mubr.f32.mxu0 0.0
    %3144 = vmatmul.mubr.f32.gmra.mrb[0].mxu0 %v3072
    %v3145 = vpop.f32.mrb[0].mxu0
    %v3146 = vadd.f32 0.0, %v3145
    %v3147 = vpop.f32.mrb[0].mxu0
    %3148 = vdwg.mxu0
    %v3150 = vsel %vm286, %v3065, 0
    %3152 = vmatprep.subr.mxu0 0.0
    %3153 = vmatpush1.msra.mxu0 %v3060
    %3154 = vmatprep.subr.mxu0 0.0
    %3155 = vmatpush1.msra.mxu0 %v3150
    %3156 = vmatprep.subr.mxu0 0.0
    %3157 = vmatpush1.msra.mxu0 0.0
    %3158 = vmatprep.subr.mxu0 0.0
    %3159 = vmatpush1.msra.mxu0 0.0
    %3160 = vmatprep.subr.mxu0 0.0
    %3161 = vmatpush1.msra.mxu0 0.0
    %3162 = vmatprep.subr.mxu0 0.0
    %3163 = vmatpush1.msra.mxu0 0.0
    %3164 = vmatprep.subr.mxu0 0.0
    %3165 = vmatpush1.msra.mxu0 0.0
    %3166 = vmatprep.subr.mxu0 0.0
    %3167 = vmatpush1.msra.mxu0 0.0
    %3168 = vmatprep.subr.mxu0 0.0
    %3169 = vmatpush1.msra.mxu0 0.0
    %3170 = vmatprep.subr.mxu0 0.0
    %3171 = vmatpush1.msra.mxu0 0.0
    %3172 = vmatprep.subr.mxu0 0.0
    %3173 = vmatpush1.msra.mxu0 0.0
    %3174 = vmatprep.subr.mxu0 0.0
    %3175 = vmatpush1.msra.mxu0 0.0
    %3176 = vmatprep.subr.mxu0 0.0
    %3177 = vmatpush1.msra.mxu0 0.0
    %3178 = vmatprep.subr.mxu0 0.0
    %3179 = vmatpush1.msra.mxu0 0.0
    %3180 = vmatprep.subr.mxu0 0.0
    %3181 = vmatpush1.msra.mxu0 0.0
    %3182 = vmatprep.subr.mxu0 0.0
    %3183 = vmatpush1.msra.mxu0 0.0
    %3184 = vmatprep.subr.mxu0 0.0
    %3185 = vmatpush1.msra.mxu0 0.0
    %3186 = vmatprep.subr.mxu0 0.0
    %3187 = vmatpush1.msra.mxu0 0.0
    %3188 = vmatprep.subr.mxu0 0.0
    %3189 = vmatpush1.msra.mxu0 0.0
    %3190 = vmatprep.subr.mxu0 0.0
    %3191 = vmatpush1.msra.mxu0 0.0
    %3192 = vmatprep.subr.mxu0 0.0
    %3193 = vmatpush1.msra.mxu0 0.0
    %3194 = vmatprep.subr.mxu0 0.0
    %3195 = vmatpush1.msra.mxu0 0.0
    %3196 = vmatprep.subr.mxu0 0.0
    %3197 = vmatpush1.msra.mxu0 0.0
    %3198 = vmatprep.subr.mxu0 0.0
    %3199 = vmatpush1.msra.mxu0 0.0
    %3200 = vmatprep.subr.mxu0 0.0
    %3201 = vmatpush1.msra.mxu0 0.0
    %3202 = vmatprep.subr.mxu0 0.0
    %3203 = vmatpush1.msra.mxu0 0.0
    %3204 = vmatprep.subr.mxu0 0.0
    %3205 = vmatpush1.msra.mxu0 0.0
    %3206 = vmatprep.subr.mxu0 0.0
    %3207 = vmatpush1.msra.mxu0 0.0
    %3208 = vmatprep.subr.mxu0 0.0
    %3209 = vmatpush1.msra.mxu0 0.0
    %3210 = vmatprep.subr.mxu0 0.0
    %3211 = vmatpush1.msra.mxu0 0.0
    %3212 = vmatprep.subr.mxu0 0.0
    %3213 = vmatpush1.msra.mxu0 0.0
    %3214 = vmatprep.subr.mxu0 0.0
    %3215 = vmatpush1.msra.mxu0 0.0
    %3216 = vmatprep.mubr.f32.mxu0 0.0
    %3217 = vmatmul.mubr.f32.gmra.mrb[0].mxu0 %v452
    %v3218 = vpop.f32.mrb[0].mxu0
    %v3219 = vadd.f32 0.0, %v3218
    %v3220 = vpop.f32.mrb[0].mxu0
    %3221 = vmatprep.mubr.f32.mxu0 0.0
    %3222 = vmatmul.mubr.f32.gmra.mrb[0].mxu0 %v455
    %v3223 = vpop.f32.mrb[0].mxu0
    %v3224 = vadd.f32 0.0, %v3223
    %v3225 = vpop.f32.mrb[0].mxu0
    %3226 = vdwg.mxu0
    %3227 = vmatprep.subr.mxu0 0.0
    %3228 = vmatpush1.msra.mxu0 %v3060
    %3229 = vmatprep.subr.mxu0 0.0
    %3230 = vmatpush1.msra.mxu0 %v3150
    %3231 = vmatprep.subr.mxu0 0.0
    %3232 = vmatpush1.msra.mxu0 0.0
    %3233 = vmatprep.subr.mxu0 0.0
    %3234 = vmatpush1.msra.mxu0 0.0
    %3235 = vmatprep.subr.mxu0 0.0
    %3236 = vmatpush1.msra.mxu0 0.0
    %3237 = vmatprep.subr.mxu0 0.0
    %3238 = vmatpush1.msra.mxu0 0.0
    %3239 = vmatprep.subr.mxu0 0.0
    %3240 = vmatpush1.msra.mxu0 0.0
    %3241 = vmatprep.subr.mxu0 0.0
    %3242 = vmatpush1.msra.mxu0 0.0
    %3243 = vmatprep.subr.mxu0 0.0
    %3244 = vmatpush1.msra.mxu0 0.0
    %3245 = vmatprep.subr.mxu0 0.0
    %3246 = vmatpush1.msra.mxu0 0.0
    %3247 = vmatprep.subr.mxu0 0.0
    %3248 = vmatpush1.msra.mxu0 0.0
    %3249 = vmatprep.subr.mxu0 0.0
    %3250 = vmatpush1.msra.mxu0 0.0
    %3251 = vmatprep.subr.mxu0 0.0
    %3252 = vmatpush1.msra.mxu0 0.0
    %3253 = vmatprep.subr.mxu0 0.0
    %3254 = vmatpush1.msra.mxu0 0.0
    %3255 = vmatprep.subr.mxu0 0.0
    %3256 = vmatpush1.msra.mxu0 0.0
    %3257 = vmatprep.subr.mxu0 0.0
    %3258 = vmatpush1.msra.mxu0 0.0
    %3259 = vmatprep.subr.mxu0 0.0
    %3260 = vmatpush1.msra.mxu0 0.0
    %3261 = vmatprep.subr.mxu0 0.0
    %3262 = vmatpush1.msra.mxu0 0.0
    %3263 = vmatprep.subr.mxu0 0.0
    %3264 = vmatpush1.msra.mxu0 0.0
    %3265 = vmatprep.subr.mxu0 0.0
    %3266 = vmatpush1.msra.mxu0 0.0
    %3267 = vmatprep.subr.mxu0 0.0
    %3268 = vmatpush1.msra.mxu0 0.0
    %3269 = vmatprep.subr.mxu0 0.0
    %3270 = vmatpush1.msra.mxu0 0.0
    %3271 = vmatprep.subr.mxu0 0.0
    %3272 = vmatpush1.msra.mxu0 0.0
    %3273 = vmatprep.subr.mxu0 0.0
    %3274 = vmatpush1.msra.mxu0 0.0
    %3275 = vmatprep.subr.mxu0 0.0
    %3276 = vmatpush1.msra.mxu0 0.0
    %3277 = vmatprep.subr.mxu0 0.0
    %3278 = vmatpush1.msra.mxu0 0.0
    %3279 = vmatprep.subr.mxu0 0.0
    %3280 = vmatpush1.msra.mxu0 0.0
    %3281 = vmatprep.subr.mxu0 0.0
    %3282 = vmatpush1.msra.mxu0 0.0
    %3283 = vmatprep.subr.mxu0 0.0
    %3284 = vmatpush1.msra.mxu0 0.0
    %3285 = vmatprep.subr.mxu0 0.0
    %3286 = vmatpush1.msra.mxu0 0.0
    %3287 = vmatprep.subr.mxu0 0.0
    %3288 = vmatpush1.msra.mxu0 0.0
    %3289 = vmatprep.subr.mxu0 0.0
    %3290 = vmatpush1.msra.mxu0 0.0
    %3291 = vmatprep.mubr.f32.mxu0 0.0
    %3292 = vmatmul.mubr.f32.gmra.mrb[0].mxu0 %v536
    %v3293 = vpop.f32.mrb[0].mxu0
    %v3294 = vadd.f32 0.0, %v3293
    %v3295 = vpop.f32.mrb[0].mxu0
    %3296 = vmatprep.mubr.f32.mxu0 0.0
    %3297 = vmatmul.mubr.f32.gmra.mrb[0].mxu0 %v539
    %v3298 = vpop.f32.mrb[0].mxu0
    %v3299 = vadd.f32 0.0, %v3298
    %v3300 = vpop.f32.mrb[0].mxu0
    %3301 = vdwg.mxu0
    %vm3302 = vcmask 31744
    %v3304 = vsel %vm3302, %v3294, 0
    %v3307 = vsel %vm3302, %v3299, 0
    %vm3309 = vcmask 1043456
    %v3311 = vsel %vm3309, %v185, 0
    %3313 = vmatprep.subr.mxu0 0.0
    %3314 = vmatpush1.msra.mxu0 %v3311
    %3315 = vmatprep.subr.mxu0 0.0
    %3316 = vmatpush1.msra.mxu0 0.0
    %3317 = vmatprep.subr.mxu0 0.0
    %3318 = vmatpush1.msra.mxu0 0.0
    %3319 = vmatprep.subr.mxu0 0.0
    %3320 = vmatpush1.msra.mxu0 0.0
    %3321 = vmatprep.subr.mxu0 0.0
    %3322 = vmatpush1.msra.mxu0 0.0
    %3323 = vmatprep.subr.mxu0 0.0
    %3324 = vmatpush1.msra.mxu0 0.0
    %3325 = vmatprep.subr.mxu0 0.0
    %3326 = vmatpush1.msra.mxu0 0.0
    %3327 = vmatprep.subr.mxu0 0.0
    %3328 = vmatpush1.msra.mxu0 0.0
    %3329 = vmatprep.subr.mxu0 0.0
    %3330 = vmatpush1.msra.mxu0 0.0
    %3331 = vmatprep.subr.mxu0 0.0
    %3332 = vmatpush1.msra.mxu0 0.0
    %3333 = vmatprep.subr.mxu0 0.0
    %3334 = vmatpush1.msra.mxu0 0.0
    %3335 = vmatprep.subr.mxu0 0.0
    %3336 = vmatpush1.msra.mxu0 0.0
    %3337 = vmatprep.subr.mxu0 0.0
    %3338 = vmatpush1.msra.mxu0 0.0
    %3339 = vmatprep.subr.mxu0 0.0
    %3340 = vmatpush1.msra.mxu0 0.0
    %3341 = vmatprep.subr.mxu0 0.0
    %3342 = vmatpush1.msra.mxu0 0.0
    %3343 = vmatprep.subr.mxu0 0.0
    %3344 = vmatpush1.msra.mxu0 0.0
    %3345 = vmatprep.subr.mxu0 0.0
    %3346 = vmatpush1.msra.mxu0 0.0
    %3347 = vmatprep.subr.mxu0 0.0
    %3348 = vmatpush1.msra.mxu0 0.0
    %3349 = vmatprep.subr.mxu0 0.0
    %3350 = vmatpush1.msra.mxu0 0.0
    %3351 = vmatprep.subr.mxu0 0.0
    %3352 = vmatpush1.msra.mxu0 0.0
    %3353 = vmatprep.subr.mxu0 0.0
    %3354 = vmatpush1.msra.mxu0 0.0
    %3355 = vmatprep.subr.mxu0 0.0
    %3356 = vmatpush1.msra.mxu0 0.0
    %3357 = vmatprep.subr.mxu0 0.0
    %3358 = vmatpush1.msra.mxu0 0.0
    %3359 = vmatprep.subr.mxu0 0.0
    %3360 = vmatpush1.msra.mxu0 0.0
    %3361 = vmatprep.subr.mxu0 0.0
    %3362 = vmatpush1.msra.mxu0 0.0
    %3363 = vmatprep.subr.mxu0 0.0
    %3364 = vmatpush1.msra.mxu0 0.0
    %3365 = vmatprep.subr.mxu0 0.0
    %3366 = vmatpush1.msra.mxu0 0.0
    %3367 = vmatprep.subr.mxu0 0.0
    %3368 = vmatpush1.msra.mxu0 0.0
    %3369 = vmatprep.subr.mxu0 0.0
    %3370 = vmatpush1.msra.mxu0 0.0
    %3371 = vmatprep.subr.mxu0 0.0
    %3372 = vmatpush1.msra.mxu0 0.0
    %3373 = vmatprep.subr.mxu0 0.0
    %3374 = vmatpush1.msra.mxu0 0.0
    %3375 = vmatprep.subr.mxu0 0.0
    %3376 = vmatpush1.msra.mxu0 0.0
    %3377 = vmatprep.mubr.f32.mxu0 0.0
    %3378 = vmatmul.mubr.f32.gmra.mrb[0].mxu0 %v3304
    %v3379 = vpop.f32.mrb[0].mxu0
    %v3380 = vadd.f32 0.0, %v3379
    %v3381 = vpop.f32.mrb[0].mxu0
    %3382 = vmatprep.mubr.f32.mxu0 0.0
    %3383 = vmatmul.mubr.f32.gmra.mrb[0].mxu0 %v3307
    %v3384 = vpop.f32.mrb[0].mxu0
    %v3385 = vadd.f32 0.0, %v3384
    %v3386 = vpop.f32.mrb[0].mxu0
    %3387 = vdwg.mxu0
    %v3389 = vsel %vm3302, %v3219, 0
    %v3392 = vsel %vm3302, %v3224, 0
    %v3395 = vsel %vm3309, %v184, 0
    %3397 = vmatprep.subr.mxu0 0.0
    %3398 = vmatpush1.msra.mxu0 %v3395
    %3399 = vmatprep.subr.mxu0 0.0
    %3400 = vmatpush1.msra.mxu0 0.0
    %3401 = vmatprep.subr.mxu0 0.0
    %3402 = vmatpush1.msra.mxu0 0.0
    %3403 = vmatprep.subr.mxu0 0.0
    %3404 = vmatpush1.msra.mxu0 0.0
    %3405 = vmatprep.subr.mxu0 0.0
    %3406 = vmatpush1.msra.mxu0 0.0
    %3407 = vmatprep.subr.mxu0 0.0
    %3408 = vmatpush1.msra.mxu0 0.0
    %3409 = vmatprep.subr.mxu0 0.0
    %3410 = vmatpush1.msra.mxu0 0.0
    %3411 = vmatprep.subr.mxu0 0.0
    %3412 = vmatpush1.msra.mxu0 0.0
    %3413 = vmatprep.subr.mxu0 0.0
    %3414 = vmatpush1.msra.mxu0 0.0
    %3415 = vmatprep.subr.mxu0 0.0
    %3416 = vmatpush1.msra.mxu0 0.0
    %3417 = vmatprep.subr.mxu0 0.0
    %3418 = vmatpush1.msra.mxu0 0.0
    %3419 = vmatprep.subr.mxu0 0.0
    %3420 = vmatpush1.msra.mxu0 0.0
    %3421 = vmatprep.subr.mxu0 0.0
    %3422 = vmatpush1.msra.mxu0 0.0
    %3423 = vmatprep.subr.mxu0 0.0
    %3424 = vmatpush1.msra.mxu0 0.0
    %3425 = vmatprep.subr.mxu0 0.0
    %3426 = vmatpush1.msra.mxu0 0.0
    %3427 = vmatprep.subr.mxu0 0.0
    %3428 = vmatpush1.msra.mxu0 0.0
    %3429 = vmatprep.subr.mxu0 0.0
    %3430 = vmatpush1.msra.mxu0 0.0
    %3431 = vmatprep.subr.mxu0 0.0
    %3432 = vmatpush1.msra.mxu0 0.0
    %3433 = vmatprep.subr.mxu0 0.0
    %3434 = vmatpush1.msra.mxu0 0.0
    %3435 = vmatprep.subr.mxu0 0.0
    %3436 = vmatpush1.msra.mxu0 0.0
    %3437 = vmatprep.subr.mxu0 0.0
    %3438 = vmatpush1.msra.mxu0 0.0
    %3439 = vmatprep.subr.mxu0 0.0
    %3440 = vmatpush1.msra.mxu0 0.0
    %3441 = vmatprep.subr.mxu0 0.0
    %3442 = vmatpush1.msra.mxu0 0.0
    %3443 = vmatprep.subr.mxu0 0.0
    %3444 = vmatpush1.msra.mxu0 0.0
    %3445 = vmatprep.subr.mxu0 0.0
    %3446 = vmatpush1.msra.mxu0 0.0
    %3447 = vmatprep.subr.mxu0 0.0
    %3448 = vmatpush1.msra.mxu0 0.0
    %3449 = vmatprep.subr.mxu0 0.0
    %3450 = vmatpush1.msra.mxu0 0.0
    %3451 = vmatprep.subr.mxu0 0.0
    %3452 = vmatpush1.msra.mxu0 0.0
    %3453 = vmatprep.subr.mxu0 0.0
    %3454 = vmatpush1.msra.mxu0 0.0
    %3455 = vmatprep.subr.mxu0 0.0
    %3456 = vmatpush1.msra.mxu0 0.0
    %3457 = vmatprep.subr.mxu0 0.0
    %3458 = vmatpush1.msra.mxu0 0.0
    %3459 = vmatprep.subr.mxu0 0.0
    %3460 = vmatpush1.msra.mxu0 0.0
    %3461 = vmatprep.mubr.f32.mxu0 0.0
    %3462 = vmatmul.mubr.f32.gmra.mrb[0].mxu0 %v3389
    %v3463 = vpop.f32.mrb[0].mxu0
    %v3464 = vadd.f32 %v3380, %v3463
    %v3465 = vpop.f32.mrb[0].mxu0
    %3466 = vmatprep.mubr.f32.mxu0 0.0
    %3467 = vmatmul.mubr.f32.gmra.mrb[0].mxu0 %v3392
    %v3468 = vpop.f32.mrb[0].mxu0
    %v3469 = vadd.f32 %v3385, %v3468
    %v3470 = vpop.f32.mrb[0].mxu0
    %3471 = vdwg.mxu0
    %v3473 = vsel %vm3302, %v3141, 0
    %v3476 = vsel %vm3302, %v3146, 0
    %v3479 = vsel %vm3309, %v186, 0
    %3481 = vmatprep.subr.mxu0 0.0
    %3482 = vmatpush1.msra.mxu0 %v3479
    %3483 = vmatprep.subr.mxu0 0.0
    %3484 = vmatpush1.msra.mxu0 0.0
    %3485 = vmatprep.subr.mxu0 0.0
    %3486 = vmatpush1.msra.mxu0 0.0
    %3487 = vmatprep.subr.mxu0 0.0
    %3488 = vmatpush1.msra.mxu0 0.0
    %3489 = vmatprep.subr.mxu0 0.0
    %3490 = vmatpush1.msra.mxu0 0.0
    %3491 = vmatprep.subr.mxu0 0.0
    %3492 = vmatpush1.msra.mxu0 0.0
    %3493 = vmatprep.subr.mxu0 0.0
    %3494 = vmatpush1.msra.mxu0 0.0
    %3495 = vmatprep.subr.mxu0 0.0
    %3496 = vmatpush1.msra.mxu0 0.0
    %3497 = vmatprep.subr.mxu0 0.0
    %3498 = vmatpush1.msra.mxu0 0.0
    %3499 = vmatprep.subr.mxu0 0.0
    %3500 = vmatpush1.msra.mxu0 0.0
    %3501 = vmatprep.subr.mxu0 0.0
    %3502 = vmatpush1.msra.mxu0 0.0
    %3503 = vmatprep.subr.mxu0 0.0
    %3504 = vmatpush1.msra.mxu0 0.0
    %3505 = vmatprep.subr.mxu0 0.0
    %3506 = vmatpush1.msra.mxu0 0.0
    %3507 = vmatprep.subr.mxu0 0.0
    %3508 = vmatpush1.msra.mxu0 0.0
    %3509 = vmatprep.subr.mxu0 0.0
    %3510 = vmatpush1.msra.mxu0 0.0
    %3511 = vmatprep.subr.mxu0 0.0
    %3512 = vmatpush1.msra.mxu0 0.0
    %3513 = vmatprep.subr.mxu0 0.0
    %3514 = vmatpush1.msra.mxu0 0.0
    %3515 = vmatprep.subr.mxu0 0.0
    %3516 = vmatpush1.msra.mxu0 0.0
    %3517 = vmatprep.subr.mxu0 0.0
    %3518 = vmatpush1.msra.mxu0 0.0
    %3519 = vmatprep.subr.mxu0 0.0
    %3520 = vmatpush1.msra.mxu0 0.0
    %3521 = vmatprep.subr.mxu0 0.0
    %3522 = vmatpush1.msra.mxu0 0.0
    %3523 = vmatprep.subr.mxu0 0.0
    %3524 = vmatpush1.msra.mxu0 0.0
    %3525 = vmatprep.subr.mxu0 0.0
    %3526 = vmatpush1.msra.mxu0 0.0
    %3527 = vmatprep.subr.mxu0 0.0
    %3528 = vmatpush1.msra.mxu0 0.0
    %3529 = vmatprep.subr.mxu0 0.0
    %3530 = vmatpush1.msra.mxu0 0.0
    %3531 = vmatprep.subr.mxu0 0.0
    %3532 = vmatpush1.msra.mxu0 0.0
    %3533 = vmatprep.subr.mxu0 0.0
    %3534 = vmatpush1.msra.mxu0 0.0
    %3535 = vmatprep.subr.mxu0 0.0
    %3536 = vmatpush1.msra.mxu0 0.0
    %3537 = vmatprep.subr.mxu0 0.0
    %3538 = vmatpush1.msra.mxu0 0.0
    %3539 = vmatprep.subr.mxu0 0.0
    %3540 = vmatpush1.msra.mxu0 0.0
    %3541 = vmatprep.subr.mxu0 0.0
    %3542 = vmatpush1.msra.mxu0 0.0
    %3543 = vmatprep.subr.mxu0 0.0
    %3544 = vmatpush1.msra.mxu0 0.0
    %3545 = vmatprep.mubr.f32.mxu0 0.0
    %3546 = vmatmul.mubr.f32.gmra.mrb[0].mxu0 %v3473
    %v3547 = vpop.f32.mrb[0].mxu0
    %v3548 = vadd.f32 0.0, %v3547
    %v3549 = vpop.f32.mrb[0].mxu0
    %3550 = vmatprep.mubr.f32.mxu0 0.0
    %3551 = vmatmul.mubr.f32.gmra.mrb[0].mxu0 %v3476
    %v3552 = vpop.f32.mrb[0].mxu0
    %v3553 = vadd.f32 0.0, %v3552
    %v3554 = vpop.f32.mrb[0].mxu0
    %3555 = vdwg.mxu0
    %v3556 = vadd.f32 %v3464, %v3548
    %v3557 = vadd.f32 %v3469, %v3553
    %v3558 = vmul.f32 %v3556, %v203
    %v3559 = vmul.f32 %v3557, %v204
    %v3560 = vsel %vm864, %v3558, 0.0
    %3561 = vadd.xlane.f32.xlu0 %v3560
    %v3562 = vpop.xlane.xlu0 %3561
    %v3563 = vsel %vm868, %v3559, 0.0
    %3564 = vadd.xlane.f32.xlu0 %v3563
    %v3565 = vpop.xlane.xlu0 %3564
    %vm3566 = vcmp.ge.f32.partialorder %v3562, 0.0
    %vm3567 = vcmp.ge.f32.partialorder %v3565, 0.0
    %v3568 = vmul.f32 %v3562, 0.2
    %v3569 = vmul.f32 %v3565, 0.2
    %v3570 = vsel %vm3566, %v3562, %v3568
    %v3571 = vsel %vm3567, %v3565, %v3569
    %v3572 = vsel %vm878, %v3570, -1e+30
    %v3573 = vsel %vm879, %v3571, -1e+30
    %v3574 = vsel %vm279, %v3572, -inf
    %v3575 = vsel %vm883, %v3573, -inf
    %v3576 = vmax.f32 %v3574, %v3575
    %v3577 = vrot.slane %v3576, 4
    %v3578 = vmax.f32 %v3576, %v3577
    %v3579 = vrot.slane %v3578, 2
    %v3580 = vmax.f32 %v3578, %v3579
    %v3581 = vrot.slane %v3580, 1
    %v3582 = vmax.f32 %v3580, %v3581
    %v3583 = vmul.f32 %v201, %v3582
    %v3584 = vmul.f32 %v202, %v3582
    %v3585 = vsel %vm279, %v3583, 0.0
    %3586 = vadd.xlane.f32.xlu0 %v3585
    %v3587 = vpop.xlane.xlu0 %3586
    %v3588 = vsel %vm883, %v3584, 0.0
    %3589 = vadd.xlane.f32.xlu0 %v3588
    %v3590 = vpop.xlane.xlu0 %3589
    %v3591 = vsub.f32 %v3570, %v3587
    %v3592 = vsub.f32 %v3571, %v3590
    %v3593 = vmul.f32 %v3591, 1.442695
    %v3594 = vpow.pop %v3593
    %v3595 = vmul.f32 %v3592, 1.442695
    %v3596 = vpow.pop %v3595
    %v3598 = vsel %vm286, %v3596, 0
    %3600 = vmatprep.subr.mxu0 0.0
    %3601 = vmatpush1.msra.mxu0 %v3594
    %3602 = vmatprep.subr.mxu0 0.0
    %3603 = vmatpush1.msra.mxu0 %v3598
    %3604 = vmatprep.subr.mxu0 0.0
    %3605 = vmatpush1.msra.mxu0 0.0
    %3606 = vmatprep.subr.mxu0 0.0
    %3607 = vmatpush1.msra.mxu0 0.0
    %3608 = vmatprep.subr.mxu0 0.0
    %3609 = vmatpush1.msra.mxu0 0.0
    %3610 = vmatprep.subr.mxu0 0.0
    %3611 = vmatpush1.msra.mxu0 0.0
    %3612 = vmatprep.subr.mxu0 0.0
    %3613 = vmatpush1.msra.mxu0 0.0
    %3614 = vmatprep.subr.mxu0 0.0
    %3615 = vmatpush1.msra.mxu0 0.0
    %3616 = vmatprep.subr.mxu0 0.0
    %3617 = vmatpush1.msra.mxu0 0.0
    %3618 = vmatprep.subr.mxu0 0.0
    %3619 = vmatpush1.msra.mxu0 0.0
    %3620 = vmatprep.subr.mxu0 0.0
    %3621 = vmatpush1.msra.mxu0 0.0
    %3622 = vmatprep.subr.mxu0 0.0
    %3623 = vmatpush1.msra.mxu0 0.0
    %3624 = vmatprep.subr.mxu0 0.0
    %3625 = vmatpush1.msra.mxu0 0.0
    %3626 = vmatprep.subr.mxu0 0.0
    %3627 = vmatpush1.msra.mxu0 0.0
    %3628 = vmatprep.subr.mxu0 0.0
    %3629 = vmatpush1.msra.mxu0 0.0
    %3630 = vmatprep.subr.mxu0 0.0
    %3631 = vmatpush1.msra.mxu0 0.0
    %3632 = vmatprep.subr.mxu0 0.0
    %3633 = vmatpush1.msra.mxu0 0.0
    %3634 = vmatprep.subr.mxu0 0.0
    %3635 = vmatpush1.msra.mxu0 0.0
    %3636 = vmatprep.subr.mxu0 0.0
    %3637 = vmatpush1.msra.mxu0 0.0
    %3638 = vmatprep.subr.mxu0 0.0
    %3639 = vmatpush1.msra.mxu0 0.0
    %3640 = vmatprep.subr.mxu0 0.0
    %3641 = vmatpush1.msra.mxu0 0.0
    %3642 = vmatprep.subr.mxu0 0.0
    %3643 = vmatpush1.msra.mxu0 0.0
    %3644 = vmatprep.subr.mxu0 0.0
    %3645 = vmatpush1.msra.mxu0 0.0
    %3646 = vmatprep.subr.mxu0 0.0
    %3647 = vmatpush1.msra.mxu0 0.0
    %3648 = vmatprep.subr.mxu0 0.0
    %3649 = vmatpush1.msra.mxu0 0.0
    %3650 = vmatprep.subr.mxu0 0.0
    %3651 = vmatpush1.msra.mxu0 0.0
    %3652 = vmatprep.subr.mxu0 0.0
    %3653 = vmatpush1.msra.mxu0 0.0
    %3654 = vmatprep.subr.mxu0 0.0
    %3655 = vmatpush1.msra.mxu0 0.0
    %3656 = vmatprep.subr.mxu0 0.0
    %3657 = vmatpush1.msra.mxu0 0.0
    %3658 = vmatprep.subr.mxu0 0.0
    %3659 = vmatpush1.msra.mxu0 0.0
    %3660 = vmatprep.subr.mxu0 0.0
    %3661 = vmatpush1.msra.mxu0 0.0
    %3662 = vmatprep.subr.mxu0 0.0
    %3663 = vmatpush1.msra.mxu0 0.0
    %3664 = vmatprep.mubr.f32.mxu0 0.0
    %3665 = vmatmul.mubr.f32.gmra.mrb[0].mxu0 %v907
    %v3666 = vpop.f32.mrb[0].mxu0
    %v3667 = vadd.f32 0.0, %v3666
    %v3668 = vpop.f32.mrb[0].mxu0
    %3669 = vmatprep.mubr.f32.mxu0 0.0
    %3670 = vmatmul.mubr.f32.gmra.mrb[0].mxu0 %v910
    %v3671 = vpop.f32.mrb[0].mxu0
    %v3672 = vadd.f32 0.0, %v3671
    %v3673 = vpop.f32.mrb[0].mxu0
    %3674 = vdwg.mxu0
    %v3676 = vsel %vm286, %v3672, 0
    %3678 = vmatprep.subr.mxu0 0.0
    %3679 = vmatpush1.msra.mxu0 %v3667
    %3680 = vmatprep.subr.mxu0 0.0
    %3681 = vmatpush1.msra.mxu0 %v3676
    %3682 = vmatprep.subr.mxu0 0.0
    %3683 = vmatpush1.msra.mxu0 0.0
    %3684 = vmatprep.subr.mxu0 0.0
    %3685 = vmatpush1.msra.mxu0 0.0
    %3686 = vmatprep.subr.mxu0 0.0
    %3687 = vmatpush1.msra.mxu0 0.0
    %3688 = vmatprep.subr.mxu0 0.0
    %3689 = vmatpush1.msra.mxu0 0.0
    %3690 = vmatprep.subr.mxu0 0.0
    %3691 = vmatpush1.msra.mxu0 0.0
    %3692 = vmatprep.subr.mxu0 0.0
    %3693 = vmatpush1.msra.mxu0 0.0
    %3694 = vmatprep.subr.mxu0 0.0
    %3695 = vmatpush1.msra.mxu0 0.0
    %3696 = vmatprep.subr.mxu0 0.0
    %3697 = vmatpush1.msra.mxu0 0.0
    %3698 = vmatprep.subr.mxu0 0.0
    %3699 = vmatpush1.msra.mxu0 0.0
    %3700 = vmatprep.subr.mxu0 0.0
    %3701 = vmatpush1.msra.mxu0 0.0
    %3702 = vmatprep.subr.mxu0 0.0
    %3703 = vmatpush1.msra.mxu0 0.0
    %3704 = vmatprep.subr.mxu0 0.0
    %3705 = vmatpush1.msra.mxu0 0.0
    %3706 = vmatprep.subr.mxu0 0.0
    %3707 = vmatpush1.msra.mxu0 0.0
    %3708 = vmatprep.subr.mxu0 0.0
    %3709 = vmatpush1.msra.mxu0 0.0
    %3710 = vmatprep.subr.mxu0 0.0
    %3711 = vmatpush1.msra.mxu0 0.0
    %3712 = vmatprep.subr.mxu0 0.0
    %3713 = vmatpush1.msra.mxu0 0.0
    %3714 = vmatprep.subr.mxu0 0.0
    %3715 = vmatpush1.msra.mxu0 0.0
    %3716 = vmatprep.subr.mxu0 0.0
    %3717 = vmatpush1.msra.mxu0 0.0
    %3718 = vmatprep.subr.mxu0 0.0
    %3719 = vmatpush1.msra.mxu0 0.0
    %3720 = vmatprep.subr.mxu0 0.0
    %3721 = vmatpush1.msra.mxu0 0.0
    %3722 = vmatprep.subr.mxu0 0.0
    %3723 = vmatpush1.msra.mxu0 0.0
    %3724 = vmatprep.subr.mxu0 0.0
    %3725 = vmatpush1.msra.mxu0 0.0
    %3726 = vmatprep.subr.mxu0 0.0
    %3727 = vmatpush1.msra.mxu0 0.0
    %3728 = vmatprep.subr.mxu0 0.0
    %3729 = vmatpush1.msra.mxu0 0.0
    %3730 = vmatprep.subr.mxu0 0.0
    %3731 = vmatpush1.msra.mxu0 0.0
    %3732 = vmatprep.subr.mxu0 0.0
    %3733 = vmatpush1.msra.mxu0 0.0
    %3734 = vmatprep.subr.mxu0 0.0
    %3735 = vmatpush1.msra.mxu0 0.0
    %3736 = vmatprep.subr.mxu0 0.0
    %3737 = vmatpush1.msra.mxu0 0.0
    %3738 = vmatprep.subr.mxu0 0.0
    %3739 = vmatpush1.msra.mxu0 0.0
    %3740 = vmatprep.subr.mxu0 0.0
    %3741 = vmatpush1.msra.mxu0 0.0
    %3742 = vmatprep.mubr.f32.mxu0 0.0
    %3743 = vmatmul.mubr.f32.gmra.mrb[0].mxu0 %v536
    %v3744 = vpop.f32.mrb[0].mxu0
    %v3745 = vadd.f32 0.0, %v3744
    %v3746 = vpop.f32.mrb[0].mxu0
    %3747 = vmatprep.mubr.f32.mxu0 0.0
    %3748 = vmatmul.mubr.f32.gmra.mrb[0].mxu0 %v539
    %v3749 = vpop.f32.mrb[0].mxu0
    %v3750 = vadd.f32 0.0, %v3749
    %v3751 = vpop.f32.mrb[0].mxu0
    %3752 = vdwg.mxu0
    %v3753 = vrcp.pop %v3745
    %v3754 = vrcp.pop %v3750
    %v3755 = vmul.f32 %v3594, %v3753
    %v3756 = vmul.f32 %v3596, %v3754
    %3758 = vset.pattern.permute.xlu0 0
    %3759 = vperm.xlu0 %3758, %v3755
    %v3760 = vpop.permute.xlu0 %3759
    %3763 = vset.pattern.permute.xlu0 0
    %3764 = vperm.xlu0 %3763, %v3756
    %v3765 = vpop.permute.xlu0 %3764
    %3767 = vrot.lane.b32.xlu0 %v3294, 124
    %v3768 = vpop.permute.xlu0 %3767
    %3769 = vrot.lane.b32.xlu0 %v3299, 124
    %v3770 = vpop.permute.xlu0 %3769
    %v3771 = vrot.slane %v185, 4
    %v3772 = vsel %vm3302, %v3768, 0
    %v3774 = vsel %vm3302, %v3770, 0
    %v3776 = vsel %vm3309, %v3771, 0
    %3778 = vmatprep.subr.mxu0 0.0
    %3779 = vmatpush1.msra.mxu0 %v3776
    %3780 = vmatprep.subr.mxu0 0.0
    %3781 = vmatpush1.msra.mxu0 0.0
    %3782 = vmatprep.subr.mxu0 0.0
    %3783 = vmatpush1.msra.mxu0 0.0
    %3784 = vmatprep.subr.mxu0 0.0
    %3785 = vmatpush1.msra.mxu0 0.0
    %3786 = vmatprep.subr.mxu0 0.0
    %3787 = vmatpush1.msra.mxu0 0.0
    %3788 = vmatprep.subr.mxu0 0.0
    %3789 = vmatpush1.msra.mxu0 0.0
    %3790 = vmatprep.subr.mxu0 0.0
    %3791 = vmatpush1.msra.mxu0 0.0
    %3792 = vmatprep.subr.mxu0 0.0
    %3793 = vmatpush1.msra.mxu0 0.0
    %3794 = vmatprep.subr.mxu0 0.0
    %3795 = vmatpush1.msra.mxu0 0.0
    %3796 = vmatprep.subr.mxu0 0.0
    %3797 = vmatpush1.msra.mxu0 0.0
    %3798 = vmatprep.subr.mxu0 0.0
    %3799 = vmatpush1.msra.mxu0 0.0
    %3800 = vmatprep.subr.mxu0 0.0
    %3801 = vmatpush1.msra.mxu0 0.0
    %3802 = vmatprep.subr.mxu0 0.0
    %3803 = vmatpush1.msra.mxu0 0.0
    %3804 = vmatprep.subr.mxu0 0.0
    %3805 = vmatpush1.msra.mxu0 0.0
    %3806 = vmatprep.subr.mxu0 0.0
    %3807 = vmatpush1.msra.mxu0 0.0
    %3808 = vmatprep.subr.mxu0 0.0
    %3809 = vmatpush1.msra.mxu0 0.0
    %3810 = vmatprep.subr.mxu0 0.0
    %3811 = vmatpush1.msra.mxu0 0.0
    %3812 = vmatprep.subr.mxu0 0.0
    %3813 = vmatpush1.msra.mxu0 0.0
    %3814 = vmatprep.subr.mxu0 0.0
    %3815 = vmatpush1.msra.mxu0 0.0
    %3816 = vmatprep.subr.mxu0 0.0
    %3817 = vmatpush1.msra.mxu0 0.0
    %3818 = vmatprep.subr.mxu0 0.0
    %3819 = vmatpush1.msra.mxu0 0.0
    %3820 = vmatprep.subr.mxu0 0.0
    %3821 = vmatpush1.msra.mxu0 0.0
    %3822 = vmatprep.subr.mxu0 0.0
    %3823 = vmatpush1.msra.mxu0 0.0
    %3824 = vmatprep.subr.mxu0 0.0
    %3825 = vmatpush1.msra.mxu0 0.0
    %3826 = vmatprep.subr.mxu0 0.0
    %3827 = vmatpush1.msra.mxu0 0.0
    %3828 = vmatprep.subr.mxu0 0.0
    %3829 = vmatpush1.msra.mxu0 0.0
    %3830 = vmatprep.subr.mxu0 0.0
    %3831 = vmatpush1.msra.mxu0 0.0
    %3832 = vmatprep.subr.mxu0 0.0
    %3833 = vmatpush1.msra.mxu0 0.0
    %3834 = vmatprep.subr.mxu0 0.0
    %3835 = vmatpush1.msra.mxu0 0.0
    %3836 = vmatprep.subr.mxu0 0.0
    %3837 = vmatpush1.msra.mxu0 0.0
    %3838 = vmatprep.subr.mxu0 0.0
    %3839 = vmatpush1.msra.mxu0 0.0
    %3840 = vmatprep.subr.mxu0 0.0
    %3841 = vmatpush1.msra.mxu0 0.0
    %3842 = vmatprep.mubr.f32.mxu0 0.0
    %3843 = vmatmul.mubr.f32.gmra.mrb[0].mxu0 %v3772
    %v3844 = vpop.f32.mrb[0].mxu0
    %v3845 = vadd.f32 0.0, %v3844
    %v3846 = vpop.f32.mrb[0].mxu0
    %3847 = vmatprep.mubr.f32.mxu0 0.0
    %3848 = vmatmul.mubr.f32.gmra.mrb[0].mxu0 %v3774
    %v3849 = vpop.f32.mrb[0].mxu0
    %v3850 = vadd.f32 0.0, %v3849
    %v3851 = vpop.f32.mrb[0].mxu0
    %3852 = vdwg.mxu0
    %3853 = vrot.lane.b32.xlu0 %v3219, 124
    %v3854 = vpop.permute.xlu0 %3853
    %3855 = vrot.lane.b32.xlu0 %v3224, 124
    %v3856 = vpop.permute.xlu0 %3855
    %v3857 = vrot.slane %v184, 4
    %v3858 = vsel %vm3302, %v3854, 0
    %v3860 = vsel %vm3302, %v3856, 0
    %v3862 = vsel %vm3309, %v3857, 0
    %3864 = vmatprep.subr.mxu0 0.0
    %3865 = vmatpush1.msra.mxu0 %v3862
    %3866 = vmatprep.subr.mxu0 0.0
    %3867 = vmatpush1.msra.mxu0 0.0
    %3868 = vmatprep.subr.mxu0 0.0
    %3869 = vmatpush1.msra.mxu0 0.0
    %3870 = vmatprep.subr.mxu0 0.0
    %3871 = vmatpush1.msra.mxu0 0.0
    %3872 = vmatprep.subr.mxu0 0.0
    %3873 = vmatpush1.msra.mxu0 0.0
    %3874 = vmatprep.subr.mxu0 0.0
    %3875 = vmatpush1.msra.mxu0 0.0
    %3876 = vmatprep.subr.mxu0 0.0
    %3877 = vmatpush1.msra.mxu0 0.0
    %3878 = vmatprep.subr.mxu0 0.0
    %3879 = vmatpush1.msra.mxu0 0.0
    %3880 = vmatprep.subr.mxu0 0.0
    %3881 = vmatpush1.msra.mxu0 0.0
    %3882 = vmatprep.subr.mxu0 0.0
    %3883 = vmatpush1.msra.mxu0 0.0
    %3884 = vmatprep.subr.mxu0 0.0
    %3885 = vmatpush1.msra.mxu0 0.0
    %3886 = vmatprep.subr.mxu0 0.0
    %3887 = vmatpush1.msra.mxu0 0.0
    %3888 = vmatprep.subr.mxu0 0.0
    %3889 = vmatpush1.msra.mxu0 0.0
    %3890 = vmatprep.subr.mxu0 0.0
    %3891 = vmatpush1.msra.mxu0 0.0
    %3892 = vmatprep.subr.mxu0 0.0
    %3893 = vmatpush1.msra.mxu0 0.0
    %3894 = vmatprep.subr.mxu0 0.0
    %3895 = vmatpush1.msra.mxu0 0.0
    %3896 = vmatprep.subr.mxu0 0.0
    %3897 = vmatpush1.msra.mxu0 0.0
    %3898 = vmatprep.subr.mxu0 0.0
    %3899 = vmatpush1.msra.mxu0 0.0
    %3900 = vmatprep.subr.mxu0 0.0
    %3901 = vmatpush1.msra.mxu0 0.0
    %3902 = vmatprep.subr.mxu0 0.0
    %3903 = vmatpush1.msra.mxu0 0.0
    %3904 = vmatprep.subr.mxu0 0.0
    %3905 = vmatpush1.msra.mxu0 0.0
    %3906 = vmatprep.subr.mxu0 0.0
    %3907 = vmatpush1.msra.mxu0 0.0
    %3908 = vmatprep.subr.mxu0 0.0
    %3909 = vmatpush1.msra.mxu0 0.0
    %3910 = vmatprep.subr.mxu0 0.0
    %3911 = vmatpush1.msra.mxu0 0.0
    %3912 = vmatprep.subr.mxu0 0.0
    %3913 = vmatpush1.msra.mxu0 0.0
    %3914 = vmatprep.subr.mxu0 0.0
    %3915 = vmatpush1.msra.mxu0 0.0
    %3916 = vmatprep.subr.mxu0 0.0
    %3917 = vmatpush1.msra.mxu0 0.0
    %3918 = vmatprep.subr.mxu0 0.0
    %3919 = vmatpush1.msra.mxu0 0.0
    %3920 = vmatprep.subr.mxu0 0.0
    %3921 = vmatpush1.msra.mxu0 0.0
    %3922 = vmatprep.subr.mxu0 0.0
    %3923 = vmatpush1.msra.mxu0 0.0
    %3924 = vmatprep.subr.mxu0 0.0
    %3925 = vmatpush1.msra.mxu0 0.0
    %3926 = vmatprep.subr.mxu0 0.0
    %3927 = vmatpush1.msra.mxu0 0.0
    %3928 = vmatprep.mubr.f32.mxu0 0.0
    %3929 = vmatmul.mubr.f32.gmra.mrb[0].mxu0 %v3858
    %v3930 = vpop.f32.mrb[0].mxu0
    %v3931 = vadd.f32 %v3845, %v3930
    %v3932 = vpop.f32.mrb[0].mxu0
    %3933 = vmatprep.mubr.f32.mxu0 0.0
    %3934 = vmatmul.mubr.f32.gmra.mrb[0].mxu0 %v3860
    %v3935 = vpop.f32.mrb[0].mxu0
    %v3936 = vadd.f32 %v3850, %v3935
    %v3937 = vpop.f32.mrb[0].mxu0
    %3938 = vdwg.mxu0
    %3939 = vrot.lane.b32.xlu0 %v3141, 124
    %v3940 = vpop.permute.xlu0 %3939
    %3941 = vrot.lane.b32.xlu0 %v3146, 124
    %v3942 = vpop.permute.xlu0 %3941
    %v3943 = vrot.slane %v186, 4
    %v3944 = vsel %vm3302, %v3940, 0
    %v3946 = vsel %vm3302, %v3942, 0
    %v3948 = vsel %vm3309, %v3943, 0
    %3950 = vmatprep.subr.mxu0 0.0
    %3951 = vmatpush1.msra.mxu0 %v3948
    %3952 = vmatprep.subr.mxu0 0.0
    %3953 = vmatpush1.msra.mxu0 0.0
    %3954 = vmatprep.subr.mxu0 0.0
    %3955 = vmatpush1.msra.mxu0 0.0
    %3956 = vmatprep.subr.mxu0 0.0
    %3957 = vmatpush1.msra.mxu0 0.0
    %3958 = vmatprep.subr.mxu0 0.0
    %3959 = vmatpush1.msra.mxu0 0.0
    %3960 = vmatprep.subr.mxu0 0.0
    %3961 = vmatpush1.msra.mxu0 0.0
    %3962 = vmatprep.subr.mxu0 0.0
    %3963 = vmatpush1.msra.mxu0 0.0
    %3964 = vmatprep.subr.mxu0 0.0
    %3965 = vmatpush1.msra.mxu0 0.0
    %3966 = vmatprep.subr.mxu0 0.0
    %3967 = vmatpush1.msra.mxu0 0.0
    %3968 = vmatprep.subr.mxu0 0.0
    %3969 = vmatpush1.msra.mxu0 0.0
    %3970 = vmatprep.subr.mxu0 0.0
    %3971 = vmatpush1.msra.mxu0 0.0
    %3972 = vmatprep.subr.mxu0 0.0
    %3973 = vmatpush1.msra.mxu0 0.0
    %3974 = vmatprep.subr.mxu0 0.0
    %3975 = vmatpush1.msra.mxu0 0.0
    %3976 = vmatprep.subr.mxu0 0.0
    %3977 = vmatpush1.msra.mxu0 0.0
    %3978 = vmatprep.subr.mxu0 0.0
    %3979 = vmatpush1.msra.mxu0 0.0
    %3980 = vmatprep.subr.mxu0 0.0
    %3981 = vmatpush1.msra.mxu0 0.0
    %3982 = vmatprep.subr.mxu0 0.0
    %3983 = vmatpush1.msra.mxu0 0.0
    %3984 = vmatprep.subr.mxu0 0.0
    %3985 = vmatpush1.msra.mxu0 0.0
    %3986 = vmatprep.subr.mxu0 0.0
    %3987 = vmatpush1.msra.mxu0 0.0
    %3988 = vmatprep.subr.mxu0 0.0
    %3989 = vmatpush1.msra.mxu0 0.0
    %3990 = vmatprep.subr.mxu0 0.0
    %3991 = vmatpush1.msra.mxu0 0.0
    %3992 = vmatprep.subr.mxu0 0.0
    %3993 = vmatpush1.msra.mxu0 0.0
    %3994 = vmatprep.subr.mxu0 0.0
    %3995 = vmatpush1.msra.mxu0 0.0
    %3996 = vmatprep.subr.mxu0 0.0
    %3997 = vmatpush1.msra.mxu0 0.0
    %3998 = vmatprep.subr.mxu0 0.0
    %3999 = vmatpush1.msra.mxu0 0.0
    %4000 = vmatprep.subr.mxu0 0.0
    %4001 = vmatpush1.msra.mxu0 0.0
    %4002 = vmatprep.subr.mxu0 0.0
    %4003 = vmatpush1.msra.mxu0 0.0
    %4004 = vmatprep.subr.mxu0 0.0
    %4005 = vmatpush1.msra.mxu0 0.0
    %4006 = vmatprep.subr.mxu0 0.0
    %4007 = vmatpush1.msra.mxu0 0.0
    %4008 = vmatprep.subr.mxu0 0.0
    %4009 = vmatpush1.msra.mxu0 0.0
    %4010 = vmatprep.subr.mxu0 0.0
    %4011 = vmatpush1.msra.mxu0 0.0
    %4012 = vmatprep.subr.mxu0 0.0
    %4013 = vmatpush1.msra.mxu0 0.0
    %4014 = vmatprep.mubr.f32.mxu0 0.0
    %4015 = vmatmul.mubr.f32.gmra.mrb[0].mxu0 %v3944
    %v4016 = vpop.f32.mrb[0].mxu0
    %v4017 = vadd.f32 0.0, %v4016
    %v4018 = vpop.f32.mrb[0].mxu0
    %4019 = vmatprep.mubr.f32.mxu0 0.0
    %4020 = vmatmul.mubr.f32.gmra.mrb[0].mxu0 %v3946
    %v4021 = vpop.f32.mrb[0].mxu0
    %v4022 = vadd.f32 0.0, %v4021
    %v4023 = vpop.f32.mrb[0].mxu0
    %4024 = vdwg.mxu0
    %v4025 = vadd.f32 %v3931, %v4017
    %v4026 = vadd.f32 %v3936, %v4022
    %v4027 = vmul.f32 %v4025, %v203
    %v4028 = vmul.f32 %v4026, %v204
    %v4029 = vsel %vm864, %v4027, 0.0
    %4030 = vadd.xlane.f32.xlu0 %v4029
    %v4031 = vpop.xlane.xlu0 %4030
    %v4032 = vsel %vm868, %v4028, 0.0
    %4033 = vadd.xlane.f32.xlu0 %v4032
    %v4034 = vpop.xlane.xlu0 %4033
    %vm4035 = vcmp.ge.f32.partialorder %v4031, 0.0
    %vm4036 = vcmp.ge.f32.partialorder %v4034, 0.0
    %v4037 = vmul.f32 %v4031, 0.2
    %v4038 = vmul.f32 %v4034, 0.2
    %v4039 = vsel %vm4035, %v4031, %v4037
    %v4040 = vsel %vm4036, %v4034, %v4038
    %v4041 = vsel %vm878, %v4039, -1e+30
    %v4042 = vsel %vm879, %v4040, -1e+30
    %v4043 = vsel %vm279, %v4041, -inf
    %v4044 = vsel %vm883, %v4042, -inf
    %v4045 = vmax.f32 %v4043, %v4044
    %v4046 = vrot.slane %v4045, 4
    %v4047 = vmax.f32 %v4045, %v4046
    %v4048 = vrot.slane %v4047, 2
    %v4049 = vmax.f32 %v4047, %v4048
    %v4050 = vrot.slane %v4049, 1
    %v4051 = vmax.f32 %v4049, %v4050
    %v4052 = vmul.f32 %v201, %v4051
    %v4053 = vmul.f32 %v202, %v4051
    %v4054 = vsel %vm279, %v4052, 0.0
    %4055 = vadd.xlane.f32.xlu0 %v4054
    %v4056 = vpop.xlane.xlu0 %4055
    %v4057 = vsel %vm883, %v4053, 0.0
    %4058 = vadd.xlane.f32.xlu0 %v4057
    %v4059 = vpop.xlane.xlu0 %4058
    %v4060 = vsub.f32 %v4039, %v4056
    %v4061 = vsub.f32 %v4040, %v4059
    %v4062 = vmul.f32 %v4060, 1.442695
    %v4063 = vpow.pop %v4062
    %v4064 = vmul.f32 %v4061, 1.442695
    %v4065 = vpow.pop %v4064
    %v4067 = vsel %vm286, %v4065, 0
    %4069 = vmatprep.subr.mxu0 0.0
    %4070 = vmatpush1.msra.mxu0 %v4063
    %4071 = vmatprep.subr.mxu0 0.0
    %4072 = vmatpush1.msra.mxu0 %v4067
    %4073 = vmatprep.subr.mxu0 0.0
    %4074 = vmatpush1.msra.mxu0 0.0
    %4075 = vmatprep.subr.mxu0 0.0
    %4076 = vmatpush1.msra.mxu0 0.0
    %4077 = vmatprep.subr.mxu0 0.0
    %4078 = vmatpush1.msra.mxu0 0.0
    %4079 = vmatprep.subr.mxu0 0.0
    %4080 = vmatpush1.msra.mxu0 0.0
    %4081 = vmatprep.subr.mxu0 0.0
    %4082 = vmatpush1.msra.mxu0 0.0
    %4083 = vmatprep.subr.mxu0 0.0
    %4084 = vmatpush1.msra.mxu0 0.0
    %4085 = vmatprep.subr.mxu0 0.0
    %4086 = vmatpush1.msra.mxu0 0.0
    %4087 = vmatprep.subr.mxu0 0.0
    %4088 = vmatpush1.msra.mxu0 0.0
    %4089 = vmatprep.subr.mxu0 0.0
    %4090 = vmatpush1.msra.mxu0 0.0
    %4091 = vmatprep.subr.mxu0 0.0
    %4092 = vmatpush1.msra.mxu0 0.0
    %4093 = vmatprep.subr.mxu0 0.0
    %4094 = vmatpush1.msra.mxu0 0.0
    %4095 = vmatprep.subr.mxu0 0.0
    %4096 = vmatpush1.msra.mxu0 0.0
    %4097 = vmatprep.subr.mxu0 0.0
    %4098 = vmatpush1.msra.mxu0 0.0
    %4099 = vmatprep.subr.mxu0 0.0
    %4100 = vmatpush1.msra.mxu0 0.0
    %4101 = vmatprep.subr.mxu0 0.0
    %4102 = vmatpush1.msra.mxu0 0.0
    %4103 = vmatprep.subr.mxu0 0.0
    %4104 = vmatpush1.msra.mxu0 0.0
    %4105 = vmatprep.subr.mxu0 0.0
    %4106 = vmatpush1.msra.mxu0 0.0
    %4107 = vmatprep.subr.mxu0 0.0
    %4108 = vmatpush1.msra.mxu0 0.0
    %4109 = vmatprep.subr.mxu0 0.0
    %4110 = vmatpush1.msra.mxu0 0.0
    %4111 = vmatprep.subr.mxu0 0.0
    %4112 = vmatpush1.msra.mxu0 0.0
    %4113 = vmatprep.subr.mxu0 0.0
    %4114 = vmatpush1.msra.mxu0 0.0
    %4115 = vmatprep.subr.mxu0 0.0
    %4116 = vmatpush1.msra.mxu0 0.0
    %4117 = vmatprep.subr.mxu0 0.0
    %4118 = vmatpush1.msra.mxu0 0.0
    %4119 = vmatprep.subr.mxu0 0.0
    %4120 = vmatpush1.msra.mxu0 0.0
    %4121 = vmatprep.subr.mxu0 0.0
    %4122 = vmatpush1.msra.mxu0 0.0
    %4123 = vmatprep.subr.mxu0 0.0
    %4124 = vmatpush1.msra.mxu0 0.0
    %4125 = vmatprep.subr.mxu0 0.0
    %4126 = vmatpush1.msra.mxu0 0.0
    %4127 = vmatprep.subr.mxu0 0.0
    %4128 = vmatpush1.msra.mxu0 0.0
    %4129 = vmatprep.subr.mxu0 0.0
    %4130 = vmatpush1.msra.mxu0 0.0
    %4131 = vmatprep.subr.mxu0 0.0
    %4132 = vmatpush1.msra.mxu0 0.0
    %4133 = vmatprep.mubr.f32.mxu0 0.0
    %4134 = vmatmul.mubr.f32.gmra.mrb[0].mxu0 %v907
    %v4135 = vpop.f32.mrb[0].mxu0
    %v4136 = vadd.f32 0.0, %v4135
    %v4137 = vpop.f32.mrb[0].mxu0
    %4138 = vmatprep.mubr.f32.mxu0 0.0
    %4139 = vmatmul.mubr.f32.gmra.mrb[0].mxu0 %v910
    %v4140 = vpop.f32.mrb[0].mxu0
    %v4141 = vadd.f32 0.0, %v4140
    %v4142 = vpop.f32.mrb[0].mxu0
    %4143 = vdwg.mxu0
    %v4145 = vsel %vm286, %v4141, 0
    %4147 = vmatprep.subr.mxu0 0.0
    %4148 = vmatpush1.msra.mxu0 %v4136
    %4149 = vmatprep.subr.mxu0 0.0
    %4150 = vmatpush1.msra.mxu0 %v4145
    %4151 = vmatprep.subr.mxu0 0.0
    %4152 = vmatpush1.msra.mxu0 0.0
    %4153 = vmatprep.subr.mxu0 0.0
    %4154 = vmatpush1.msra.mxu0 0.0
    %4155 = vmatprep.subr.mxu0 0.0
    %4156 = vmatpush1.msra.mxu0 0.0
    %4157 = vmatprep.subr.mxu0 0.0
    %4158 = vmatpush1.msra.mxu0 0.0
    %4159 = vmatprep.subr.mxu0 0.0
    %4160 = vmatpush1.msra.mxu0 0.0
    %4161 = vmatprep.subr.mxu0 0.0
    %4162 = vmatpush1.msra.mxu0 0.0
    %4163 = vmatprep.subr.mxu0 0.0
    %4164 = vmatpush1.msra.mxu0 0.0
    %4165 = vmatprep.subr.mxu0 0.0
    %4166 = vmatpush1.msra.mxu0 0.0
    %4167 = vmatprep.subr.mxu0 0.0
    %4168 = vmatpush1.msra.mxu0 0.0
    %4169 = vmatprep.subr.mxu0 0.0
    %4170 = vmatpush1.msra.mxu0 0.0
    %4171 = vmatprep.subr.mxu0 0.0
    %4172 = vmatpush1.msra.mxu0 0.0
    %4173 = vmatprep.subr.mxu0 0.0
    %4174 = vmatpush1.msra.mxu0 0.0
    %4175 = vmatprep.subr.mxu0 0.0
    %4176 = vmatpush1.msra.mxu0 0.0
    %4177 = vmatprep.subr.mxu0 0.0
    %4178 = vmatpush1.msra.mxu0 0.0
    %4179 = vmatprep.subr.mxu0 0.0
    %4180 = vmatpush1.msra.mxu0 0.0
    %4181 = vmatprep.subr.mxu0 0.0
    %4182 = vmatpush1.msra.mxu0 0.0
    %4183 = vmatprep.subr.mxu0 0.0
    %4184 = vmatpush1.msra.mxu0 0.0
    %4185 = vmatprep.subr.mxu0 0.0
    %4186 = vmatpush1.msra.mxu0 0.0
    %4187 = vmatprep.subr.mxu0 0.0
    %4188 = vmatpush1.msra.mxu0 0.0
    %4189 = vmatprep.subr.mxu0 0.0
    %4190 = vmatpush1.msra.mxu0 0.0
    %4191 = vmatprep.subr.mxu0 0.0
    %4192 = vmatpush1.msra.mxu0 0.0
    %4193 = vmatprep.subr.mxu0 0.0
    %4194 = vmatpush1.msra.mxu0 0.0
    %4195 = vmatprep.subr.mxu0 0.0
    %4196 = vmatpush1.msra.mxu0 0.0
    %4197 = vmatprep.subr.mxu0 0.0
    %4198 = vmatpush1.msra.mxu0 0.0
    %4199 = vmatprep.subr.mxu0 0.0
    %4200 = vmatpush1.msra.mxu0 0.0
    %4201 = vmatprep.subr.mxu0 0.0
    %4202 = vmatpush1.msra.mxu0 0.0
    %4203 = vmatprep.subr.mxu0 0.0
    %4204 = vmatpush1.msra.mxu0 0.0
    %4205 = vmatprep.subr.mxu0 0.0
    %4206 = vmatpush1.msra.mxu0 0.0
    %4207 = vmatprep.subr.mxu0 0.0
    %4208 = vmatpush1.msra.mxu0 0.0
    %4209 = vmatprep.subr.mxu0 0.0
    %4210 = vmatpush1.msra.mxu0 0.0
    %4211 = vmatprep.mubr.f32.mxu0 0.0
    %4212 = vmatmul.mubr.f32.gmra.mrb[0].mxu0 %v536
    %v4213 = vpop.f32.mrb[0].mxu0
    %v4214 = vadd.f32 0.0, %v4213
    %v4215 = vpop.f32.mrb[0].mxu0
    %4216 = vmatprep.mubr.f32.mxu0 0.0
    %4217 = vmatmul.mubr.f32.gmra.mrb[0].mxu0 %v539
    %v4218 = vpop.f32.mrb[0].mxu0
    %v4219 = vadd.f32 0.0, %v4218
    %v4220 = vpop.f32.mrb[0].mxu0
    %4221 = vdwg.mxu0
    %v4222 = vrcp.pop %v4214
    %v4223 = vrcp.pop %v4219
    %v4224 = vmul.f32 %v4063, %v4222
    %v4225 = vmul.f32 %v4065, %v4223
    %4227 = vset.pattern.permute.xlu0 0
    %4228 = vperm.xlu0 %4227, %v4224
    %v4229 = vpop.permute.xlu0 %4228
    %4232 = vset.pattern.permute.xlu0 0
    %4233 = vperm.xlu0 %4232, %v4225
    %v4234 = vpop.permute.xlu0 %4233
    %v4236 = vsel %vm3302, %v3760, %v4229
    %v4237 = vsel %vm3302, %v3765, %v4234
    %v4238 = vmul.f32 %v3219, %v4236
    %v4239 = vmul.f32 %v3224, %v4237
    %v4241 = vsel %vm286, %v4239, 0
    %4243 = vmatprep.subr.mxu0 0.0
    %4244 = vmatpush1.msra.mxu0 %v4238
    %4245 = vmatprep.subr.mxu0 0.0
    %4246 = vmatpush1.msra.mxu0 %v4241
    %4247 = vmatprep.subr.mxu0 0.0
    %4248 = vmatpush1.msra.mxu0 0.0
    %4249 = vmatprep.subr.mxu0 0.0
    %4250 = vmatpush1.msra.mxu0 0.0
    %4251 = vmatprep.subr.mxu0 0.0
    %4252 = vmatpush1.msra.mxu0 0.0
    %4253 = vmatprep.subr.mxu0 0.0
    %4254 = vmatpush1.msra.mxu0 0.0
    %4255 = vmatprep.subr.mxu0 0.0
    %4256 = vmatpush1.msra.mxu0 0.0
    %4257 = vmatprep.subr.mxu0 0.0
    %4258 = vmatpush1.msra.mxu0 0.0
    %4259 = vmatprep.subr.mxu0 0.0
    %4260 = vmatpush1.msra.mxu0 0.0
    %4261 = vmatprep.subr.mxu0 0.0
    %4262 = vmatpush1.msra.mxu0 0.0
    %4263 = vmatprep.subr.mxu0 0.0
    %4264 = vmatpush1.msra.mxu0 0.0
    %4265 = vmatprep.subr.mxu0 0.0
    %4266 = vmatpush1.msra.mxu0 0.0
    %4267 = vmatprep.subr.mxu0 0.0
    %4268 = vmatpush1.msra.mxu0 0.0
    %4269 = vmatprep.subr.mxu0 0.0
    %4270 = vmatpush1.msra.mxu0 0.0
    %4271 = vmatprep.subr.mxu0 0.0
    %4272 = vmatpush1.msra.mxu0 0.0
    %4273 = vmatprep.subr.mxu0 0.0
    %4274 = vmatpush1.msra.mxu0 0.0
    %4275 = vmatprep.subr.mxu0 0.0
    %4276 = vmatpush1.msra.mxu0 0.0
    %4277 = vmatprep.subr.mxu0 0.0
    %4278 = vmatpush1.msra.mxu0 0.0
    %4279 = vmatprep.subr.mxu0 0.0
    %4280 = vmatpush1.msra.mxu0 0.0
    %4281 = vmatprep.subr.mxu0 0.0
    %4282 = vmatpush1.msra.mxu0 0.0
    %4283 = vmatprep.subr.mxu0 0.0
    %4284 = vmatpush1.msra.mxu0 0.0
    %4285 = vmatprep.subr.mxu0 0.0
    %4286 = vmatpush1.msra.mxu0 0.0
    %4287 = vmatprep.subr.mxu0 0.0
    %4288 = vmatpush1.msra.mxu0 0.0
    %4289 = vmatprep.subr.mxu0 0.0
    %4290 = vmatpush1.msra.mxu0 0.0
    %4291 = vmatprep.subr.mxu0 0.0
    %4292 = vmatpush1.msra.mxu0 0.0
    %4293 = vmatprep.subr.mxu0 0.0
    %4294 = vmatpush1.msra.mxu0 0.0
    %4295 = vmatprep.subr.mxu0 0.0
    %4296 = vmatpush1.msra.mxu0 0.0
    %4297 = vmatprep.subr.mxu0 0.0
    %4298 = vmatpush1.msra.mxu0 0.0
    %4299 = vmatprep.subr.mxu0 0.0
    %4300 = vmatpush1.msra.mxu0 0.0
    %4301 = vmatprep.subr.mxu0 0.0
    %4302 = vmatpush1.msra.mxu0 0.0
    %4303 = vmatprep.subr.mxu0 0.0
    %4304 = vmatpush1.msra.mxu0 0.0
    %4305 = vmatprep.subr.mxu0 0.0
    %4306 = vmatpush1.msra.mxu0 0.0
    %4307 = vmatprep.mubr.f32.mxu0 0.0
    %4308 = vmatmul.mubr.f32.gmra.mrb[0].mxu0 %v907
    %v4309 = vpop.f32.mrb[0].mxu0
    %v4310 = vadd.f32 0.0, %v4309
    %v4311 = vpop.f32.mrb[0].mxu0
    %4312 = vmatprep.mubr.f32.mxu0 0.0
    %4313 = vmatmul.mubr.f32.gmra.mrb[0].mxu0 %v910
    %v4314 = vpop.f32.mrb[0].mxu0
    %v4315 = vadd.f32 0.0, %v4314
    %v4316 = vpop.f32.mrb[0].mxu0
    %4317 = vdwg.mxu0
    %v4318 = vadd.f32 %v3141, %v3219
    %v4319 = vadd.f32 %v3146, %v3224
    %v4320 = vadd.f32 %v4318, %v3294
    %v4321 = vadd.f32 %v4319, %v3299
    %v4322 = vmul.f32 %v4320, %v1628
    %v4323 = vmul.f32 %v4321, %v1628
    %4326 = vrot.lane.b32.xlu0 %v4310, 124
    %v4327 = vpop.permute.xlu0 %4326
    %4328 = vrot.lane.b32.xlu0 %v4315, 124
    %v4329 = vpop.permute.xlu0 %4328
    %v4332 = vadd.f32 %v4310, %v4327
    %v4333 = vadd.f32 %v4315, %v4329
    %4336 = vrot.lane.b32.xlu0 %v4322, 124
    %v4337 = vpop.permute.xlu0 %4336
    %4338 = vrot.lane.b32.xlu0 %v4323, 124
    %v4339 = vpop.permute.xlu0 %4338
    %v4342 = vadd.f32 %v4322, %v4337
    %v4343 = vadd.f32 %v4323, %v4339
    %v4344 = vrcp.pop 2.0
    %v4345 = vmul.f32 %v4332, %v4344
    %v4346 = vmul.f32 %v4333, %v4344
    %v4347 = vmul.f32 %v4342, %v4344
    %v4348 = vmul.f32 %v4343, %v4344
    %v4349 = vsub.f32 0.0, %v4345
    %v4350 = vsub.f32 0.0, %v4346
    %v4351 = vmul.f32 %v4349, 1.442695
    %v4352 = vpow.pop %v4351
    %v4353 = vmul.f32 %v4350, 1.442695
    %v4354 = vpow.pop %v4353
    %v4355 = vadd.f32 %v4352, 1.0
    %v4356 = vadd.f32 %v4354, 1.0
    %v4357 = vrcp.pop %v4355
    %v4358 = vmul.f32 1.0, %v4357
    %v4359 = vrcp.pop %v4356
    %v4360 = vmul.f32 1.0, %v4359
    %v4361 = vsub.f32 0.0, %v4347
    %v4362 = vsub.f32 0.0, %v4348
    %v4363 = vmul.f32 %v4361, 1.442695
    %v4364 = vpow.pop %v4363
    %v4365 = vmul.f32 %v4362, 1.442695
    %v4366 = vpow.pop %v4365
    %v4367 = vadd.f32 %v4364, 1.0
    %v4368 = vadd.f32 %v4366, 1.0
    %v4369 = vrcp.pop %v4367
    %v4370 = vmul.f32 1.0, %v4369
    %v4371 = vrcp.pop %v4368
    %v4372 = vmul.f32 1.0, %v4371
    %4373 = vmatprep.subr.mxu0 0.0
    %4374 = vmatpush1.msra.mxu0 %v187
    %4375 = vmatprep.subr.mxu0 0.0
    %4376 = vmatpush1.msra.mxu0 %v188
    %4377 = vmatprep.subr.mxu0 0.0
    %4378 = vmatpush1.msra.mxu0 0.0
    %4379 = vmatprep.subr.mxu0 0.0
    %4380 = vmatpush1.msra.mxu0 0.0
    %4381 = vmatprep.subr.mxu0 0.0
    %4382 = vmatpush1.msra.mxu0 0.0
    %4383 = vmatprep.subr.mxu0 0.0
    %4384 = vmatpush1.msra.mxu0 0.0
    %4385 = vmatprep.subr.mxu0 0.0
    %4386 = vmatpush1.msra.mxu0 0.0
    %4387 = vmatprep.subr.mxu0 0.0
    %4388 = vmatpush1.msra.mxu0 0.0
    %4389 = vmatprep.subr.mxu0 0.0
    %4390 = vmatpush1.msra.mxu0 0.0
    %4391 = vmatprep.subr.mxu0 0.0
    %4392 = vmatpush1.msra.mxu0 0.0
    %4393 = vmatprep.subr.mxu0 0.0
    %4394 = vmatpush1.msra.mxu0 0.0
    %4395 = vmatprep.subr.mxu0 0.0
    %4396 = vmatpush1.msra.mxu0 0.0
    %4397 = vmatprep.subr.mxu0 0.0
    %4398 = vmatpush1.msra.mxu0 0.0
    %4399 = vmatprep.subr.mxu0 0.0
    %4400 = vmatpush1.msra.mxu0 0.0
    %4401 = vmatprep.subr.mxu0 0.0
    %4402 = vmatpush1.msra.mxu0 0.0
    %4403 = vmatprep.subr.mxu0 0.0
    %4404 = vmatpush1.msra.mxu0 0.0
    %4405 = vmatprep.subr.mxu0 0.0
    %4406 = vmatpush1.msra.mxu0 0.0
    %4407 = vmatprep.subr.mxu0 0.0
    %4408 = vmatpush1.msra.mxu0 0.0
    %4409 = vmatprep.subr.mxu0 0.0
    %4410 = vmatpush1.msra.mxu0 0.0
    %4411 = vmatprep.subr.mxu0 0.0
    %4412 = vmatpush1.msra.mxu0 0.0
    %4413 = vmatprep.subr.mxu0 0.0
    %4414 = vmatpush1.msra.mxu0 0.0
    %4415 = vmatprep.subr.mxu0 0.0
    %4416 = vmatpush1.msra.mxu0 0.0
    %4417 = vmatprep.subr.mxu0 0.0
    %4418 = vmatpush1.msra.mxu0 0.0
    %4419 = vmatprep.subr.mxu0 0.0
    %4420 = vmatpush1.msra.mxu0 0.0
    %4421 = vmatprep.subr.mxu0 0.0
    %4422 = vmatpush1.msra.mxu0 0.0
    %4423 = vmatprep.subr.mxu0 0.0
    %4424 = vmatpush1.msra.mxu0 0.0
    %4425 = vmatprep.subr.mxu0 0.0
    %4426 = vmatpush1.msra.mxu0 0.0
    %4427 = vmatprep.subr.mxu0 0.0
    %4428 = vmatpush1.msra.mxu0 0.0
    %4429 = vmatprep.subr.mxu0 0.0
    %4430 = vmatpush1.msra.mxu0 0.0
    %4431 = vmatprep.subr.mxu0 0.0
    %4432 = vmatpush1.msra.mxu0 0.0
    %4433 = vmatprep.subr.mxu0 0.0
    %4434 = vmatpush1.msra.mxu0 0.0
    %4435 = vmatprep.subr.mxu0 0.0
    %4436 = vmatpush1.msra.mxu0 0.0
    %4437 = vmatprep.mubr.f32.mxu0 0.0
    %4438 = vmatmul.mubr.f32.gmra.mrb[0].mxu0 %v2988
    %v4439 = vpop.f32.mrb[0].mxu0
    %v4440 = vadd.f32 0.0, %v4439
    %v4441 = vpop.f32.mrb[0].mxu0
    %4442 = vmatprep.mubr.f32.mxu0 0.0
    %4443 = vmatmul.mubr.f32.gmra.mrb[0].mxu0 %v2991
    %v4444 = vpop.f32.mrb[0].mxu0
    %v4445 = vadd.f32 0.0, %v4444
    %v4446 = vpop.f32.mrb[0].mxu0
    %4447 = vdwg.mxu0
    %4448 = vmatprep.subr.mxu0 0.0
    %4449 = vmatpush1.msra.mxu0 %v189
    %4450 = vmatprep.subr.mxu0 0.0
    %4451 = vmatpush1.msra.mxu0 %v190
    %4452 = vmatprep.subr.mxu0 0.0
    %4453 = vmatpush1.msra.mxu0 0.0
    %4454 = vmatprep.subr.mxu0 0.0
    %4455 = vmatpush1.msra.mxu0 0.0
    %4456 = vmatprep.subr.mxu0 0.0
    %4457 = vmatpush1.msra.mxu0 0.0
    %4458 = vmatprep.subr.mxu0 0.0
    %4459 = vmatpush1.msra.mxu0 0.0
    %4460 = vmatprep.subr.mxu0 0.0
    %4461 = vmatpush1.msra.mxu0 0.0
    %4462 = vmatprep.subr.mxu0 0.0
    %4463 = vmatpush1.msra.mxu0 0.0
    %4464 = vmatprep.subr.mxu0 0.0
    %4465 = vmatpush1.msra.mxu0 0.0
    %4466 = vmatprep.subr.mxu0 0.0
    %4467 = vmatpush1.msra.mxu0 0.0
    %4468 = vmatprep.subr.mxu0 0.0
    %4469 = vmatpush1.msra.mxu0 0.0
    %4470 = vmatprep.subr.mxu0 0.0
    %4471 = vmatpush1.msra.mxu0 0.0
    %4472 = vmatprep.subr.mxu0 0.0
    %4473 = vmatpush1.msra.mxu0 0.0
    %4474 = vmatprep.subr.mxu0 0.0
    %4475 = vmatpush1.msra.mxu0 0.0
    %4476 = vmatprep.subr.mxu0 0.0
    %4477 = vmatpush1.msra.mxu0 0.0
    %4478 = vmatprep.subr.mxu0 0.0
    %4479 = vmatpush1.msra.mxu0 0.0
    %4480 = vmatprep.subr.mxu0 0.0
    %4481 = vmatpush1.msra.mxu0 0.0
    %4482 = vmatprep.subr.mxu0 0.0
    %4483 = vmatpush1.msra.mxu0 0.0
    %4484 = vmatprep.subr.mxu0 0.0
    %4485 = vmatpush1.msra.mxu0 0.0
    %4486 = vmatprep.subr.mxu0 0.0
    %4487 = vmatpush1.msra.mxu0 0.0
    %4488 = vmatprep.subr.mxu0 0.0
    %4489 = vmatpush1.msra.mxu0 0.0
    %4490 = vmatprep.subr.mxu0 0.0
    %4491 = vmatpush1.msra.mxu0 0.0
    %4492 = vmatprep.subr.mxu0 0.0
    %4493 = vmatpush1.msra.mxu0 0.0
    %4494 = vmatprep.subr.mxu0 0.0
    %4495 = vmatpush1.msra.mxu0 0.0
    %4496 = vmatprep.subr.mxu0 0.0
    %4497 = vmatpush1.msra.mxu0 0.0
    %4498 = vmatprep.subr.mxu0 0.0
    %4499 = vmatpush1.msra.mxu0 0.0
    %4500 = vmatprep.subr.mxu0 0.0
    %4501 = vmatpush1.msra.mxu0 0.0
    %4502 = vmatprep.subr.mxu0 0.0
    %4503 = vmatpush1.msra.mxu0 0.0
    %4504 = vmatprep.subr.mxu0 0.0
    %4505 = vmatpush1.msra.mxu0 0.0
    %4506 = vmatprep.subr.mxu0 0.0
    %4507 = vmatpush1.msra.mxu0 0.0
    %4508 = vmatprep.subr.mxu0 0.0
    %4509 = vmatpush1.msra.mxu0 0.0
    %4510 = vmatprep.subr.mxu0 0.0
    %4511 = vmatpush1.msra.mxu0 0.0
    %4512 = vmatprep.mubr.f32.mxu0 0.0
    %4513 = vmatmul.mubr.f32.gmra.mrb[0].mxu0 %v3069
    %v4514 = vpop.f32.mrb[0].mxu0
    %v4515 = vadd.f32 0.0, %v4514
    %v4516 = vpop.f32.mrb[0].mxu0
    %4517 = vmatprep.mubr.f32.mxu0 0.0
    %4518 = vmatmul.mubr.f32.gmra.mrb[0].mxu0 %v3072
    %v4519 = vpop.f32.mrb[0].mxu0
    %v4520 = vadd.f32 0.0, %v4519
    %v4521 = vpop.f32.mrb[0].mxu0
    %4522 = vdwg.mxu0
    %v4524 = vsel %vm286, %v4445, 0
    %4526 = vmatprep.subr.mxu0 0.0
    %4527 = vmatpush1.msra.mxu0 %v4440
    %4528 = vmatprep.subr.mxu0 0.0
    %4529 = vmatpush1.msra.mxu0 %v4524
    %4530 = vmatprep.subr.mxu0 0.0
    %4531 = vmatpush1.msra.mxu0 0.0
    %4532 = vmatprep.subr.mxu0 0.0
    %4533 = vmatpush1.msra.mxu0 0.0
    %4534 = vmatprep.subr.mxu0 0.0
    %4535 = vmatpush1.msra.mxu0 0.0
    %4536 = vmatprep.subr.mxu0 0.0
    %4537 = vmatpush1.msra.mxu0 0.0
    %4538 = vmatprep.subr.mxu0 0.0
    %4539 = vmatpush1.msra.mxu0 0.0
    %4540 = vmatprep.subr.mxu0 0.0
    %4541 = vmatpush1.msra.mxu0 0.0
    %4542 = vmatprep.subr.mxu0 0.0
    %4543 = vmatpush1.msra.mxu0 0.0
    %4544 = vmatprep.subr.mxu0 0.0
    %4545 = vmatpush1.msra.mxu0 0.0
    %4546 = vmatprep.subr.mxu0 0.0
    %4547 = vmatpush1.msra.mxu0 0.0
    %4548 = vmatprep.subr.mxu0 0.0
    %4549 = vmatpush1.msra.mxu0 0.0
    %4550 = vmatprep.subr.mxu0 0.0
    %4551 = vmatpush1.msra.mxu0 0.0
    %4552 = vmatprep.subr.mxu0 0.0
    %4553 = vmatpush1.msra.mxu0 0.0
    %4554 = vmatprep.subr.mxu0 0.0
    %4555 = vmatpush1.msra.mxu0 0.0
    %4556 = vmatprep.subr.mxu0 0.0
    %4557 = vmatpush1.msra.mxu0 0.0
    %4558 = vmatprep.subr.mxu0 0.0
    %4559 = vmatpush1.msra.mxu0 0.0
    %4560 = vmatprep.subr.mxu0 0.0
    %4561 = vmatpush1.msra.mxu0 0.0
    %4562 = vmatprep.subr.mxu0 0.0
    %4563 = vmatpush1.msra.mxu0 0.0
    %4564 = vmatprep.subr.mxu0 0.0
    %4565 = vmatpush1.msra.mxu0 0.0
    %4566 = vmatprep.subr.mxu0 0.0
    %4567 = vmatpush1.msra.mxu0 0.0
    %4568 = vmatprep.subr.mxu0 0.0
    %4569 = vmatpush1.msra.mxu0 0.0
    %4570 = vmatprep.subr.mxu0 0.0
    %4571 = vmatpush1.msra.mxu0 0.0
    %4572 = vmatprep.subr.mxu0 0.0
    %4573 = vmatpush1.msra.mxu0 0.0
    %4574 = vmatprep.subr.mxu0 0.0
    %4575 = vmatpush1.msra.mxu0 0.0
    %4576 = vmatprep.subr.mxu0 0.0
    %4577 = vmatpush1.msra.mxu0 0.0
    %4578 = vmatprep.subr.mxu0 0.0
    %4579 = vmatpush1.msra.mxu0 0.0
    %4580 = vmatprep.subr.mxu0 0.0
    %4581 = vmatpush1.msra.mxu0 0.0
    %4582 = vmatprep.subr.mxu0 0.0
    %4583 = vmatpush1.msra.mxu0 0.0
    %4584 = vmatprep.subr.mxu0 0.0
    %4585 = vmatpush1.msra.mxu0 0.0
    %4586 = vmatprep.subr.mxu0 0.0
    %4587 = vmatpush1.msra.mxu0 0.0
    %4588 = vmatprep.subr.mxu0 0.0
    %4589 = vmatpush1.msra.mxu0 0.0
    %4590 = vmatprep.mubr.f32.mxu0 0.0
    %4591 = vmatmul.mubr.f32.gmra.mrb[0].mxu0 %v1804
    %v4592 = vpop.f32.mrb[0].mxu0
    %v4593 = vadd.f32 0.0, %v4592
    %v4594 = vpop.f32.mrb[0].mxu0
    %4595 = vmatprep.mubr.f32.mxu0 0.0
    %4596 = vmatmul.mubr.f32.gmra.mrb[0].mxu0 %v1807
    %v4597 = vpop.f32.mrb[0].mxu0
    %v4598 = vadd.f32 0.0, %v4597
    %v4599 = vpop.f32.mrb[0].mxu0
    %4600 = vdwg.mxu0
    %4601 = vmatprep.subr.mxu0 0.0
    %4602 = vmatpush1.msra.mxu0 %v4440
    %4603 = vmatprep.subr.mxu0 0.0
    %4604 = vmatpush1.msra.mxu0 %v4524
    %4605 = vmatprep.subr.mxu0 0.0
    %4606 = vmatpush1.msra.mxu0 0.0
    %4607 = vmatprep.subr.mxu0 0.0
    %4608 = vmatpush1.msra.mxu0 0.0
    %4609 = vmatprep.subr.mxu0 0.0
    %4610 = vmatpush1.msra.mxu0 0.0
    %4611 = vmatprep.subr.mxu0 0.0
    %4612 = vmatpush1.msra.mxu0 0.0
    %4613 = vmatprep.subr.mxu0 0.0
    %4614 = vmatpush1.msra.mxu0 0.0
    %4615 = vmatprep.subr.mxu0 0.0
    %4616 = vmatpush1.msra.mxu0 0.0
    %4617 = vmatprep.subr.mxu0 0.0
    %4618 = vmatpush1.msra.mxu0 0.0
    %4619 = vmatprep.subr.mxu0 0.0
    %4620 = vmatpush1.msra.mxu0 0.0
    %4621 = vmatprep.subr.mxu0 0.0
    %4622 = vmatpush1.msra.mxu0 0.0
    %4623 = vmatprep.subr.mxu0 0.0
    %4624 = vmatpush1.msra.mxu0 0.0
    %4625 = vmatprep.subr.mxu0 0.0
    %4626 = vmatpush1.msra.mxu0 0.0
    %4627 = vmatprep.subr.mxu0 0.0
    %4628 = vmatpush1.msra.mxu0 0.0
    %4629 = vmatprep.subr.mxu0 0.0
    %4630 = vmatpush1.msra.mxu0 0.0
    %4631 = vmatprep.subr.mxu0 0.0
    %4632 = vmatpush1.msra.mxu0 0.0
    %4633 = vmatprep.subr.mxu0 0.0
    %4634 = vmatpush1.msra.mxu0 0.0
    %4635 = vmatprep.subr.mxu0 0.0
    %4636 = vmatpush1.msra.mxu0 0.0
    %4637 = vmatprep.subr.mxu0 0.0
    %4638 = vmatpush1.msra.mxu0 0.0
    %4639 = vmatprep.subr.mxu0 0.0
    %4640 = vmatpush1.msra.mxu0 0.0
    %4641 = vmatprep.subr.mxu0 0.0
    %4642 = vmatpush1.msra.mxu0 0.0
    %4643 = vmatprep.subr.mxu0 0.0
    %4644 = vmatpush1.msra.mxu0 0.0
    %4645 = vmatprep.subr.mxu0 0.0
    %4646 = vmatpush1.msra.mxu0 0.0
    %4647 = vmatprep.subr.mxu0 0.0
    %4648 = vmatpush1.msra.mxu0 0.0
    %4649 = vmatprep.subr.mxu0 0.0
    %4650 = vmatpush1.msra.mxu0 0.0
    %4651 = vmatprep.subr.mxu0 0.0
    %4652 = vmatpush1.msra.mxu0 0.0
    %4653 = vmatprep.subr.mxu0 0.0
    %4654 = vmatpush1.msra.mxu0 0.0
    %4655 = vmatprep.subr.mxu0 0.0
    %4656 = vmatpush1.msra.mxu0 0.0
    %4657 = vmatprep.subr.mxu0 0.0
    %4658 = vmatpush1.msra.mxu0 0.0
    %4659 = vmatprep.subr.mxu0 0.0
    %4660 = vmatpush1.msra.mxu0 0.0
    %4661 = vmatprep.subr.mxu0 0.0
    %4662 = vmatpush1.msra.mxu0 0.0
    %4663 = vmatprep.subr.mxu0 0.0
    %4664 = vmatpush1.msra.mxu0 0.0
    %4665 = vmatprep.mubr.f32.mxu0 0.0
    %4666 = vmatmul.mubr.f32.gmra.mrb[0].mxu0 %v1888
    %v4667 = vpop.f32.mrb[0].mxu0
    %v4668 = vadd.f32 0.0, %v4667
    %v4669 = vpop.f32.mrb[0].mxu0
    %4670 = vmatprep.mubr.f32.mxu0 0.0
    %4671 = vmatmul.mubr.f32.gmra.mrb[0].mxu0 %v1891
    %v4672 = vpop.f32.mrb[0].mxu0
    %v4673 = vadd.f32 0.0, %v4672
    %v4674 = vpop.f32.mrb[0].mxu0
    %4675 = vdwg.mxu0
    %v4677 = vsel %vm3302, %v4668, 0
    %v4680 = vsel %vm3302, %v4673, 0
    %v4683 = vsel %vm3309, %v192, 0
    %4685 = vmatprep.subr.mxu0 0.0
    %4686 = vmatpush1.msra.mxu0 %v4683
    %4687 = vmatprep.subr.mxu0 0.0
    %4688 = vmatpush1.msra.mxu0 0.0
    %4689 = vmatprep.subr.mxu0 0.0
    %4690 = vmatpush1.msra.mxu0 0.0
    %4691 = vmatprep.subr.mxu0 0.0
    %4692 = vmatpush1.msra.mxu0 0.0
    %4693 = vmatprep.subr.mxu0 0.0
    %4694 = vmatpush1.msra.mxu0 0.0
    %4695 = vmatprep.subr.mxu0 0.0
    %4696 = vmatpush1.msra.mxu0 0.0
    %4697 = vmatprep.subr.mxu0 0.0
    %4698 = vmatpush1.msra.mxu0 0.0
    %4699 = vmatprep.subr.mxu0 0.0
    %4700 = vmatpush1.msra.mxu0 0.0
    %4701 = vmatprep.subr.mxu0 0.0
    %4702 = vmatpush1.msra.mxu0 0.0
    %4703 = vmatprep.subr.mxu0 0.0
    %4704 = vmatpush1.msra.mxu0 0.0
    %4705 = vmatprep.subr.mxu0 0.0
    %4706 = vmatpush1.msra.mxu0 0.0
    %4707 = vmatprep.subr.mxu0 0.0
    %4708 = vmatpush1.msra.mxu0 0.0
    %4709 = vmatprep.subr.mxu0 0.0
    %4710 = vmatpush1.msra.mxu0 0.0
    %4711 = vmatprep.subr.mxu0 0.0
    %4712 = vmatpush1.msra.mxu0 0.0
    %4713 = vmatprep.subr.mxu0 0.0
    %4714 = vmatpush1.msra.mxu0 0.0
    %4715 = vmatprep.subr.mxu0 0.0
    %4716 = vmatpush1.msra.mxu0 0.0
    %4717 = vmatprep.subr.mxu0 0.0
    %4718 = vmatpush1.msra.mxu0 0.0
    %4719 = vmatprep.subr.mxu0 0.0
    %4720 = vmatpush1.msra.mxu0 0.0
    %4721 = vmatprep.subr.mxu0 0.0
    %4722 = vmatpush1.msra.mxu0 0.0
    %4723 = vmatprep.subr.mxu0 0.0
    %4724 = vmatpush1.msra.mxu0 0.0
    %4725 = vmatprep.subr.mxu0 0.0
    %4726 = vmatpush1.msra.mxu0 0.0
    %4727 = vmatprep.subr.mxu0 0.0
    %4728 = vmatpush1.msra.mxu0 0.0
    %4729 = vmatprep.subr.mxu0 0.0
    %4730 = vmatpush1.msra.mxu0 0.0
    %4731 = vmatprep.subr.mxu0 0.0
    %4732 = vmatpush1.msra.mxu0 0.0
    %4733 = vmatprep.subr.mxu0 0.0
    %4734 = vmatpush1.msra.mxu0 0.0
    %4735 = vmatprep.subr.mxu0 0.0
    %4736 = vmatpush1.msra.mxu0 0.0
    %4737 = vmatprep.subr.mxu0 0.0
    %4738 = vmatpush1.msra.mxu0 0.0
    %4739 = vmatprep.subr.mxu0 0.0
    %4740 = vmatpush1.msra.mxu0 0.0
    %4741 = vmatprep.subr.mxu0 0.0
    %4742 = vmatpush1.msra.mxu0 0.0
    %4743 = vmatprep.subr.mxu0 0.0
    %4744 = vmatpush1.msra.mxu0 0.0
    %4745 = vmatprep.subr.mxu0 0.0
    %4746 = vmatpush1.msra.mxu0 0.0
    %4747 = vmatprep.subr.mxu0 0.0
    %4748 = vmatpush1.msra.mxu0 0.0
    %4749 = vmatprep.mubr.f32.mxu0 0.0
    %4750 = vmatmul.mubr.f32.gmra.mrb[0].mxu0 %v4677
    %v4751 = vpop.f32.mrb[0].mxu0
    %v4752 = vadd.f32 0.0, %v4751
    %v4753 = vpop.f32.mrb[0].mxu0
    %4754 = vmatprep.mubr.f32.mxu0 0.0
    %4755 = vmatmul.mubr.f32.gmra.mrb[0].mxu0 %v4680
    %v4756 = vpop.f32.mrb[0].mxu0
    %v4757 = vadd.f32 0.0, %v4756
    %v4758 = vpop.f32.mrb[0].mxu0
    %4759 = vdwg.mxu0
    %v4761 = vsel %vm3302, %v4593, 0
    %v4764 = vsel %vm3302, %v4598, 0
    %v4767 = vsel %vm3309, %v191, 0
    %4769 = vmatprep.subr.mxu0 0.0
    %4770 = vmatpush1.msra.mxu0 %v4767
    %4771 = vmatprep.subr.mxu0 0.0
    %4772 = vmatpush1.msra.mxu0 0.0
    %4773 = vmatprep.subr.mxu0 0.0
    %4774 = vmatpush1.msra.mxu0 0.0
    %4775 = vmatprep.subr.mxu0 0.0
    %4776 = vmatpush1.msra.mxu0 0.0
    %4777 = vmatprep.subr.mxu0 0.0
    %4778 = vmatpush1.msra.mxu0 0.0
    %4779 = vmatprep.subr.mxu0 0.0
    %4780 = vmatpush1.msra.mxu0 0.0
    %4781 = vmatprep.subr.mxu0 0.0
    %4782 = vmatpush1.msra.mxu0 0.0
    %4783 = vmatprep.subr.mxu0 0.0
    %4784 = vmatpush1.msra.mxu0 0.0
    %4785 = vmatprep.subr.mxu0 0.0
    %4786 = vmatpush1.msra.mxu0 0.0
    %4787 = vmatprep.subr.mxu0 0.0
    %4788 = vmatpush1.msra.mxu0 0.0
    %4789 = vmatprep.subr.mxu0 0.0
    %4790 = vmatpush1.msra.mxu0 0.0
    %4791 = vmatprep.subr.mxu0 0.0
    %4792 = vmatpush1.msra.mxu0 0.0
    %4793 = vmatprep.subr.mxu0 0.0
    %4794 = vmatpush1.msra.mxu0 0.0
    %4795 = vmatprep.subr.mxu0 0.0
    %4796 = vmatpush1.msra.mxu0 0.0
    %4797 = vmatprep.subr.mxu0 0.0
    %4798 = vmatpush1.msra.mxu0 0.0
    %4799 = vmatprep.subr.mxu0 0.0
    %4800 = vmatpush1.msra.mxu0 0.0
    %4801 = vmatprep.subr.mxu0 0.0
    %4802 = vmatpush1.msra.mxu0 0.0
    %4803 = vmatprep.subr.mxu0 0.0
    %4804 = vmatpush1.msra.mxu0 0.0
    %4805 = vmatprep.subr.mxu0 0.0
    %4806 = vmatpush1.msra.mxu0 0.0
    %4807 = vmatprep.subr.mxu0 0.0
    %4808 = vmatpush1.msra.mxu0 0.0
    %4809 = vmatprep.subr.mxu0 0.0
    %4810 = vmatpush1.msra.mxu0 0.0
    %4811 = vmatprep.subr.mxu0 0.0
    %4812 = vmatpush1.msra.mxu0 0.0
    %4813 = vmatprep.subr.mxu0 0.0
    %4814 = vmatpush1.msra.mxu0 0.0
    %4815 = vmatprep.subr.mxu0 0.0
    %4816 = vmatpush1.msra.mxu0 0.0
    %4817 = vmatprep.subr.mxu0 0.0
    %4818 = vmatpush1.msra.mxu0 0.0
    %4819 = vmatprep.subr.mxu0 0.0
    %4820 = vmatpush1.msra.mxu0 0.0
    %4821 = vmatprep.subr.mxu0 0.0
    %4822 = vmatpush1.msra.mxu0 0.0
    %4823 = vmatprep.subr.mxu0 0.0
    %4824 = vmatpush1.msra.mxu0 0.0
    %4825 = vmatprep.subr.mxu0 0.0
    %4826 = vmatpush1.msra.mxu0 0.0
    %4827 = vmatprep.subr.mxu0 0.0
    %4828 = vmatpush1.msra.mxu0 0.0
    %4829 = vmatprep.subr.mxu0 0.0
    %4830 = vmatpush1.msra.mxu0 0.0
    %4831 = vmatprep.subr.mxu0 0.0
    %4832 = vmatpush1.msra.mxu0 0.0
    %4833 = vmatprep.mubr.f32.mxu0 0.0
    %4834 = vmatmul.mubr.f32.gmra.mrb[0].mxu0 %v4761
    %v4835 = vpop.f32.mrb[0].mxu0
    %v4836 = vadd.f32 %v4752, %v4835
    %v4837 = vpop.f32.mrb[0].mxu0
    %4838 = vmatprep.mubr.f32.mxu0 0.0
    %4839 = vmatmul.mubr.f32.gmra.mrb[0].mxu0 %v4764
    %v4840 = vpop.f32.mrb[0].mxu0
    %v4841 = vadd.f32 %v4757, %v4840
    %v4842 = vpop.f32.mrb[0].mxu0
    %4843 = vdwg.mxu0
    %v4845 = vsel %vm3302, %v4515, 0
    %v4848 = vsel %vm3302, %v4520, 0
    %v4851 = vsel %vm3309, %v193, 0
    %4853 = vmatprep.subr.mxu0 0.0
    %4854 = vmatpush1.msra.mxu0 %v4851
    %4855 = vmatprep.subr.mxu0 0.0
    %4856 = vmatpush1.msra.mxu0 0.0
    %4857 = vmatprep.subr.mxu0 0.0
    %4858 = vmatpush1.msra.mxu0 0.0
    %4859 = vmatprep.subr.mxu0 0.0
    %4860 = vmatpush1.msra.mxu0 0.0
    %4861 = vmatprep.subr.mxu0 0.0
    %4862 = vmatpush1.msra.mxu0 0.0
    %4863 = vmatprep.subr.mxu0 0.0
    %4864 = vmatpush1.msra.mxu0 0.0
    %4865 = vmatprep.subr.mxu0 0.0
    %4866 = vmatpush1.msra.mxu0 0.0
    %4867 = vmatprep.subr.mxu0 0.0
    %4868 = vmatpush1.msra.mxu0 0.0
    %4869 = vmatprep.subr.mxu0 0.0
    %4870 = vmatpush1.msra.mxu0 0.0
    %4871 = vmatprep.subr.mxu0 0.0
    %4872 = vmatpush1.msra.mxu0 0.0
    %4873 = vmatprep.subr.mxu0 0.0
    %4874 = vmatpush1.msra.mxu0 0.0
    %4875 = vmatprep.subr.mxu0 0.0
    %4876 = vmatpush1.msra.mxu0 0.0
    %4877 = vmatprep.subr.mxu0 0.0
    %4878 = vmatpush1.msra.mxu0 0.0
    %4879 = vmatprep.subr.mxu0 0.0
    %4880 = vmatpush1.msra.mxu0 0.0
    %4881 = vmatprep.subr.mxu0 0.0
    %4882 = vmatpush1.msra.mxu0 0.0
    %4883 = vmatprep.subr.mxu0 0.0
    %4884 = vmatpush1.msra.mxu0 0.0
    %4885 = vmatprep.subr.mxu0 0.0
    %4886 = vmatpush1.msra.mxu0 0.0
    %4887 = vmatprep.subr.mxu0 0.0
    %4888 = vmatpush1.msra.mxu0 0.0
    %4889 = vmatprep.subr.mxu0 0.0
    %4890 = vmatpush1.msra.mxu0 0.0
    %4891 = vmatprep.subr.mxu0 0.0
    %4892 = vmatpush1.msra.mxu0 0.0
    %4893 = vmatprep.subr.mxu0 0.0
    %4894 = vmatpush1.msra.mxu0 0.0
    %4895 = vmatprep.subr.mxu0 0.0
    %4896 = vmatpush1.msra.mxu0 0.0
    %4897 = vmatprep.subr.mxu0 0.0
    %4898 = vmatpush1.msra.mxu0 0.0
    %4899 = vmatprep.subr.mxu0 0.0
    %4900 = vmatpush1.msra.mxu0 0.0
    %4901 = vmatprep.subr.mxu0 0.0
    %4902 = vmatpush1.msra.mxu0 0.0
    %4903 = vmatprep.subr.mxu0 0.0
    %4904 = vmatpush1.msra.mxu0 0.0
    %4905 = vmatprep.subr.mxu0 0.0
    %4906 = vmatpush1.msra.mxu0 0.0
    %4907 = vmatprep.subr.mxu0 0.0
    %4908 = vmatpush1.msra.mxu0 0.0
    %4909 = vmatprep.subr.mxu0 0.0
    %4910 = vmatpush1.msra.mxu0 0.0
    %4911 = vmatprep.subr.mxu0 0.0
    %4912 = vmatpush1.msra.mxu0 0.0
    %4913 = vmatprep.subr.mxu0 0.0
    %4914 = vmatpush1.msra.mxu0 0.0
    %4915 = vmatprep.subr.mxu0 0.0
    %4916 = vmatpush1.msra.mxu0 0.0
    %4917 = vmatprep.mubr.f32.mxu0 0.0
    %4918 = vmatmul.mubr.f32.gmra.mrb[0].mxu0 %v4845
    %v4919 = vpop.f32.mrb[0].mxu0
    %v4920 = vadd.f32 0.0, %v4919
    %v4921 = vpop.f32.mrb[0].mxu0
    %4922 = vmatprep.mubr.f32.mxu0 0.0
    %4923 = vmatmul.mubr.f32.gmra.mrb[0].mxu0 %v4848
    %v4924 = vpop.f32.mrb[0].mxu0
    %v4925 = vadd.f32 0.0, %v4924
    %v4926 = vpop.f32.mrb[0].mxu0
    %4927 = vdwg.mxu0
    %v4928 = vadd.f32 %v4836, %v4920
    %v4929 = vadd.f32 %v4841, %v4925
    %v4930 = vmul.f32 %v4928, %v213
    %v4931 = vmul.f32 %v4929, %v214
    %v4932 = vsel %vm864, %v4930, 0.0
    %4933 = vadd.xlane.f32.xlu0 %v4932
    %v4934 = vpop.xlane.xlu0 %4933
    %v4935 = vsel %vm868, %v4931, 0.0
    %4936 = vadd.xlane.f32.xlu0 %v4935
    %v4937 = vpop.xlane.xlu0 %4936
    %vm4938 = vcmp.ge.f32.partialorder %v4934, 0.0
    %vm4939 = vcmp.ge.f32.partialorder %v4937, 0.0
    %v4940 = vmul.f32 %v4934, 0.2
    %v4941 = vmul.f32 %v4937, 0.2
    %v4942 = vsel %vm4938, %v4934, %v4940
    %v4943 = vsel %vm4939, %v4937, %v4941
    %v4944 = vsel %vm2227, %v4942, -1e+30
    %v4945 = vsel %vm2228, %v4943, -1e+30
    %v4946 = vsel %vm279, %v4944, -inf
    %v4947 = vsel %vm883, %v4945, -inf
    %v4948 = vmax.f32 %v4946, %v4947
    %v4949 = vrot.slane %v4948, 4
    %v4950 = vmax.f32 %v4948, %v4949
    %v4951 = vrot.slane %v4950, 2
    %v4952 = vmax.f32 %v4950, %v4951
    %v4953 = vrot.slane %v4952, 1
    %v4954 = vmax.f32 %v4952, %v4953
    %v4955 = vmul.f32 %v211, %v4954
    %v4956 = vmul.f32 %v212, %v4954
    %v4957 = vsel %vm279, %v4955, 0.0
    %4958 = vadd.xlane.f32.xlu0 %v4957
    %v4959 = vpop.xlane.xlu0 %4958
    %v4960 = vsel %vm883, %v4956, 0.0
    %4961 = vadd.xlane.f32.xlu0 %v4960
    %v4962 = vpop.xlane.xlu0 %4961
    %v4963 = vsub.f32 %v4942, %v4959
    %v4964 = vsub.f32 %v4943, %v4962
    %v4965 = vmul.f32 %v4963, 1.442695
    %v4966 = vpow.pop %v4965
    %v4967 = vmul.f32 %v4964, 1.442695
    %v4968 = vpow.pop %v4967
    %v4970 = vsel %vm286, %v4968, 0
    %4972 = vmatprep.subr.mxu0 0.0
    %4973 = vmatpush1.msra.mxu0 %v4966
    %4974 = vmatprep.subr.mxu0 0.0
    %4975 = vmatpush1.msra.mxu0 %v4970
    %4976 = vmatprep.subr.mxu0 0.0
    %4977 = vmatpush1.msra.mxu0 0.0
    %4978 = vmatprep.subr.mxu0 0.0
    %4979 = vmatpush1.msra.mxu0 0.0
    %4980 = vmatprep.subr.mxu0 0.0
    %4981 = vmatpush1.msra.mxu0 0.0
    %4982 = vmatprep.subr.mxu0 0.0
    %4983 = vmatpush1.msra.mxu0 0.0
    %4984 = vmatprep.subr.mxu0 0.0
    %4985 = vmatpush1.msra.mxu0 0.0
    %4986 = vmatprep.subr.mxu0 0.0
    %4987 = vmatpush1.msra.mxu0 0.0
    %4988 = vmatprep.subr.mxu0 0.0
    %4989 = vmatpush1.msra.mxu0 0.0
    %4990 = vmatprep.subr.mxu0 0.0
    %4991 = vmatpush1.msra.mxu0 0.0
    %4992 = vmatprep.subr.mxu0 0.0
    %4993 = vmatpush1.msra.mxu0 0.0
    %4994 = vmatprep.subr.mxu0 0.0
    %4995 = vmatpush1.msra.mxu0 0.0
    %4996 = vmatprep.subr.mxu0 0.0
    %4997 = vmatpush1.msra.mxu0 0.0
    %4998 = vmatprep.subr.mxu0 0.0
    %4999 = vmatpush1.msra.mxu0 0.0
    %5000 = vmatprep.subr.mxu0 0.0
    %5001 = vmatpush1.msra.mxu0 0.0
    %5002 = vmatprep.subr.mxu0 0.0
    %5003 = vmatpush1.msra.mxu0 0.0
    %5004 = vmatprep.subr.mxu0 0.0
    %5005 = vmatpush1.msra.mxu0 0.0
    %5006 = vmatprep.subr.mxu0 0.0
    %5007 = vmatpush1.msra.mxu0 0.0
    %5008 = vmatprep.subr.mxu0 0.0
    %5009 = vmatpush1.msra.mxu0 0.0
    %5010 = vmatprep.subr.mxu0 0.0
    %5011 = vmatpush1.msra.mxu0 0.0
    %5012 = vmatprep.subr.mxu0 0.0
    %5013 = vmatpush1.msra.mxu0 0.0
    %5014 = vmatprep.subr.mxu0 0.0
    %5015 = vmatpush1.msra.mxu0 0.0
    %5016 = vmatprep.subr.mxu0 0.0
    %5017 = vmatpush1.msra.mxu0 0.0
    %5018 = vmatprep.subr.mxu0 0.0
    %5019 = vmatpush1.msra.mxu0 0.0
    %5020 = vmatprep.subr.mxu0 0.0
    %5021 = vmatpush1.msra.mxu0 0.0
    %5022 = vmatprep.subr.mxu0 0.0
    %5023 = vmatpush1.msra.mxu0 0.0
    %5024 = vmatprep.subr.mxu0 0.0
    %5025 = vmatpush1.msra.mxu0 0.0
    %5026 = vmatprep.subr.mxu0 0.0
    %5027 = vmatpush1.msra.mxu0 0.0
    %5028 = vmatprep.subr.mxu0 0.0
    %5029 = vmatpush1.msra.mxu0 0.0
    %5030 = vmatprep.subr.mxu0 0.0
    %5031 = vmatpush1.msra.mxu0 0.0
    %5032 = vmatprep.subr.mxu0 0.0
    %5033 = vmatpush1.msra.mxu0 0.0
    %5034 = vmatprep.subr.mxu0 0.0
    %5035 = vmatpush1.msra.mxu0 0.0
    %5036 = vmatprep.mubr.f32.mxu0 0.0
    %5037 = vmatmul.mubr.f32.gmra.mrb[0].mxu0 %v2255
    %v5038 = vpop.f32.mrb[0].mxu0
    %v5039 = vadd.f32 0.0, %v5038
    %v5040 = vpop.f32.mrb[0].mxu0
    %5041 = vmatprep.mubr.f32.mxu0 0.0
    %5042 = vmatmul.mubr.f32.gmra.mrb[0].mxu0 %v2258
    %v5043 = vpop.f32.mrb[0].mxu0
    %v5044 = vadd.f32 0.0, %v5043
    %v5045 = vpop.f32.mrb[0].mxu0
    %5046 = vdwg.mxu0
    %v5048 = vsel %vm286, %v5044, 0
    %5050 = vmatprep.subr.mxu0 0.0
    %5051 = vmatpush1.msra.mxu0 %v5039
    %5052 = vmatprep.subr.mxu0 0.0
    %5053 = vmatpush1.msra.mxu0 %v5048
    %5054 = vmatprep.subr.mxu0 0.0
    %5055 = vmatpush1.msra.mxu0 0.0
    %5056 = vmatprep.subr.mxu0 0.0
    %5057 = vmatpush1.msra.mxu0 0.0
    %5058 = vmatprep.subr.mxu0 0.0
    %5059 = vmatpush1.msra.mxu0 0.0
    %5060 = vmatprep.subr.mxu0 0.0
    %5061 = vmatpush1.msra.mxu0 0.0
    %5062 = vmatprep.subr.mxu0 0.0
    %5063 = vmatpush1.msra.mxu0 0.0
    %5064 = vmatprep.subr.mxu0 0.0
    %5065 = vmatpush1.msra.mxu0 0.0
    %5066 = vmatprep.subr.mxu0 0.0
    %5067 = vmatpush1.msra.mxu0 0.0
    %5068 = vmatprep.subr.mxu0 0.0
    %5069 = vmatpush1.msra.mxu0 0.0
    %5070 = vmatprep.subr.mxu0 0.0
    %5071 = vmatpush1.msra.mxu0 0.0
    %5072 = vmatprep.subr.mxu0 0.0
    %5073 = vmatpush1.msra.mxu0 0.0
    %5074 = vmatprep.subr.mxu0 0.0
    %5075 = vmatpush1.msra.mxu0 0.0
    %5076 = vmatprep.subr.mxu0 0.0
    %5077 = vmatpush1.msra.mxu0 0.0
    %5078 = vmatprep.subr.mxu0 0.0
    %5079 = vmatpush1.msra.mxu0 0.0
    %5080 = vmatprep.subr.mxu0 0.0
    %5081 = vmatpush1.msra.mxu0 0.0
    %5082 = vmatprep.subr.mxu0 0.0
    %5083 = vmatpush1.msra.mxu0 0.0
    %5084 = vmatprep.subr.mxu0 0.0
    %5085 = vmatpush1.msra.mxu0 0.0
    %5086 = vmatprep.subr.mxu0 0.0
    %5087 = vmatpush1.msra.mxu0 0.0
    %5088 = vmatprep.subr.mxu0 0.0
    %5089 = vmatpush1.msra.mxu0 0.0
    %5090 = vmatprep.subr.mxu0 0.0
    %5091 = vmatpush1.msra.mxu0 0.0
    %5092 = vmatprep.subr.mxu0 0.0
    %5093 = vmatpush1.msra.mxu0 0.0
    %5094 = vmatprep.subr.mxu0 0.0
    %5095 = vmatpush1.msra.mxu0 0.0
    %5096 = vmatprep.subr.mxu0 0.0
    %5097 = vmatpush1.msra.mxu0 0.0
    %5098 = vmatprep.subr.mxu0 0.0
    %5099 = vmatpush1.msra.mxu0 0.0
    %5100 = vmatprep.subr.mxu0 0.0
    %5101 = vmatpush1.msra.mxu0 0.0
    %5102 = vmatprep.subr.mxu0 0.0
    %5103 = vmatpush1.msra.mxu0 0.0
    %5104 = vmatprep.subr.mxu0 0.0
    %5105 = vmatpush1.msra.mxu0 0.0
    %5106 = vmatprep.subr.mxu0 0.0
    %5107 = vmatpush1.msra.mxu0 0.0
    %5108 = vmatprep.subr.mxu0 0.0
    %5109 = vmatpush1.msra.mxu0 0.0
    %5110 = vmatprep.subr.mxu0 0.0
    %5111 = vmatpush1.msra.mxu0 0.0
    %5112 = vmatprep.subr.mxu0 0.0
    %5113 = vmatpush1.msra.mxu0 0.0
    %5114 = vmatprep.mubr.f32.mxu0 0.0
    %5115 = vmatmul.mubr.f32.gmra.mrb[0].mxu0 %v1888
    %v5116 = vpop.f32.mrb[0].mxu0
    %v5117 = vadd.f32 0.0, %v5116
    %v5118 = vpop.f32.mrb[0].mxu0
    %5119 = vmatprep.mubr.f32.mxu0 0.0
    %5120 = vmatmul.mubr.f32.gmra.mrb[0].mxu0 %v1891
    %v5121 = vpop.f32.mrb[0].mxu0
    %v5122 = vadd.f32 0.0, %v5121
    %v5123 = vpop.f32.mrb[0].mxu0
    %5124 = vdwg.mxu0
    %v5125 = vrcp.pop %v5117
    %v5126 = vrcp.pop %v5122
    %v5127 = vmul.f32 %v4966, %v5125
    %v5128 = vmul.f32 %v4968, %v5126
    %5130 = vset.pattern.permute.xlu0 0
    %5131 = vperm.xlu0 %5130, %v5127
    %v5132 = vpop.permute.xlu0 %5131
    %5135 = vset.pattern.permute.xlu0 0
    %5136 = vperm.xlu0 %5135, %v5128
    %v5137 = vpop.permute.xlu0 %5136
    %5139 = vrot.lane.b32.xlu0 %v4668, 124
    %v5140 = vpop.permute.xlu0 %5139
    %5141 = vrot.lane.b32.xlu0 %v4673, 124
    %v5142 = vpop.permute.xlu0 %5141
    %v5143 = vrot.slane %v192, 4
    %v5144 = vsel %vm3302, %v5140, 0
    %v5146 = vsel %vm3302, %v5142, 0
    %v5148 = vsel %vm3309, %v5143, 0
    %5150 = vmatprep.subr.mxu0 0.0
    %5151 = vmatpush1.msra.mxu0 %v5148
    %5152 = vmatprep.subr.mxu0 0.0
    %5153 = vmatpush1.msra.mxu0 0.0
    %5154 = vmatprep.subr.mxu0 0.0
    %5155 = vmatpush1.msra.mxu0 0.0
    %5156 = vmatprep.subr.mxu0 0.0
    %5157 = vmatpush1.msra.mxu0 0.0
    %5158 = vmatprep.subr.mxu0 0.0
    %5159 = vmatpush1.msra.mxu0 0.0
    %5160 = vmatprep.subr.mxu0 0.0
    %5161 = vmatpush1.msra.mxu0 0.0
    %5162 = vmatprep.subr.mxu0 0.0
    %5163 = vmatpush1.msra.mxu0 0.0
    %5164 = vmatprep.subr.mxu0 0.0
    %5165 = vmatpush1.msra.mxu0 0.0
    %5166 = vmatprep.subr.mxu0 0.0
    %5167 = vmatpush1.msra.mxu0 0.0
    %5168 = vmatprep.subr.mxu0 0.0
    %5169 = vmatpush1.msra.mxu0 0.0
    %5170 = vmatprep.subr.mxu0 0.0
    %5171 = vmatpush1.msra.mxu0 0.0
    %5172 = vmatprep.subr.mxu0 0.0
    %5173 = vmatpush1.msra.mxu0 0.0
    %5174 = vmatprep.subr.mxu0 0.0
    %5175 = vmatpush1.msra.mxu0 0.0
    %5176 = vmatprep.subr.mxu0 0.0
    %5177 = vmatpush1.msra.mxu0 0.0
    %5178 = vmatprep.subr.mxu0 0.0
    %5179 = vmatpush1.msra.mxu0 0.0
    %5180 = vmatprep.subr.mxu0 0.0
    %5181 = vmatpush1.msra.mxu0 0.0
    %5182 = vmatprep.subr.mxu0 0.0
    %5183 = vmatpush1.msra.mxu0 0.0
    %5184 = vmatprep.subr.mxu0 0.0
    %5185 = vmatpush1.msra.mxu0 0.0
    %5186 = vmatprep.subr.mxu0 0.0
    %5187 = vmatpush1.msra.mxu0 0.0
    %5188 = vmatprep.subr.mxu0 0.0
    %5189 = vmatpush1.msra.mxu0 0.0
    %5190 = vmatprep.subr.mxu0 0.0
    %5191 = vmatpush1.msra.mxu0 0.0
    %5192 = vmatprep.subr.mxu0 0.0
    %5193 = vmatpush1.msra.mxu0 0.0
    %5194 = vmatprep.subr.mxu0 0.0
    %5195 = vmatpush1.msra.mxu0 0.0
    %5196 = vmatprep.subr.mxu0 0.0
    %5197 = vmatpush1.msra.mxu0 0.0
    %5198 = vmatprep.subr.mxu0 0.0
    %5199 = vmatpush1.msra.mxu0 0.0
    %5200 = vmatprep.subr.mxu0 0.0
    %5201 = vmatpush1.msra.mxu0 0.0
    %5202 = vmatprep.subr.mxu0 0.0
    %5203 = vmatpush1.msra.mxu0 0.0
    %5204 = vmatprep.subr.mxu0 0.0
    %5205 = vmatpush1.msra.mxu0 0.0
    %5206 = vmatprep.subr.mxu0 0.0
    %5207 = vmatpush1.msra.mxu0 0.0
    %5208 = vmatprep.subr.mxu0 0.0
    %5209 = vmatpush1.msra.mxu0 0.0
    %5210 = vmatprep.subr.mxu0 0.0
    %5211 = vmatpush1.msra.mxu0 0.0
    %5212 = vmatprep.subr.mxu0 0.0
    %5213 = vmatpush1.msra.mxu0 0.0
    %5214 = vmatprep.mubr.f32.mxu0 0.0
    %5215 = vmatmul.mubr.f32.gmra.mrb[0].mxu0 %v5144
    %v5216 = vpop.f32.mrb[0].mxu0
    %v5217 = vadd.f32 0.0, %v5216
    %v5218 = vpop.f32.mrb[0].mxu0
    %5219 = vmatprep.mubr.f32.mxu0 0.0
    %5220 = vmatmul.mubr.f32.gmra.mrb[0].mxu0 %v5146
    %v5221 = vpop.f32.mrb[0].mxu0
    %v5222 = vadd.f32 0.0, %v5221
    %v5223 = vpop.f32.mrb[0].mxu0
    %5224 = vdwg.mxu0
    %5225 = vrot.lane.b32.xlu0 %v4593, 124
    %v5226 = vpop.permute.xlu0 %5225
    %5227 = vrot.lane.b32.xlu0 %v4598, 124
    %v5228 = vpop.permute.xlu0 %5227
    %v5229 = vrot.slane %v191, 4
    %v5230 = vsel %vm3302, %v5226, 0
    %v5232 = vsel %vm3302, %v5228, 0
    %v5234 = vsel %vm3309, %v5229, 0
    %5236 = vmatprep.subr.mxu0 0.0
    %5237 = vmatpush1.msra.mxu0 %v5234
    %5238 = vmatprep.subr.mxu0 0.0
    %5239 = vmatpush1.msra.mxu0 0.0
    %5240 = vmatprep.subr.mxu0 0.0
    %5241 = vmatpush1.msra.mxu0 0.0
    %5242 = vmatprep.subr.mxu0 0.0
    %5243 = vmatpush1.msra.mxu0 0.0
    %5244 = vmatprep.subr.mxu0 0.0
    %5245 = vmatpush1.msra.mxu0 0.0
    %5246 = vmatprep.subr.mxu0 0.0
    %5247 = vmatpush1.msra.mxu0 0.0
    %5248 = vmatprep.subr.mxu0 0.0
    %5249 = vmatpush1.msra.mxu0 0.0
    %5250 = vmatprep.subr.mxu0 0.0
    %5251 = vmatpush1.msra.mxu0 0.0
    %5252 = vmatprep.subr.mxu0 0.0
    %5253 = vmatpush1.msra.mxu0 0.0
    %5254 = vmatprep.subr.mxu0 0.0
    %5255 = vmatpush1.msra.mxu0 0.0
    %5256 = vmatprep.subr.mxu0 0.0
    %5257 = vmatpush1.msra.mxu0 0.0
    %5258 = vmatprep.subr.mxu0 0.0
    %5259 = vmatpush1.msra.mxu0 0.0
    %5260 = vmatprep.subr.mxu0 0.0
    %5261 = vmatpush1.msra.mxu0 0.0
    %5262 = vmatprep.subr.mxu0 0.0
    %5263 = vmatpush1.msra.mxu0 0.0
    %5264 = vmatprep.subr.mxu0 0.0
    %5265 = vmatpush1.msra.mxu0 0.0
    %5266 = vmatprep.subr.mxu0 0.0
    %5267 = vmatpush1.msra.mxu0 0.0
    %5268 = vmatprep.subr.mxu0 0.0
    %5269 = vmatpush1.msra.mxu0 0.0
    %5270 = vmatprep.subr.mxu0 0.0
    %5271 = vmatpush1.msra.mxu0 0.0
    %5272 = vmatprep.subr.mxu0 0.0
    %5273 = vmatpush1.msra.mxu0 0.0
    %5274 = vmatprep.subr.mxu0 0.0
    %5275 = vmatpush1.msra.mxu0 0.0
    %5276 = vmatprep.subr.mxu0 0.0
    %5277 = vmatpush1.msra.mxu0 0.0
    %5278 = vmatprep.subr.mxu0 0.0
    %5279 = vmatpush1.msra.mxu0 0.0
    %5280 = vmatprep.subr.mxu0 0.0
    %5281 = vmatpush1.msra.mxu0 0.0
    %5282 = vmatprep.subr.mxu0 0.0
    %5283 = vmatpush1.msra.mxu0 0.0
    %5284 = vmatprep.subr.mxu0 0.0
    %5285 = vmatpush1.msra.mxu0 0.0
    %5286 = vmatprep.subr.mxu0 0.0
    %5287 = vmatpush1.msra.mxu0 0.0
    %5288 = vmatprep.subr.mxu0 0.0
    %5289 = vmatpush1.msra.mxu0 0.0
    %5290 = vmatprep.subr.mxu0 0.0
    %5291 = vmatpush1.msra.mxu0 0.0
    %5292 = vmatprep.subr.mxu0 0.0
    %5293 = vmatpush1.msra.mxu0 0.0
    %5294 = vmatprep.subr.mxu0 0.0
    %5295 = vmatpush1.msra.mxu0 0.0
    %5296 = vmatprep.subr.mxu0 0.0
    %5297 = vmatpush1.msra.mxu0 0.0
    %5298 = vmatprep.subr.mxu0 0.0
    %5299 = vmatpush1.msra.mxu0 0.0
    %5300 = vmatprep.mubr.f32.mxu0 0.0
    %5301 = vmatmul.mubr.f32.gmra.mrb[0].mxu0 %v5230
    %v5302 = vpop.f32.mrb[0].mxu0
    %v5303 = vadd.f32 %v5217, %v5302
    %v5304 = vpop.f32.mrb[0].mxu0
    %5305 = vmatprep.mubr.f32.mxu0 0.0
    %5306 = vmatmul.mubr.f32.gmra.mrb[0].mxu0 %v5232
    %v5307 = vpop.f32.mrb[0].mxu0
    %v5308 = vadd.f32 %v5222, %v5307
    %v5309 = vpop.f32.mrb[0].mxu0
    %5310 = vdwg.mxu0
    %5311 = vrot.lane.b32.xlu0 %v4515, 124
    %v5312 = vpop.permute.xlu0 %5311
    %5313 = vrot.lane.b32.xlu0 %v4520, 124
    %v5314 = vpop.permute.xlu0 %5313
    %v5315 = vrot.slane %v193, 4
    %v5316 = vsel %vm3302, %v5312, 0
    %v5318 = vsel %vm3302, %v5314, 0
    %v5320 = vsel %vm3309, %v5315, 0
    %5322 = vmatprep.subr.mxu0 0.0
    %5323 = vmatpush1.msra.mxu0 %v5320
    %5324 = vmatprep.subr.mxu0 0.0
    %5325 = vmatpush1.msra.mxu0 0.0
    %5326 = vmatprep.subr.mxu0 0.0
    %5327 = vmatpush1.msra.mxu0 0.0
    %5328 = vmatprep.subr.mxu0 0.0
    %5329 = vmatpush1.msra.mxu0 0.0
    %5330 = vmatprep.subr.mxu0 0.0
    %5331 = vmatpush1.msra.mxu0 0.0
    %5332 = vmatprep.subr.mxu0 0.0
    %5333 = vmatpush1.msra.mxu0 0.0
    %5334 = vmatprep.subr.mxu0 0.0
    %5335 = vmatpush1.msra.mxu0 0.0
    %5336 = vmatprep.subr.mxu0 0.0
    %5337 = vmatpush1.msra.mxu0 0.0
    %5338 = vmatprep.subr.mxu0 0.0
    %5339 = vmatpush1.msra.mxu0 0.0
    %5340 = vmatprep.subr.mxu0 0.0
    %5341 = vmatpush1.msra.mxu0 0.0
    %5342 = vmatprep.subr.mxu0 0.0
    %5343 = vmatpush1.msra.mxu0 0.0
    %5344 = vmatprep.subr.mxu0 0.0
    %5345 = vmatpush1.msra.mxu0 0.0
    %5346 = vmatprep.subr.mxu0 0.0
    %5347 = vmatpush1.msra.mxu0 0.0
    %5348 = vmatprep.subr.mxu0 0.0
    %5349 = vmatpush1.msra.mxu0 0.0
    %5350 = vmatprep.subr.mxu0 0.0
    %5351 = vmatpush1.msra.mxu0 0.0
    %5352 = vmatprep.subr.mxu0 0.0
    %5353 = vmatpush1.msra.mxu0 0.0
    %5354 = vmatprep.subr.mxu0 0.0
    %5355 = vmatpush1.msra.mxu0 0.0
    %5356 = vmatprep.subr.mxu0 0.0
    %5357 = vmatpush1.msra.mxu0 0.0
    %5358 = vmatprep.subr.mxu0 0.0
    %5359 = vmatpush1.msra.mxu0 0.0
    %5360 = vmatprep.subr.mxu0 0.0
    %5361 = vmatpush1.msra.mxu0 0.0
    %5362 = vmatprep.subr.mxu0 0.0
    %5363 = vmatpush1.msra.mxu0 0.0
    %5364 = vmatprep.subr.mxu0 0.0
    %5365 = vmatpush1.msra.mxu0 0.0
    %5366 = vmatprep.subr.mxu0 0.0
    %5367 = vmatpush1.msra.mxu0 0.0
    %5368 = vmatprep.subr.mxu0 0.0
    %5369 = vmatpush1.msra.mxu0 0.0
    %5370 = vmatprep.subr.mxu0 0.0
    %5371 = vmatpush1.msra.mxu0 0.0
    %5372 = vmatprep.subr.mxu0 0.0
    %5373 = vmatpush1.msra.mxu0 0.0
    %5374 = vmatprep.subr.mxu0 0.0
    %5375 = vmatpush1.msra.mxu0 0.0
    %5376 = vmatprep.subr.mxu0 0.0
    %5377 = vmatpush1.msra.mxu0 0.0
    %5378 = vmatprep.subr.mxu0 0.0
    %5379 = vmatpush1.msra.mxu0 0.0
    %5380 = vmatprep.subr.mxu0 0.0
    %5381 = vmatpush1.msra.mxu0 0.0
    %5382 = vmatprep.subr.mxu0 0.0
    %5383 = vmatpush1.msra.mxu0 0.0
    %5384 = vmatprep.subr.mxu0 0.0
    %5385 = vmatpush1.msra.mxu0 0.0
    %5386 = vmatprep.mubr.f32.mxu0 0.0
    %5387 = vmatmul.mubr.f32.gmra.mrb[0].mxu0 %v5316
    %v5388 = vpop.f32.mrb[0].mxu0
    %v5389 = vadd.f32 0.0, %v5388
    %v5390 = vpop.f32.mrb[0].mxu0
    %5391 = vmatprep.mubr.f32.mxu0 0.0
    %5392 = vmatmul.mubr.f32.gmra.mrb[0].mxu0 %v5318
    %v5393 = vpop.f32.mrb[0].mxu0
    %v5394 = vadd.f32 0.0, %v5393
    %v5395 = vpop.f32.mrb[0].mxu0
    %5396 = vdwg.mxu0
    %v5397 = vadd.f32 %v5303, %v5389
    %v5398 = vadd.f32 %v5308, %v5394
    %v5399 = vmul.f32 %v5397, %v213
    %v5400 = vmul.f32 %v5398, %v214
    %v5401 = vsel %vm864, %v5399, 0.0
    %5402 = vadd.xlane.f32.xlu0 %v5401
    %v5403 = vpop.xlane.xlu0 %5402
    %v5404 = vsel %vm868, %v5400, 0.0
    %5405 = vadd.xlane.f32.xlu0 %v5404
    %v5406 = vpop.xlane.xlu0 %5405
    %vm5407 = vcmp.ge.f32.partialorder %v5403, 0.0
    %vm5408 = vcmp.ge.f32.partialorder %v5406, 0.0
    %v5409 = vmul.f32 %v5403, 0.2
    %v5410 = vmul.f32 %v5406, 0.2
    %v5411 = vsel %vm5407, %v5403, %v5409
    %v5412 = vsel %vm5408, %v5406, %v5410
    %v5413 = vsel %vm2227, %v5411, -1e+30
    %v5414 = vsel %vm2228, %v5412, -1e+30
    %v5415 = vsel %vm279, %v5413, -inf
    %v5416 = vsel %vm883, %v5414, -inf
    %v5417 = vmax.f32 %v5415, %v5416
    %v5418 = vrot.slane %v5417, 4
    %v5419 = vmax.f32 %v5417, %v5418
    %v5420 = vrot.slane %v5419, 2
    %v5421 = vmax.f32 %v5419, %v5420
    %v5422 = vrot.slane %v5421, 1
    %v5423 = vmax.f32 %v5421, %v5422
    %v5424 = vmul.f32 %v211, %v5423
    %v5425 = vmul.f32 %v212, %v5423
    %v5426 = vsel %vm279, %v5424, 0.0
    %5427 = vadd.xlane.f32.xlu0 %v5426
    %v5428 = vpop.xlane.xlu0 %5427
    %v5429 = vsel %vm883, %v5425, 0.0
    %5430 = vadd.xlane.f32.xlu0 %v5429
    %v5431 = vpop.xlane.xlu0 %5430
    %v5432 = vsub.f32 %v5411, %v5428
    %v5433 = vsub.f32 %v5412, %v5431
    %v5434 = vmul.f32 %v5432, 1.442695
    %v5435 = vpow.pop %v5434
    %v5436 = vmul.f32 %v5433, 1.442695
    %v5437 = vpow.pop %v5436
    %v5439 = vsel %vm286, %v5437, 0
    %5441 = vmatprep.subr.mxu0 0.0
    %5442 = vmatpush1.msra.mxu0 %v5435
    %5443 = vmatprep.subr.mxu0 0.0
    %5444 = vmatpush1.msra.mxu0 %v5439
    %5445 = vmatprep.subr.mxu0 0.0
    %5446 = vmatpush1.msra.mxu0 0.0
    %5447 = vmatprep.subr.mxu0 0.0
    %5448 = vmatpush1.msra.mxu0 0.0
    %5449 = vmatprep.subr.mxu0 0.0
    %5450 = vmatpush1.msra.mxu0 0.0
    %5451 = vmatprep.subr.mxu0 0.0
    %5452 = vmatpush1.msra.mxu0 0.0
    %5453 = vmatprep.subr.mxu0 0.0
    %5454 = vmatpush1.msra.mxu0 0.0
    %5455 = vmatprep.subr.mxu0 0.0
    %5456 = vmatpush1.msra.mxu0 0.0
    %5457 = vmatprep.subr.mxu0 0.0
    %5458 = vmatpush1.msra.mxu0 0.0
    %5459 = vmatprep.subr.mxu0 0.0
    %5460 = vmatpush1.msra.mxu0 0.0
    %5461 = vmatprep.subr.mxu0 0.0
    %5462 = vmatpush1.msra.mxu0 0.0
    %5463 = vmatprep.subr.mxu0 0.0
    %5464 = vmatpush1.msra.mxu0 0.0
    %5465 = vmatprep.subr.mxu0 0.0
    %5466 = vmatpush1.msra.mxu0 0.0
    %5467 = vmatprep.subr.mxu0 0.0
    %5468 = vmatpush1.msra.mxu0 0.0
    %5469 = vmatprep.subr.mxu0 0.0
    %5470 = vmatpush1.msra.mxu0 0.0
    %5471 = vmatprep.subr.mxu0 0.0
    %5472 = vmatpush1.msra.mxu0 0.0
    %5473 = vmatprep.subr.mxu0 0.0
    %5474 = vmatpush1.msra.mxu0 0.0
    %5475 = vmatprep.subr.mxu0 0.0
    %5476 = vmatpush1.msra.mxu0 0.0
    %5477 = vmatprep.subr.mxu0 0.0
    %5478 = vmatpush1.msra.mxu0 0.0
    %5479 = vmatprep.subr.mxu0 0.0
    %5480 = vmatpush1.msra.mxu0 0.0
    %5481 = vmatprep.subr.mxu0 0.0
    %5482 = vmatpush1.msra.mxu0 0.0
    %5483 = vmatprep.subr.mxu0 0.0
    %5484 = vmatpush1.msra.mxu0 0.0
    %5485 = vmatprep.subr.mxu0 0.0
    %5486 = vmatpush1.msra.mxu0 0.0
    %5487 = vmatprep.subr.mxu0 0.0
    %5488 = vmatpush1.msra.mxu0 0.0
    %5489 = vmatprep.subr.mxu0 0.0
    %5490 = vmatpush1.msra.mxu0 0.0
    %5491 = vmatprep.subr.mxu0 0.0
    %5492 = vmatpush1.msra.mxu0 0.0
    %5493 = vmatprep.subr.mxu0 0.0
    %5494 = vmatpush1.msra.mxu0 0.0
    %5495 = vmatprep.subr.mxu0 0.0
    %5496 = vmatpush1.msra.mxu0 0.0
    %5497 = vmatprep.subr.mxu0 0.0
    %5498 = vmatpush1.msra.mxu0 0.0
    %5499 = vmatprep.subr.mxu0 0.0
    %5500 = vmatpush1.msra.mxu0 0.0
    %5501 = vmatprep.subr.mxu0 0.0
    %5502 = vmatpush1.msra.mxu0 0.0
    %5503 = vmatprep.subr.mxu0 0.0
    %5504 = vmatpush1.msra.mxu0 0.0
    %5505 = vmatprep.mubr.f32.mxu0 0.0
    %5506 = vmatmul.mubr.f32.gmra.mrb[0].mxu0 %v2255
    %v5507 = vpop.f32.mrb[0].mxu0
    %v5508 = vadd.f32 0.0, %v5507
    %v5509 = vpop.f32.mrb[0].mxu0
    %5510 = vmatprep.mubr.f32.mxu0 0.0
    %5511 = vmatmul.mubr.f32.gmra.mrb[0].mxu0 %v2258
    %v5512 = vpop.f32.mrb[0].mxu0
    %v5513 = vadd.f32 0.0, %v5512
    %v5514 = vpop.f32.mrb[0].mxu0
    %5515 = vdwg.mxu0
    %v5517 = vsel %vm286, %v5513, 0
    %5519 = vmatprep.subr.mxu0 0.0
    %5520 = vmatpush1.msra.mxu0 %v5508
    %5521 = vmatprep.subr.mxu0 0.0
    %5522 = vmatpush1.msra.mxu0 %v5517
    %5523 = vmatprep.subr.mxu0 0.0
    %5524 = vmatpush1.msra.mxu0 0.0
    %5525 = vmatprep.subr.mxu0 0.0
    %5526 = vmatpush1.msra.mxu0 0.0
    %5527 = vmatprep.subr.mxu0 0.0
    %5528 = vmatpush1.msra.mxu0 0.0
    %5529 = vmatprep.subr.mxu0 0.0
    %5530 = vmatpush1.msra.mxu0 0.0
    %5531 = vmatprep.subr.mxu0 0.0
    %5532 = vmatpush1.msra.mxu0 0.0
    %5533 = vmatprep.subr.mxu0 0.0
    %5534 = vmatpush1.msra.mxu0 0.0
    %5535 = vmatprep.subr.mxu0 0.0
    %5536 = vmatpush1.msra.mxu0 0.0
    %5537 = vmatprep.subr.mxu0 0.0
    %5538 = vmatpush1.msra.mxu0 0.0
    %5539 = vmatprep.subr.mxu0 0.0
    %5540 = vmatpush1.msra.mxu0 0.0
    %5541 = vmatprep.subr.mxu0 0.0
    %5542 = vmatpush1.msra.mxu0 0.0
    %5543 = vmatprep.subr.mxu0 0.0
    %5544 = vmatpush1.msra.mxu0 0.0
    %5545 = vmatprep.subr.mxu0 0.0
    %5546 = vmatpush1.msra.mxu0 0.0
    %5547 = vmatprep.subr.mxu0 0.0
    %5548 = vmatpush1.msra.mxu0 0.0
    %5549 = vmatprep.subr.mxu0 0.0
    %5550 = vmatpush1.msra.mxu0 0.0
    %5551 = vmatprep.subr.mxu0 0.0
    %5552 = vmatpush1.msra.mxu0 0.0
    %5553 = vmatprep.subr.mxu0 0.0
    %5554 = vmatpush1.msra.mxu0 0.0
    %5555 = vmatprep.subr.mxu0 0.0
    %5556 = vmatpush1.msra.mxu0 0.0
    %5557 = vmatprep.subr.mxu0 0.0
    %5558 = vmatpush1.msra.mxu0 0.0
    %5559 = vmatprep.subr.mxu0 0.0
    %5560 = vmatpush1.msra.mxu0 0.0
    %5561 = vmatprep.subr.mxu0 0.0
    %5562 = vmatpush1.msra.mxu0 0.0
    %5563 = vmatprep.subr.mxu0 0.0
    %5564 = vmatpush1.msra.mxu0 0.0
    %5565 = vmatprep.subr.mxu0 0.0
    %5566 = vmatpush1.msra.mxu0 0.0
    %5567 = vmatprep.subr.mxu0 0.0
    %5568 = vmatpush1.msra.mxu0 0.0
    %5569 = vmatprep.subr.mxu0 0.0
    %5570 = vmatpush1.msra.mxu0 0.0
    %5571 = vmatprep.subr.mxu0 0.0
    %5572 = vmatpush1.msra.mxu0 0.0
    %5573 = vmatprep.subr.mxu0 0.0
    %5574 = vmatpush1.msra.mxu0 0.0
    %5575 = vmatprep.subr.mxu0 0.0
    %5576 = vmatpush1.msra.mxu0 0.0
    %5577 = vmatprep.subr.mxu0 0.0
    %5578 = vmatpush1.msra.mxu0 0.0
    %5579 = vmatprep.subr.mxu0 0.0
    %5580 = vmatpush1.msra.mxu0 0.0
    %5581 = vmatprep.subr.mxu0 0.0
    %5582 = vmatpush1.msra.mxu0 0.0
    %5583 = vmatprep.mubr.f32.mxu0 0.0
    %5584 = vmatmul.mubr.f32.gmra.mrb[0].mxu0 %v1888
    %v5585 = vpop.f32.mrb[0].mxu0
    %v5586 = vadd.f32 0.0, %v5585
    %v5587 = vpop.f32.mrb[0].mxu0
    %5588 = vmatprep.mubr.f32.mxu0 0.0
    %5589 = vmatmul.mubr.f32.gmra.mrb[0].mxu0 %v1891
    %v5590 = vpop.f32.mrb[0].mxu0
    %v5591 = vadd.f32 0.0, %v5590
    %v5592 = vpop.f32.mrb[0].mxu0
    %5593 = vdwg.mxu0
    %v5594 = vrcp.pop %v5586
    %v5595 = vrcp.pop %v5591
    %v5596 = vmul.f32 %v5435, %v5594
    %v5597 = vmul.f32 %v5437, %v5595
    %5599 = vset.pattern.permute.xlu0 0
    %5600 = vperm.xlu0 %5599, %v5596
    %v5601 = vpop.permute.xlu0 %5600
    %5604 = vset.pattern.permute.xlu0 0
    %5605 = vperm.xlu0 %5604, %v5597
    %v5606 = vpop.permute.xlu0 %5605
    %v5608 = vsel %vm3302, %v5132, %v5601
    %v5609 = vsel %vm3302, %v5137, %v5606
    %v5610 = vmul.f32 %v4593, %v5608
    %v5611 = vmul.f32 %v4598, %v5609
    %v5613 = vsel %vm286, %v5611, 0
    %5615 = vmatprep.subr.mxu0 0.0
    %5616 = vmatpush1.msra.mxu0 %v5610
    %5617 = vmatprep.subr.mxu0 0.0
    %5618 = vmatpush1.msra.mxu0 %v5613
    %5619 = vmatprep.subr.mxu0 0.0
    %5620 = vmatpush1.msra.mxu0 0.0
    %5621 = vmatprep.subr.mxu0 0.0
    %5622 = vmatpush1.msra.mxu0 0.0
    %5623 = vmatprep.subr.mxu0 0.0
    %5624 = vmatpush1.msra.mxu0 0.0
    %5625 = vmatprep.subr.mxu0 0.0
    %5626 = vmatpush1.msra.mxu0 0.0
    %5627 = vmatprep.subr.mxu0 0.0
    %5628 = vmatpush1.msra.mxu0 0.0
    %5629 = vmatprep.subr.mxu0 0.0
    %5630 = vmatpush1.msra.mxu0 0.0
    %5631 = vmatprep.subr.mxu0 0.0
    %5632 = vmatpush1.msra.mxu0 0.0
    %5633 = vmatprep.subr.mxu0 0.0
    %5634 = vmatpush1.msra.mxu0 0.0
    %5635 = vmatprep.subr.mxu0 0.0
    %5636 = vmatpush1.msra.mxu0 0.0
    %5637 = vmatprep.subr.mxu0 0.0
    %5638 = vmatpush1.msra.mxu0 0.0
    %5639 = vmatprep.subr.mxu0 0.0
    %5640 = vmatpush1.msra.mxu0 0.0
    %5641 = vmatprep.subr.mxu0 0.0
    %5642 = vmatpush1.msra.mxu0 0.0
    %5643 = vmatprep.subr.mxu0 0.0
    %5644 = vmatpush1.msra.mxu0 0.0
    %5645 = vmatprep.subr.mxu0 0.0
    %5646 = vmatpush1.msra.mxu0 0.0
    %5647 = vmatprep.subr.mxu0 0.0
    %5648 = vmatpush1.msra.mxu0 0.0
    %5649 = vmatprep.subr.mxu0 0.0
    %5650 = vmatpush1.msra.mxu0 0.0
    %5651 = vmatprep.subr.mxu0 0.0
    %5652 = vmatpush1.msra.mxu0 0.0
    %5653 = vmatprep.subr.mxu0 0.0
    %5654 = vmatpush1.msra.mxu0 0.0
    %5655 = vmatprep.subr.mxu0 0.0
    %5656 = vmatpush1.msra.mxu0 0.0
    %5657 = vmatprep.subr.mxu0 0.0
    %5658 = vmatpush1.msra.mxu0 0.0
    %5659 = vmatprep.subr.mxu0 0.0
    %5660 = vmatpush1.msra.mxu0 0.0
    %5661 = vmatprep.subr.mxu0 0.0
    %5662 = vmatpush1.msra.mxu0 0.0
    %5663 = vmatprep.subr.mxu0 0.0
    %5664 = vmatpush1.msra.mxu0 0.0
    %5665 = vmatprep.subr.mxu0 0.0
    %5666 = vmatpush1.msra.mxu0 0.0
    %5667 = vmatprep.subr.mxu0 0.0
    %5668 = vmatpush1.msra.mxu0 0.0
    %5669 = vmatprep.subr.mxu0 0.0
    %5670 = vmatpush1.msra.mxu0 0.0
    %5671 = vmatprep.subr.mxu0 0.0
    %5672 = vmatpush1.msra.mxu0 0.0
    %5673 = vmatprep.subr.mxu0 0.0
    %5674 = vmatpush1.msra.mxu0 0.0
    %5675 = vmatprep.subr.mxu0 0.0
    %5676 = vmatpush1.msra.mxu0 0.0
    %5677 = vmatprep.subr.mxu0 0.0
    %5678 = vmatpush1.msra.mxu0 0.0
    %5679 = vmatprep.mubr.f32.mxu0 0.0
    %5680 = vmatmul.mubr.f32.gmra.mrb[0].mxu0 %v2255
    %v5681 = vpop.f32.mrb[0].mxu0
    %v5682 = vadd.f32 0.0, %v5681
    %v5683 = vpop.f32.mrb[0].mxu0
    %5684 = vmatprep.mubr.f32.mxu0 0.0
    %5685 = vmatmul.mubr.f32.gmra.mrb[0].mxu0 %v2258
    %v5686 = vpop.f32.mrb[0].mxu0
    %v5687 = vadd.f32 0.0, %v5686
    %v5688 = vpop.f32.mrb[0].mxu0
    %5689 = vdwg.mxu0
    %v5690 = vadd.f32 %v4515, %v4593
    %v5691 = vadd.f32 %v4520, %v4598
    %v5692 = vadd.f32 %v5690, %v4668
    %v5693 = vadd.f32 %v5691, %v4673
    %v5694 = vmul.f32 %v5692, %v1628
    %v5695 = vmul.f32 %v5693, %v1628
    %5698 = vrot.lane.b32.xlu0 %v5682, 124
    %v5699 = vpop.permute.xlu0 %5698
    %5700 = vrot.lane.b32.xlu0 %v5687, 124
    %v5701 = vpop.permute.xlu0 %5700
    %v5704 = vadd.f32 %v5682, %v5699
    %v5705 = vadd.f32 %v5687, %v5701
    %5708 = vrot.lane.b32.xlu0 %v5694, 124
    %v5709 = vpop.permute.xlu0 %5708
    %5710 = vrot.lane.b32.xlu0 %v5695, 124
    %v5711 = vpop.permute.xlu0 %5710
    %v5714 = vadd.f32 %v5694, %v5709
    %v5715 = vadd.f32 %v5695, %v5711
    %v5716 = vmul.f32 %v5704, %v4344
    %v5717 = vmul.f32 %v5705, %v4344
    %v5718 = vmul.f32 %v5714, %v4344
    %v5719 = vmul.f32 %v5715, %v4344
    %v5720 = vsub.f32 0.0, %v5716
    %v5721 = vsub.f32 0.0, %v5717
    %v5722 = vmul.f32 %v5720, 1.442695
    %v5723 = vpow.pop %v5722
    %v5724 = vmul.f32 %v5721, 1.442695
    %v5725 = vpow.pop %v5724
    %v5726 = vadd.f32 %v5723, 1.0
    %v5727 = vadd.f32 %v5725, 1.0
    %v5728 = vrcp.pop %v5726
    %v5729 = vmul.f32 1.0, %v5728
    %v5730 = vrcp.pop %v5727
    %v5731 = vmul.f32 1.0, %v5730
    %v5732 = vsub.f32 0.0, %v5718
    %v5733 = vsub.f32 0.0, %v5719
    %v5734 = vmul.f32 %v5732, 1.442695
    %v5735 = vpow.pop %v5734
    %v5736 = vmul.f32 %v5733, 1.442695
    %v5737 = vpow.pop %v5736
    %v5738 = vadd.f32 %v5735, 1.0
    %v5739 = vadd.f32 %v5737, 1.0
    %v5740 = vrcp.pop %v5738
    %v5741 = vmul.f32 1.0, %v5740
    %v5742 = vrcp.pop %v5739
    %v5743 = vmul.f32 1.0, %v5742
    %v5744 = vadd.f32 %v4358, %v5729
    %v5745 = vadd.f32 %v4360, %v5731
    %v5746 = vadd.f32 %v4370, %v5741
    %v5747 = vadd.f32 %v4372, %v5743
    %v5748 = vld [vmem:[%s63] sm:$0xf]
    %v5750 = vsel %vm3302, %v5744, 0
    %v5753 = vsel %vm3302, %v5745, 0
    %v5756 = vsel %vm3309, %v5748, 0
    %5758 = vmatprep.subr.mxu0 0.0
    %5759 = vmatpush1.msra.mxu0 %v5756
    %5760 = vmatprep.subr.mxu0 0.0
    %5761 = vmatpush1.msra.mxu0 0.0
    %5762 = vmatprep.subr.mxu0 0.0
    %5763 = vmatpush1.msra.mxu0 0.0
    %5764 = vmatprep.subr.mxu0 0.0
    %5765 = vmatpush1.msra.mxu0 0.0
    %5766 = vmatprep.subr.mxu0 0.0
    %5767 = vmatpush1.msra.mxu0 0.0
    %5768 = vmatprep.subr.mxu0 0.0
    %5769 = vmatpush1.msra.mxu0 0.0
    %5770 = vmatprep.subr.mxu0 0.0
    %5771 = vmatpush1.msra.mxu0 0.0
    %5772 = vmatprep.subr.mxu0 0.0
    %5773 = vmatpush1.msra.mxu0 0.0
    %5774 = vmatprep.subr.mxu0 0.0
    %5775 = vmatpush1.msra.mxu0 0.0
    %5776 = vmatprep.subr.mxu0 0.0
    %5777 = vmatpush1.msra.mxu0 0.0
    %5778 = vmatprep.subr.mxu0 0.0
    %5779 = vmatpush1.msra.mxu0 0.0
    %5780 = vmatprep.subr.mxu0 0.0
    %5781 = vmatpush1.msra.mxu0 0.0
    %5782 = vmatprep.subr.mxu0 0.0
    %5783 = vmatpush1.msra.mxu0 0.0
    %5784 = vmatprep.subr.mxu0 0.0
    %5785 = vmatpush1.msra.mxu0 0.0
    %5786 = vmatprep.subr.mxu0 0.0
    %5787 = vmatpush1.msra.mxu0 0.0
    %5788 = vmatprep.subr.mxu0 0.0
    %5789 = vmatpush1.msra.mxu0 0.0
    %5790 = vmatprep.subr.mxu0 0.0
    %5791 = vmatpush1.msra.mxu0 0.0
    %5792 = vmatprep.subr.mxu0 0.0
    %5793 = vmatpush1.msra.mxu0 0.0
    %5794 = vmatprep.subr.mxu0 0.0
    %5795 = vmatpush1.msra.mxu0 0.0
    %5796 = vmatprep.subr.mxu0 0.0
    %5797 = vmatpush1.msra.mxu0 0.0
    %5798 = vmatprep.subr.mxu0 0.0
    %5799 = vmatpush1.msra.mxu0 0.0
    %5800 = vmatprep.subr.mxu0 0.0
    %5801 = vmatpush1.msra.mxu0 0.0
    %5802 = vmatprep.subr.mxu0 0.0
    %5803 = vmatpush1.msra.mxu0 0.0
    %5804 = vmatprep.subr.mxu0 0.0
    %5805 = vmatpush1.msra.mxu0 0.0
    %5806 = vmatprep.subr.mxu0 0.0
    %5807 = vmatpush1.msra.mxu0 0.0
    %5808 = vmatprep.subr.mxu0 0.0
    %5809 = vmatpush1.msra.mxu0 0.0
    %5810 = vmatprep.subr.mxu0 0.0
    %5811 = vmatpush1.msra.mxu0 0.0
    %5812 = vmatprep.subr.mxu0 0.0
    %5813 = vmatpush1.msra.mxu0 0.0
    %5814 = vmatprep.subr.mxu0 0.0
    %5815 = vmatpush1.msra.mxu0 0.0
    %5816 = vmatprep.subr.mxu0 0.0
    %5817 = vmatpush1.msra.mxu0 0.0
    %5818 = vmatprep.subr.mxu0 0.0
    %5819 = vmatpush1.msra.mxu0 0.0
    %5820 = vmatprep.subr.mxu0 0.0
    %5821 = vmatpush1.msra.mxu0 0.0
    %5822 = vmatprep.mubr.f32.mxu0 0.0
    %5823 = vmatmul.mubr.f32.gmra.mrb[0].mxu0 %v5750
    %v5824 = vpop.f32.mrb[0].mxu0
    %v5825 = vadd.f32 0.0, %v5824
    %v5826 = vpop.f32.mrb[0].mxu0
    %5827 = vmatprep.mubr.f32.mxu0 0.0
    %5828 = vmatmul.mubr.f32.gmra.mrb[0].mxu0 %v5753
    %v5829 = vpop.f32.mrb[0].mxu0
    %v5830 = vadd.f32 0.0, %v5829
    %v5831 = vpop.f32.mrb[0].mxu0
    %5832 = vdwg.mxu0
    %v5833 = vld [vmem:[%s65] sm:$0xf]
    %v5835 = vsel %vm3309, %v5833, 0
    %5837 = vmatprep.subr.mxu0 0.0
    %5838 = vmatpush1.msra.mxu0 %v5835
    %5839 = vmatprep.subr.mxu0 0.0
    %5840 = vmatpush1.msra.mxu0 0.0
    %5841 = vmatprep.subr.mxu0 0.0
    %5842 = vmatpush1.msra.mxu0 0.0
    %5843 = vmatprep.subr.mxu0 0.0
    %5844 = vmatpush1.msra.mxu0 0.0
    %5845 = vmatprep.subr.mxu0 0.0
    %5846 = vmatpush1.msra.mxu0 0.0
    %5847 = vmatprep.subr.mxu0 0.0
    %5848 = vmatpush1.msra.mxu0 0.0
    %5849 = vmatprep.subr.mxu0 0.0
    %5850 = vmatpush1.msra.mxu0 0.0
    %5851 = vmatprep.subr.mxu0 0.0
    %5852 = vmatpush1.msra.mxu0 0.0
    %5853 = vmatprep.subr.mxu0 0.0
    %5854 = vmatpush1.msra.mxu0 0.0
    %5855 = vmatprep.subr.mxu0 0.0
    %5856 = vmatpush1.msra.mxu0 0.0
    %5857 = vmatprep.subr.mxu0 0.0
    %5858 = vmatpush1.msra.mxu0 0.0
    %5859 = vmatprep.subr.mxu0 0.0
    %5860 = vmatpush1.msra.mxu0 0.0
    %5861 = vmatprep.subr.mxu0 0.0
    %5862 = vmatpush1.msra.mxu0 0.0
    %5863 = vmatprep.subr.mxu0 0.0
    %5864 = vmatpush1.msra.mxu0 0.0
    %5865 = vmatprep.subr.mxu0 0.0
    %5866 = vmatpush1.msra.mxu0 0.0
    %5867 = vmatprep.subr.mxu0 0.0
    %5868 = vmatpush1.msra.mxu0 0.0
    %5869 = vmatprep.subr.mxu0 0.0
    %5870 = vmatpush1.msra.mxu0 0.0
    %5871 = vmatprep.subr.mxu0 0.0
    %5872 = vmatpush1.msra.mxu0 0.0
    %5873 = vmatprep.subr.mxu0 0.0
    %5874 = vmatpush1.msra.mxu0 0.0
    %5875 = vmatprep.subr.mxu0 0.0
    %5876 = vmatpush1.msra.mxu0 0.0
    %5877 = vmatprep.subr.mxu0 0.0
    %5878 = vmatpush1.msra.mxu0 0.0
    %5879 = vmatprep.subr.mxu0 0.0
    %5880 = vmatpush1.msra.mxu0 0.0
    %5881 = vmatprep.subr.mxu0 0.0
    %5882 = vmatpush1.msra.mxu0 0.0
    %5883 = vmatprep.subr.mxu0 0.0
    %5884 = vmatpush1.msra.mxu0 0.0
    %5885 = vmatprep.subr.mxu0 0.0
    %5886 = vmatpush1.msra.mxu0 0.0
    %5887 = vmatprep.subr.mxu0 0.0
    %5888 = vmatpush1.msra.mxu0 0.0
    %5889 = vmatprep.subr.mxu0 0.0
    %5890 = vmatpush1.msra.mxu0 0.0
    %5891 = vmatprep.subr.mxu0 0.0
    %5892 = vmatpush1.msra.mxu0 0.0
    %5893 = vmatprep.subr.mxu0 0.0
    %5894 = vmatpush1.msra.mxu0 0.0
    %5895 = vmatprep.subr.mxu0 0.0
    %5896 = vmatpush1.msra.mxu0 0.0
    %5897 = vmatprep.subr.mxu0 0.0
    %5898 = vmatpush1.msra.mxu0 0.0
    %5899 = vmatprep.subr.mxu0 0.0
    %5900 = vmatpush1.msra.mxu0 0.0
    %5901 = vmatprep.mubr.f32.mxu0 0.0
    %5902 = vmatmul.mubr.f32.gmra.mrb[0].mxu0 %v5750
    %v5903 = vpop.f32.mrb[0].mxu0
    %v5904 = vadd.f32 0.0, %v5903
    %v5905 = vpop.f32.mrb[0].mxu0
    %5906 = vmatprep.mubr.f32.mxu0 0.0
    %5907 = vmatmul.mubr.f32.gmra.mrb[0].mxu0 %v5753
    %v5908 = vpop.f32.mrb[0].mxu0
    %v5909 = vadd.f32 0.0, %v5908
    %v5910 = vpop.f32.mrb[0].mxu0
    %5911 = vdwg.mxu0
    %v5912 = vld [vmem:[%s67] sm:$0xf]
    %v5914 = vsel %vm3302, %v5746, 0
    %v5917 = vsel %vm3302, %v5747, 0
    %v5920 = vsel %vm3309, %v5912, 0
    %5922 = vmatprep.subr.mxu0 0.0
    %5923 = vmatpush1.msra.mxu0 %v5920
    %5924 = vmatprep.subr.mxu0 0.0
    %5925 = vmatpush1.msra.mxu0 0.0
    %5926 = vmatprep.subr.mxu0 0.0
    %5927 = vmatpush1.msra.mxu0 0.0
    %5928 = vmatprep.subr.mxu0 0.0
    %5929 = vmatpush1.msra.mxu0 0.0
    %5930 = vmatprep.subr.mxu0 0.0
    %5931 = vmatpush1.msra.mxu0 0.0
    %5932 = vmatprep.subr.mxu0 0.0
    %5933 = vmatpush1.msra.mxu0 0.0
    %5934 = vmatprep.subr.mxu0 0.0
    %5935 = vmatpush1.msra.mxu0 0.0
    %5936 = vmatprep.subr.mxu0 0.0
    %5937 = vmatpush1.msra.mxu0 0.0
    %5938 = vmatprep.subr.mxu0 0.0
    %5939 = vmatpush1.msra.mxu0 0.0
    %5940 = vmatprep.subr.mxu0 0.0
    %5941 = vmatpush1.msra.mxu0 0.0
    %5942 = vmatprep.subr.mxu0 0.0
    %5943 = vmatpush1.msra.mxu0 0.0
    %5944 = vmatprep.subr.mxu0 0.0
    %5945 = vmatpush1.msra.mxu0 0.0
    %5946 = vmatprep.subr.mxu0 0.0
    %5947 = vmatpush1.msra.mxu0 0.0
    %5948 = vmatprep.subr.mxu0 0.0
    %5949 = vmatpush1.msra.mxu0 0.0
    %5950 = vmatprep.subr.mxu0 0.0
    %5951 = vmatpush1.msra.mxu0 0.0
    %5952 = vmatprep.subr.mxu0 0.0
    %5953 = vmatpush1.msra.mxu0 0.0
    %5954 = vmatprep.subr.mxu0 0.0
    %5955 = vmatpush1.msra.mxu0 0.0
    %5956 = vmatprep.subr.mxu0 0.0
    %5957 = vmatpush1.msra.mxu0 0.0
    %5958 = vmatprep.subr.mxu0 0.0
    %5959 = vmatpush1.msra.mxu0 0.0
    %5960 = vmatprep.subr.mxu0 0.0
    %5961 = vmatpush1.msra.mxu0 0.0
    %5962 = vmatprep.subr.mxu0 0.0
    %5963 = vmatpush1.msra.mxu0 0.0
    %5964 = vmatprep.subr.mxu0 0.0
    %5965 = vmatpush1.msra.mxu0 0.0
    %5966 = vmatprep.subr.mxu0 0.0
    %5967 = vmatpush1.msra.mxu0 0.0
    %5968 = vmatprep.subr.mxu0 0.0
    %5969 = vmatpush1.msra.mxu0 0.0
    %5970 = vmatprep.subr.mxu0 0.0
    %5971 = vmatpush1.msra.mxu0 0.0
    %5972 = vmatprep.subr.mxu0 0.0
    %5973 = vmatpush1.msra.mxu0 0.0
    %5974 = vmatprep.subr.mxu0 0.0
    %5975 = vmatpush1.msra.mxu0 0.0
    %5976 = vmatprep.subr.mxu0 0.0
    %5977 = vmatpush1.msra.mxu0 0.0
    %5978 = vmatprep.subr.mxu0 0.0
    %5979 = vmatpush1.msra.mxu0 0.0
    %5980 = vmatprep.subr.mxu0 0.0
    %5981 = vmatpush1.msra.mxu0 0.0
    %5982 = vmatprep.subr.mxu0 0.0
    %5983 = vmatpush1.msra.mxu0 0.0
    %5984 = vmatprep.subr.mxu0 0.0
    %5985 = vmatpush1.msra.mxu0 0.0
    %5986 = vmatprep.mubr.f32.mxu0 0.0
    %5987 = vmatmul.mubr.f32.gmra.mrb[0].mxu0 %v5914
    %v5988 = vpop.f32.mrb[0].mxu0
    %v5989 = vadd.f32 0.0, %v5988
    %v5990 = vpop.f32.mrb[0].mxu0
    %5991 = vmatprep.mubr.f32.mxu0 0.0
    %5992 = vmatmul.mubr.f32.gmra.mrb[0].mxu0 %v5917
    %v5993 = vpop.f32.mrb[0].mxu0
    %v5994 = vadd.f32 0.0, %v5993
    %v5995 = vpop.f32.mrb[0].mxu0
    %5996 = vdwg.mxu0
    %v5997 = vld [vmem:[%s69] sm:$0xf]
    %v5999 = vsel %vm3309, %v5997, 0
    %6001 = vmatprep.subr.mxu0 0.0
    %6002 = vmatpush1.msra.mxu0 %v5999
    %6003 = vmatprep.subr.mxu0 0.0
    %6004 = vmatpush1.msra.mxu0 0.0
    %6005 = vmatprep.subr.mxu0 0.0
    %6006 = vmatpush1.msra.mxu0 0.0
    %6007 = vmatprep.subr.mxu0 0.0
    %6008 = vmatpush1.msra.mxu0 0.0
    %6009 = vmatprep.subr.mxu0 0.0
    %6010 = vmatpush1.msra.mxu0 0.0
    %6011 = vmatprep.subr.mxu0 0.0
    %6012 = vmatpush1.msra.mxu0 0.0
    %6013 = vmatprep.subr.mxu0 0.0
    %6014 = vmatpush1.msra.mxu0 0.0
    %6015 = vmatprep.subr.mxu0 0.0
    %6016 = vmatpush1.msra.mxu0 0.0
    %6017 = vmatprep.subr.mxu0 0.0
    %6018 = vmatpush1.msra.mxu0 0.0
    %6019 = vmatprep.subr.mxu0 0.0
    %6020 = vmatpush1.msra.mxu0 0.0
    %6021 = vmatprep.subr.mxu0 0.0
    %6022 = vmatpush1.msra.mxu0 0.0
    %6023 = vmatprep.subr.mxu0 0.0
    %6024 = vmatpush1.msra.mxu0 0.0
    %6025 = vmatprep.subr.mxu0 0.0
    %6026 = vmatpush1.msra.mxu0 0.0
    %6027 = vmatprep.subr.mxu0 0.0
    %6028 = vmatpush1.msra.mxu0 0.0
    %6029 = vmatprep.subr.mxu0 0.0
    %6030 = vmatpush1.msra.mxu0 0.0
    %6031 = vmatprep.subr.mxu0 0.0
    %6032 = vmatpush1.msra.mxu0 0.0
    %6033 = vmatprep.subr.mxu0 0.0
    %6034 = vmatpush1.msra.mxu0 0.0
    %6035 = vmatprep.subr.mxu0 0.0
    %6036 = vmatpush1.msra.mxu0 0.0
    %6037 = vmatprep.subr.mxu0 0.0
    %6038 = vmatpush1.msra.mxu0 0.0
    %6039 = vmatprep.subr.mxu0 0.0
    %6040 = vmatpush1.msra.mxu0 0.0
    %6041 = vmatprep.subr.mxu0 0.0
    %6042 = vmatpush1.msra.mxu0 0.0
    %6043 = vmatprep.subr.mxu0 0.0
    %6044 = vmatpush1.msra.mxu0 0.0
    %6045 = vmatprep.subr.mxu0 0.0
    %6046 = vmatpush1.msra.mxu0 0.0
    %6047 = vmatprep.subr.mxu0 0.0
    %6048 = vmatpush1.msra.mxu0 0.0
    %6049 = vmatprep.subr.mxu0 0.0
    %6050 = vmatpush1.msra.mxu0 0.0
    %6051 = vmatprep.subr.mxu0 0.0
    %6052 = vmatpush1.msra.mxu0 0.0
    %6053 = vmatprep.subr.mxu0 0.0
    %6054 = vmatpush1.msra.mxu0 0.0
    %6055 = vmatprep.subr.mxu0 0.0
    %6056 = vmatpush1.msra.mxu0 0.0
    %6057 = vmatprep.subr.mxu0 0.0
    %6058 = vmatpush1.msra.mxu0 0.0
    %6059 = vmatprep.subr.mxu0 0.0
    %6060 = vmatpush1.msra.mxu0 0.0
    %6061 = vmatprep.subr.mxu0 0.0
    %6062 = vmatpush1.msra.mxu0 0.0
    %6063 = vmatprep.subr.mxu0 0.0
    %6064 = vmatpush1.msra.mxu0 0.0
    %6065 = vmatprep.mubr.f32.mxu0 0.0
    %6066 = vmatmul.mubr.f32.gmra.mrb[0].mxu0 %v5914
    %v6067 = vpop.f32.mrb[0].mxu0
    %v6068 = vadd.f32 0.0, %v6067
    %v6069 = vpop.f32.mrb[0].mxu0
    %6070 = vmatprep.mubr.f32.mxu0 0.0
    %6071 = vmatmul.mubr.f32.gmra.mrb[0].mxu0 %v5917
    %v6072 = vpop.f32.mrb[0].mxu0
    %v6073 = vadd.f32 0.0, %v6072
    %v6074 = vpop.f32.mrb[0].mxu0
    %6075 = vdwg.mxu0
    %v6077 = vsel %vm616, %v194, 0
    %v6080 = vsel %vm616, %v5825, 0
    %v6083 = vsel %vm616, %v5830, 0
    %6085 = vmatprep.subr.mxu0 0.0
    %6086 = vmatpush1.xpose.msra.mxu0 %v6080
    %6087 = vmatprep.subr.mxu0 0.0
    %6088 = vmatpush1.xpose.msra.mxu0 %v6083
    %6089 = vmatprep.subr.mxu0 0.0
    %6090 = vmatpush1.xpose.msra.mxu0 0.0
    %6091 = vmatprep.subr.mxu0 0.0
    %6092 = vmatpush1.xpose.msra.mxu0 0.0
    %6093 = vmatprep.subr.mxu0 0.0
    %6094 = vmatpush1.xpose.msra.mxu0 0.0
    %6095 = vmatprep.subr.mxu0 0.0
    %6096 = vmatpush1.xpose.msra.mxu0 0.0
    %6097 = vmatprep.subr.mxu0 0.0
    %6098 = vmatpush1.xpose.msra.mxu0 0.0
    %6099 = vmatprep.subr.mxu0 0.0
    %6100 = vmatpush1.xpose.msra.mxu0 0.0
    %6101 = vmatprep.subr.mxu0 0.0
    %6102 = vmatpush1.xpose.msra.mxu0 0.0
    %6103 = vmatprep.subr.mxu0 0.0
    %6104 = vmatpush1.xpose.msra.mxu0 0.0
    %6105 = vmatprep.subr.mxu0 0.0
    %6106 = vmatpush1.xpose.msra.mxu0 0.0
    %6107 = vmatprep.subr.mxu0 0.0
    %6108 = vmatpush1.xpose.msra.mxu0 0.0
    %6109 = vmatprep.subr.mxu0 0.0
    %6110 = vmatpush1.xpose.msra.mxu0 0.0
    %6111 = vmatprep.subr.mxu0 0.0
    %6112 = vmatpush1.xpose.msra.mxu0 0.0
    %6113 = vmatprep.subr.mxu0 0.0
    %6114 = vmatpush1.xpose.msra.mxu0 0.0
    %6115 = vmatprep.subr.mxu0 0.0
    %6116 = vmatpush1.xpose.msra.mxu0 0.0
    %6117 = vmatprep.subr.mxu0 0.0
    %6118 = vmatpush1.xpose.msra.mxu0 0.0
    %6119 = vmatprep.subr.mxu0 0.0
    %6120 = vmatpush1.xpose.msra.mxu0 0.0
    %6121 = vmatprep.subr.mxu0 0.0
    %6122 = vmatpush1.xpose.msra.mxu0 0.0
    %6123 = vmatprep.subr.mxu0 0.0
    %6124 = vmatpush1.xpose.msra.mxu0 0.0
    %6125 = vmatprep.subr.mxu0 0.0
    %6126 = vmatpush1.xpose.msra.mxu0 0.0
    %6127 = vmatprep.subr.mxu0 0.0
    %6128 = vmatpush1.xpose.msra.mxu0 0.0
    %6129 = vmatprep.subr.mxu0 0.0
    %6130 = vmatpush1.xpose.msra.mxu0 0.0
    %6131 = vmatprep.subr.mxu0 0.0
    %6132 = vmatpush1.xpose.msra.mxu0 0.0
    %6133 = vmatprep.subr.mxu0 0.0
    %6134 = vmatpush1.xpose.msra.mxu0 0.0
    %6135 = vmatprep.subr.mxu0 0.0
    %6136 = vmatpush1.xpose.msra.mxu0 0.0
    %6137 = vmatprep.subr.mxu0 0.0
    %6138 = vmatpush1.xpose.msra.mxu0 0.0
    %6139 = vmatprep.subr.mxu0 0.0
    %6140 = vmatpush1.xpose.msra.mxu0 0.0
    %6141 = vmatprep.subr.mxu0 0.0
    %6142 = vmatpush1.xpose.msra.mxu0 0.0
    %6143 = vmatprep.subr.mxu0 0.0
    %6144 = vmatpush1.xpose.msra.mxu0 0.0
    %6145 = vmatprep.subr.mxu0 0.0
    %6146 = vmatpush1.xpose.msra.mxu0 0.0
    %6147 = vmatprep.subr.mxu0 0.0
    %6148 = vmatpush1.xpose.msra.mxu0 0.0
    %6149 = vmatprep.mubr.f32.mxu0 0.0
    %6150 = vmatmul.mubr.f32.gmra.mrb[0].mxu0 %v6077
    %v6151 = vpop.f32.mrb[0].mxu0
    %v6152 = vadd.f32 0.0, %v6151
    %v6153 = vpop.f32.mrb[0].mxu0
    %6154 = vdwg.mxu0
    %6155 = vst.msk [vmem:[#allocation2] sm:$0x3] %vm883, %v6152
    %v6157 = vsel %vm616, %v5904, 0
    %v6160 = vsel %vm616, %v5909, 0
    %6162 = vmatprep.subr.mxu0 0.0
    %6163 = vmatpush1.xpose.msra.mxu0 %v6157
    %6164 = vmatprep.subr.mxu0 0.0
    %6165 = vmatpush1.xpose.msra.mxu0 %v6160
    %6166 = vmatprep.subr.mxu0 0.0
    %6167 = vmatpush1.xpose.msra.mxu0 0.0
    %6168 = vmatprep.subr.mxu0 0.0
    %6169 = vmatpush1.xpose.msra.mxu0 0.0
    %6170 = vmatprep.subr.mxu0 0.0
    %6171 = vmatpush1.xpose.msra.mxu0 0.0
    %6172 = vmatprep.subr.mxu0 0.0
    %6173 = vmatpush1.xpose.msra.mxu0 0.0
    %6174 = vmatprep.subr.mxu0 0.0
    %6175 = vmatpush1.xpose.msra.mxu0 0.0
    %6176 = vmatprep.subr.mxu0 0.0
    %6177 = vmatpush1.xpose.msra.mxu0 0.0
    %6178 = vmatprep.subr.mxu0 0.0
    %6179 = vmatpush1.xpose.msra.mxu0 0.0
    %6180 = vmatprep.subr.mxu0 0.0
    %6181 = vmatpush1.xpose.msra.mxu0 0.0
    %6182 = vmatprep.subr.mxu0 0.0
    %6183 = vmatpush1.xpose.msra.mxu0 0.0
    %6184 = vmatprep.subr.mxu0 0.0
    %6185 = vmatpush1.xpose.msra.mxu0 0.0
    %6186 = vmatprep.subr.mxu0 0.0
    %6187 = vmatpush1.xpose.msra.mxu0 0.0
    %6188 = vmatprep.subr.mxu0 0.0
    %6189 = vmatpush1.xpose.msra.mxu0 0.0
    %6190 = vmatprep.subr.mxu0 0.0
    %6191 = vmatpush1.xpose.msra.mxu0 0.0
    %6192 = vmatprep.subr.mxu0 0.0
    %6193 = vmatpush1.xpose.msra.mxu0 0.0
    %6194 = vmatprep.subr.mxu0 0.0
    %6195 = vmatpush1.xpose.msra.mxu0 0.0
    %6196 = vmatprep.subr.mxu0 0.0
    %6197 = vmatpush1.xpose.msra.mxu0 0.0
    %6198 = vmatprep.subr.mxu0 0.0
    %6199 = vmatpush1.xpose.msra.mxu0 0.0
    %6200 = vmatprep.subr.mxu0 0.0
    %6201 = vmatpush1.xpose.msra.mxu0 0.0
    %6202 = vmatprep.subr.mxu0 0.0
    %6203 = vmatpush1.xpose.msra.mxu0 0.0
    %6204 = vmatprep.subr.mxu0 0.0
    %6205 = vmatpush1.xpose.msra.mxu0 0.0
    %6206 = vmatprep.subr.mxu0 0.0
    %6207 = vmatpush1.xpose.msra.mxu0 0.0
    %6208 = vmatprep.subr.mxu0 0.0
    %6209 = vmatpush1.xpose.msra.mxu0 0.0
    %6210 = vmatprep.subr.mxu0 0.0
    %6211 = vmatpush1.xpose.msra.mxu0 0.0
    %6212 = vmatprep.subr.mxu0 0.0
    %6213 = vmatpush1.xpose.msra.mxu0 0.0
    %6214 = vmatprep.subr.mxu0 0.0
    %6215 = vmatpush1.xpose.msra.mxu0 0.0
    %6216 = vmatprep.subr.mxu0 0.0
    %6217 = vmatpush1.xpose.msra.mxu0 0.0
    %6218 = vmatprep.subr.mxu0 0.0
    %6219 = vmatpush1.xpose.msra.mxu0 0.0
    %6220 = vmatprep.subr.mxu0 0.0
    %6221 = vmatpush1.xpose.msra.mxu0 0.0
    %6222 = vmatprep.subr.mxu0 0.0
    %6223 = vmatpush1.xpose.msra.mxu0 0.0
    %6224 = vmatprep.subr.mxu0 0.0
    %6225 = vmatpush1.xpose.msra.mxu0 0.0
    %6226 = vmatprep.mubr.f32.mxu0 0.0
    %6227 = vmatmul.mubr.f32.gmra.mrb[0].mxu0 %v6077
    %v6228 = vpop.f32.mrb[0].mxu0
    %v6229 = vadd.f32 0.0, %v6228
    %v6230 = vpop.f32.mrb[0].mxu0
    %6231 = vdwg.mxu0
    %v6232 = vmul.f32 %v6229, %v6229
    %6233 = vst.msk [vmem:[#allocation4] sm:$0x3] %vm883, %v6232
    %v6235 = vsel %vm616, %v5989, 0
    %v6238 = vsel %vm616, %v5994, 0
    %6240 = vmatprep.subr.mxu0 0.0
    %6241 = vmatpush1.xpose.msra.mxu0 %v6235
    %6242 = vmatprep.subr.mxu0 0.0
    %6243 = vmatpush1.xpose.msra.mxu0 %v6238
    %6244 = vmatprep.subr.mxu0 0.0
    %6245 = vmatpush1.xpose.msra.mxu0 0.0
    %6246 = vmatprep.subr.mxu0 0.0
    %6247 = vmatpush1.xpose.msra.mxu0 0.0
    %6248 = vmatprep.subr.mxu0 0.0
    %6249 = vmatpush1.xpose.msra.mxu0 0.0
    %6250 = vmatprep.subr.mxu0 0.0
    %6251 = vmatpush1.xpose.msra.mxu0 0.0
    %6252 = vmatprep.subr.mxu0 0.0
    %6253 = vmatpush1.xpose.msra.mxu0 0.0
    %6254 = vmatprep.subr.mxu0 0.0
    %6255 = vmatpush1.xpose.msra.mxu0 0.0
    %6256 = vmatprep.subr.mxu0 0.0
    %6257 = vmatpush1.xpose.msra.mxu0 0.0
    %6258 = vmatprep.subr.mxu0 0.0
    %6259 = vmatpush1.xpose.msra.mxu0 0.0
    %6260 = vmatprep.subr.mxu0 0.0
    %6261 = vmatpush1.xpose.msra.mxu0 0.0
    %6262 = vmatprep.subr.mxu0 0.0
    %6263 = vmatpush1.xpose.msra.mxu0 0.0
    %6264 = vmatprep.subr.mxu0 0.0
    %6265 = vmatpush1.xpose.msra.mxu0 0.0
    %6266 = vmatprep.subr.mxu0 0.0
    %6267 = vmatpush1.xpose.msra.mxu0 0.0
    %6268 = vmatprep.subr.mxu0 0.0
    %6269 = vmatpush1.xpose.msra.mxu0 0.0
    %6270 = vmatprep.subr.mxu0 0.0
    %6271 = vmatpush1.xpose.msra.mxu0 0.0
    %6272 = vmatprep.subr.mxu0 0.0
    %6273 = vmatpush1.xpose.msra.mxu0 0.0
    %6274 = vmatprep.subr.mxu0 0.0
    %6275 = vmatpush1.xpose.msra.mxu0 0.0
    %6276 = vmatprep.subr.mxu0 0.0
    %6277 = vmatpush1.xpose.msra.mxu0 0.0
    %6278 = vmatprep.subr.mxu0 0.0
    %6279 = vmatpush1.xpose.msra.mxu0 0.0
    %6280 = vmatprep.subr.mxu0 0.0
    %6281 = vmatpush1.xpose.msra.mxu0 0.0
    %6282 = vmatprep.subr.mxu0 0.0
    %6283 = vmatpush1.xpose.msra.mxu0 0.0
    %6284 = vmatprep.subr.mxu0 0.0
    %6285 = vmatpush1.xpose.msra.mxu0 0.0
    %6286 = vmatprep.subr.mxu0 0.0
    %6287 = vmatpush1.xpose.msra.mxu0 0.0
    %6288 = vmatprep.subr.mxu0 0.0
    %6289 = vmatpush1.xpose.msra.mxu0 0.0
    %6290 = vmatprep.subr.mxu0 0.0
    %6291 = vmatpush1.xpose.msra.mxu0 0.0
    %6292 = vmatprep.subr.mxu0 0.0
    %6293 = vmatpush1.xpose.msra.mxu0 0.0
    %6294 = vmatprep.subr.mxu0 0.0
    %6295 = vmatpush1.xpose.msra.mxu0 0.0
    %6296 = vmatprep.subr.mxu0 0.0
    %6297 = vmatpush1.xpose.msra.mxu0 0.0
    %6298 = vmatprep.subr.mxu0 0.0
    %6299 = vmatpush1.xpose.msra.mxu0 0.0
    %6300 = vmatprep.subr.mxu0 0.0
    %6301 = vmatpush1.xpose.msra.mxu0 0.0
    %6302 = vmatprep.subr.mxu0 0.0
    %6303 = vmatpush1.xpose.msra.mxu0 0.0
    %6304 = vmatprep.mubr.f32.mxu0 0.0
    %6305 = vmatmul.mubr.f32.gmra.mrb[0].mxu0 %v6077
    %v6306 = vpop.f32.mrb[0].mxu0
    %v6307 = vadd.f32 0.0, %v6306
    %v6308 = vpop.f32.mrb[0].mxu0
    %6309 = vdwg.mxu0
    %6310 = vst.msk [vmem:[#allocation6] sm:$0x3] %vm883, %v6307
    %v6312 = vsel %vm616, %v6068, 0
    %v6315 = vsel %vm616, %v6073, 0
    %6317 = vmatprep.subr.mxu0 0.0
    %6318 = vmatpush1.xpose.msra.mxu0 %v6312
    %6319 = vmatprep.subr.mxu0 0.0
    %6320 = vmatpush1.xpose.msra.mxu0 %v6315
    %6321 = vmatprep.subr.mxu0 0.0
    %6322 = vmatpush1.xpose.msra.mxu0 0.0
    %6323 = vmatprep.subr.mxu0 0.0
    %6324 = vmatpush1.xpose.msra.mxu0 0.0
    %6325 = vmatprep.subr.mxu0 0.0
    %6326 = vmatpush1.xpose.msra.mxu0 0.0
    %6327 = vmatprep.subr.mxu0 0.0
    %6328 = vmatpush1.xpose.msra.mxu0 0.0
    %6329 = vmatprep.subr.mxu0 0.0
    %6330 = vmatpush1.xpose.msra.mxu0 0.0
    %6331 = vmatprep.subr.mxu0 0.0
    %6332 = vmatpush1.xpose.msra.mxu0 0.0
    %6333 = vmatprep.subr.mxu0 0.0
    %6334 = vmatpush1.xpose.msra.mxu0 0.0
    %6335 = vmatprep.subr.mxu0 0.0
    %6336 = vmatpush1.xpose.msra.mxu0 0.0
    %6337 = vmatprep.subr.mxu0 0.0
    %6338 = vmatpush1.xpose.msra.mxu0 0.0
    %6339 = vmatprep.subr.mxu0 0.0
    %6340 = vmatpush1.xpose.msra.mxu0 0.0
    %6341 = vmatprep.subr.mxu0 0.0
    %6342 = vmatpush1.xpose.msra.mxu0 0.0
    %6343 = vmatprep.subr.mxu0 0.0
    %6344 = vmatpush1.xpose.msra.mxu0 0.0
    %6345 = vmatprep.subr.mxu0 0.0
    %6346 = vmatpush1.xpose.msra.mxu0 0.0
    %6347 = vmatprep.subr.mxu0 0.0
    %6348 = vmatpush1.xpose.msra.mxu0 0.0
    %6349 = vmatprep.subr.mxu0 0.0
    %6350 = vmatpush1.xpose.msra.mxu0 0.0
    %6351 = vmatprep.subr.mxu0 0.0
    %6352 = vmatpush1.xpose.msra.mxu0 0.0
    %6353 = vmatprep.subr.mxu0 0.0
    %6354 = vmatpush1.xpose.msra.mxu0 0.0
    %6355 = vmatprep.subr.mxu0 0.0
    %6356 = vmatpush1.xpose.msra.mxu0 0.0
    %6357 = vmatprep.subr.mxu0 0.0
    %6358 = vmatpush1.xpose.msra.mxu0 0.0
    %6359 = vmatprep.subr.mxu0 0.0
    %6360 = vmatpush1.xpose.msra.mxu0 0.0
    %6361 = vmatprep.subr.mxu0 0.0
    %6362 = vmatpush1.xpose.msra.mxu0 0.0
    %6363 = vmatprep.subr.mxu0 0.0
    %6364 = vmatpush1.xpose.msra.mxu0 0.0
    %6365 = vmatprep.subr.mxu0 0.0
    %6366 = vmatpush1.xpose.msra.mxu0 0.0
    %6367 = vmatprep.subr.mxu0 0.0
    %6368 = vmatpush1.xpose.msra.mxu0 0.0
    %6369 = vmatprep.subr.mxu0 0.0
    %6370 = vmatpush1.xpose.msra.mxu0 0.0
    %6371 = vmatprep.subr.mxu0 0.0
    %6372 = vmatpush1.xpose.msra.mxu0 0.0
    %6373 = vmatprep.subr.mxu0 0.0
    %6374 = vmatpush1.xpose.msra.mxu0 0.0
    %6375 = vmatprep.subr.mxu0 0.0
    %6376 = vmatpush1.xpose.msra.mxu0 0.0
    %6377 = vmatprep.subr.mxu0 0.0
    %6378 = vmatpush1.xpose.msra.mxu0 0.0
    %6379 = vmatprep.subr.mxu0 0.0
    %6380 = vmatpush1.xpose.msra.mxu0 0.0
    %6381 = vmatprep.mubr.f32.mxu0 0.0
    %6382 = vmatmul.mubr.f32.gmra.mrb[0].mxu0 %v6077
    %v6383 = vpop.f32.mrb[0].mxu0
    %v6384 = vadd.f32 0.0, %v6383
    %v6385 = vpop.f32.mrb[0].mxu0
    %6386 = vdwg.mxu0
    %v6387 = vmul.f32 %v6384, %v6384
    %6388 = vst.msk [vmem:[#allocation7] sm:$0x3] %vm883, %v6387
    // Predicated region
    $region142: #{forward.1} parent=1 // pred_check
      _
    $region143: #{forward.1} parent=1 // pred_check_branch
      %6390 = sbr.rel (0) target = $region145
    $region144: #{forward.1} parent=1 // pred_region
      %s6392 = ssub.s32 32, 32
      %6393 = vsyncadd [#allocation3], %s6392
      %s6395 = sshll.u32 [#allocation2], 4
      %s6396 = int_to_ptr.vmem [resolvable:$true] %s6395
      %6398 = dma.vmem_to_hbm [thread:$0]  %s6396, 32, %s71, [#allocation3]
    $region145: #{forward.1} parent=1 // pred_fallthru
      _
    // Predicated region
    $region146: #{forward.1} parent=1 // pred_check
      _
    $region147: #{forward.1} parent=1 // pred_check_branch
      %6400 = sbr.rel (0) target = $region149
    $region148: #{forward.1} parent=1 // pred_region
      %s6402 = ssub.s32 32, 32
      %6403 = vsyncadd [#allocation5], %s6402
      %s6405 = sshll.u32 [#allocation4], 4
      %s6406 = int_to_ptr.vmem [resolvable:$true] %s6405
      %6408 = dma.vmem_to_hbm [thread:$0]  %s6406, 32, %s73, [#allocation5]
    $region149: #{forward.1} parent=1 // pred_fallthru
      _
    // Predicated region
    $region150: #{forward.1} parent=1 // pred_check
      _
    $region151: #{forward.1} parent=1 // pred_check_branch
      %6410 = sbr.rel (0) target = $region153
    $region152: #{forward.1} parent=1 // pred_region
      %s6412 = ssub.s32 32, 32
      %6413 = vsyncadd [#allocation5], %s6412
      %s6415 = sshll.u32 [#allocation6], 4
      %s6416 = int_to_ptr.vmem [resolvable:$true] %s6415
      %6418 = dma.vmem_to_hbm [thread:$0]  %s6416, 32, %s75, [#allocation5]
    $region153: #{forward.1} parent=1 // pred_fallthru
      _
    // Predicated region
    $region154: #{forward.1} parent=1 // pred_check
      _
    $region155: #{forward.1} parent=1 // pred_check_branch
      %6420 = sbr.rel (0) target = $region157
    $region156: #{forward.1} parent=1 // pred_region
      %s6422 = ssub.s32 32, 32
      %6423 = vsyncadd [#allocation8], %s6422
      %s6425 = sshll.u32 [#allocation7], 4
      %s6426 = int_to_ptr.vmem [resolvable:$true] %s6425
      %6428 = dma.vmem_to_hbm [thread:$0]  %s6426, 32, %s77, [#allocation8]
    $region157: #{forward.1} parent=1 // pred_fallthru
      _
    // Predicated region
    $region158: #{forward.1} parent=1 // pred_check
      _
    $region159: #{forward.1} parent=1 // pred_check_branch
      %6430 = sbr.rel (0) target = $region161
    $region160: #{forward.1} parent=1 // pred_region
      %6431 = dma.done [#allocation3], 32
    $region161: #{forward.1} parent=1 // pred_fallthru
      _
    // Predicated region
    $region162: #{forward.1} parent=1 // pred_check
      _
    $region163: #{forward.1} parent=1 // pred_check_branch
      %6433 = sbr.rel (0) target = $region165
    $region164: #{forward.1} parent=1 // pred_region
      %6434 = dma.done [#allocation5], 32
    $region165: #{forward.1} parent=1 // pred_fallthru
      _
    // Predicated region
    $region166: #{forward.1} parent=1 // pred_check
      _
    $region167: #{forward.1} parent=1 // pred_check_branch
      %6436 = sbr.rel (0) target = $region169
    $region168: #{forward.1} parent=1 // pred_region
      %6437 = dma.done [#allocation5], 32
    $region169: #{forward.1} parent=1 // pred_fallthru
      _
    // Predicated region
    $region170: #{forward.1} parent=1 // pred_check
      _
    $region171: #{forward.1} parent=1 // pred_check_branch
      %6439 = sbr.rel (0) target = $region173
    $region172: #{forward.1} parent=1 // pred_region
      %6440 = dma.done [#allocation8], 32
    $region173: #{forward.1} parent=1 // pred_fallthru
      _
    %6441 = vsyncpa [#allocation3], 1
    %6442 = vsyncpa [#allocation5], 1
    %6443 = vsyncpa [#allocation8], 1

</llo_original>
